<compile_context>
chip_gen: v7x
topology: tpu7x:2x2x1
jax: 0.10.0
libtpu: 0.0.40
codegen_flags: <defaults>
</compile_context>

<pallas_src>
import math
from functools import partial

import jax
import jax.numpy as jnp
from jax.experimental import pallas as pl
from jax.experimental.pallas import tpu as pltpu


def _round_up(x, m):
    return (x + m - 1) // m * m


# ---------------------------------------------------------------------------
# Kernel 1: tiled matmul with fused bias epilogue (all Linear / 1x1-conv math)
# ---------------------------------------------------------------------------
def _mm_kernel(a_ref, b_ref, bias_ref, o_ref, acc_ref):
    @pl.when(pl.program_id(2) == 0)
    def _():
        acc_ref[...] = jnp.zeros_like(acc_ref)

    acc_ref[...] += jnp.dot(a_ref[...], b_ref[...],
                            preferred_element_type=jnp.float32)

    @pl.when(pl.program_id(2) == pl.num_programs(2) - 1)
    def _():
        o_ref[...] = (acc_ref[...] + bias_ref[...]).astype(o_ref.dtype)


def pallas_matmul(a, b, bias=None):
    """a: (M, K) @ b: (K, N) + bias -> (M, N) float32.

    bf16 operands, f32 accumulation.  M/N/K are zero-padded so every block is
    (8,128)-legal and output stores are lane-dense; padding is stripped after.
    """
    M, K = a.shape
    K2, N = b.shape
    assert K == K2
    tm = min(256, _round_up(max(M, 1), 8))
    Mp = _round_up(M, tm)
    Kp = _round_up(K, 128)
    tk = 512 if Kp % 512 == 0 else (256 if Kp % 256 == 0 else 128)
    Np = _round_up(N, 128)
    tn = 256 if Np % 256 == 0 else 128

    a_p = jnp.pad(a.astype(jnp.bfloat16), ((0, Mp - M), (0, Kp - K)))
    b_p = jnp.pad(b.astype(jnp.bfloat16), ((0, Kp - K), (0, Np - N)))
    if bias is None:
        bias = jnp.zeros((N,), jnp.float32)
    bias_p = jnp.pad(bias.astype(jnp.float32), (0, Np - N)).reshape(1, Np)

    out = pl.pallas_call(
        _mm_kernel,
        out_shape=jax.ShapeDtypeStruct((Mp, Np), jnp.float32),
        grid=(Mp // tm, Np // tn, Kp // tk),
        in_specs=[
            pl.BlockSpec((tm, tk), lambda i, j, k: (i, k)),
            pl.BlockSpec((tk, tn), lambda i, j, k: (k, j)),
            pl.BlockSpec((1, tn), lambda i, j, k: (0, j)),
        ],
        out_specs=pl.BlockSpec((tm, tn), lambda i, j, k: (i, j)),
        scratch_shapes=[pltpu.VMEM((tm, tn), jnp.float32)],
        compiler_params=pltpu.CompilerParams(
            dimension_semantics=("parallel", "parallel", "arbitrary"),
            vmem_limit_bytes=32 * 1024 * 1024),
        cost_estimate=pl.CostEstimate(
            flops=int(2 * Mp * Np * Kp), transcendentals=0,
            bytes_accessed=int(2 * (Mp * Kp + Kp * Np) + 4 * Mp * Np)),
    )(a_p, b_p, bias_p)
    return out[:M, :N]


# ---------------------------------------------------------------------------
# Kernel 2: Conv1d (k > 1) with no materialized im2col — k shifted matmuls
# accumulate into a register accumulator from static slices of the padded
# activation.  Strided convs are phase-split so every slice is contiguous.
# ---------------------------------------------------------------------------
def _conv_kernel(x_ref, w_ref, bias_ref, o_ref, *, k, stride, lph, lout):
    cout = o_ref.shape[-1]
    acc = jnp.zeros((lout, cout), jnp.float32)
    for tap in range(k):                       # unrolled; k in {3, 4}
        start = (tap % stride) * lph + (tap // stride)   # static
        xs = x_ref[0, pl.ds(start, lout), :]
        acc = acc + jnp.dot(xs, w_ref[tap], preferred_element_type=jnp.float32)
    o_ref[0] = (acc + bias_ref[...]).astype(o_ref.dtype)


def pallas_conv1d(x, w, b=None, stride=1, pad=0):
    """x: (B, L, Cin); w: (k, Cin, Cout) -> (B, Lout, Cout) float32."""
    B, L, Cin = x.shape
    k, _, Cout = w.shape
    if k == 1 and stride == 1 and pad == 0:    # pointwise conv == matmul
        out = pallas_matmul(x.reshape(B * L, Cin), w[0], b)
        return out.reshape(B, L, Cout)

    xp = jnp.pad(x, ((0, 0), (pad, pad), (0, 0)))
    Lp = L + 2 * pad
    Lout = (Lp - k) // stride + 1
    Lp_pad = _round_up(Lp, stride)
    if Lp_pad != Lp:
        xp = jnp.pad(xp, ((0, 0), (0, Lp_pad - Lp), (0, 0)))
    Lph = Lp_pad // stride
    assert (k - 1) // stride + Lout <= Lph
    if stride == 1:
        phases = xp                                        # (B, Lp, Cin)
    else:
        # phase split (one x-sized copy) so in-kernel tap slices are contiguous
        phases = jnp.stack([xp[:, p::stride] for p in range(stride)], axis=1)
        phases = phases.reshape(B, stride * Lph, Cin)
    phases = phases.astype(jnp.bfloat16)
    w_b = w.astype(jnp.bfloat16)
    if b is None:
        b = jnp.zeros((Cout,), jnp.float32)
    bias = b.astype(jnp.float32).reshape(1, Cout)

    # TODO(synk): for very long sequences, additionally tile the Lout axis
    # (halo tiles) instead of holding the whole per-batch sequence in VMEM.
    return pl.pallas_call(
        partial(_conv_kernel, k=k, stride=stride, lph=Lph, lout=Lout),
        out_shape=jax.ShapeDtypeStruct((B, Lout, Cout), jnp.float32),
        grid=(B,),
        in_specs=[
            pl.BlockSpec((1, stride * Lph, Cin), lambda bi: (bi, 0, 0)),
            pl.BlockSpec((k, Cin, Cout), lambda bi: (0, 0, 0)),
            pl.BlockSpec((1, Cout), lambda bi: (0, 0)),
        ],
        out_specs=pl.BlockSpec((1, Lout, Cout), lambda bi: (bi, 0, 0)),
        compiler_params=pltpu.CompilerParams(
            dimension_semantics=("parallel",),
            vmem_limit_bytes=32 * 1024 * 1024),
    )(phases, w_b, bias)


# ---------------------------------------------------------------------------
# Kernel 3: fused softmax attention (all heads of one batch element per step)
# ---------------------------------------------------------------------------
def _attn_kernel(q_ref, k_ref, v_ref, o_ref, *, scale):
    q = q_ref[0]                                            # (H, N, D) bf16
    k = k_ref[0]
    v = v_ref[0]
    sim = jnp.einsum('hnd,hmd->hnm', q, k,
                     preferred_element_type=jnp.float32) * scale
    sim = sim - jnp.max(sim, axis=-1, keepdims=True)
    p = jnp.exp(sim)
    p = p * pl.reciprocal(jnp.sum(p, axis=-1, keepdims=True), approx=True)
    out = jnp.einsum('hnm,hmd->hnd', p.astype(jnp.bfloat16), v,
                     preferred_element_type=jnp.float32)
    o_ref[0] = out.astype(o_ref.dtype)


def fused_attention(q, k, v, scale):
    B, H, N, D = q.shape
    spec = pl.BlockSpec((1, H, N, D), lambda b: (b, 0, 0, 0))
    return pl.pallas_call(
        partial(_attn_kernel, scale=scale),
        out_shape=jax.ShapeDtypeStruct((B, H, N, D), jnp.float32),
        grid=(B,),
        in_specs=[spec, spec, spec],
        out_specs=spec,
        compiler_params=pltpu.CompilerParams(dimension_semantics=("parallel",)),
    )(q, k, v)


# ---------------------------------------------------------------------------
# Kernel 4: fused linear attention (softmaxes + both contractions in-kernel)
# ---------------------------------------------------------------------------
def _softmax(x, axis):
    m = jnp.max(x, axis=axis, keepdims=True)
    e = jnp.exp(x - m)
    return e / jnp.sum(e, axis=axis, keepdims=True)


def _linattn_kernel(q_ref, k_ref, v_ref, o_ref, *, scale):
    q = q_ref[0].astype(jnp.float32)                        # (H, D, N)
    k = k_ref[0].astype(jnp.float32)
    v = v_ref[0]                                            # (H, D, N) bf16
    q = _softmax(q, axis=-2) * scale                        # over features
    k = _softmax(k, axis=-1)                                # over sequence
    ctx = jnp.einsum('hdn,hen->hde', k.astype(jnp.bfloat16), v,
                     preferred_element_type=jnp.float32)
    out = jnp.einsum('hde,hdn->hen', ctx.astype(jnp.bfloat16),
                     q.astype(jnp.bfloat16),
                     preferred_element_type=jnp.float32)
    o_ref[0] = out.astype(o_ref.dtype)


def fused_linear_attention(q, k, v, scale):
    B, H, D, N = q.shape
    spec = pl.BlockSpec((1, H, D, N), lambda b: (b, 0, 0, 0))
    return pl.pallas_call(
        partial(_linattn_kernel, scale=scale),
        out_shape=jax.ShapeDtypeStruct((B, H, D, N), jnp.float32),
        grid=(B,),
        in_specs=[spec, spec, spec],
        out_specs=spec,
        compiler_params=pltpu.CompilerParams(dimension_semantics=("parallel",)),
    )(q, k, v)


# ---------------------------------------------------------------------------
# Model ops (glue in plain JAX; all heavy math routed through Pallas kernels)
# ---------------------------------------------------------------------------
def linear(x, p):
    return pallas_matmul(x, p["w"], p["b"])


def gelu(x):
    # nn.GELU() default is the exact erf formulation.
    # TODO(synk): erf has no guaranteed Mosaic lowering, so GELU stays as an
    # XLA elementwise op between the two bias-fused matmuls.
    return jax.nn.gelu(x, approximate=False)


def mlp2(x, p):
    return linear(gelu(linear(x, p["l1"])), p["l2"])


def group_norm(x, gamma, beta, groups, eps=1e-5):
    B, L, C = x.shape
    xg = x.reshape(B, L, groups, C // groups)
    mean = xg.mean(axis=(1, 3), keepdims=True)
    var = jnp.mean((xg - mean) ** 2, axis=(1, 3), keepdims=True)
    xg = (xg - mean) * jax.lax.rsqrt(var + eps)
    return xg.reshape(B, L, C) * gamma + beta


def rms_norm(x, g):
    C = x.shape[-1]
    nrm = jnp.sqrt(jnp.sum(x * x, axis=-1, keepdims=True))
    return x / jnp.maximum(nrm, 1e-12) * g * (C ** 0.5)


def sinusoidal_pos_emb(t, dim, theta):
    half = dim // 2
    freqs = jnp.exp(jnp.arange(half, dtype=jnp.float32) *
                    (-math.log(theta) / (half - 1)))
    emb = t.astype(jnp.float32)[:, None] * freqs[None, :]
    return jnp.concatenate([jnp.sin(emb), jnp.cos(emb)], axis=-1)


def block_apply(x, p, scale_shift, groups):
    x = pallas_conv1d(x, p["proj"]["w"], p["proj"]["b"], stride=1, pad=1)
    x = group_norm(x, p["norm"]["g"], p["norm"]["b"], groups)
    if scale_shift is not None:
        scale, shift = scale_shift
        x = x * (scale[:, None, :] + 1.0) + shift[:, None, :]
    return jax.nn.silu(x)


def resnet_block(x, t, c, p, groups):
    emb = jax.nn.silu(jnp.concatenate([t, c], axis=-1))
    emb = linear(emb, p["mlp"])                       # (B, 2*dim_out), bias fused
    dim_out = emb.shape[-1] // 2
    scale, shift = emb[:, :dim_out], emb[:, dim_out:]
    h = block_apply(x, p["block1"], (scale, shift), groups)
    h = block_apply(h, p["block2"], None, groups)
    if "res_conv" in p:
        res = pallas_conv1d(x, p["res_conv"]["w"], p["res_conv"]["b"])
    else:
        res = x
    return h + res


def linear_attention(x, p, heads, dim_head):
    B, N, C = x.shape
    scale = dim_head ** -0.5
    qkv = pallas_conv1d(x, p["to_qkv"]["w"])          # (B, N, 3*H*D), no bias
    qkv = qkv.reshape(B, N, 3, heads, dim_head).transpose(2, 0, 3, 4, 1)
    q, k, v = (t.astype(jnp.bfloat16) for t in (qkv[0], qkv[1], qkv[2]))
    out = fused_linear_attention(q, k, v, scale)      # (B, H, D, N) f32
    out = out.transpose(0, 3, 1, 2).reshape(B, N, heads * dim_head)
    out = pallas_conv1d(out, p["to_out_conv"]["w"], p["to_out_conv"]["b"])
    return rms_norm(out, p["to_out_norm"]["g"])


def attention(x, p, heads, dim_head):
    B, N, C = x.shape
    scale = dim_head ** -0.5
    qkv = pallas_conv1d(x, p["to_qkv"]["w"])
    qkv = qkv.reshape(B, N, 3, heads, dim_head).transpose(2, 0, 3, 1, 4)
    q, k, v = (t.astype(jnp.bfloat16) for t in (qkv[0], qkv[1], qkv[2]))
    out = fused_attention(q, k, v, scale)             # (B, H, N, D) f32
    out = out.transpose(0, 2, 1, 3).reshape(B, N, heads * dim_head)
    return pallas_conv1d(out, p["to_out"]["w"], p["to_out"]["b"])


def residual_prenorm(x, prenorm_g, fn):
    return fn(rms_norm(x, prenorm_g)) + x


# ---------------------------------------------------------------------------
# Parameter init (deterministic, synthetic)
# ---------------------------------------------------------------------------
def init_model_params(key, cfg):
    dim = cfg["dim"]
    ncb = cfg["num_codebooks"]
    dims = [dim] + [dim * m for m in cfg["dim_mults"]]
    in_out = list(zip(dims[:-1], dims[1:]))
    time_dim = dim * 4
    cond_dim = dim * 4
    in_flat = cfg["input_dim"] // ncb
    la_dh = cfg["la_dim_head"]
    keys = iter(jax.random.split(key, 1024))
    nk = lambda: next(keys)

    def dense(fi, fo):
        return {"w": 0.02 * jax.random.normal(nk(), (fi, fo), jnp.float32),
                "b": jnp.zeros((fo,), jnp.float32)}

    def conv(cin, cout, k=1, bias=True):
        p = {"w": 0.02 * jax.random.normal(nk(), (k, cin, cout), jnp.float32)}
        if bias:
            p["b"] = jnp.zeros((cout,), jnp.float32)
        return p

    def gn(c):
        return {"g": jnp.ones((c,), jnp.float32), "b": jnp.zeros((c,), jnp.float32)}

    def rms(c):
        return {"g": jnp.ones((c,), jnp.float32)}

    def block(cin, cout):
        return {"proj": conv(cin, cout, 3), "norm": gn(cout)}

    def resblock(cin, cout):
        p = {"mlp": dense(time_dim + cond_dim, cout * 2),
             "block1": block(cin, cout),
             "block2": block(cout, cout)}
        if cin != cout:
            p["res_conv"] = conv(cin, cout, 1)
        return p

    def lin_attn(c):
        hid = ncb * la_dh
        return {"prenorm": rms(c),
                "to_qkv": conv(c, 3 * hid, 1, bias=False),
                "to_out_conv": conv(hid, c, 1),
                "to_out_norm": rms(c)}

    def full_attn(c):
        hid = ncb * cfg["attn_dim_head"]
        return {"prenorm": rms(c),
                "to_qkv": conv(c, 3 * hid, 1, bias=False),
                "to_out": conv(hid, c, 1)}

    params = {
        "null_cond_emb": jax.random.normal(nk(), (cfg["input_cond_dim"],), jnp.float32),
        "time_mlp": {"l1": dense(dim, time_dim), "l2": dense(time_dim, time_dim)},
        "cond_mlp": {"l1": dense(cfg["input_cond_dim"], cond_dim),
                     "l2": dense(cond_dim, cond_dim)},
        "init_conv": conv(in_flat, dim, 1),
        "final_conv": conv(dim, in_flat, 1),
    }

    downs = []
    for ind, (di, do) in enumerate(in_out):
        is_last = ind >= len(in_out) - 1
        downs.append({"b1": resblock(di, di), "b2": resblock(di, di),
                      "attn1": lin_attn(di),
                      "b3": resblock(di, di), "b4": resblock(di, di),
                      "attn2": lin_attn(di),
                      "down": conv(di, do, 3 if is_last else 4)})
    params["downs"] = downs

    mid = dims[-1]
    params["mid"] = {"b1": resblock(mid, mid),
                     "attn": full_attn(mid),
                     "b2": resblock(mid, mid)}

    ups = []
    for ind, (di, do) in enumerate(reversed(in_out)):
        ups.append({"b1": resblock(do + di, do), "b2": resblock(do + di, do),
                    "attn1": lin_attn(do),
                    "b3": resblock(do + di, do), "b4": resblock(do + di, do),
                    "attn2": lin_attn(do),
                    "up": conv(do, di, 3)})
    params["ups"] = ups

    params["final_res_block"] = resblock(dim * 2, dim)
    return params


# ---------------------------------------------------------------------------
# Full forward pass (Unet1DFlatteningPattern.forward)
# ---------------------------------------------------------------------------
def unet1d_flattening_forward(params, latent, timestep, encoder_hidden_states=None,
                              cfg=None, cond_drop_prob=None, drop_key=None):
    dim = cfg["dim"]
    ncb = cfg["num_codebooks"]
    dims = [dim] + [dim * m for m in cfg["dim_mults"]]
    in_out = list(zip(dims[:-1], dims[1:]))
    la_dh = cfg["la_dim_head"]

    B, D_in, L = latent.shape
    dflat = D_in // ncb

    # flatten_interleave: (B, D_in, L) -> (B, dflat, L*ncb); then channels-last
    lat = latent.reshape(B, ncb, dflat, L).transpose(0, 2, 3, 1).reshape(B, dflat, L * ncb)
    x = lat.transpose(0, 2, 1)                            # (B, S, dflat), S = L*ncb
    x = pallas_conv1d(x, params["init_conv"]["w"], params["init_conv"]["b"])

    # condition embedding — matches Unet1DBase.form_condition_emb exactly:
    # the *argument* gates the drop branch, the module-level prob sets keep_mask.
    if cond_drop_prob is None:
        cond_drop_prob = cfg["cond_drop_prob"]
    if encoder_hidden_states is None:
        ehs = jnp.tile(params["null_cond_emb"][None, :], (B, 1))
    else:
        ehs = encoder_hidden_states
        if cond_drop_prob > 0.0:
            # TODO(synk): torch prob_mask_like uses the global RNG; an explicit key is used here.
            if drop_key is None:
                drop_key = jax.random.PRNGKey(1)
            keep = jax.random.uniform(drop_key, (B, 1)) < (1.0 - cfg["cond_drop_prob"])
            ehs = jnp.where(keep, ehs, params["null_cond_emb"][None, :])
    c = mlp2(ehs, params["cond_mlp"])
    t = mlp2(sinusoidal_pos_emb(timestep, dim, cfg["theta"]), params["time_mlp"])

    r = x
    hs = []
    for ind, ((di, do), sp) in enumerate(zip(in_out, params["downs"])):
        is_last = ind >= len(in_out) - 1
        x = resnet_block(x, t, c, sp["b1"], ncb); hs.append(x)
        x = resnet_block(x, t, c, sp["b2"], ncb)
        x = residual_prenorm(x, sp["attn1"]["prenorm"]["g"],
                             lambda y, p=sp["attn1"]: linear_attention(y, p, ncb, la_dh))
        hs.append(x)
        x = resnet_block(x, t, c, sp["b3"], ncb); hs.append(x)
        x = resnet_block(x, t, c, sp["b4"], ncb)
        x = residual_prenorm(x, sp["attn2"]["prenorm"]["g"],
                             lambda y, p=sp["attn2"]: linear_attention(y, p, ncb, la_dh))
        hs.append(x)
        if is_last:
            x = pallas_conv1d(x, sp["down"]["w"], sp["down"]["b"], stride=1, pad=1)
        else:
            x = pallas_conv1d(x, sp["down"]["w"], sp["down"]["b"], stride=2, pad=1)

    mp = params["mid"]
    x = resnet_block(x, t, c, mp["b1"], ncb)
    x = residual_prenorm(x, mp["attn"]["prenorm"]["g"],
                         lambda y: attention(y, mp["attn"], ncb, cfg["attn_dim_head"]))
    x = resnet_block(x, t, c, mp["b2"], ncb)

    for ind, ((di, do), sp) in enumerate(zip(list(reversed(in_out)), params["ups"])):
        is_last = ind == len(in_out) - 1
        # TODO(synk): skip-concat and nearest-upsample are still separate XLA
        # copies; folding them into the following conv's accumulation
        # (weight split / index_map i//2) is future work.
        x = jnp.concatenate([x, hs.pop()], axis=-1)
        x = resnet_block(x, t, c, sp["b1"], ncb)
        x = jnp.concatenate([x, hs.pop()], axis=-1)
        x = resnet_block(x, t, c, sp["b2"], ncb)
        x = residual_prenorm(x, sp["attn1"]["prenorm"]["g"],
                             lambda y, p=sp["attn1"]: linear_attention(y, p, ncb, la_dh))
        x = jnp.concatenate([x, hs.pop()], axis=-1)
        x = resnet_block(x, t, c, sp["b3"], ncb)
        x = jnp.concatenate([x, hs.pop()], axis=-1)
        x = resnet_block(x, t, c, sp["b4"], ncb)
        x = residual_prenorm(x, sp["attn2"]["prenorm"]["g"],
                             lambda y, p=sp["attn2"]: linear_attention(y, p, ncb, la_dh))
        if not is_last:
            x = jnp.repeat(x, 2, axis=1)                  # nearest-neighbor 2x upsample
        x = pallas_conv1d(x, sp["up"]["w"], sp["up"]["b"], stride=1, pad=1)

    x = jnp.concatenate([x, r], axis=-1)
    x = resnet_block(x, t, c, params["final_res_block"], ncb)
    x = pallas_conv1d(x, params["final_conv"]["w"], params["final_conv"]["b"])

    # back to channels-first + unflatten_interleave
    xf = x.transpose(0, 2, 1)                             # (B, dflat, S)
    out = xf.reshape(B, dflat, L, ncb).transpose(0, 3, 1, 2).reshape(B, ncb * dflat, L)
    return out


# ---------------------------------------------------------------------------
# Demo
# ---------------------------------------------------------------------------
if __name__ == "__main__":
    # Small config consistent with the module's constraints:
    #   input_dim % num_codebooks == 0, channels divisible by num_codebooks,
    #   flattened seq (L * num_codebooks) divisible by 2^(#downsamples).
    cfg = dict(input_dim=6, input_cond_dim=16, num_codebooks=3, dim=24,
               dim_mults=(1, 2), theta=10000.0, attn_dim_head=8,
               la_dim_head=32,  # LinearAttention default dim_head
               cond_drop_prob=0.5)

    key = jax.random.PRNGKey(0)
    kp, kx, kc = jax.random.split(key, 3)
    params = init_model_params(kp, cfg)

    B, L = 2, 8
    latent = jax.random.normal(kx, (B, cfg["input_dim"], L), jnp.float32)
    timestep = jnp.array([3, 7], dtype=jnp.int32)
    ehs = jax.random.normal(kc, (B, cfg["input_cond_dim"]), jnp.float32)

    fwd = jax.jit(partial(unet1d_flattening_forward, cfg=cfg, cond_drop_prob=0.0))
    out = fwd(params, latent, timestep, ehs)
    out = jax.block_until_ready(out)
    assert out.shape == latent.shape, (out.shape, latent.shape)
    assert out.dtype == jnp.float32
    print("KERNEL_OK")
</pallas_src>

<mosaic_0001>
module attributes {stable_mosaic.version = 11 : i64} {
  func.func @_mm_kernel(%arg0: i32, %arg1: i32, %arg2: i32, %arg3: memref<48x128xbf16, #tpu.memory_space<vmem>>, %arg4: memref<128x128xbf16, #tpu.memory_space<vmem>>, %arg5: memref<1x128xf32, #tpu.memory_space<vmem>>, %arg6: memref<48x128xf32, #tpu.memory_space<vmem>>, %arg7: memref<48x128xf32, #tpu.memory_space<vmem>>) attributes {dimension_semantics = [#tpu.dimension_semantics<parallel>, #tpu.dimension_semantics<parallel>, #tpu.dimension_semantics<arbitrary>], iteration_bounds = array<i64: 1, 1, 1>, scalar_prefetch = 0 : i64, scratch_operands = 1 : i64, tpu.core_type = #tpu.core_type<tc>, window_params = [{transform_indices = @transform_0, window_bounds = array<i64: 48, 128>}, {transform_indices = @transform_1, window_bounds = array<i64: 128, 128>}, {transform_indices = @transform_2, window_bounds = array<i64: 1, 128>}, {transform_indices = @transform_3, window_bounds = array<i64: 48, 128>}]} {
    %c0_i32 = arith.constant 0 : i32
    %0 = arith.cmpi eq, %arg2, %c0_i32 : i32
    %1 = arith.extui %0 : i1 to i32
    %c0_i32_0 = arith.constant 0 : i32
    %2 = arith.cmpi ne, %1, %c0_i32_0 : i32
    scf.if %2 {
      %cst_10 = arith.constant 0.000000e+00 : f32
      %12 = vector.broadcast %cst_10 : f32 to vector<48x128xf32>
      %c0_11 = arith.constant 0 : index
      %c0_12 = arith.constant 0 : index
      %13 = vector.load %arg7[%c0_11, %c0_12] : memref<48x128xf32, #tpu.memory_space<vmem>>, vector<48x128xf32>
      tpu.vector_store %arg7[%c0_11, %c0_12], %12 {strides = array<i32>} : memref<48x128xf32, #tpu.memory_space<vmem>>, vector<48x128xf32>,
    } else {
    }
    %c0 = arith.constant 0 : index
    %c0_1 = arith.constant 0 : index
    %3 = vector.load %arg7[%c0, %c0_1] : memref<48x128xf32, #tpu.memory_space<vmem>>, vector<48x128xf32>
    %c0_2 = arith.constant 0 : index
    %c0_3 = arith.constant 0 : index
    %4 = vector.load %arg3[%c0_2, %c0_3] : memref<48x128xbf16, #tpu.memory_space<vmem>>, vector<48x128xbf16>
    %c0_4 = arith.constant 0 : index
    %c0_5 = arith.constant 0 : index
    %5 = vector.load %arg4[%c0_4, %c0_5] : memref<128x128xbf16, #tpu.memory_space<vmem>>, vector<128x128xbf16>
    %cst = arith.constant dense<0.000000e+00> : vector<48x128xf32>
    %6 = tpu.matmul %4, %5, %cst {dimension_numbers = #tpu.dot_dimension_numbers<[1], [0], [0], [1], [0, 0, 1, 1], [], []>} : vector<48x128xbf16>, vector<128x128xbf16>, vector<48x128xf32> -> vector<48x128xf32>
    %7 = arith.addf %3, %6 : vector<48x128xf32>
    %c0_6 = arith.constant 0 : index
    %c0_7 = arith.constant 0 : index
    %8 = vector.load %arg7[%c0_6, %c0_7] : memref<48x128xf32, #tpu.memory_space<vmem>>, vector<48x128xf32>
    tpu.vector_store %arg7[%c0_6, %c0_7], %7 {strides = array<i32>} : memref<48x128xf32, #tpu.memory_space<vmem>>, vector<48x128xf32>,
    %c0_i32_8 = arith.constant 0 : i32
    %9 = arith.cmpi eq, %arg2, %c0_i32_8 : i32
    %10 = arith.extui %9 : i1 to i32
    %c0_i32_9 = arith.constant 0 : i32
    %11 = arith.cmpi ne, %10, %c0_i32_9 : i32
    scf.if %11 {
      %c0_10 = arith.constant 0 : index
      %c0_11 = arith.constant 0 : index
      %12 = vector.load %arg7[%c0_10, %c0_11] : memref<48x128xf32, #tpu.memory_space<vmem>>, vector<48x128xf32>
      %c0_12 = arith.constant 0 : index
      %c0_13 = arith.constant 0 : index
      %13 = vector.load %arg5[%c0_12, %c0_13] : memref<1x128xf32, #tpu.memory_space<vmem>>, vector<1x128xf32>
      %14 = vector.broadcast %13 : vector<1x128xf32> to vector<48x128xf32>
      %15 = arith.addf %12, %14 : vector<48x128xf32>
      %c0_14 = arith.constant 0 : index
      %c0_15 = arith.constant 0 : index
      %16 = vector.load %arg6[%c0_14, %c0_15] : memref<48x128xf32, #tpu.memory_space<vmem>>, vector<48x128xf32>
      tpu.vector_store %arg6[%c0_14, %c0_15], %15 {strides = array<i32>} : memref<48x128xf32, #tpu.memory_space<vmem>>, vector<48x128xf32>,
    } else {
    }
    return
  }
  func.func @transform_0(%arg0: i32, %arg1: i32, %arg2: i32) -> (i32, i32) {
    %c0_i32 = arith.constant 0 : i32
    return %arg0, %arg2 : i32, i32
  }
  func.func @transform_1(%arg0: i32, %arg1: i32, %arg2: i32) -> (i32, i32) {
    %c0_i32 = arith.constant 0 : i32
    return %arg2, %arg1 : i32, i32
  }
  func.func @transform_2(%arg0: i32, %arg1: i32, %arg2: i32) -> (i32, i32) {
    %c0_i32 = arith.constant 0 : i32
    %c0_i32_0 = arith.constant 0 : i32
    return %c0_i32, %arg1 : i32, i32
  }
  func.func @transform_3(%arg0: i32, %arg1: i32, %arg2: i32) -> (i32, i32) {
    %c0_i32 = arith.constant 0 : i32
    return %arg0, %arg1 : i32, i32
  }
}

module attributes {stable_mosaic.version = 11 : i64} {
  func.func @_conv_kernel(%arg0: i32, %arg1: memref<1x26x24xbf16, #tpu.memory_space<vmem>>, %arg2: memref<3x24x24xbf16, #tpu.memory_space<vmem>>, %arg3: memref<1x24xf32, #tpu.memory_space<vmem>>, %arg4: memref<1x24x24xf32, #tpu.memory_space<vmem>>) attributes {dimension_semantics = [#tpu.dimension_semantics<parallel>], iteration_bounds = array<i64: 2>, scalar_prefetch = 0 : i64, scratch_operands = 0 : i64, tpu.core_type = #tpu.core_type<tc>, window_params = [{transform_indices = @transform_0, window_bounds = array<i64: 1, 26, 24>}, {pipeline_mode = #tpu.pipeline_mode<synchronous>, transform_indices = @transform_1, window_bounds = array<i64: 3, 24, 24>}, {pipeline_mode = #tpu.pipeline_mode<synchronous>, transform_indices = @transform_2, window_bounds = array<i64: 1, 24>}, {transform_indices = @transform_3, window_bounds = array<i64: 1, 24, 24>}]} {
    %cst = arith.constant 0.000000e+00 : f32
    %0 = vector.broadcast %cst : f32 to vector<24x24xf32>
    %c0 = arith.constant 0 : index
    %c0_0 = arith.constant 0 : index
    %c0_1 = arith.constant 0 : index
    %1 = vector.load %arg1[%c0, %c0_0, %c0_1] : memref<1x26x24xbf16, #tpu.memory_space<vmem>>, vector<1x24x24xbf16>
    %2 = vector.shape_cast %1 : vector<1x24x24xbf16> to vector<24x24xbf16>
    %c0_2 = arith.constant 0 : index
    %c0_3 = arith.constant 0 : index
    %c0_4 = arith.constant 0 : index
    %3 = vector.load %arg2[%c0_2, %c0_3, %c0_4] : memref<3x24x24xbf16, #tpu.memory_space<vmem>>, vector<1x24x24xbf16>
    %4 = vector.shape_cast %3 : vector<1x24x24xbf16> to vector<24x24xbf16>
    %cst_5 = arith.constant dense<0.000000e+00> : vector<24x24xf32>
    %5 = tpu.matmul %2, %4, %cst_5 {dimension_numbers = #tpu.dot_dimension_numbers<[1], [0], [0], [1], [0, 0, 1, 1], [], []>} : vector<24x24xbf16>, vector<24x24xbf16>, vector<24x24xf32> -> vector<24x24xf32>
    %6 = arith.addf %0, %5 : vector<24x24xf32>
    %c0_6 = arith.constant 0 : index
    %c1 = arith.constant 1 : index
    %c0_7 = arith.constant 0 : index
    %7 = vector.load %arg1[%c0_6, %c1, %c0_7] : memref<1x26x24xbf16, #tpu.memory_space<vmem>>, vector<1x24x24xbf16>
    %8 = vector.shape_cast %7 : vector<1x24x24xbf16> to vector<24x24xbf16>
    %c1_8 = arith.constant 1 : index
    %c0_9 = arith.constant 0 : index
    %c0_10 = arith.constant 0 : index
    %9 = vector.load %arg2[%c1_8, %c0_9, %c0_10] : memref<3x24x24xbf16, #tpu.memory_space<vmem>>, vector<1x24x24xbf16>
    %10 = vector.shape_cast %9 : vector<1x24x24xbf16> to vector<24x24xbf16>
    %cst_11 = arith.constant dense<0.000000e+00> : vector<24x24xf32>
    %11 = tpu.matmul %8, %10, %cst_11 {dimension_numbers = #tpu.dot_dimension_numbers<[1], [0], [0], [1], [0, 0, 1, 1], [], []>} : vector<24x24xbf16>, vector<24x24xbf16>, vector<24x24xf32> -> vector<24x24xf32>
    %12 = arith.addf %6, %11 : vector<24x24xf32>
    %c0_12 = arith.constant 0 : index
    %c2 = arith.constant 2 : index
    %c0_13 = arith.constant 0 : index
    %13 = vector.load %arg1[%c0_12, %c2, %c0_13] : memref<1x26x24xbf16, #tpu.memory_space<vmem>>, vector<1x24x24xbf16>
    %14 = vector.shape_cast %13 : vector<1x24x24xbf16> to vector<24x24xbf16>
    %c2_14 = arith.constant 2 : index
    %c0_15 = arith.constant 0 : index
    %c0_16 = arith.constant 0 : index
    %15 = vector.load %arg2[%c2_14, %c0_15, %c0_16] : memref<3x24x24xbf16, #tpu.memory_space<vmem>>, vector<1x24x24xbf16>
    %16 = vector.shape_cast %15 : vector<1x24x24xbf16> to vector<24x24xbf16>
    %cst_17 = arith.constant dense<0.000000e+00> : vector<24x24xf32>
    %17 = tpu.matmul %14, %16, %cst_17 {dimension_numbers = #tpu.dot_dimension_numbers<[1], [0], [0], [1], [0, 0, 1, 1], [], []>} : vector<24x24xbf16>, vector<24x24xbf16>, vector<24x24xf32> -> vector<24x24xf32>
    %18 = arith.addf %12, %17 : vector<24x24xf32>
    %c0_18 = arith.constant 0 : index
    %c0_19 = arith.constant 0 : index
    %19 = vector.load %arg3[%c0_18, %c0_19] : memref<1x24xf32, #tpu.memory_space<vmem>>, vector<1x24xf32>
    %20 = vector.broadcast %19 : vector<1x24xf32> to vector<24x24xf32>
    %21 = arith.addf %18, %20 : vector<24x24xf32>
    %c0_20 = arith.constant 0 : index
    %c0_21 = arith.constant 0 : index
    %c0_22 = arith.constant 0 : index
    %22 = vector.load %arg4[%c0_20, %c0_21, %c0_22] : memref<1x24x24xf32, #tpu.memory_space<vmem>>, vector<1x24x24xf32>
    %23 = vector.shape_cast %22 : vector<1x24x24xf32> to vector<24x24xf32>
    %24 = vector.shape_cast %21 : vector<24x24xf32> to vector<1x24x24xf32>
    tpu.vector_store %arg4[%c0_20, %c0_21, %c0_22], %24 {strides = array<i32>} : memref<1x24x24xf32, #tpu.memory_space<vmem>>, vector<1x24x24xf32>,
    return
  }
  func.func @transform_0(%arg0: i32) -> (i32, i32, i32) {
    %c0_i32 = arith.constant 0 : i32
    %c0_i32_0 = arith.constant 0 : i32
    %c0_i32_1 = arith.constant 0 : i32
    return %arg0, %c0_i32, %c0_i32_0 : i32, i32, i32
  }
  func.func @transform_1(%arg0: i32) -> (i32, i32, i32) {
    %c0_i32 = arith.constant 0 : i32
    %c0_i32_0 = arith.constant 0 : i32
    %c0_i32_1 = arith.constant 0 : i32
    %c0_i32_2 = arith.constant 0 : i32
    return %c0_i32, %c0_i32_0, %c0_i32_1 : i32, i32, i32
  }
  func.func @transform_2(%arg0: i32) -> (i32, i32) {
    %c0_i32 = arith.constant 0 : i32
    %c0_i32_0 = arith.constant 0 : i32
    %c0_i32_1 = arith.constant 0 : i32
    return %c0_i32, %c0_i32_0 : i32, i32
  }
  func.func @transform_3(%arg0: i32) -> (i32, i32, i32) {
    %c0_i32 = arith.constant 0 : i32
    %c0_i32_0 = arith.constant 0 : i32
    %c0_i32_1 = arith.constant 0 : i32
    return %arg0, %c0_i32, %c0_i32_0 : i32, i32, i32
  }
}

module attributes {stable_mosaic.version = 11 : i64} {
  func.func @_mm_kernel(%arg0: i32, %arg1: i32, %arg2: i32, %arg3: memref<8x128xbf16, #tpu.memory_space<vmem>>, %arg4: memref<128x128xbf16, #tpu.memory_space<vmem>>, %arg5: memref<1x128xf32, #tpu.memory_space<vmem>>, %arg6: memref<8x128xf32, #tpu.memory_space<vmem>>, %arg7: memref<8x128xf32, #tpu.memory_space<vmem>>) attributes {dimension_semantics = [#tpu.dimension_semantics<parallel>, #tpu.dimension_semantics<parallel>, #tpu.dimension_semantics<arbitrary>], iteration_bounds = array<i64: 1, 1, 1>, scalar_prefetch = 0 : i64, scratch_operands = 1 : i64, tpu.core_type = #tpu.core_type<tc>, window_params = [{transform_indices = @transform_0, window_bounds = array<i64: 8, 128>}, {transform_indices = @transform_1, window_bounds = array<i64: 128, 128>}, {transform_indices = @transform_2, window_bounds = array<i64: 1, 128>}, {transform_indices = @transform_3, window_bounds = array<i64: 8, 128>}]} {
    %c0_i32 = arith.constant 0 : i32
    %0 = arith.cmpi eq, %arg2, %c0_i32 : i32
    %1 = arith.extui %0 : i1 to i32
    %c0_i32_0 = arith.constant 0 : i32
    %2 = arith.cmpi ne, %1, %c0_i32_0 : i32
    scf.if %2 {
      %cst_10 = arith.constant 0.000000e+00 : f32
      %12 = vector.broadcast %cst_10 : f32 to vector<8x128xf32>
      %c0_11 = arith.constant 0 : index
      %c0_12 = arith.constant 0 : index
      %13 = vector.load %arg7[%c0_11, %c0_12] : memref<8x128xf32, #tpu.memory_space<vmem>>, vector<8x128xf32>
      tpu.vector_store %arg7[%c0_11, %c0_12], %12 {strides = array<i32>} : memref<8x128xf32, #tpu.memory_space<vmem>>, vector<8x128xf32>,
    } else {
    }
    %c0 = arith.constant 0 : index
    %c0_1 = arith.constant 0 : index
    %3 = vector.load %arg7[%c0, %c0_1] : memref<8x128xf32, #tpu.memory_space<vmem>>, vector<8x128xf32>
    %c0_2 = arith.constant 0 : index
    %c0_3 = arith.constant 0 : index
    %4 = vector.load %arg3[%c0_2, %c0_3] : memref<8x128xbf16, #tpu.memory_space<vmem>>, vector<8x128xbf16>
    %c0_4 = arith.constant 0 : index
    %c0_5 = arith.constant 0 : index
    %5 = vector.load %arg4[%c0_4, %c0_5] : memref<128x128xbf16, #tpu.memory_space<vmem>>, vector<128x128xbf16>
    %cst = arith.constant dense<0.000000e+00> : vector<8x128xf32>
    %6 = tpu.matmul %4, %5, %cst {dimension_numbers = #tpu.dot_dimension_numbers<[1], [0], [0], [1], [0, 0, 1, 1], [], []>} : vector<8x128xbf16>, vector<128x128xbf16>, vector<8x128xf32> -> vector<8x128xf32>
    %7 = arith.addf %3, %6 : vector<8x128xf32>
    %c0_6 = arith.constant 0 : index
    %c0_7 = arith.constant 0 : index
    %8 = vector.load %arg7[%c0_6, %c0_7] : memref<8x128xf32, #tpu.memory_space<vmem>>, vector<8x128xf32>
    tpu.vector_store %arg7[%c0_6, %c0_7], %7 {strides = array<i32>} : memref<8x128xf32, #tpu.memory_space<vmem>>, vector<8x128xf32>,
    %c0_i32_8 = arith.constant 0 : i32
    %9 = arith.cmpi eq, %arg2, %c0_i32_8 : i32
    %10 = arith.extui %9 : i1 to i32
    %c0_i32_9 = arith.constant 0 : i32
    %11 = arith.cmpi ne, %10, %c0_i32_9 : i32
    scf.if %11 {
      %c0_10 = arith.constant 0 : index
      %c0_11 = arith.constant 0 : index
      %12 = vector.load %arg7[%c0_10, %c0_11] : memref<8x128xf32, #tpu.memory_space<vmem>>, vector<8x128xf32>
      %c0_12 = arith.constant 0 : index
      %c0_13 = arith.constant 0 : index
      %13 = vector.load %arg5[%c0_12, %c0_13] : memref<1x128xf32, #tpu.memory_space<vmem>>, vector<1x128xf32>
      %14 = vector.broadcast %13 : vector<1x128xf32> to vector<8x128xf32>
      %15 = arith.addf %12, %14 : vector<8x128xf32>
      %c0_14 = arith.constant 0 : index
      %c0_15 = arith.constant 0 : index
      %16 = vector.load %arg6[%c0_14, %c0_15] : memref<8x128xf32, #tpu.memory_space<vmem>>, vector<8x128xf32>
      tpu.vector_store %arg6[%c0_14, %c0_15], %15 {strides = array<i32>} : memref<8x128xf32, #tpu.memory_space<vmem>>, vector<8x128xf32>,
    } else {
    }
    return
  }
  func.func @transform_0(%arg0: i32, %arg1: i32, %arg2: i32) -> (i32, i32) {
    %c0_i32 = arith.constant 0 : i32
    return %arg0, %arg2 : i32, i32
  }
  func.func @transform_1(%arg0: i32, %arg1: i32, %arg2: i32) -> (i32, i32) {
    %c0_i32 = arith.constant 0 : i32
    return %arg2, %arg1 : i32, i32
  }
  func.func @transform_2(%arg0: i32, %arg1: i32, %arg2: i32) -> (i32, i32) {
    %c0_i32 = arith.constant 0 : i32
    %c0_i32_0 = arith.constant 0 : i32
    return %c0_i32, %arg1 : i32, i32
  }
  func.func @transform_3(%arg0: i32, %arg1: i32, %arg2: i32) -> (i32, i32) {
    %c0_i32 = arith.constant 0 : i32
    return %arg0, %arg1 : i32, i32
  }
}

module attributes {stable_mosaic.version = 11 : i64} {
  func.func @_mm_kernel(%arg0: i32, %arg1: i32, %arg2: i32, %arg3: memref<8x256xbf16, #tpu.memory_space<vmem>>, %arg4: memref<256x128xbf16, #tpu.memory_space<vmem>>, %arg5: memref<1x128xf32, #tpu.memory_space<vmem>>, %arg6: memref<8x128xf32, #tpu.memory_space<vmem>>, %arg7: memref<8x128xf32, #tpu.memory_space<vmem>>) attributes {dimension_semantics = [#tpu.dimension_semantics<parallel>, #tpu.dimension_semantics<parallel>, #tpu.dimension_semantics<arbitrary>], iteration_bounds = array<i64: 1, 1, 1>, scalar_prefetch = 0 : i64, scratch_operands = 1 : i64, tpu.core_type = #tpu.core_type<tc>, window_params = [{transform_indices = @transform_0, window_bounds = array<i64: 8, 256>}, {transform_indices = @transform_1, window_bounds = array<i64: 256, 128>}, {transform_indices = @transform_2, window_bounds = array<i64: 1, 128>}, {transform_indices = @transform_3, window_bounds = array<i64: 8, 128>}]} {
    %c0_i32 = arith.constant 0 : i32
    %0 = arith.cmpi eq, %arg2, %c0_i32 : i32
    %1 = arith.extui %0 : i1 to i32
    %c0_i32_0 = arith.constant 0 : i32
    %2 = arith.cmpi ne, %1, %c0_i32_0 : i32
    scf.if %2 {
      %cst_10 = arith.constant 0.000000e+00 : f32
      %12 = vector.broadcast %cst_10 : f32 to vector<8x128xf32>
      %c0_11 = arith.constant 0 : index
      %c0_12 = arith.constant 0 : index
      %13 = vector.load %arg7[%c0_11, %c0_12] : memref<8x128xf32, #tpu.memory_space<vmem>>, vector<8x128xf32>
      tpu.vector_store %arg7[%c0_11, %c0_12], %12 {strides = array<i32>} : memref<8x128xf32, #tpu.memory_space<vmem>>, vector<8x128xf32>,
    } else {
    }
    %c0 = arith.constant 0 : index
    %c0_1 = arith.constant 0 : index
    %3 = vector.load %arg7[%c0, %c0_1] : memref<8x128xf32, #tpu.memory_space<vmem>>, vector<8x128xf32>
    %c0_2 = arith.constant 0 : index
    %c0_3 = arith.constant 0 : index
    %4 = vector.load %arg3[%c0_2, %c0_3] : memref<8x256xbf16, #tpu.memory_space<vmem>>, vector<8x256xbf16>
    %c0_4 = arith.constant 0 : index
    %c0_5 = arith.constant 0 : index
    %5 = vector.load %arg4[%c0_4, %c0_5] : memref<256x128xbf16, #tpu.memory_space<vmem>>, vector<256x128xbf16>
    %cst = arith.constant dense<0.000000e+00> : vector<8x128xf32>
    %6 = tpu.matmul %4, %5, %cst {dimension_numbers = #tpu.dot_dimension_numbers<[1], [0], [0], [1], [0, 0, 1, 1], [], []>} : vector<8x256xbf16>, vector<256x128xbf16>, vector<8x128xf32> -> vector<8x128xf32>
    %7 = arith.addf %3, %6 : vector<8x128xf32>
    %c0_6 = arith.constant 0 : index
    %c0_7 = arith.constant 0 : index
    %8 = vector.load %arg7[%c0_6, %c0_7] : memref<8x128xf32, #tpu.memory_space<vmem>>, vector<8x128xf32>
    tpu.vector_store %arg7[%c0_6, %c0_7], %7 {strides = array<i32>} : memref<8x128xf32, #tpu.memory_space<vmem>>, vector<8x128xf32>,
    %c0_i32_8 = arith.constant 0 : i32
    %9 = arith.cmpi eq, %arg2, %c0_i32_8 : i32
    %10 = arith.extui %9 : i1 to i32
    %c0_i32_9 = arith.constant 0 : i32
    %11 = arith.cmpi ne, %10, %c0_i32_9 : i32
    scf.if %11 {
      %c0_10 = arith.constant 0 : index
      %c0_11 = arith.constant 0 : index
      %12 = vector.load %arg7[%c0_10, %c0_11] : memref<8x128xf32, #tpu.memory_space<vmem>>, vector<8x128xf32>
      %c0_12 = arith.constant 0 : index
      %c0_13 = arith.constant 0 : index
      %13 = vector.load %arg5[%c0_12, %c0_13] : memref<1x128xf32, #tpu.memory_space<vmem>>, vector<1x128xf32>
      %14 = vector.broadcast %13 : vector<1x128xf32> to vector<8x128xf32>
      %15 = arith.addf %12, %14 : vector<8x128xf32>
      %c0_14 = arith.constant 0 : index
      %c0_15 = arith.constant 0 : index
      %16 = vector.load %arg6[%c0_14, %c0_15] : memref<8x128xf32, #tpu.memory_space<vmem>>, vector<8x128xf32>
      tpu.vector_store %arg6[%c0_14, %c0_15], %15 {strides = array<i32>} : memref<8x128xf32, #tpu.memory_space<vmem>>, vector<8x128xf32>,
    } else {
    }
    return
  }
  func.func @transform_0(%arg0: i32, %arg1: i32, %arg2: i32) -> (i32, i32) {
    %c0_i32 = arith.constant 0 : i32
    return %arg0, %arg2 : i32, i32
  }
  func.func @transform_1(%arg0: i32, %arg1: i32, %arg2: i32) -> (i32, i32) {
    %c0_i32 = arith.constant 0 : i32
    return %arg2, %arg1 : i32, i32
  }
  func.func @transform_2(%arg0: i32, %arg1: i32, %arg2: i32) -> (i32, i32) {
    %c0_i32 = arith.constant 0 : i32
    %c0_i32_0 = arith.constant 0 : i32
    return %c0_i32, %arg1 : i32, i32
  }
  func.func @transform_3(%arg0: i32, %arg1: i32, %arg2: i32) -> (i32, i32) {
    %c0_i32 = arith.constant 0 : i32
    return %arg0, %arg1 : i32, i32
  }
}

module attributes {stable_mosaic.version = 11 : i64} {
  func.func @_mm_kernel(%arg0: i32, %arg1: i32, %arg2: i32, %arg3: memref<48x128xbf16, #tpu.memory_space<vmem>>, %arg4: memref<128x128xbf16, #tpu.memory_space<vmem>>, %arg5: memref<1x128xf32, #tpu.memory_space<vmem>>, %arg6: memref<48x128xf32, #tpu.memory_space<vmem>>, %arg7: memref<48x128xf32, #tpu.memory_space<vmem>>) attributes {dimension_semantics = [#tpu.dimension_semantics<parallel>, #tpu.dimension_semantics<parallel>, #tpu.dimension_semantics<arbitrary>], iteration_bounds = array<i64: 1, 3, 1>, scalar_prefetch = 0 : i64, scratch_operands = 1 : i64, tpu.core_type = #tpu.core_type<tc>, window_params = [{transform_indices = @transform_0, window_bounds = array<i64: 48, 128>}, {transform_indices = @transform_1, window_bounds = array<i64: 128, 128>}, {transform_indices = @transform_2, window_bounds = array<i64: 1, 128>}, {transform_indices = @transform_3, window_bounds = array<i64: 48, 128>}]} {
    %c0_i32 = arith.constant 0 : i32
    %0 = arith.cmpi eq, %arg2, %c0_i32 : i32
    %1 = arith.extui %0 : i1 to i32
    %c0_i32_0 = arith.constant 0 : i32
    %2 = arith.cmpi ne, %1, %c0_i32_0 : i32
    scf.if %2 {
      %cst_10 = arith.constant 0.000000e+00 : f32
      %12 = vector.broadcast %cst_10 : f32 to vector<48x128xf32>
      %c0_11 = arith.constant 0 : index
      %c0_12 = arith.constant 0 : index
      %13 = vector.load %arg7[%c0_11, %c0_12] : memref<48x128xf32, #tpu.memory_space<vmem>>, vector<48x128xf32>
      tpu.vector_store %arg7[%c0_11, %c0_12], %12 {strides = array<i32>} : memref<48x128xf32, #tpu.memory_space<vmem>>, vector<48x128xf32>,
    } else {
    }
    %c0 = arith.constant 0 : index
    %c0_1 = arith.constant 0 : index
    %3 = vector.load %arg7[%c0, %c0_1] : memref<48x128xf32, #tpu.memory_space<vmem>>, vector<48x128xf32>
    %c0_2 = arith.constant 0 : index
    %c0_3 = arith.constant 0 : index
    %4 = vector.load %arg3[%c0_2, %c0_3] : memref<48x128xbf16, #tpu.memory_space<vmem>>, vector<48x128xbf16>
    %c0_4 = arith.constant 0 : index
    %c0_5 = arith.constant 0 : index
    %5 = vector.load %arg4[%c0_4, %c0_5] : memref<128x128xbf16, #tpu.memory_space<vmem>>, vector<128x128xbf16>
    %cst = arith.constant dense<0.000000e+00> : vector<48x128xf32>
    %6 = tpu.matmul %4, %5, %cst {dimension_numbers = #tpu.dot_dimension_numbers<[1], [0], [0], [1], [0, 0, 1, 1], [], []>} : vector<48x128xbf16>, vector<128x128xbf16>, vector<48x128xf32> -> vector<48x128xf32>
    %7 = arith.addf %3, %6 : vector<48x128xf32>
    %c0_6 = arith.constant 0 : index
    %c0_7 = arith.constant 0 : index
    %8 = vector.load %arg7[%c0_6, %c0_7] : memref<48x128xf32, #tpu.memory_space<vmem>>, vector<48x128xf32>
    tpu.vector_store %arg7[%c0_6, %c0_7], %7 {strides = array<i32>} : memref<48x128xf32, #tpu.memory_space<vmem>>, vector<48x128xf32>,
    %c0_i32_8 = arith.constant 0 : i32
    %9 = arith.cmpi eq, %arg2, %c0_i32_8 : i32
    %10 = arith.extui %9 : i1 to i32
    %c0_i32_9 = arith.constant 0 : i32
    %11 = arith.cmpi ne, %10, %c0_i32_9 : i32
    scf.if %11 {
      %c0_10 = arith.constant 0 : index
      %c0_11 = arith.constant 0 : index
      %12 = vector.load %arg7[%c0_10, %c0_11] : memref<48x128xf32, #tpu.memory_space<vmem>>, vector<48x128xf32>
      %c0_12 = arith.constant 0 : index
      %c0_13 = arith.constant 0 : index
      %13 = vector.load %arg5[%c0_12, %c0_13] : memref<1x128xf32, #tpu.memory_space<vmem>>, vector<1x128xf32>
      %14 = vector.broadcast %13 : vector<1x128xf32> to vector<48x128xf32>
      %15 = arith.addf %12, %14 : vector<48x128xf32>
      %c0_14 = arith.constant 0 : index
      %c0_15 = arith.constant 0 : index
      %16 = vector.load %arg6[%c0_14, %c0_15] : memref<48x128xf32, #tpu.memory_space<vmem>>, vector<48x128xf32>
      tpu.vector_store %arg6[%c0_14, %c0_15], %15 {strides = array<i32>} : memref<48x128xf32, #tpu.memory_space<vmem>>, vector<48x128xf32>,
    } else {
    }
    return
  }
  func.func @transform_0(%arg0: i32, %arg1: i32, %arg2: i32) -> (i32, i32) {
    %c0_i32 = arith.constant 0 : i32
    return %arg0, %arg2 : i32, i32
  }
  func.func @transform_1(%arg0: i32, %arg1: i32, %arg2: i32) -> (i32, i32) {
    %c0_i32 = arith.constant 0 : i32
    return %arg2, %arg1 : i32, i32
  }
  func.func @transform_2(%arg0: i32, %arg1: i32, %arg2: i32) -> (i32, i32) {
    %c0_i32 = arith.constant 0 : i32
    %c0_i32_0 = arith.constant 0 : i32
    return %c0_i32, %arg1 : i32, i32
  }
  func.func @transform_3(%arg0: i32, %arg1: i32, %arg2: i32) -> (i32, i32) {
    %c0_i32 = arith.constant 0 : i32
    return %arg0, %arg1 : i32, i32
  }
}

module attributes {stable_mosaic.version = 11 : i64} {
  func.func @_linattn_kernel(%arg0: i32, %arg1: memref<1x3x32x24xbf16, #tpu.memory_space<vmem>>, %arg2: memref<1x3x32x24xbf16, #tpu.memory_space<vmem>>, %arg3: memref<1x3x32x24xbf16, #tpu.memory_space<vmem>>, %arg4: memref<1x3x32x24xf32, #tpu.memory_space<vmem>>) attributes {dimension_semantics = [#tpu.dimension_semantics<parallel>], iteration_bounds = array<i64: 2>, scalar_prefetch = 0 : i64, scratch_operands = 0 : i64, tpu.core_type = #tpu.core_type<tc>, window_params = [{transform_indices = @transform_0, window_bounds = array<i64: 1, 3, 32, 24>}, {transform_indices = @transform_1, window_bounds = array<i64: 1, 3, 32, 24>}, {transform_indices = @transform_2, window_bounds = array<i64: 1, 3, 32, 24>}, {transform_indices = @transform_3, window_bounds = array<i64: 1, 3, 32, 24>}]} {
    %c0 = arith.constant 0 : index
    %c0_0 = arith.constant 0 : index
    %c0_1 = arith.constant 0 : index
    %c0_2 = arith.constant 0 : index
    %0 = vector.load %arg1[%c0, %c0_0, %c0_1, %c0_2] : memref<1x3x32x24xbf16, #tpu.memory_space<vmem>>, vector<1x3x32x24xbf16>
    %1 = vector.shape_cast %0 : vector<1x3x32x24xbf16> to vector<3x32x24xbf16>
    %2 = arith.extf %1 : vector<3x32x24xbf16> to vector<3x32x24xf32>
    %c0_3 = arith.constant 0 : index
    %c0_4 = arith.constant 0 : index
    %c0_5 = arith.constant 0 : index
    %c0_6 = arith.constant 0 : index
    %3 = vector.load %arg2[%c0_3, %c0_4, %c0_5, %c0_6] : memref<1x3x32x24xbf16, #tpu.memory_space<vmem>>, vector<1x3x32x24xbf16>
    %4 = vector.shape_cast %3 : vector<1x3x32x24xbf16> to vector<3x32x24xbf16>
    %5 = arith.extf %4 : vector<3x32x24xbf16> to vector<3x32x24xf32>
    %c0_7 = arith.constant 0 : index
    %c0_8 = arith.constant 0 : index
    %c0_9 = arith.constant 0 : index
    %c0_10 = arith.constant 0 : index
    %6 = vector.load %arg3[%c0_7, %c0_8, %c0_9, %c0_10] : memref<1x3x32x24xbf16, #tpu.memory_space<vmem>>, vector<1x3x32x24xbf16>
    %7 = vector.shape_cast %6 : vector<1x3x32x24xbf16> to vector<3x32x24xbf16>
    %cst = arith.constant dense<0xFF800000> : vector<3x24xf32>
    %8 = vector.multi_reduction <maximumf>, %2, %cst [1] : vector<3x32x24xf32> to vector<3x24xf32>
    %9 = vector.shape_cast %8 : vector<3x24xf32> to vector<3x1x24xf32>
    %10 = vector.broadcast %9 : vector<3x1x24xf32> to vector<3x32x24xf32>
    %11 = arith.subf %2, %10 : vector<3x32x24xf32>
    %12 = math.exp %11 : vector<3x32x24xf32>
    %cst_11 = arith.constant dense<0.000000e+00> : vector<3x24xf32>
    %13 = vector.multi_reduction <add>, %12, %cst_11 [1] : vector<3x32x24xf32> to vector<3x24xf32>
    %14 = vector.shape_cast %13 : vector<3x24xf32> to vector<3x1x24xf32>
    %15 = vector.broadcast %14 : vector<3x1x24xf32> to vector<3x32x24xf32>
    %16 = arith.divf %12, %15 : vector<3x32x24xf32>
    %cst_12 = arith.constant 0.176776692 : f32
    %17 = vector.broadcast %cst_12 : f32 to vector<3x32x24xf32>
    %18 = arith.mulf %16, %17 : vector<3x32x24xf32>
    %cst_13 = arith.constant dense<0xFF800000> : vector<3x32xf32>
    %19 = vector.multi_reduction <maximumf>, %5, %cst_13 [2] : vector<3x32x24xf32> to vector<3x32xf32>
    %20 = vector.shape_cast %19 : vector<3x32xf32> to vector<3x32x1xf32>
    %21 = vector.broadcast %20 : vector<3x32x1xf32> to vector<3x32x24xf32>
    %22 = arith.subf %5, %21 : vector<3x32x24xf32>
    %23 = math.exp %22 : vector<3x32x24xf32>
    %cst_14 = arith.constant dense<0.000000e+00> : vector<3x32xf32>
    %24 = vector.multi_reduction <add>, %23, %cst_14 [2] : vector<3x32x24xf32> to vector<3x32xf32>
    %25 = vector.shape_cast %24 : vector<3x32xf32> to vector<3x32x1xf32>
    %26 = vector.broadcast %25 : vector<3x32x1xf32> to vector<3x32x24xf32>
    %27 = arith.divf %23, %26 : vector<3x32x24xf32>
    %28 = arith.truncf %27 : vector<3x32x24xf32> to vector<3x32x24xbf16>
    "tpu.trace_start"() <{level = 10 : i32, message = "hdn,hen->hde"}> : () -> ()
    %cst_15 = arith.constant dense<0.000000e+00> : vector<3x32x32xf32>
    %29 = tpu.matmul %28, %7, %cst_15 {dimension_numbers = #tpu.dot_dimension_numbers<[2], [2], [1], [1], [0, 0, 0, 1, 1, 1], [0], [0]>} : vector<3x32x24xbf16>, vector<3x32x24xbf16>, vector<3x32x32xf32> -> vector<3x32x32xf32>
    "tpu.trace_stop"() : () -> ()
    %30 = arith.truncf %29 : vector<3x32x32xf32> to vector<3x32x32xbf16>
    %31 = arith.truncf %18 : vector<3x32x24xf32> to vector<3x32x24xbf16>
    "tpu.trace_start"() <{level = 10 : i32, message = "hde,hdn->hen"}> : () -> ()
    %cst_16 = arith.constant dense<0.000000e+00> : vector<3x32x24xf32>
    %32 = tpu.matmul %30, %31, %cst_16 {dimension_numbers = #tpu.dot_dimension_numbers<[1], [1], [2], [2], [0, 0, 0, 2, 1, 2], [0], [0]>} : vector<3x32x32xbf16>, vector<3x32x24xbf16>, vector<3x32x24xf32> -> vector<3x32x24xf32>
    "tpu.trace_stop"() : () -> ()
    %c0_17 = arith.constant 0 : index
    %c0_18 = arith.constant 0 : index
    %c0_19 = arith.constant 0 : index
    %c0_20 = arith.constant 0 : index
    %33 = vector.load %arg4[%c0_17, %c0_18, %c0_19, %c0_20] : memref<1x3x32x24xf32, #tpu.memory_space<vmem>>, vector<1x3x32x24xf32>
    %34 = vector.shape_cast %33 : vector<1x3x32x24xf32> to vector<3x32x24xf32>
    %35 = vector.shape_cast %32 : vector<3x32x24xf32> to vector<1x3x32x24xf32>
    tpu.vector_store %arg4[%c0_17, %c0_18, %c0_19, %c0_20], %35 {strides = array<i32>} : memref<1x3x32x24xf32, #tpu.memory_space<vmem>>, vector<1x3x32x24xf32>,
    return
  }
  func.func @transform_0(%arg0: i32) -> (i32, i32, i32, i32) {
    %c0_i32 = arith.constant 0 : i32
    %c0_i32_0 = arith.constant 0 : i32
    %c0_i32_1 = arith.constant 0 : i32
    %c0_i32_2 = arith.constant 0 : i32
    return %arg0, %c0_i32, %c0_i32_0, %c0_i32_1 : i32, i32, i32, i32
  }
  func.func @transform_1(%arg0: i32) -> (i32, i32, i32, i32) {
    %c0_i32 = arith.constant 0 : i32
    %c0_i32_0 = arith.constant 0 : i32
    %c0_i32_1 = arith.constant 0 : i32
    %c0_i32_2 = arith.constant 0 : i32
    return %arg0, %c0_i32, %c0_i32_0, %c0_i32_1 : i32, i32, i32, i32
  }
  func.func @transform_2(%arg0: i32) -> (i32, i32, i32, i32) {
    %c0_i32 = arith.constant 0 : i32
    %c0_i32_0 = arith.constant 0 : i32
    %c0_i32_1 = arith.constant 0 : i32
    %c0_i32_2 = arith.constant 0 : i32
    return %arg0, %c0_i32, %c0_i32_0, %c0_i32_1 : i32, i32, i32, i32
  }
  func.func @transform_3(%arg0: i32) -> (i32, i32, i32, i32) {
    %c0_i32 = arith.constant 0 : i32
    %c0_i32_0 = arith.constant 0 : i32
    %c0_i32_1 = arith.constant 0 : i32
    %c0_i32_2 = arith.constant 0 : i32
    return %arg0, %c0_i32, %c0_i32_0, %c0_i32_1 : i32, i32, i32, i32
  }
}

module attributes {stable_mosaic.version = 11 : i64} {
  func.func @_conv_kernel(%arg0: i32, %arg1: memref<1x26x24xbf16, #tpu.memory_space<vmem>>, %arg2: memref<4x24x24xbf16, #tpu.memory_space<vmem>>, %arg3: memref<1x24xf32, #tpu.memory_space<vmem>>, %arg4: memref<1x12x24xf32, #tpu.memory_space<vmem>>) attributes {dimension_semantics = [#tpu.dimension_semantics<parallel>], iteration_bounds = array<i64: 2>, scalar_prefetch = 0 : i64, scratch_operands = 0 : i64, tpu.core_type = #tpu.core_type<tc>, window_params = [{transform_indices = @transform_0, window_bounds = array<i64: 1, 26, 24>}, {pipeline_mode = #tpu.pipeline_mode<synchronous>, transform_indices = @transform_1, window_bounds = array<i64: 4, 24, 24>}, {pipeline_mode = #tpu.pipeline_mode<synchronous>, transform_indices = @transform_2, window_bounds = array<i64: 1, 24>}, {transform_indices = @transform_3, window_bounds = array<i64: 1, 12, 24>}]} {
    %cst = arith.constant 0.000000e+00 : f32
    %0 = vector.broadcast %cst : f32 to vector<12x24xf32>
    %c0 = arith.constant 0 : index
    %c0_0 = arith.constant 0 : index
    %c0_1 = arith.constant 0 : index
    %1 = vector.load %arg1[%c0, %c0_0, %c0_1] : memref<1x26x24xbf16, #tpu.memory_space<vmem>>, vector<1x12x24xbf16>
    %2 = vector.shape_cast %1 : vector<1x12x24xbf16> to vector<12x24xbf16>
    %c0_2 = arith.constant 0 : index
    %c0_3 = arith.constant 0 : index
    %c0_4 = arith.constant 0 : index
    %3 = vector.load %arg2[%c0_2, %c0_3, %c0_4] : memref<4x24x24xbf16, #tpu.memory_space<vmem>>, vector<1x24x24xbf16>
    %4 = vector.shape_cast %3 : vector<1x24x24xbf16> to vector<24x24xbf16>
    %cst_5 = arith.constant dense<0.000000e+00> : vector<12x24xf32>
    %5 = tpu.matmul %2, %4, %cst_5 {dimension_numbers = #tpu.dot_dimension_numbers<[1], [0], [0], [1], [0, 0, 1, 1], [], []>} : vector<12x24xbf16>, vector<24x24xbf16>, vector<12x24xf32> -> vector<12x24xf32>
    %6 = arith.addf %0, %5 : vector<12x24xf32>
    %c0_6 = arith.constant 0 : index
    %c13 = arith.constant 13 : index
    %c0_7 = arith.constant 0 : index
    %7 = vector.load %arg1[%c0_6, %c13, %c0_7] : memref<1x26x24xbf16, #tpu.memory_space<vmem>>, vector<1x12x24xbf16>
    %8 = vector.shape_cast %7 : vector<1x12x24xbf16> to vector<12x24xbf16>
    %c1 = arith.constant 1 : index
    %c0_8 = arith.constant 0 : index
    %c0_9 = arith.constant 0 : index
    %9 = vector.load %arg2[%c1, %c0_8, %c0_9] : memref<4x24x24xbf16, #tpu.memory_space<vmem>>, vector<1x24x24xbf16>
    %10 = vector.shape_cast %9 : vector<1x24x24xbf16> to vector<24x24xbf16>
    %cst_10 = arith.constant dense<0.000000e+00> : vector<12x24xf32>
    %11 = tpu.matmul %8, %10, %cst_10 {dimension_numbers = #tpu.dot_dimension_numbers<[1], [0], [0], [1], [0, 0, 1, 1], [], []>} : vector<12x24xbf16>, vector<24x24xbf16>, vector<12x24xf32> -> vector<12x24xf32>
    %12 = arith.addf %6, %11 : vector<12x24xf32>
    %c0_11 = arith.constant 0 : index
    %c1_12 = arith.constant 1 : index
    %c0_13 = arith.constant 0 : index
    %13 = vector.load %arg1[%c0_11, %c1_12, %c0_13] : memref<1x26x24xbf16, #tpu.memory_space<vmem>>, vector<1x12x24xbf16>
    %14 = vector.shape_cast %13 : vector<1x12x24xbf16> to vector<12x24xbf16>
    %c2 = arith.constant 2 : index
    %c0_14 = arith.constant 0 : index
    %c0_15 = arith.constant 0 : index
    %15 = vector.load %arg2[%c2, %c0_14, %c0_15] : memref<4x24x24xbf16, #tpu.memory_space<vmem>>, vector<1x24x24xbf16>
    %16 = vector.shape_cast %15 : vector<1x24x24xbf16> to vector<24x24xbf16>
    %cst_16 = arith.constant dense<0.000000e+00> : vector<12x24xf32>
    %17 = tpu.matmul %14, %16, %cst_16 {dimension_numbers = #tpu.dot_dimension_numbers<[1], [0], [0], [1], [0, 0, 1, 1], [], []>} : vector<12x24xbf16>, vector<24x24xbf16>, vector<12x24xf32> -> vector<12x24xf32>
    %18 = arith.addf %12, %17 : vector<12x24xf32>
    %c0_17 = arith.constant 0 : index
    %c14 = arith.constant 14 : index
    %c0_18 = arith.constant 0 : index
    %19 = vector.load %arg1[%c0_17, %c14, %c0_18] : memref<1x26x24xbf16, #tpu.memory_space<vmem>>, vector<1x12x24xbf16>
    %20 = vector.shape_cast %19 : vector<1x12x24xbf16> to vector<12x24xbf16>
    %c3 = arith.constant 3 : index
    %c0_19 = arith.constant 0 : index
    %c0_20 = arith.constant 0 : index
    %21 = vector.load %arg2[%c3, %c0_19, %c0_20] : memref<4x24x24xbf16, #tpu.memory_space<vmem>>, vector<1x24x24xbf16>
    %22 = vector.shape_cast %21 : vector<1x24x24xbf16> to vector<24x24xbf16>
    %cst_21 = arith.constant dense<0.000000e+00> : vector<12x24xf32>
    %23 = tpu.matmul %20, %22, %cst_21 {dimension_numbers = #tpu.dot_dimension_numbers<[1], [0], [0], [1], [0, 0, 1, 1], [], []>} : vector<12x24xbf16>, vector<24x24xbf16>, vector<12x24xf32> -> vector<12x24xf32>
    %24 = arith.addf %18, %23 : vector<12x24xf32>
    %c0_22 = arith.constant 0 : index
    %c0_23 = arith.constant 0 : index
    %25 = vector.load %arg3[%c0_22, %c0_23] : memref<1x24xf32, #tpu.memory_space<vmem>>, vector<1x24xf32>
    %26 = vector.broadcast %25 : vector<1x24xf32> to vector<12x24xf32>
    %27 = arith.addf %24, %26 : vector<12x24xf32>
    %c0_24 = arith.constant 0 : index
    %c0_25 = arith.constant 0 : index
    %c0_26 = arith.constant 0 : index
    %28 = vector.load %arg4[%c0_24, %c0_25, %c0_26] : memref<1x12x24xf32, #tpu.memory_space<vmem>>, vector<1x12x24xf32>
    %29 = vector.shape_cast %28 : vector<1x12x24xf32> to vector<12x24xf32>
    %30 = vector.shape_cast %27 : vector<12x24xf32> to vector<1x12x24xf32>
    tpu.vector_store %arg4[%c0_24, %c0_25, %c0_26], %30 {strides = array<i32>} : memref<1x12x24xf32, #tpu.memory_space<vmem>>, vector<1x12x24xf32>,
    return
  }
  func.func @transform_0(%arg0: i32) -> (i32, i32, i32) {
    %c0_i32 = arith.constant 0 : i32
    %c0_i32_0 = arith.constant 0 : i32
    %c0_i32_1 = arith.constant 0 : i32
    return %arg0, %c0_i32, %c0_i32_0 : i32, i32, i32
  }
  func.func @transform_1(%arg0: i32) -> (i32, i32, i32) {
    %c0_i32 = arith.constant 0 : i32
    %c0_i32_0 = arith.constant 0 : i32
    %c0_i32_1 = arith.constant 0 : i32
    %c0_i32_2 = arith.constant 0 : i32
    return %c0_i32, %c0_i32_0, %c0_i32_1 : i32, i32, i32
  }
  func.func @transform_2(%arg0: i32) -> (i32, i32) {
    %c0_i32 = arith.constant 0 : i32
    %c0_i32_0 = arith.constant 0 : i32
    %c0_i32_1 = arith.constant 0 : i32
    return %c0_i32, %c0_i32_0 : i32, i32
  }
  func.func @transform_3(%arg0: i32) -> (i32, i32, i32) {
    %c0_i32 = arith.constant 0 : i32
    %c0_i32_0 = arith.constant 0 : i32
    %c0_i32_1 = arith.constant 0 : i32
    return %arg0, %c0_i32, %c0_i32_0 : i32, i32, i32
  }
}

module attributes {stable_mosaic.version = 11 : i64} {
  func.func @_conv_kernel(%arg0: i32, %arg1: memref<1x14x24xbf16, #tpu.memory_space<vmem>>, %arg2: memref<3x24x24xbf16, #tpu.memory_space<vmem>>, %arg3: memref<1x24xf32, #tpu.memory_space<vmem>>, %arg4: memref<1x12x24xf32, #tpu.memory_space<vmem>>) attributes {dimension_semantics = [#tpu.dimension_semantics<parallel>], iteration_bounds = array<i64: 2>, scalar_prefetch = 0 : i64, scratch_operands = 0 : i64, tpu.core_type = #tpu.core_type<tc>, window_params = [{transform_indices = @transform_0, window_bounds = array<i64: 1, 14, 24>}, {pipeline_mode = #tpu.pipeline_mode<synchronous>, transform_indices = @transform_1, window_bounds = array<i64: 3, 24, 24>}, {pipeline_mode = #tpu.pipeline_mode<synchronous>, transform_indices = @transform_2, window_bounds = array<i64: 1, 24>}, {transform_indices = @transform_3, window_bounds = array<i64: 1, 12, 24>}]} {
    %cst = arith.constant 0.000000e+00 : f32
    %0 = vector.broadcast %cst : f32 to vector<12x24xf32>
    %c0 = arith.constant 0 : index
    %c0_0 = arith.constant 0 : index
    %c0_1 = arith.constant 0 : index
    %1 = vector.load %arg1[%c0, %c0_0, %c0_1] : memref<1x14x24xbf16, #tpu.memory_space<vmem>>, vector<1x12x24xbf16>
    %2 = vector.shape_cast %1 : vector<1x12x24xbf16> to vector<12x24xbf16>
    %c0_2 = arith.constant 0 : index
    %c0_3 = arith.constant 0 : index
    %c0_4 = arith.constant 0 : index
    %3 = vector.load %arg2[%c0_2, %c0_3, %c0_4] : memref<3x24x24xbf16, #tpu.memory_space<vmem>>, vector<1x24x24xbf16>
    %4 = vector.shape_cast %3 : vector<1x24x24xbf16> to vector<24x24xbf16>
    %cst_5 = arith.constant dense<0.000000e+00> : vector<12x24xf32>
    %5 = tpu.matmul %2, %4, %cst_5 {dimension_numbers = #tpu.dot_dimension_numbers<[1], [0], [0], [1], [0, 0, 1, 1], [], []>} : vector<12x24xbf16>, vector<24x24xbf16>, vector<12x24xf32> -> vector<12x24xf32>
    %6 = arith.addf %0, %5 : vector<12x24xf32>
    %c0_6 = arith.constant 0 : index
    %c1 = arith.constant 1 : index
    %c0_7 = arith.constant 0 : index
    %7 = vector.load %arg1[%c0_6, %c1, %c0_7] : memref<1x14x24xbf16, #tpu.memory_space<vmem>>, vector<1x12x24xbf16>
    %8 = vector.shape_cast %7 : vector<1x12x24xbf16> to vector<12x24xbf16>
    %c1_8 = arith.constant 1 : index
    %c0_9 = arith.constant 0 : index
    %c0_10 = arith.constant 0 : index
    %9 = vector.load %arg2[%c1_8, %c0_9, %c0_10] : memref<3x24x24xbf16, #tpu.memory_space<vmem>>, vector<1x24x24xbf16>
    %10 = vector.shape_cast %9 : vector<1x24x24xbf16> to vector<24x24xbf16>
    %cst_11 = arith.constant dense<0.000000e+00> : vector<12x24xf32>
    %11 = tpu.matmul %8, %10, %cst_11 {dimension_numbers = #tpu.dot_dimension_numbers<[1], [0], [0], [1], [0, 0, 1, 1], [], []>} : vector<12x24xbf16>, vector<24x24xbf16>, vector<12x24xf32> -> vector<12x24xf32>
    %12 = arith.addf %6, %11 : vector<12x24xf32>
    %c0_12 = arith.constant 0 : index
    %c2 = arith.constant 2 : index
    %c0_13 = arith.constant 0 : index
    %13 = vector.load %arg1[%c0_12, %c2, %c0_13] : memref<1x14x24xbf16, #tpu.memory_space<vmem>>, vector<1x12x24xbf16>
    %14 = vector.shape_cast %13 : vector<1x12x24xbf16> to vector<12x24xbf16>
    %c2_14 = arith.constant 2 : index
    %c0_15 = arith.constant 0 : index
    %c0_16 = arith.constant 0 : index
    %15 = vector.load %arg2[%c2_14, %c0_15, %c0_16] : memref<3x24x24xbf16, #tpu.memory_space<vmem>>, vector<1x24x24xbf16>
    %16 = vector.shape_cast %15 : vector<1x24x24xbf16> to vector<24x24xbf16>
    %cst_17 = arith.constant dense<0.000000e+00> : vector<12x24xf32>
    %17 = tpu.matmul %14, %16, %cst_17 {dimension_numbers = #tpu.dot_dimension_numbers<[1], [0], [0], [1], [0, 0, 1, 1], [], []>} : vector<12x24xbf16>, vector<24x24xbf16>, vector<12x24xf32> -> vector<12x24xf32>
    %18 = arith.addf %12, %17 : vector<12x24xf32>
    %c0_18 = arith.constant 0 : index
    %c0_19 = arith.constant 0 : index
    %19 = vector.load %arg3[%c0_18, %c0_19] : memref<1x24xf32, #tpu.memory_space<vmem>>, vector<1x24xf32>
    %20 = vector.broadcast %19 : vector<1x24xf32> to vector<12x24xf32>
    %21 = arith.addf %18, %20 : vector<12x24xf32>
    %c0_20 = arith.constant 0 : index
    %c0_21 = arith.constant 0 : index
    %c0_22 = arith.constant 0 : index
    %22 = vector.load %arg4[%c0_20, %c0_21, %c0_22] : memref<1x12x24xf32, #tpu.memory_space<vmem>>, vector<1x12x24xf32>
    %23 = vector.shape_cast %22 : vector<1x12x24xf32> to vector<12x24xf32>
    %24 = vector.shape_cast %21 : vector<12x24xf32> to vector<1x12x24xf32>
    tpu.vector_store %arg4[%c0_20, %c0_21, %c0_22], %24 {strides = array<i32>} : memref<1x12x24xf32, #tpu.memory_space<vmem>>, vector<1x12x24xf32>,
    return
  }
  func.func @transform_0(%arg0: i32) -> (i32, i32, i32) {
    %c0_i32 = arith.constant 0 : i32
    %c0_i32_0 = arith.constant 0 : i32
    %c0_i32_1 = arith.constant 0 : i32
    return %arg0, %c0_i32, %c0_i32_0 : i32, i32, i32
  }
  func.func @transform_1(%arg0: i32) -> (i32, i32, i32) {
    %c0_i32 = arith.constant 0 : i32
    %c0_i32_0 = arith.constant 0 : i32
    %c0_i32_1 = arith.constant 0 : i32
    %c0_i32_2 = arith.constant 0 : i32
    return %c0_i32, %c0_i32_0, %c0_i32_1 : i32, i32, i32
  }
  func.func @transform_2(%arg0: i32) -> (i32, i32) {
    %c0_i32 = arith.constant 0 : i32
    %c0_i32_0 = arith.constant 0 : i32
    %c0_i32_1 = arith.constant 0 : i32
    return %c0_i32, %c0_i32_0 : i32, i32
  }
  func.func @transform_3(%arg0: i32) -> (i32, i32, i32) {
    %c0_i32 = arith.constant 0 : i32
    %c0_i32_0 = arith.constant 0 : i32
    %c0_i32_1 = arith.constant 0 : i32
    return %arg0, %c0_i32, %c0_i32_0 : i32, i32, i32
  }
}

module attributes {stable_mosaic.version = 11 : i64} {
  func.func @_mm_kernel(%arg0: i32, %arg1: i32, %arg2: i32, %arg3: memref<24x128xbf16, #tpu.memory_space<vmem>>, %arg4: memref<128x128xbf16, #tpu.memory_space<vmem>>, %arg5: memref<1x128xf32, #tpu.memory_space<vmem>>, %arg6: memref<24x128xf32, #tpu.memory_space<vmem>>, %arg7: memref<24x128xf32, #tpu.memory_space<vmem>>) attributes {dimension_semantics = [#tpu.dimension_semantics<parallel>, #tpu.dimension_semantics<parallel>, #tpu.dimension_semantics<arbitrary>], iteration_bounds = array<i64: 1, 3, 1>, scalar_prefetch = 0 : i64, scratch_operands = 1 : i64, tpu.core_type = #tpu.core_type<tc>, window_params = [{transform_indices = @transform_0, window_bounds = array<i64: 24, 128>}, {transform_indices = @transform_1, window_bounds = array<i64: 128, 128>}, {transform_indices = @transform_2, window_bounds = array<i64: 1, 128>}, {transform_indices = @transform_3, window_bounds = array<i64: 24, 128>}]} {
    %c0_i32 = arith.constant 0 : i32
    %0 = arith.cmpi eq, %arg2, %c0_i32 : i32
    %1 = arith.extui %0 : i1 to i32
    %c0_i32_0 = arith.constant 0 : i32
    %2 = arith.cmpi ne, %1, %c0_i32_0 : i32
    scf.if %2 {
      %cst_10 = arith.constant 0.000000e+00 : f32
      %12 = vector.broadcast %cst_10 : f32 to vector<24x128xf32>
      %c0_11 = arith.constant 0 : index
      %c0_12 = arith.constant 0 : index
      %13 = vector.load %arg7[%c0_11, %c0_12] : memref<24x128xf32, #tpu.memory_space<vmem>>, vector<24x128xf32>
      tpu.vector_store %arg7[%c0_11, %c0_12], %12 {strides = array<i32>} : memref<24x128xf32, #tpu.memory_space<vmem>>, vector<24x128xf32>,
    } else {
    }
    %c0 = arith.constant 0 : index
    %c0_1 = arith.constant 0 : index
    %3 = vector.load %arg7[%c0, %c0_1] : memref<24x128xf32, #tpu.memory_space<vmem>>, vector<24x128xf32>
    %c0_2 = arith.constant 0 : index
    %c0_3 = arith.constant 0 : index
    %4 = vector.load %arg3[%c0_2, %c0_3] : memref<24x128xbf16, #tpu.memory_space<vmem>>, vector<24x128xbf16>
    %c0_4 = arith.constant 0 : index
    %c0_5 = arith.constant 0 : index
    %5 = vector.load %arg4[%c0_4, %c0_5] : memref<128x128xbf16, #tpu.memory_space<vmem>>, vector<128x128xbf16>
    %cst = arith.constant dense<0.000000e+00> : vector<24x128xf32>
    %6 = tpu.matmul %4, %5, %cst {dimension_numbers = #tpu.dot_dimension_numbers<[1], [0], [0], [1], [0, 0, 1, 1], [], []>} : vector<24x128xbf16>, vector<128x128xbf16>, vector<24x128xf32> -> vector<24x128xf32>
    %7 = arith.addf %3, %6 : vector<24x128xf32>
    %c0_6 = arith.constant 0 : index
    %c0_7 = arith.constant 0 : index
    %8 = vector.load %arg7[%c0_6, %c0_7] : memref<24x128xf32, #tpu.memory_space<vmem>>, vector<24x128xf32>
    tpu.vector_store %arg7[%c0_6, %c0_7], %7 {strides = array<i32>} : memref<24x128xf32, #tpu.memory_space<vmem>>, vector<24x128xf32>,
    %c0_i32_8 = arith.constant 0 : i32
    %9 = arith.cmpi eq, %arg2, %c0_i32_8 : i32
    %10 = arith.extui %9 : i1 to i32
    %c0_i32_9 = arith.constant 0 : i32
    %11 = arith.cmpi ne, %10, %c0_i32_9 : i32
    scf.if %11 {
      %c0_10 = arith.constant 0 : index
      %c0_11 = arith.constant 0 : index
      %12 = vector.load %arg7[%c0_10, %c0_11] : memref<24x128xf32, #tpu.memory_space<vmem>>, vector<24x128xf32>
      %c0_12 = arith.constant 0 : index
      %c0_13 = arith.constant 0 : index
      %13 = vector.load %arg5[%c0_12, %c0_13] : memref<1x128xf32, #tpu.memory_space<vmem>>, vector<1x128xf32>
      %14 = vector.broadcast %13 : vector<1x128xf32> to vector<24x128xf32>
      %15 = arith.addf %12, %14 : vector<24x128xf32>
      %c0_14 = arith.constant 0 : index
      %c0_15 = arith.constant 0 : index
      %16 = vector.load %arg6[%c0_14, %c0_15] : memref<24x128xf32, #tpu.memory_space<vmem>>, vector<24x128xf32>
      tpu.vector_store %arg6[%c0_14, %c0_15], %15 {strides = array<i32>} : memref<24x128xf32, #tpu.memory_space<vmem>>, vector<24x128xf32>,
    } else {
    }
    return
  }
  func.func @transform_0(%arg0: i32, %arg1: i32, %arg2: i32) -> (i32, i32) {
    %c0_i32 = arith.constant 0 : i32
    return %arg0, %arg2 : i32, i32
  }
  func.func @transform_1(%arg0: i32, %arg1: i32, %arg2: i32) -> (i32, i32) {
    %c0_i32 = arith.constant 0 : i32
    return %arg2, %arg1 : i32, i32
  }
  func.func @transform_2(%arg0: i32, %arg1: i32, %arg2: i32) -> (i32, i32) {
    %c0_i32 = arith.constant 0 : i32
    %c0_i32_0 = arith.constant 0 : i32
    return %c0_i32, %arg1 : i32, i32
  }
  func.func @transform_3(%arg0: i32, %arg1: i32, %arg2: i32) -> (i32, i32) {
    %c0_i32 = arith.constant 0 : i32
    return %arg0, %arg1 : i32, i32
  }
}

module attributes {stable_mosaic.version = 11 : i64} {
  func.func @_linattn_kernel(%arg0: i32, %arg1: memref<1x3x32x12xbf16, #tpu.memory_space<vmem>>, %arg2: memref<1x3x32x12xbf16, #tpu.memory_space<vmem>>, %arg3: memref<1x3x32x12xbf16, #tpu.memory_space<vmem>>, %arg4: memref<1x3x32x12xf32, #tpu.memory_space<vmem>>) attributes {dimension_semantics = [#tpu.dimension_semantics<parallel>], iteration_bounds = array<i64: 2>, scalar_prefetch = 0 : i64, scratch_operands = 0 : i64, tpu.core_type = #tpu.core_type<tc>, window_params = [{transform_indices = @transform_0, window_bounds = array<i64: 1, 3, 32, 12>}, {transform_indices = @transform_1, window_bounds = array<i64: 1, 3, 32, 12>}, {transform_indices = @transform_2, window_bounds = array<i64: 1, 3, 32, 12>}, {transform_indices = @transform_3, window_bounds = array<i64: 1, 3, 32, 12>}]} {
    %c0 = arith.constant 0 : index
    %c0_0 = arith.constant 0 : index
    %c0_1 = arith.constant 0 : index
    %c0_2 = arith.constant 0 : index
    %0 = vector.load %arg1[%c0, %c0_0, %c0_1, %c0_2] : memref<1x3x32x12xbf16, #tpu.memory_space<vmem>>, vector<1x3x32x12xbf16>
    %1 = vector.shape_cast %0 : vector<1x3x32x12xbf16> to vector<3x32x12xbf16>
    %2 = arith.extf %1 : vector<3x32x12xbf16> to vector<3x32x12xf32>
    %c0_3 = arith.constant 0 : index
    %c0_4 = arith.constant 0 : index
    %c0_5 = arith.constant 0 : index
    %c0_6 = arith.constant 0 : index
    %3 = vector.load %arg2[%c0_3, %c0_4, %c0_5, %c0_6] : memref<1x3x32x12xbf16, #tpu.memory_space<vmem>>, vector<1x3x32x12xbf16>
    %4 = vector.shape_cast %3 : vector<1x3x32x12xbf16> to vector<3x32x12xbf16>
    %5 = arith.extf %4 : vector<3x32x12xbf16> to vector<3x32x12xf32>
    %c0_7 = arith.constant 0 : index
    %c0_8 = arith.constant 0 : index
    %c0_9 = arith.constant 0 : index
    %c0_10 = arith.constant 0 : index
    %6 = vector.load %arg3[%c0_7, %c0_8, %c0_9, %c0_10] : memref<1x3x32x12xbf16, #tpu.memory_space<vmem>>, vector<1x3x32x12xbf16>
    %7 = vector.shape_cast %6 : vector<1x3x32x12xbf16> to vector<3x32x12xbf16>
    %cst = arith.constant dense<0xFF800000> : vector<3x12xf32>
    %8 = vector.multi_reduction <maximumf>, %2, %cst [1] : vector<3x32x12xf32> to vector<3x12xf32>
    %9 = vector.shape_cast %8 : vector<3x12xf32> to vector<3x1x12xf32>
    %10 = vector.broadcast %9 : vector<3x1x12xf32> to vector<3x32x12xf32>
    %11 = arith.subf %2, %10 : vector<3x32x12xf32>
    %12 = math.exp %11 : vector<3x32x12xf32>
    %cst_11 = arith.constant dense<0.000000e+00> : vector<3x12xf32>
    %13 = vector.multi_reduction <add>, %12, %cst_11 [1] : vector<3x32x12xf32> to vector<3x12xf32>
    %14 = vector.shape_cast %13 : vector<3x12xf32> to vector<3x1x12xf32>
    %15 = vector.broadcast %14 : vector<3x1x12xf32> to vector<3x32x12xf32>
    %16 = arith.divf %12, %15 : vector<3x32x12xf32>
    %cst_12 = arith.constant 0.176776692 : f32
    %17 = vector.broadcast %cst_12 : f32 to vector<3x32x12xf32>
    %18 = arith.mulf %16, %17 : vector<3x32x12xf32>
    %cst_13 = arith.constant dense<0xFF800000> : vector<3x32xf32>
    %19 = vector.multi_reduction <maximumf>, %5, %cst_13 [2] : vector<3x32x12xf32> to vector<3x32xf32>
    %20 = vector.shape_cast %19 : vector<3x32xf32> to vector<3x32x1xf32>
    %21 = vector.broadcast %20 : vector<3x32x1xf32> to vector<3x32x12xf32>
    %22 = arith.subf %5, %21 : vector<3x32x12xf32>
    %23 = math.exp %22 : vector<3x32x12xf32>
    %cst_14 = arith.constant dense<0.000000e+00> : vector<3x32xf32>
    %24 = vector.multi_reduction <add>, %23, %cst_14 [2] : vector<3x32x12xf32> to vector<3x32xf32>
    %25 = vector.shape_cast %24 : vector<3x32xf32> to vector<3x32x1xf32>
    %26 = vector.broadcast %25 : vector<3x32x1xf32> to vector<3x32x12xf32>
    %27 = arith.divf %23, %26 : vector<3x32x12xf32>
    %28 = arith.truncf %27 : vector<3x32x12xf32> to vector<3x32x12xbf16>
    "tpu.trace_start"() <{level = 10 : i32, message = "hdn,hen->hde"}> : () -> ()
    %cst_15 = arith.constant dense<0.000000e+00> : vector<3x32x32xf32>
    %29 = tpu.matmul %28, %7, %cst_15 {dimension_numbers = #tpu.dot_dimension_numbers<[2], [2], [1], [1], [0, 0, 0, 1, 1, 1], [0], [0]>} : vector<3x32x12xbf16>, vector<3x32x12xbf16>, vector<3x32x32xf32> -> vector<3x32x32xf32>
    "tpu.trace_stop"() : () -> ()
    %30 = arith.truncf %29 : vector<3x32x32xf32> to vector<3x32x32xbf16>
    %31 = arith.truncf %18 : vector<3x32x12xf32> to vector<3x32x12xbf16>
    "tpu.trace_start"() <{level = 10 : i32, message = "hde,hdn->hen"}> : () -> ()
    %cst_16 = arith.constant dense<0.000000e+00> : vector<3x32x12xf32>
    %32 = tpu.matmul %30, %31, %cst_16 {dimension_numbers = #tpu.dot_dimension_numbers<[1], [1], [2], [2], [0, 0, 0, 2, 1, 2], [0], [0]>} : vector<3x32x32xbf16>, vector<3x32x12xbf16>, vector<3x32x12xf32> -> vector<3x32x12xf32>
    "tpu.trace_stop"() : () -> ()
    %c0_17 = arith.constant 0 : index
    %c0_18 = arith.constant 0 : index
    %c0_19 = arith.constant 0 : index
    %c0_20 = arith.constant 0 : index
    %33 = vector.load %arg4[%c0_17, %c0_18, %c0_19, %c0_20] : memref<1x3x32x12xf32, #tpu.memory_space<vmem>>, vector<1x3x32x12xf32>
    %34 = vector.shape_cast %33 : vector<1x3x32x12xf32> to vector<3x32x12xf32>
    %35 = vector.shape_cast %32 : vector<3x32x12xf32> to vector<1x3x32x12xf32>
    tpu.vector_store %arg4[%c0_17, %c0_18, %c0_19, %c0_20], %35 {strides = array<i32>} : memref<1x3x32x12xf32, #tpu.memory_space<vmem>>, vector<1x3x32x12xf32>,
    return
  }
  func.func @transform_0(%arg0: i32) -> (i32, i32, i32, i32) {
    %c0_i32 = arith.constant 0 : i32
    %c0_i32_0 = arith.constant 0 : i32
    %c0_i32_1 = arith.constant 0 : i32
    %c0_i32_2 = arith.constant 0 : i32
    return %arg0, %c0_i32, %c0_i32_0, %c0_i32_1 : i32, i32, i32, i32
  }
  func.func @transform_1(%arg0: i32) -> (i32, i32, i32, i32) {
    %c0_i32 = arith.constant 0 : i32
    %c0_i32_0 = arith.constant 0 : i32
    %c0_i32_1 = arith.constant 0 : i32
    %c0_i32_2 = arith.constant 0 : i32
    return %arg0, %c0_i32, %c0_i32_0, %c0_i32_1 : i32, i32, i32, i32
  }
  func.func @transform_2(%arg0: i32) -> (i32, i32, i32, i32) {
    %c0_i32 = arith.constant 0 : i32
    %c0_i32_0 = arith.constant 0 : i32
    %c0_i32_1 = arith.constant 0 : i32
    %c0_i32_2 = arith.constant 0 : i32
    return %arg0, %c0_i32, %c0_i32_0, %c0_i32_1 : i32, i32, i32, i32
  }
  func.func @transform_3(%arg0: i32) -> (i32, i32, i32, i32) {
    %c0_i32 = arith.constant 0 : i32
    %c0_i32_0 = arith.constant 0 : i32
    %c0_i32_1 = arith.constant 0 : i32
    %c0_i32_2 = arith.constant 0 : i32
    return %arg0, %c0_i32, %c0_i32_0, %c0_i32_1 : i32, i32, i32, i32
  }
}

module attributes {stable_mosaic.version = 11 : i64} {
  func.func @_mm_kernel(%arg0: i32, %arg1: i32, %arg2: i32, %arg3: memref<24x128xbf16, #tpu.memory_space<vmem>>, %arg4: memref<128x128xbf16, #tpu.memory_space<vmem>>, %arg5: memref<1x128xf32, #tpu.memory_space<vmem>>, %arg6: memref<24x128xf32, #tpu.memory_space<vmem>>, %arg7: memref<24x128xf32, #tpu.memory_space<vmem>>) attributes {dimension_semantics = [#tpu.dimension_semantics<parallel>, #tpu.dimension_semantics<parallel>, #tpu.dimension_semantics<arbitrary>], iteration_bounds = array<i64: 1, 1, 1>, scalar_prefetch = 0 : i64, scratch_operands = 1 : i64, tpu.core_type = #tpu.core_type<tc>, window_params = [{transform_indices = @transform_0, window_bounds = array<i64: 24, 128>}, {transform_indices = @transform_1, window_bounds = array<i64: 128, 128>}, {transform_indices = @transform_2, window_bounds = array<i64: 1, 128>}, {transform_indices = @transform_3, window_bounds = array<i64: 24, 128>}]} {
    %c0_i32 = arith.constant 0 : i32
    %0 = arith.cmpi eq, %arg2, %c0_i32 : i32
    %1 = arith.extui %0 : i1 to i32
    %c0_i32_0 = arith.constant 0 : i32
    %2 = arith.cmpi ne, %1, %c0_i32_0 : i32
    scf.if %2 {
      %cst_10 = arith.constant 0.000000e+00 : f32
      %12 = vector.broadcast %cst_10 : f32 to vector<24x128xf32>
      %c0_11 = arith.constant 0 : index
      %c0_12 = arith.constant 0 : index
      %13 = vector.load %arg7[%c0_11, %c0_12] : memref<24x128xf32, #tpu.memory_space<vmem>>, vector<24x128xf32>
      tpu.vector_store %arg7[%c0_11, %c0_12], %12 {strides = array<i32>} : memref<24x128xf32, #tpu.memory_space<vmem>>, vector<24x128xf32>,
    } else {
    }
    %c0 = arith.constant 0 : index
    %c0_1 = arith.constant 0 : index
    %3 = vector.load %arg7[%c0, %c0_1] : memref<24x128xf32, #tpu.memory_space<vmem>>, vector<24x128xf32>
    %c0_2 = arith.constant 0 : index
    %c0_3 = arith.constant 0 : index
    %4 = vector.load %arg3[%c0_2, %c0_3] : memref<24x128xbf16, #tpu.memory_space<vmem>>, vector<24x128xbf16>
    %c0_4 = arith.constant 0 : index
    %c0_5 = arith.constant 0 : index
    %5 = vector.load %arg4[%c0_4, %c0_5] : memref<128x128xbf16, #tpu.memory_space<vmem>>, vector<128x128xbf16>
    %cst = arith.constant dense<0.000000e+00> : vector<24x128xf32>
    %6 = tpu.matmul %4, %5, %cst {dimension_numbers = #tpu.dot_dimension_numbers<[1], [0], [0], [1], [0, 0, 1, 1], [], []>} : vector<24x128xbf16>, vector<128x128xbf16>, vector<24x128xf32> -> vector<24x128xf32>
    %7 = arith.addf %3, %6 : vector<24x128xf32>
    %c0_6 = arith.constant 0 : index
    %c0_7 = arith.constant 0 : index
    %8 = vector.load %arg7[%c0_6, %c0_7] : memref<24x128xf32, #tpu.memory_space<vmem>>, vector<24x128xf32>
    tpu.vector_store %arg7[%c0_6, %c0_7], %7 {strides = array<i32>} : memref<24x128xf32, #tpu.memory_space<vmem>>, vector<24x128xf32>,
    %c0_i32_8 = arith.constant 0 : i32
    %9 = arith.cmpi eq, %arg2, %c0_i32_8 : i32
    %10 = arith.extui %9 : i1 to i32
    %c0_i32_9 = arith.constant 0 : i32
    %11 = arith.cmpi ne, %10, %c0_i32_9 : i32
    scf.if %11 {
      %c0_10 = arith.constant 0 : index
      %c0_11 = arith.constant 0 : index
      %12 = vector.load %arg7[%c0_10, %c0_11] : memref<24x128xf32, #tpu.memory_space<vmem>>, vector<24x128xf32>
      %c0_12 = arith.constant 0 : index
      %c0_13 = arith.constant 0 : index
      %13 = vector.load %arg5[%c0_12, %c0_13] : memref<1x128xf32, #tpu.memory_space<vmem>>, vector<1x128xf32>
      %14 = vector.broadcast %13 : vector<1x128xf32> to vector<24x128xf32>
      %15 = arith.addf %12, %14 : vector<24x128xf32>
      %c0_14 = arith.constant 0 : index
      %c0_15 = arith.constant 0 : index
      %16 = vector.load %arg6[%c0_14, %c0_15] : memref<24x128xf32, #tpu.memory_space<vmem>>, vector<24x128xf32>
      tpu.vector_store %arg6[%c0_14, %c0_15], %15 {strides = array<i32>} : memref<24x128xf32, #tpu.memory_space<vmem>>, vector<24x128xf32>,
    } else {
    }
    return
  }
  func.func @transform_0(%arg0: i32, %arg1: i32, %arg2: i32) -> (i32, i32) {
    %c0_i32 = arith.constant 0 : i32
    return %arg0, %arg2 : i32, i32
  }
  func.func @transform_1(%arg0: i32, %arg1: i32, %arg2: i32) -> (i32, i32) {
    %c0_i32 = arith.constant 0 : i32
    return %arg2, %arg1 : i32, i32
  }
  func.func @transform_2(%arg0: i32, %arg1: i32, %arg2: i32) -> (i32, i32) {
    %c0_i32 = arith.constant 0 : i32
    %c0_i32_0 = arith.constant 0 : i32
    return %c0_i32, %arg1 : i32, i32
  }
  func.func @transform_3(%arg0: i32, %arg1: i32, %arg2: i32) -> (i32, i32) {
    %c0_i32 = arith.constant 0 : i32
    return %arg0, %arg1 : i32, i32
  }
}

module attributes {stable_mosaic.version = 11 : i64} {
  func.func @_conv_kernel(%arg0: i32, %arg1: memref<1x14x24xbf16, #tpu.memory_space<vmem>>, %arg2: memref<3x24x48xbf16, #tpu.memory_space<vmem>>, %arg3: memref<1x48xf32, #tpu.memory_space<vmem>>, %arg4: memref<1x12x48xf32, #tpu.memory_space<vmem>>) attributes {dimension_semantics = [#tpu.dimension_semantics<parallel>], iteration_bounds = array<i64: 2>, scalar_prefetch = 0 : i64, scratch_operands = 0 : i64, tpu.core_type = #tpu.core_type<tc>, window_params = [{transform_indices = @transform_0, window_bounds = array<i64: 1, 14, 24>}, {pipeline_mode = #tpu.pipeline_mode<synchronous>, transform_indices = @transform_1, window_bounds = array<i64: 3, 24, 48>}, {pipeline_mode = #tpu.pipeline_mode<synchronous>, transform_indices = @transform_2, window_bounds = array<i64: 1, 48>}, {transform_indices = @transform_3, window_bounds = array<i64: 1, 12, 48>}]} {
    %cst = arith.constant 0.000000e+00 : f32
    %0 = vector.broadcast %cst : f32 to vector<12x48xf32>
    %c0 = arith.constant 0 : index
    %c0_0 = arith.constant 0 : index
    %c0_1 = arith.constant 0 : index
    %1 = vector.load %arg1[%c0, %c0_0, %c0_1] : memref<1x14x24xbf16, #tpu.memory_space<vmem>>, vector<1x12x24xbf16>
    %2 = vector.shape_cast %1 : vector<1x12x24xbf16> to vector<12x24xbf16>
    %c0_2 = arith.constant 0 : index
    %c0_3 = arith.constant 0 : index
    %c0_4 = arith.constant 0 : index
    %3 = vector.load %arg2[%c0_2, %c0_3, %c0_4] : memref<3x24x48xbf16, #tpu.memory_space<vmem>>, vector<1x24x48xbf16>
    %4 = vector.shape_cast %3 : vector<1x24x48xbf16> to vector<24x48xbf16>
    %cst_5 = arith.constant dense<0.000000e+00> : vector<12x48xf32>
    %5 = tpu.matmul %2, %4, %cst_5 {dimension_numbers = #tpu.dot_dimension_numbers<[1], [0], [0], [1], [0, 0, 1, 1], [], []>} : vector<12x24xbf16>, vector<24x48xbf16>, vector<12x48xf32> -> vector<12x48xf32>
    %6 = arith.addf %0, %5 : vector<12x48xf32>
    %c0_6 = arith.constant 0 : index
    %c1 = arith.constant 1 : index
    %c0_7 = arith.constant 0 : index
    %7 = vector.load %arg1[%c0_6, %c1, %c0_7] : memref<1x14x24xbf16, #tpu.memory_space<vmem>>, vector<1x12x24xbf16>
    %8 = vector.shape_cast %7 : vector<1x12x24xbf16> to vector<12x24xbf16>
    %c1_8 = arith.constant 1 : index
    %c0_9 = arith.constant 0 : index
    %c0_10 = arith.constant 0 : index
    %9 = vector.load %arg2[%c1_8, %c0_9, %c0_10] : memref<3x24x48xbf16, #tpu.memory_space<vmem>>, vector<1x24x48xbf16>
    %10 = vector.shape_cast %9 : vector<1x24x48xbf16> to vector<24x48xbf16>
    %cst_11 = arith.constant dense<0.000000e+00> : vector<12x48xf32>
    %11 = tpu.matmul %8, %10, %cst_11 {dimension_numbers = #tpu.dot_dimension_numbers<[1], [0], [0], [1], [0, 0, 1, 1], [], []>} : vector<12x24xbf16>, vector<24x48xbf16>, vector<12x48xf32> -> vector<12x48xf32>
    %12 = arith.addf %6, %11 : vector<12x48xf32>
    %c0_12 = arith.constant 0 : index
    %c2 = arith.constant 2 : index
    %c0_13 = arith.constant 0 : index
    %13 = vector.load %arg1[%c0_12, %c2, %c0_13] : memref<1x14x24xbf16, #tpu.memory_space<vmem>>, vector<1x12x24xbf16>
    %14 = vector.shape_cast %13 : vector<1x12x24xbf16> to vector<12x24xbf16>
    %c2_14 = arith.constant 2 : index
    %c0_15 = arith.constant 0 : index
    %c0_16 = arith.constant 0 : index
    %15 = vector.load %arg2[%c2_14, %c0_15, %c0_16] : memref<3x24x48xbf16, #tpu.memory_space<vmem>>, vector<1x24x48xbf16>
    %16 = vector.shape_cast %15 : vector<1x24x48xbf16> to vector<24x48xbf16>
    %cst_17 = arith.constant dense<0.000000e+00> : vector<12x48xf32>
    %17 = tpu.matmul %14, %16, %cst_17 {dimension_numbers = #tpu.dot_dimension_numbers<[1], [0], [0], [1], [0, 0, 1, 1], [], []>} : vector<12x24xbf16>, vector<24x48xbf16>, vector<12x48xf32> -> vector<12x48xf32>
    %18 = arith.addf %12, %17 : vector<12x48xf32>
    %c0_18 = arith.constant 0 : index
    %c0_19 = arith.constant 0 : index
    %19 = vector.load %arg3[%c0_18, %c0_19] : memref<1x48xf32, #tpu.memory_space<vmem>>, vector<1x48xf32>
    %20 = vector.broadcast %19 : vector<1x48xf32> to vector<12x48xf32>
    %21 = arith.addf %18, %20 : vector<12x48xf32>
    %c0_20 = arith.constant 0 : index
    %c0_21 = arith.constant 0 : index
    %c0_22 = arith.constant 0 : index
    %22 = vector.load %arg4[%c0_20, %c0_21, %c0_22] : memref<1x12x48xf32, #tpu.memory_space<vmem>>, vector<1x12x48xf32>
    %23 = vector.shape_cast %22 : vector<1x12x48xf32> to vector<12x48xf32>
    %24 = vector.shape_cast %21 : vector<12x48xf32> to vector<1x12x48xf32>
    tpu.vector_store %arg4[%c0_20, %c0_21, %c0_22], %24 {strides = array<i32>} : memref<1x12x48xf32, #tpu.memory_space<vmem>>, vector<1x12x48xf32>,
    return
  }
  func.func @transform_0(%arg0: i32) -> (i32, i32, i32) {
    %c0_i32 = arith.constant 0 : i32
    %c0_i32_0 = arith.constant 0 : i32
    %c0_i32_1 = arith.constant 0 : i32
    return %arg0, %c0_i32, %c0_i32_0 : i32, i32, i32
  }
  func.func @transform_1(%arg0: i32) -> (i32, i32, i32) {
    %c0_i32 = arith.constant 0 : i32
    %c0_i32_0 = arith.constant 0 : i32
    %c0_i32_1 = arith.constant 0 : i32
    %c0_i32_2 = arith.constant 0 : i32
    return %c0_i32, %c0_i32_0, %c0_i32_1 : i32, i32, i32
  }
  func.func @transform_2(%arg0: i32) -> (i32, i32) {
    %c0_i32 = arith.constant 0 : i32
    %c0_i32_0 = arith.constant 0 : i32
    %c0_i32_1 = arith.constant 0 : i32
    return %c0_i32, %c0_i32_0 : i32, i32
  }
  func.func @transform_3(%arg0: i32) -> (i32, i32, i32) {
    %c0_i32 = arith.constant 0 : i32
    %c0_i32_0 = arith.constant 0 : i32
    %c0_i32_1 = arith.constant 0 : i32
    return %arg0, %c0_i32, %c0_i32_0 : i32, i32, i32
  }
}

module attributes {stable_mosaic.version = 11 : i64} {
  func.func @_conv_kernel(%arg0: i32, %arg1: memref<1x14x48xbf16, #tpu.memory_space<vmem>>, %arg2: memref<3x48x48xbf16, #tpu.memory_space<vmem>>, %arg3: memref<1x48xf32, #tpu.memory_space<vmem>>, %arg4: memref<1x12x48xf32, #tpu.memory_space<vmem>>) attributes {dimension_semantics = [#tpu.dimension_semantics<parallel>], iteration_bounds = array<i64: 2>, scalar_prefetch = 0 : i64, scratch_operands = 0 : i64, tpu.core_type = #tpu.core_type<tc>, window_params = [{transform_indices = @transform_0, window_bounds = array<i64: 1, 14, 48>}, {pipeline_mode = #tpu.pipeline_mode<synchronous>, transform_indices = @transform_1, window_bounds = array<i64: 3, 48, 48>}, {pipeline_mode = #tpu.pipeline_mode<synchronous>, transform_indices = @transform_2, window_bounds = array<i64: 1, 48>}, {transform_indices = @transform_3, window_bounds = array<i64: 1, 12, 48>}]} {
    %cst = arith.constant 0.000000e+00 : f32
    %0 = vector.broadcast %cst : f32 to vector<12x48xf32>
    %c0 = arith.constant 0 : index
    %c0_0 = arith.constant 0 : index
    %c0_1 = arith.constant 0 : index
    %1 = vector.load %arg1[%c0, %c0_0, %c0_1] : memref<1x14x48xbf16, #tpu.memory_space<vmem>>, vector<1x12x48xbf16>
    %2 = vector.shape_cast %1 : vector<1x12x48xbf16> to vector<12x48xbf16>
    %c0_2 = arith.constant 0 : index
    %c0_3 = arith.constant 0 : index
    %c0_4 = arith.constant 0 : index
    %3 = vector.load %arg2[%c0_2, %c0_3, %c0_4] : memref<3x48x48xbf16, #tpu.memory_space<vmem>>, vector<1x48x48xbf16>
    %4 = vector.shape_cast %3 : vector<1x48x48xbf16> to vector<48x48xbf16>
    %cst_5 = arith.constant dense<0.000000e+00> : vector<12x48xf32>
    %5 = tpu.matmul %2, %4, %cst_5 {dimension_numbers = #tpu.dot_dimension_numbers<[1], [0], [0], [1], [0, 0, 1, 1], [], []>} : vector<12x48xbf16>, vector<48x48xbf16>, vector<12x48xf32> -> vector<12x48xf32>
    %6 = arith.addf %0, %5 : vector<12x48xf32>
    %c0_6 = arith.constant 0 : index
    %c1 = arith.constant 1 : index
    %c0_7 = arith.constant 0 : index
    %7 = vector.load %arg1[%c0_6, %c1, %c0_7] : memref<1x14x48xbf16, #tpu.memory_space<vmem>>, vector<1x12x48xbf16>
    %8 = vector.shape_cast %7 : vector<1x12x48xbf16> to vector<12x48xbf16>
    %c1_8 = arith.constant 1 : index
    %c0_9 = arith.constant 0 : index
    %c0_10 = arith.constant 0 : index
    %9 = vector.load %arg2[%c1_8, %c0_9, %c0_10] : memref<3x48x48xbf16, #tpu.memory_space<vmem>>, vector<1x48x48xbf16>
    %10 = vector.shape_cast %9 : vector<1x48x48xbf16> to vector<48x48xbf16>
    %cst_11 = arith.constant dense<0.000000e+00> : vector<12x48xf32>
    %11 = tpu.matmul %8, %10, %cst_11 {dimension_numbers = #tpu.dot_dimension_numbers<[1], [0], [0], [1], [0, 0, 1, 1], [], []>} : vector<12x48xbf16>, vector<48x48xbf16>, vector<12x48xf32> -> vector<12x48xf32>
    %12 = arith.addf %6, %11 : vector<12x48xf32>
    %c0_12 = arith.constant 0 : index
    %c2 = arith.constant 2 : index
    %c0_13 = arith.constant 0 : index
    %13 = vector.load %arg1[%c0_12, %c2, %c0_13] : memref<1x14x48xbf16, #tpu.memory_space<vmem>>, vector<1x12x48xbf16>
    %14 = vector.shape_cast %13 : vector<1x12x48xbf16> to vector<12x48xbf16>
    %c2_14 = arith.constant 2 : index
    %c0_15 = arith.constant 0 : index
    %c0_16 = arith.constant 0 : index
    %15 = vector.load %arg2[%c2_14, %c0_15, %c0_16] : memref<3x48x48xbf16, #tpu.memory_space<vmem>>, vector<1x48x48xbf16>
    %16 = vector.shape_cast %15 : vector<1x48x48xbf16> to vector<48x48xbf16>
    %cst_17 = arith.constant dense<0.000000e+00> : vector<12x48xf32>
    %17 = tpu.matmul %14, %16, %cst_17 {dimension_numbers = #tpu.dot_dimension_numbers<[1], [0], [0], [1], [0, 0, 1, 1], [], []>} : vector<12x48xbf16>, vector<48x48xbf16>, vector<12x48xf32> -> vector<12x48xf32>
    %18 = arith.addf %12, %17 : vector<12x48xf32>
    %c0_18 = arith.constant 0 : index
    %c0_19 = arith.constant 0 : index
    %19 = vector.load %arg3[%c0_18, %c0_19] : memref<1x48xf32, #tpu.memory_space<vmem>>, vector<1x48xf32>
    %20 = vector.broadcast %19 : vector<1x48xf32> to vector<12x48xf32>
    %21 = arith.addf %18, %20 : vector<12x48xf32>
    %c0_20 = arith.constant 0 : index
    %c0_21 = arith.constant 0 : index
    %c0_22 = arith.constant 0 : index
    %22 = vector.load %arg4[%c0_20, %c0_21, %c0_22] : memref<1x12x48xf32, #tpu.memory_space<vmem>>, vector<1x12x48xf32>
    %23 = vector.shape_cast %22 : vector<1x12x48xf32> to vector<12x48xf32>
    %24 = vector.shape_cast %21 : vector<12x48xf32> to vector<1x12x48xf32>
    tpu.vector_store %arg4[%c0_20, %c0_21, %c0_22], %24 {strides = array<i32>} : memref<1x12x48xf32, #tpu.memory_space<vmem>>, vector<1x12x48xf32>,
    return
  }
  func.func @transform_0(%arg0: i32) -> (i32, i32, i32) {
    %c0_i32 = arith.constant 0 : i32
    %c0_i32_0 = arith.constant 0 : i32
    %c0_i32_1 = arith.constant 0 : i32
    return %arg0, %c0_i32, %c0_i32_0 : i32, i32, i32
  }
  func.func @transform_1(%arg0: i32) -> (i32, i32, i32) {
    %c0_i32 = arith.constant 0 : i32
    %c0_i32_0 = arith.constant 0 : i32
    %c0_i32_1 = arith.constant 0 : i32
    %c0_i32_2 = arith.constant 0 : i32
    return %c0_i32, %c0_i32_0, %c0_i32_1 : i32, i32, i32
  }
  func.func @transform_2(%arg0: i32) -> (i32, i32) {
    %c0_i32 = arith.constant 0 : i32
    %c0_i32_0 = arith.constant 0 : i32
    %c0_i32_1 = arith.constant 0 : i32
    return %c0_i32, %c0_i32_0 : i32, i32
  }
  func.func @transform_3(%arg0: i32) -> (i32, i32, i32) {
    %c0_i32 = arith.constant 0 : i32
    %c0_i32_0 = arith.constant 0 : i32
    %c0_i32_1 = arith.constant 0 : i32
    return %arg0, %c0_i32, %c0_i32_0 : i32, i32, i32
  }
}

module attributes {stable_mosaic.version = 11 : i64} {
  func.func @_attn_kernel(%arg0: i32, %arg1: memref<1x3x12x8xbf16, #tpu.memory_space<vmem>>, %arg2: memref<1x3x12x8xbf16, #tpu.memory_space<vmem>>, %arg3: memref<1x3x12x8xbf16, #tpu.memory_space<vmem>>, %arg4: memref<1x3x12x8xf32, #tpu.memory_space<vmem>>) attributes {dimension_semantics = [#tpu.dimension_semantics<parallel>], iteration_bounds = array<i64: 2>, scalar_prefetch = 0 : i64, scratch_operands = 0 : i64, tpu.core_type = #tpu.core_type<tc>, window_params = [{transform_indices = @transform_0, window_bounds = array<i64: 1, 3, 12, 8>}, {transform_indices = @transform_1, window_bounds = array<i64: 1, 3, 12, 8>}, {transform_indices = @transform_2, window_bounds = array<i64: 1, 3, 12, 8>}, {transform_indices = @transform_3, window_bounds = array<i64: 1, 3, 12, 8>}]} {
    %c0 = arith.constant 0 : index
    %c0_0 = arith.constant 0 : index
    %c0_1 = arith.constant 0 : index
    %c0_2 = arith.constant 0 : index
    %0 = vector.load %arg1[%c0, %c0_0, %c0_1, %c0_2] : memref<1x3x12x8xbf16, #tpu.memory_space<vmem>>, vector<1x3x12x8xbf16>
    %1 = vector.shape_cast %0 : vector<1x3x12x8xbf16> to vector<3x12x8xbf16>
    %c0_3 = arith.constant 0 : index
    %c0_4 = arith.constant 0 : index
    %c0_5 = arith.constant 0 : index
    %c0_6 = arith.constant 0 : index
    %2 = vector.load %arg2[%c0_3, %c0_4, %c0_5, %c0_6] : memref<1x3x12x8xbf16, #tpu.memory_space<vmem>>, vector<1x3x12x8xbf16>
    %3 = vector.shape_cast %2 : vector<1x3x12x8xbf16> to vector<3x12x8xbf16>
    %c0_7 = arith.constant 0 : index
    %c0_8 = arith.constant 0 : index
    %c0_9 = arith.constant 0 : index
    %c0_10 = arith.constant 0 : index
    %4 = vector.load %arg3[%c0_7, %c0_8, %c0_9, %c0_10] : memref<1x3x12x8xbf16, #tpu.memory_space<vmem>>, vector<1x3x12x8xbf16>
    %5 = vector.shape_cast %4 : vector<1x3x12x8xbf16> to vector<3x12x8xbf16>
    "tpu.trace_start"() <{level = 10 : i32, message = "hnd,hmd->hnm"}> : () -> ()
    %cst = arith.constant dense<0.000000e+00> : vector<3x12x12xf32>
    %6 = tpu.matmul %1, %3, %cst {dimension_numbers = #tpu.dot_dimension_numbers<[2], [2], [1], [1], [0, 0, 0, 1, 1, 1], [0], [0]>} : vector<3x12x8xbf16>, vector<3x12x8xbf16>, vector<3x12x12xf32> -> vector<3x12x12xf32>
    "tpu.trace_stop"() : () -> ()
    %cst_11 = arith.constant 0.353553385 : f32
    %7 = vector.broadcast %cst_11 : f32 to vector<3x12x12xf32>
    %8 = arith.mulf %6, %7 : vector<3x12x12xf32>
    %cst_12 = arith.constant dense<0xFF800000> : vector<3x12xf32>
    %9 = vector.multi_reduction <maximumf>, %8, %cst_12 [2] : vector<3x12x12xf32> to vector<3x12xf32>
    %10 = vector.shape_cast %9 : vector<3x12xf32> to vector<3x12x1xf32>
    %11 = vector.broadcast %10 : vector<3x12x1xf32> to vector<3x12x12xf32>
    %12 = arith.subf %8, %11 : vector<3x12x12xf32>
    %13 = math.exp %12 : vector<3x12x12xf32>
    %cst_13 = arith.constant dense<0.000000e+00> : vector<3x12xf32>
    %14 = vector.multi_reduction <add>, %13, %cst_13 [2] : vector<3x12x12xf32> to vector<3x12xf32>
    %15 = vector.shape_cast %14 : vector<3x12xf32> to vector<3x12x1xf32>
    %16 = tpu.reciprocal %15 {approx = true} : vector<3x12x1xf32> -> vector<3x12x1xf32>
    %17 = vector.broadcast %16 : vector<3x12x1xf32> to vector<3x12x12xf32>
    %18 = arith.mulf %13, %17 : vector<3x12x12xf32>
    %19 = arith.truncf %18 : vector<3x12x12xf32> to vector<3x12x12xbf16>
    "tpu.trace_start"() <{level = 10 : i32, message = "hnm,hmd->hnd"}> : () -> ()
    %cst_14 = arith.constant dense<0.000000e+00> : vector<3x12x8xf32>
    %20 = tpu.matmul %19, %5, %cst_14 {dimension_numbers = #tpu.dot_dimension_numbers<[2], [1], [1], [2], [0, 0, 0, 1, 1, 2], [0], [0]>} : vector<3x12x12xbf16>, vector<3x12x8xbf16>, vector<3x12x8xf32> -> vector<3x12x8xf32>
    "tpu.trace_stop"() : () -> ()
    %c0_15 = arith.constant 0 : index
    %c0_16 = arith.constant 0 : index
    %c0_17 = arith.constant 0 : index
    %c0_18 = arith.constant 0 : index
    %21 = vector.load %arg4[%c0_15, %c0_16, %c0_17, %c0_18] : memref<1x3x12x8xf32, #tpu.memory_space<vmem>>, vector<1x3x12x8xf32>
    %22 = vector.shape_cast %21 : vector<1x3x12x8xf32> to vector<3x12x8xf32>
    %23 = vector.shape_cast %20 : vector<3x12x8xf32> to vector<1x3x12x8xf32>
    tpu.vector_store %arg4[%c0_15, %c0_16, %c0_17, %c0_18], %23 {strides = array<i32>} : memref<1x3x12x8xf32, #tpu.memory_space<vmem>>, vector<1x3x12x8xf32>,
    return
  }
  func.func @transform_0(%arg0: i32) -> (i32, i32, i32, i32) {
    %c0_i32 = arith.constant 0 : i32
    %c0_i32_0 = arith.constant 0 : i32
    %c0_i32_1 = arith.constant 0 : i32
    %c0_i32_2 = arith.constant 0 : i32
    return %arg0, %c0_i32, %c0_i32_0, %c0_i32_1 : i32, i32, i32, i32
  }
  func.func @transform_1(%arg0: i32) -> (i32, i32, i32, i32) {
    %c0_i32 = arith.constant 0 : i32
    %c0_i32_0 = arith.constant 0 : i32
    %c0_i32_1 = arith.constant 0 : i32
    %c0_i32_2 = arith.constant 0 : i32
    return %arg0, %c0_i32, %c0_i32_0, %c0_i32_1 : i32, i32, i32, i32
  }
  func.func @transform_2(%arg0: i32) -> (i32, i32, i32, i32) {
    %c0_i32 = arith.constant 0 : i32
    %c0_i32_0 = arith.constant 0 : i32
    %c0_i32_1 = arith.constant 0 : i32
    %c0_i32_2 = arith.constant 0 : i32
    return %arg0, %c0_i32, %c0_i32_0, %c0_i32_1 : i32, i32, i32, i32
  }
  func.func @transform_3(%arg0: i32) -> (i32, i32, i32, i32) {
    %c0_i32 = arith.constant 0 : i32
    %c0_i32_0 = arith.constant 0 : i32
    %c0_i32_1 = arith.constant 0 : i32
    %c0_i32_2 = arith.constant 0 : i32
    return %arg0, %c0_i32, %c0_i32_0, %c0_i32_1 : i32, i32, i32, i32
  }
}

module attributes {stable_mosaic.version = 11 : i64} {
  func.func @_conv_kernel(%arg0: i32, %arg1: memref<1x14x72xbf16, #tpu.memory_space<vmem>>, %arg2: memref<3x72x48xbf16, #tpu.memory_space<vmem>>, %arg3: memref<1x48xf32, #tpu.memory_space<vmem>>, %arg4: memref<1x12x48xf32, #tpu.memory_space<vmem>>) attributes {dimension_semantics = [#tpu.dimension_semantics<parallel>], iteration_bounds = array<i64: 2>, scalar_prefetch = 0 : i64, scratch_operands = 0 : i64, tpu.core_type = #tpu.core_type<tc>, window_params = [{transform_indices = @transform_0, window_bounds = array<i64: 1, 14, 72>}, {pipeline_mode = #tpu.pipeline_mode<synchronous>, transform_indices = @transform_1, window_bounds = array<i64: 3, 72, 48>}, {pipeline_mode = #tpu.pipeline_mode<synchronous>, transform_indices = @transform_2, window_bounds = array<i64: 1, 48>}, {transform_indices = @transform_3, window_bounds = array<i64: 1, 12, 48>}]} {
    %cst = arith.constant 0.000000e+00 : f32
    %0 = vector.broadcast %cst : f32 to vector<12x48xf32>
    %c0 = arith.constant 0 : index
    %c0_0 = arith.constant 0 : index
    %c0_1 = arith.constant 0 : index
    %1 = vector.load %arg1[%c0, %c0_0, %c0_1] : memref<1x14x72xbf16, #tpu.memory_space<vmem>>, vector<1x12x72xbf16>
    %2 = vector.shape_cast %1 : vector<1x12x72xbf16> to vector<12x72xbf16>
    %c0_2 = arith.constant 0 : index
    %c0_3 = arith.constant 0 : index
    %c0_4 = arith.constant 0 : index
    %3 = vector.load %arg2[%c0_2, %c0_3, %c0_4] : memref<3x72x48xbf16, #tpu.memory_space<vmem>>, vector<1x72x48xbf16>
    %4 = vector.shape_cast %3 : vector<1x72x48xbf16> to vector<72x48xbf16>
    %cst_5 = arith.constant dense<0.000000e+00> : vector<12x48xf32>
    %5 = tpu.matmul %2, %4, %cst_5 {dimension_numbers = #tpu.dot_dimension_numbers<[1], [0], [0], [1], [0, 0, 1, 1], [], []>} : vector<12x72xbf16>, vector<72x48xbf16>, vector<12x48xf32> -> vector<12x48xf32>
    %6 = arith.addf %0, %5 : vector<12x48xf32>
    %c0_6 = arith.constant 0 : index
    %c1 = arith.constant 1 : index
    %c0_7 = arith.constant 0 : index
    %7 = vector.load %arg1[%c0_6, %c1, %c0_7] : memref<1x14x72xbf16, #tpu.memory_space<vmem>>, vector<1x12x72xbf16>
    %8 = vector.shape_cast %7 : vector<1x12x72xbf16> to vector<12x72xbf16>
    %c1_8 = arith.constant 1 : index
    %c0_9 = arith.constant 0 : index
    %c0_10 = arith.constant 0 : index
    %9 = vector.load %arg2[%c1_8, %c0_9, %c0_10] : memref<3x72x48xbf16, #tpu.memory_space<vmem>>, vector<1x72x48xbf16>
    %10 = vector.shape_cast %9 : vector<1x72x48xbf16> to vector<72x48xbf16>
    %cst_11 = arith.constant dense<0.000000e+00> : vector<12x48xf32>
    %11 = tpu.matmul %8, %10, %cst_11 {dimension_numbers = #tpu.dot_dimension_numbers<[1], [0], [0], [1], [0, 0, 1, 1], [], []>} : vector<12x72xbf16>, vector<72x48xbf16>, vector<12x48xf32> -> vector<12x48xf32>
    %12 = arith.addf %6, %11 : vector<12x48xf32>
    %c0_12 = arith.constant 0 : index
    %c2 = arith.constant 2 : index
    %c0_13 = arith.constant 0 : index
    %13 = vector.load %arg1[%c0_12, %c2, %c0_13] : memref<1x14x72xbf16, #tpu.memory_space<vmem>>, vector<1x12x72xbf16>
    %14 = vector.shape_cast %13 : vector<1x12x72xbf16> to vector<12x72xbf16>
    %c2_14 = arith.constant 2 : index
    %c0_15 = arith.constant 0 : index
    %c0_16 = arith.constant 0 : index
    %15 = vector.load %arg2[%c2_14, %c0_15, %c0_16] : memref<3x72x48xbf16, #tpu.memory_space<vmem>>, vector<1x72x48xbf16>
    %16 = vector.shape_cast %15 : vector<1x72x48xbf16> to vector<72x48xbf16>
    %cst_17 = arith.constant dense<0.000000e+00> : vector<12x48xf32>
    %17 = tpu.matmul %14, %16, %cst_17 {dimension_numbers = #tpu.dot_dimension_numbers<[1], [0], [0], [1], [0, 0, 1, 1], [], []>} : vector<12x72xbf16>, vector<72x48xbf16>, vector<12x48xf32> -> vector<12x48xf32>
    %18 = arith.addf %12, %17 : vector<12x48xf32>
    %c0_18 = arith.constant 0 : index
    %c0_19 = arith.constant 0 : index
    %19 = vector.load %arg3[%c0_18, %c0_19] : memref<1x48xf32, #tpu.memory_space<vmem>>, vector<1x48xf32>
    %20 = vector.broadcast %19 : vector<1x48xf32> to vector<12x48xf32>
    %21 = arith.addf %18, %20 : vector<12x48xf32>
    %c0_20 = arith.constant 0 : index
    %c0_21 = arith.constant 0 : index
    %c0_22 = arith.constant 0 : index
    %22 = vector.load %arg4[%c0_20, %c0_21, %c0_22] : memref<1x12x48xf32, #tpu.memory_space<vmem>>, vector<1x12x48xf32>
    %23 = vector.shape_cast %22 : vector<1x12x48xf32> to vector<12x48xf32>
    %24 = vector.shape_cast %21 : vector<12x48xf32> to vector<1x12x48xf32>
    tpu.vector_store %arg4[%c0_20, %c0_21, %c0_22], %24 {strides = array<i32>} : memref<1x12x48xf32, #tpu.memory_space<vmem>>, vector<1x12x48xf32>,
    return
  }
  func.func @transform_0(%arg0: i32) -> (i32, i32, i32) {
    %c0_i32 = arith.constant 0 : i32
    %c0_i32_0 = arith.constant 0 : i32
    %c0_i32_1 = arith.constant 0 : i32
    return %arg0, %c0_i32, %c0_i32_0 : i32, i32, i32
  }
  func.func @transform_1(%arg0: i32) -> (i32, i32, i32) {
    %c0_i32 = arith.constant 0 : i32
    %c0_i32_0 = arith.constant 0 : i32
    %c0_i32_1 = arith.constant 0 : i32
    %c0_i32_2 = arith.constant 0 : i32
    return %c0_i32, %c0_i32_0, %c0_i32_1 : i32, i32, i32
  }
  func.func @transform_2(%arg0: i32) -> (i32, i32) {
    %c0_i32 = arith.constant 0 : i32
    %c0_i32_0 = arith.constant 0 : i32
    %c0_i32_1 = arith.constant 0 : i32
    return %c0_i32, %c0_i32_0 : i32, i32
  }
  func.func @transform_3(%arg0: i32) -> (i32, i32, i32) {
    %c0_i32 = arith.constant 0 : i32
    %c0_i32_0 = arith.constant 0 : i32
    %c0_i32_1 = arith.constant 0 : i32
    return %arg0, %c0_i32, %c0_i32_0 : i32, i32, i32
  }
}

module attributes {stable_mosaic.version = 11 : i64} {
  func.func @_conv_kernel(%arg0: i32, %arg1: memref<1x26x48xbf16, #tpu.memory_space<vmem>>, %arg2: memref<3x48x24xbf16, #tpu.memory_space<vmem>>, %arg3: memref<1x24xf32, #tpu.memory_space<vmem>>, %arg4: memref<1x24x24xf32, #tpu.memory_space<vmem>>) attributes {dimension_semantics = [#tpu.dimension_semantics<parallel>], iteration_bounds = array<i64: 2>, scalar_prefetch = 0 : i64, scratch_operands = 0 : i64, tpu.core_type = #tpu.core_type<tc>, window_params = [{transform_indices = @transform_0, window_bounds = array<i64: 1, 26, 48>}, {pipeline_mode = #tpu.pipeline_mode<synchronous>, transform_indices = @transform_1, window_bounds = array<i64: 3, 48, 24>}, {pipeline_mode = #tpu.pipeline_mode<synchronous>, transform_indices = @transform_2, window_bounds = array<i64: 1, 24>}, {transform_indices = @transform_3, window_bounds = array<i64: 1, 24, 24>}]} {
    %cst = arith.constant 0.000000e+00 : f32
    %0 = vector.broadcast %cst : f32 to vector<24x24xf32>
    %c0 = arith.constant 0 : index
    %c0_0 = arith.constant 0 : index
    %c0_1 = arith.constant 0 : index
    %1 = vector.load %arg1[%c0, %c0_0, %c0_1] : memref<1x26x48xbf16, #tpu.memory_space<vmem>>, vector<1x24x48xbf16>
    %2 = vector.shape_cast %1 : vector<1x24x48xbf16> to vector<24x48xbf16>
    %c0_2 = arith.constant 0 : index
    %c0_3 = arith.constant 0 : index
    %c0_4 = arith.constant 0 : index
    %3 = vector.load %arg2[%c0_2, %c0_3, %c0_4] : memref<3x48x24xbf16, #tpu.memory_space<vmem>>, vector<1x48x24xbf16>
    %4 = vector.shape_cast %3 : vector<1x48x24xbf16> to vector<48x24xbf16>
    %cst_5 = arith.constant dense<0.000000e+00> : vector<24x24xf32>
    %5 = tpu.matmul %2, %4, %cst_5 {dimension_numbers = #tpu.dot_dimension_numbers<[1], [0], [0], [1], [0, 0, 1, 1], [], []>} : vector<24x48xbf16>, vector<48x24xbf16>, vector<24x24xf32> -> vector<24x24xf32>
    %6 = arith.addf %0, %5 : vector<24x24xf32>
    %c0_6 = arith.constant 0 : index
    %c1 = arith.constant 1 : index
    %c0_7 = arith.constant 0 : index
    %7 = vector.load %arg1[%c0_6, %c1, %c0_7] : memref<1x26x48xbf16, #tpu.memory_space<vmem>>, vector<1x24x48xbf16>
    %8 = vector.shape_cast %7 : vector<1x24x48xbf16> to vector<24x48xbf16>
    %c1_8 = arith.constant 1 : index
    %c0_9 = arith.constant 0 : index
    %c0_10 = arith.constant 0 : index
    %9 = vector.load %arg2[%c1_8, %c0_9, %c0_10] : memref<3x48x24xbf16, #tpu.memory_space<vmem>>, vector<1x48x24xbf16>
    %10 = vector.shape_cast %9 : vector<1x48x24xbf16> to vector<48x24xbf16>
    %cst_11 = arith.constant dense<0.000000e+00> : vector<24x24xf32>
    %11 = tpu.matmul %8, %10, %cst_11 {dimension_numbers = #tpu.dot_dimension_numbers<[1], [0], [0], [1], [0, 0, 1, 1], [], []>} : vector<24x48xbf16>, vector<48x24xbf16>, vector<24x24xf32> -> vector<24x24xf32>
    %12 = arith.addf %6, %11 : vector<24x24xf32>
    %c0_12 = arith.constant 0 : index
    %c2 = arith.constant 2 : index
    %c0_13 = arith.constant 0 : index
    %13 = vector.load %arg1[%c0_12, %c2, %c0_13] : memref<1x26x48xbf16, #tpu.memory_space<vmem>>, vector<1x24x48xbf16>
    %14 = vector.shape_cast %13 : vector<1x24x48xbf16> to vector<24x48xbf16>
    %c2_14 = arith.constant 2 : index
    %c0_15 = arith.constant 0 : index
    %c0_16 = arith.constant 0 : index
    %15 = vector.load %arg2[%c2_14, %c0_15, %c0_16] : memref<3x48x24xbf16, #tpu.memory_space<vmem>>, vector<1x48x24xbf16>
    %16 = vector.shape_cast %15 : vector<1x48x24xbf16> to vector<48x24xbf16>
    %cst_17 = arith.constant dense<0.000000e+00> : vector<24x24xf32>
    %17 = tpu.matmul %14, %16, %cst_17 {dimension_numbers = #tpu.dot_dimension_numbers<[1], [0], [0], [1], [0, 0, 1, 1], [], []>} : vector<24x48xbf16>, vector<48x24xbf16>, vector<24x24xf32> -> vector<24x24xf32>
    %18 = arith.addf %12, %17 : vector<24x24xf32>
    %c0_18 = arith.constant 0 : index
    %c0_19 = arith.constant 0 : index
    %19 = vector.load %arg3[%c0_18, %c0_19] : memref<1x24xf32, #tpu.memory_space<vmem>>, vector<1x24xf32>
    %20 = vector.broadcast %19 : vector<1x24xf32> to vector<24x24xf32>
    %21 = arith.addf %18, %20 : vector<24x24xf32>
    %c0_20 = arith.constant 0 : index
    %c0_21 = arith.constant 0 : index
    %c0_22 = arith.constant 0 : index
    %22 = vector.load %arg4[%c0_20, %c0_21, %c0_22] : memref<1x24x24xf32, #tpu.memory_space<vmem>>, vector<1x24x24xf32>
    %23 = vector.shape_cast %22 : vector<1x24x24xf32> to vector<24x24xf32>
    %24 = vector.shape_cast %21 : vector<24x24xf32> to vector<1x24x24xf32>
    tpu.vector_store %arg4[%c0_20, %c0_21, %c0_22], %24 {strides = array<i32>} : memref<1x24x24xf32, #tpu.memory_space<vmem>>, vector<1x24x24xf32>,
    return
  }
  func.func @transform_0(%arg0: i32) -> (i32, i32, i32) {
    %c0_i32 = arith.constant 0 : i32
    %c0_i32_0 = arith.constant 0 : i32
    %c0_i32_1 = arith.constant 0 : i32
    return %arg0, %c0_i32, %c0_i32_0 : i32, i32, i32
  }
  func.func @transform_1(%arg0: i32) -> (i32, i32, i32) {
    %c0_i32 = arith.constant 0 : i32
    %c0_i32_0 = arith.constant 0 : i32
    %c0_i32_1 = arith.constant 0 : i32
    %c0_i32_2 = arith.constant 0 : i32
    return %c0_i32, %c0_i32_0, %c0_i32_1 : i32, i32, i32
  }
  func.func @transform_2(%arg0: i32) -> (i32, i32) {
    %c0_i32 = arith.constant 0 : i32
    %c0_i32_0 = arith.constant 0 : i32
    %c0_i32_1 = arith.constant 0 : i32
    return %c0_i32, %c0_i32_0 : i32, i32
  }
  func.func @transform_3(%arg0: i32) -> (i32, i32, i32) {
    %c0_i32 = arith.constant 0 : i32
    %c0_i32_0 = arith.constant 0 : i32
    %c0_i32_1 = arith.constant 0 : i32
    return %arg0, %c0_i32, %c0_i32_0 : i32, i32, i32
  }
}

</mosaic_0001>

<llo_original>
// kernel: unet1d_flattening_forward.109
$region0: #{unet1d_flattening_forward.109}
  #allocation0 [shape = 'u32[]', space=smem, size = 0x4, offset = 0x4, fixed_abs, tag = 'smem constant byte address 0x4 - core index']
  #allocation1 [shape = 'u32[144,128]{1,0:T(1,128)}', space=vmem, size = 0x12000, scoped, tag = 'internal scratch']
  %s0 = inlined_call_operand.vmem [shape: bf16[2,26,24], index: 0, kind: input, shape index: {}]
  %s1 = inlined_call_operand.vmem [shape: bf16[3,24,24], index: 1, kind: input, shape index: {}]
  %s2 = inlined_call_operand.vmem [shape: f32[1,24], index: 2, kind: input, shape index: {}]
  %s3 = inlined_call_operand.vmem [shape: f32[2,24,24], index: 3, kind: output, shape index: {}]
  %s4 = sld [smem:[#allocation0]]
  $region45: #{unet1d_flattening_forward.109} parent=0
    _
  %s6 = ssub.s32 1, %s4
  %s7 = scalar_select 0, %s6, %s4
  loop: start=0, step=1, limit=4
  $region2: #{unet1d_flattening_forward.109} parent=0 // loop_pre_header
    _
  $region3: #{unet1d_flattening_forward.109} parent=0 // loop_header
    %s9 = sphi 0, %s13
    %p10 = scmp.ge.s32.totalorder %s9, 4
    %s19 = sphi 0, %s21
    %s22 = sphi 0, %s19
    %s23 = sphi 0, %s22
    %s39 = sphi 0, %s23
    %s43 = sphi 0, %s43
    %s45 = sphi 0, %s43
    %s46 = sphi 0, %s45
    %s60 = sphi 0, %s46
    %s64 = sphi 0, %s64
    %s66 = sphi 0, %s64
    %s67 = sphi 0, %s66
    %s81 = sphi 0, %s67
    %s87 = sphi 0, %s89
    %s90 = sphi 0, %s87
    %s91 = sphi 0, %s90
    %s107 = sphi 0, %s91
  $region4: #{unet1d_flattening_forward.109} parent=0 // loop_header_branch
    %12 = sbr.rel (%p10) target = $region8
  $region5: #{unet1d_flattening_forward.109} parent=0 // loop_body
    %s14 = ssub.s32 %s9, 1
    %s15 = ssub.s32 %s9, 2
    %s16 = sadd.s32 %s9, 1
    %s17 = ssub.s32 %s9, %s16
    %p18 = scmp.eq.s32.totalorder %s17, 0
    %s20 = sadd.s32 %s19, 1
    %s21 = scalar_select %p18, %s19, %s20
    %p24 = pneg %p18
    %p25 = scmp.eq.s32.totalorder %s9, 1
    %p26 = por %p24, %p25
    %p27 = scmp.ne.s32.totalorder %s19, %s22
    %p28 = scmp.eq.s32.totalorder %s9, 0
    %p29 = por %p27, %p28
    %p30 = scmp.ne.s32.totalorder %s19, %s22
    %p31 = scmp.eq.s32.totalorder %s14, 1
    %p32 = por %p30, %p31
    %p33 = scmp.ne.s32.totalorder %s22, %s23
    %p34 = scmp.eq.s32.totalorder %s14, 0
    %p35 = por %p33, %p34
    %p36 = scmp.ne.s32.totalorder %s22, %s23
    %p37 = scmp.eq.s32.totalorder %s15, 1
    %p38 = por %p36, %p37
    %p40 = scmp.ne.s32.totalorder %s23, %s39
    %p41 = scmp.eq.s32.totalorder %s15, 0
    %p42 = por %p40, %p41
    %s44 = sadd.s32 %s43, 1
    %p47 = scmp.eq.s32.totalorder %s9, 1
    %p48 = scmp.ne.s32.totalorder %s43, %s45
    %p49 = scmp.eq.s32.totalorder %s9, 0
    %p50 = por %p48, %p49
    %p51 = scmp.ne.s32.totalorder %s43, %s45
    %p52 = scmp.eq.s32.totalorder %s14, 1
    %p53 = por %p51, %p52
    %p54 = scmp.ne.s32.totalorder %s45, %s46
    %p55 = scmp.eq.s32.totalorder %s14, 0
    %p56 = por %p54, %p55
    %p57 = scmp.ne.s32.totalorder %s45, %s46
    %p58 = scmp.eq.s32.totalorder %s15, 1
    %p59 = por %p57, %p58
    %p61 = scmp.ne.s32.totalorder %s46, %s60
    %p62 = scmp.eq.s32.totalorder %s15, 0
    %p63 = por %p61, %p62
    %s65 = sadd.s32 %s64, 1
    %p68 = scmp.eq.s32.totalorder %s9, 1
    %p69 = scmp.ne.s32.totalorder %s64, %s66
    %p70 = scmp.eq.s32.totalorder %s9, 0
    %p71 = por %p69, %p70
    %p72 = scmp.ne.s32.totalorder %s64, %s66
    %p73 = scmp.eq.s32.totalorder %s14, 1
    %p74 = por %p72, %p73
    %p75 = scmp.ne.s32.totalorder %s66, %s67
    %p76 = scmp.eq.s32.totalorder %s14, 0
    %p77 = por %p75, %p76
    %p78 = scmp.ne.s32.totalorder %s66, %s67
    %p79 = scmp.eq.s32.totalorder %s15, 1
    %p80 = por %p78, %p79
    %p82 = scmp.ne.s32.totalorder %s67, %s81
    %p83 = scmp.eq.s32.totalorder %s15, 0
    %p84 = por %p82, %p83
    %s85 = ssub.s32 %s9, %s16
    %p86 = scmp.eq.s32.totalorder %s85, 0
    %s88 = sadd.s32 %s87, 1
    %s89 = scalar_select %p86, %s87, %s88
    %p92 = pneg %p86
    %p93 = scmp.eq.s32.totalorder %s9, 1
    %p94 = por %p92, %p93
    %p95 = scmp.ne.s32.totalorder %s87, %s90
    %p96 = scmp.eq.s32.totalorder %s9, 0
    %p97 = por %p95, %p96
    %p98 = scmp.ne.s32.totalorder %s87, %s90
    %p99 = scmp.eq.s32.totalorder %s14, 1
    %p100 = por %p98, %p99
    %p101 = scmp.ne.s32.totalorder %s90, %s91
    %p102 = scmp.eq.s32.totalorder %s14, 0
    %p103 = por %p101, %p102
    %p104 = scmp.ne.s32.totalorder %s90, %s91
    %p105 = scmp.eq.s32.totalorder %s15, 1
    %p106 = por %p104, %p105
    %p108 = scmp.ne.s32.totalorder %s91, %s107
    %p109 = scmp.eq.s32.totalorder %s15, 0
    %p110 = por %p108, %p109
    %p111 = scmp.le.s32.totalorder 1, %s9
    %p112 = scmp.lt.s32.totalorder %s9, 3
    %p113 = pnand %p111, %p112
    %p114 = pneg %p113
    // Predicated region
    $region9: #{unet1d_flattening_forward.109} parent=5 // pred_check
      _
    $region10: #{unet1d_flattening_forward.109} parent=5 // pred_check_branch
      %116 = sbr.rel (%p113) target = $region12
    $region11: #{unet1d_flattening_forward.109} parent=5 // pred_region
      %s117 = ssub.s32 %s9, 1
      // Predicated region
      $region13: #{unet1d_flattening_forward.109} parent=11 // pred_check
        %p118 = pneg %p56
      $region14: #{unet1d_flattening_forward.109} parent=11 // pred_check_branch
        %120 = sbr.rel (%p118) target = $region16
      $region15: #{unet1d_flattening_forward.109} parent=11 // pred_region
        _
      $region16: #{unet1d_flattening_forward.109} parent=11 // pred_fallthru
        _
      // Predicated region
      $region17: #{unet1d_flattening_forward.109} parent=11 // pred_check
        %p121 = pneg %p77
      $region18: #{unet1d_flattening_forward.109} parent=11 // pred_check_branch
        %123 = sbr.rel (%p121) target = $region20
      $region19: #{unet1d_flattening_forward.109} parent=11 // pred_region
        _
      $region20: #{unet1d_flattening_forward.109} parent=11 // pred_fallthru
        _
    $region12: #{unet1d_flattening_forward.109} parent=5 // pred_fallthru
      _
    %p124 = scmp.lt.s32.totalorder %s9, 2
    // Predicated region
    $region21: #{unet1d_flattening_forward.109} parent=5 // pred_check
      %p125 = pneg %p124
    $region22: #{unet1d_flattening_forward.109} parent=5 // pred_check_branch
      %127 = sbr.rel (%p125) target = $region24
    $region23: #{unet1d_flattening_forward.109} parent=5 // pred_region
      // Predicated region
      $region25: #{unet1d_flattening_forward.109} parent=23 // pred_check
        %p128 = pneg %p29
      $region26: #{unet1d_flattening_forward.109} parent=23 // pred_check_branch
        %130 = sbr.rel (%p128) target = $region28
      $region27: #{unet1d_flattening_forward.109} parent=23 // pred_region
        %p131 = scmp.lt.s32.totalorder %s9, 1
        %s132 = scalar_select %p131, %s9, 1
        %s133 = smul.addr %s132, 4
        %s134 = smul.addr %s133, 4
        %s135 = scalar_lea.vmem %s0, %s134
      $region28: #{unet1d_flattening_forward.109} parent=23 // pred_fallthru
        _
    $region24: #{unet1d_flattening_forward.109} parent=5 // pred_fallthru
      _
    %p136 = scmp.le.s32.totalorder 1, %s9
    %p137 = scmp.lt.s32.totalorder %s9, 3
    %p138 = pnand %p136, %p137
    %p139 = pneg %p138
    // Predicated region
    $region29: #{unet1d_flattening_forward.109} parent=5 // pred_check
      _
    $region30: #{unet1d_flattening_forward.109} parent=5 // pred_check_branch
      %141 = sbr.rel (%p138) target = $region32
    $region31: #{unet1d_flattening_forward.109} parent=5 // pred_region
      %s142 = ssub.s32 %s9, 1
      %p143 = scmp.lt.s32.totalorder %s14, 1
      %s144 = scalar_select %p143, %s14, 1
      %s145 = smul.addr %s144, 4
      %s146 = smul.addr %s145, 4
      %s147 = scalar_lea.vmem %s0, %s146
      %p148 = pneg %p35
      %p149 = pneg %p32
      %p150 = pneg %p56
      %p151 = pneg %p53
      %p152 = pneg %p77
      %p153 = pneg %p74
      %p154 = pneg %p103
      %p155 = pneg %p100
      %p156 = scmp.lt.s32.totalorder %s14, 1
      %s157 = scalar_select %p156, %s14, 1
      %s158 = smul.addr %s157, 3
      %s159 = smul.addr %s158, 8
      %s160 = scalar_lea.vmem %s3, %s159
      %p161 = scmp.lt.s32.totalorder %s14, 1
      %s162 = scalar_select %p161, %s14, 1
      %s163 = smul.addr %s162, 4
      %s164 = smul.addr %s163, 4
      %s165 = scalar_lea.vmem %s0, %s164
      %p166 = scmp.lt.s32.totalorder %s14, 1
      %s167 = scalar_select %p166, %s14, 1
      %s168 = smul.addr %s167, 3
      %s169 = smul.addr %s168, 8
      %s170 = scalar_lea.vmem %s3, %s169
      %v172 = vld [vmem:[%s165] sm:$0xf]
      %v173 = vld [vmem:[%s165 + $0x4] sm:$0xf]
      %v174 = vld [vmem:[%s165 + $0x8] sm:$0xf]
      %v175 = vld [vmem:[%s1] sm:$0xf]
      %v176 = vld [vmem:[%s1 + $0x4] sm:$0xf]
      %v177 = vld [vmem:[%s1 + $0x8] sm:$0xf]
      %v178 = vld [vmem:[%s165 + $0xc] sm:$0x1]
      %s179 = scalar_lea.vmem %s1, 12
      %v180 = vld [vmem:[%s179] sm:$0xf]
      %v181 = vld [vmem:[%s179 + $0x4] sm:$0xf]
      %v182 = vld [vmem:[%s179 + $0x8] sm:$0xf]
      %v187 = vunpack.c.l.b16 %v172
      %v188 = vunpack.c.l.b16 %v173
      %v189 = vunpack.c.l.b16 %v174
      %v190 = vunpack.c.l.b16 %v178
      %v191 = vpack.c.b16 %v188, %v187
      %v192 = vpack.c.b16 %v190, %v189
      %vm193 = vsmask.f32 7424
      %v195 = vshrl.u32 %v191, 16
      %v197 = vshll.u32 %v191, 16
      %v199 = vrot.slane %v197, 1
      %v200 = vor.u32 %v195, %v199
      %v202 = vshll.u32 %v192, 16
      %v204 = vrot.slane %v202, 1
      %v205 = vsel %vm193, %v200, %v204
      %v206 = vshrl.u32 %v192, 16
      %v208 = vor.u32 %v206, %v204
      %v212 = vunpack.c.l.b16 %v180
      %v213 = vunpack.c.l.b16 %v181
      %v214 = vunpack.c.l.b16 %v182
      %v215 = vpack.c.b16 %v213, %v212
      %v216 = vpack.c.b16 %v214, %v214
      %vm218 = vcmask 195584
      %v220 = vsel %vm218, %v205, 0
      %v223 = vsel %vm218, %v208, 0
      %vm225 = vcmask 1043456
      %v227 = vsel %vm225, %v216, 0
      %229 = vmatprep.subr.bf16.mxu0 0
      %230 = vmatpush1.bf16.msra.mxu0 %v215
      %231 = vmatprep.subr.bf16.mxu0 0
      %232 = vmatpush1.bf16.msra.mxu0 %v227
      %233 = vmatprep.subr.bf16.mxu0 0
      %234 = vmatpush1.bf16.msra.mxu0 0
      %235 = vmatprep.subr.bf16.mxu0 0
      %236 = vmatpush1.bf16.msra.mxu0 0
      %237 = vmatprep.subr.bf16.mxu0 0
      %238 = vmatpush1.bf16.msra.mxu0 0
      %239 = vmatprep.subr.bf16.mxu0 0
      %240 = vmatpush1.bf16.msra.mxu0 0
      %241 = vmatprep.subr.bf16.mxu0 0
      %242 = vmatpush1.bf16.msra.mxu0 0
      %243 = vmatprep.subr.bf16.mxu0 0
      %244 = vmatpush1.bf16.msra.mxu0 0
      %245 = vmatprep.subr.bf16.mxu0 0
      %246 = vmatpush1.bf16.msra.mxu0 0
      %247 = vmatprep.subr.bf16.mxu0 0
      %248 = vmatpush1.bf16.msra.mxu0 0
      %249 = vmatprep.subr.bf16.mxu0 0
      %250 = vmatpush1.bf16.msra.mxu0 0
      %251 = vmatprep.subr.bf16.mxu0 0
      %252 = vmatpush1.bf16.msra.mxu0 0
      %253 = vmatprep.subr.bf16.mxu0 0
      %254 = vmatpush1.bf16.msra.mxu0 0
      %255 = vmatprep.subr.bf16.mxu0 0
      %256 = vmatpush1.bf16.msra.mxu0 0
      %257 = vmatprep.subr.bf16.mxu0 0
      %258 = vmatpush1.bf16.msra.mxu0 0
      %259 = vmatprep.subr.bf16.mxu0 0
      %260 = vmatpush1.bf16.msra.mxu0 0
      %261 = vmatprep.mubr.bf16.mxu0 0
      %262 = vmatmul.mubr.bf16.gmra.mrb[0].mxu0 %v220
      %v263 = vpop.f32.mrb[0].mxu0
      %v264 = vadd.f32 0.0, %v263
      %v265 = vpop.f32.mrb[0].mxu0
      %v266 = vpop.f32.mrb[0].mxu0
      %v267 = vadd.f32 0.0, %v266
      %v268 = vpop.f32.mrb[0].mxu0
      %269 = vmatprep.mubr.bf16.mxu0 0
      %270 = vmatmul.mubr.bf16.gmra.mrb[0].mxu0 %v223
      %v271 = vpop.f32.mrb[0].mxu0
      %v272 = vadd.f32 0.0, %v271
      %v273 = vpop.f32.mrb[0].mxu0
      %v274 = vpop.f32.mrb[0].mxu0
      %v275 = vpop.f32.mrb[0].mxu0
      %276 = vdwg.mxu0
      %v277 = vpack.c.b16 %v189, %v189
      %v281 = vunpack.c.l.b16 %v175
      %v282 = vunpack.c.l.b16 %v176
      %v283 = vunpack.c.l.b16 %v177
      %v284 = vpack.c.b16 %v282, %v281
      %v285 = vpack.c.b16 %v283, %v283
      %v287 = vsel %vm218, %v191, 0
      %v290 = vsel %vm218, %v277, 0
      %v293 = vsel %vm225, %v285, 0
      %295 = vmatprep.subr.bf16.mxu0 0
      %296 = vmatpush1.bf16.msra.mxu0 %v284
      %297 = vmatprep.subr.bf16.mxu0 0
      %298 = vmatpush1.bf16.msra.mxu0 %v293
      %299 = vmatprep.subr.bf16.mxu0 0
      %300 = vmatpush1.bf16.msra.mxu0 0
      %301 = vmatprep.subr.bf16.mxu0 0
      %302 = vmatpush1.bf16.msra.mxu0 0
      %303 = vmatprep.subr.bf16.mxu0 0
      %304 = vmatpush1.bf16.msra.mxu0 0
      %305 = vmatprep.subr.bf16.mxu0 0
      %306 = vmatpush1.bf16.msra.mxu0 0
      %307 = vmatprep.subr.bf16.mxu0 0
      %308 = vmatpush1.bf16.msra.mxu0 0
      %309 = vmatprep.subr.bf16.mxu0 0
      %310 = vmatpush1.bf16.msra.mxu0 0
      %311 = vmatprep.subr.bf16.mxu0 0
      %312 = vmatpush1.bf16.msra.mxu0 0
      %313 = vmatprep.subr.bf16.mxu0 0
      %314 = vmatpush1.bf16.msra.mxu0 0
      %315 = vmatprep.subr.bf16.mxu0 0
      %316 = vmatpush1.bf16.msra.mxu0 0
      %317 = vmatprep.subr.bf16.mxu0 0
      %318 = vmatpush1.bf16.msra.mxu0 0
      %319 = vmatprep.subr.bf16.mxu0 0
      %320 = vmatpush1.bf16.msra.mxu0 0
      %321 = vmatprep.subr.bf16.mxu0 0
      %322 = vmatpush1.bf16.msra.mxu0 0
      %323 = vmatprep.subr.bf16.mxu0 0
      %324 = vmatpush1.bf16.msra.mxu0 0
      %325 = vmatprep.subr.bf16.mxu0 0
      %326 = vmatpush1.bf16.msra.mxu0 0
      %327 = vmatprep.mubr.bf16.mxu0 0
      %328 = vmatmul.mubr.bf16.gmra.mrb[0].mxu0 %v287
      %v329 = vpop.f32.mrb[0].mxu0
      %v330 = vadd.f32 %v264, %v329
      %v331 = vpop.f32.mrb[0].mxu0
      %v332 = vpop.f32.mrb[0].mxu0
      %v333 = vadd.f32 %v267, %v332
      %v334 = vpop.f32.mrb[0].mxu0
      %335 = vmatprep.mubr.bf16.mxu0 0
      %336 = vmatmul.mubr.bf16.gmra.mrb[0].mxu0 %v290
      %v337 = vpop.f32.mrb[0].mxu0
      %v338 = vadd.f32 %v272, %v337
      %v339 = vpop.f32.mrb[0].mxu0
      %v340 = vpop.f32.mrb[0].mxu0
      %v341 = vpop.f32.mrb[0].mxu0
      %342 = vdwg.mxu0
      %v343 = vld [vmem:[%s165] sm:$0xe]
      %s344 = scalar_lea.vmem %s1, 24
      %v345 = vld [vmem:[%s344] sm:$0xf]
      %v346 = vld [vmem:[%s344 + $0x4] sm:$0xf]
      %v347 = vld [vmem:[%s344 + $0x8] sm:$0xf]
      %v349 = vunpack.c.l.b16 %v343
      %v350 = vpack.c.b16 %v188, %v349
      %vm351 = vcmask 1046528
      %v352 = vrot.slane %v350, 1
      %v353 = vrot.slane %v192, 1
      %v354 = vsel %vm351, %v352, %v353
      %v358 = vunpack.c.l.b16 %v345
      %v359 = vunpack.c.l.b16 %v346
      %v360 = vunpack.c.l.b16 %v347
      %v361 = vpack.c.b16 %v359, %v358
      %v362 = vpack.c.b16 %v360, %v360
      %v365 = vsel %vm218, %v354, 0
      %v368 = vsel %vm218, %v353, 0
      %v371 = vsel %vm225, %v362, 0
      %373 = vmatprep.subr.bf16.mxu0 0
      %374 = vmatpush1.bf16.msra.mxu0 %v361
      %375 = vmatprep.subr.bf16.mxu0 0
      %376 = vmatpush1.bf16.msra.mxu0 %v371
      %377 = vmatprep.subr.bf16.mxu0 0
      %378 = vmatpush1.bf16.msra.mxu0 0
      %379 = vmatprep.subr.bf16.mxu0 0
      %380 = vmatpush1.bf16.msra.mxu0 0
      %381 = vmatprep.subr.bf16.mxu0 0
      %382 = vmatpush1.bf16.msra.mxu0 0
      %383 = vmatprep.subr.bf16.mxu0 0
      %384 = vmatpush1.bf16.msra.mxu0 0
      %385 = vmatprep.subr.bf16.mxu0 0
      %386 = vmatpush1.bf16.msra.mxu0 0
      %387 = vmatprep.subr.bf16.mxu0 0
      %388 = vmatpush1.bf16.msra.mxu0 0
      %389 = vmatprep.subr.bf16.mxu0 0
      %390 = vmatpush1.bf16.msra.mxu0 0
      %391 = vmatprep.subr.bf16.mxu0 0
      %392 = vmatpush1.bf16.msra.mxu0 0
      %393 = vmatprep.subr.bf16.mxu0 0
      %394 = vmatpush1.bf16.msra.mxu0 0
      %395 = vmatprep.subr.bf16.mxu0 0
      %396 = vmatpush1.bf16.msra.mxu0 0
      %397 = vmatprep.subr.bf16.mxu0 0
      %398 = vmatpush1.bf16.msra.mxu0 0
      %399 = vmatprep.subr.bf16.mxu0 0
      %400 = vmatpush1.bf16.msra.mxu0 0
      %401 = vmatprep.subr.bf16.mxu0 0
      %402 = vmatpush1.bf16.msra.mxu0 0
      %403 = vmatprep.subr.bf16.mxu0 0
      %404 = vmatpush1.bf16.msra.mxu0 0
      %405 = vmatprep.mubr.bf16.mxu0 0
      %406 = vmatmul.mubr.bf16.gmra.mrb[0].mxu0 %v365
      %v407 = vpop.f32.mrb[0].mxu0
      %v408 = vadd.f32 0.0, %v407
      %v409 = vpop.f32.mrb[0].mxu0
      %v410 = vpop.f32.mrb[0].mxu0
      %v411 = vadd.f32 0.0, %v410
      %v412 = vpop.f32.mrb[0].mxu0
      %413 = vmatprep.mubr.bf16.mxu0 0
      %414 = vmatmul.mubr.bf16.gmra.mrb[0].mxu0 %v368
      %v415 = vpop.f32.mrb[0].mxu0
      %v416 = vadd.f32 0.0, %v415
      %v417 = vpop.f32.mrb[0].mxu0
      %v418 = vpop.f32.mrb[0].mxu0
      %v419 = vpop.f32.mrb[0].mxu0
      %420 = vdwg.mxu0
      %v421 = vadd.f32 %v330, %v408
      %v422 = vadd.f32 %v333, %v411
      %v423 = vadd.f32 %v338, %v416
      %v424 = vld [vmem:[%s2] sm:$0x1]
      %v426 = vlaneseq
      %v427 = vshrl.u32 %v426, 7
      %v428 = vsub.s32 0, %v427
      %v429 = vrot.slane %v424, %v428
      %v431 = vadd.f32 %v421, %v429
      %v432 = vadd.f32 %v422, %v429
      %v433 = vadd.f32 %v423, %v429
      %434 = vst.msk [vmem:[%s170] sm:$0xff] %vm218, %v431
      %435 = vst.msk [vmem:[%s170 + $0x8] sm:$0xff] %vm218, %v432
      %436 = vst.msk [vmem:[%s170 + $0x10] sm:$0xff] %vm218, %v433
      %p437 = scmp.lt.s32.totalorder %s14, 1
      %s438 = scalar_select %p437, %s14, 1
      %s439 = smul.addr %s438, 3
      %s440 = smul.addr %s439, 8
      %s441 = scalar_lea.vmem %s3, %s440
      // Predicated region
      $region33: #{unet1d_flattening_forward.109} parent=31 // pred_check
        %p442 = pneg %p100
      $region34: #{unet1d_flattening_forward.109} parent=31 // pred_check_branch
        %444 = sbr.rel (%p442) target = $region36
      $region35: #{unet1d_flattening_forward.109} parent=31 // pred_region
        _
      $region36: #{unet1d_flattening_forward.109} parent=31 // pred_fallthru
        _
    $region32: #{unet1d_flattening_forward.109} parent=5 // pred_fallthru
      _
    %p445 = scmp.le.s32.totalorder 2, %s9
    // Predicated region
    $region37: #{unet1d_flattening_forward.109} parent=5 // pred_check
      %p446 = pneg %p445
    $region38: #{unet1d_flattening_forward.109} parent=5 // pred_check_branch
      %448 = sbr.rel (%p446) target = $region40
    $region39: #{unet1d_flattening_forward.109} parent=5 // pred_region
      %s449 = ssub.s32 %s9, 2
      // Predicated region
      $region41: #{unet1d_flattening_forward.109} parent=39 // pred_check
        %p450 = pneg %p106
      $region42: #{unet1d_flattening_forward.109} parent=39 // pred_check_branch
        %452 = sbr.rel (%p450) target = $region44
      $region43: #{unet1d_flattening_forward.109} parent=39 // pred_region
        %p453 = scmp.lt.s32.totalorder %s15, 1
        %s454 = scalar_select %p453, %s15, 1
        %s455 = smul.addr %s454, 3
        %s456 = smul.addr %s455, 8
        %s457 = scalar_lea.vmem %s3, %s456
      $region44: #{unet1d_flattening_forward.109} parent=39 // pred_fallthru
        _
    $region40: #{unet1d_flattening_forward.109} parent=5 // pred_fallthru
      _
  $region6: #{unet1d_flattening_forward.109} parent=0 // loop_footer
    %s13 = sadd.s32 1, %s9
  $region7: #{unet1d_flattening_forward.109} parent=0 // loop_footer_branch
    %8 = sbr.rel target = $region3
  $region8: #{unet1d_flattening_forward.109} parent=0 // loop_exit
    _

// kernel: unet1d_flattening_forward.103
$region0: #{unet1d_flattening_forward.103}
  #allocation0 [shape = 'u32[]', space=smem, size = 0x4, offset = 0x4, fixed_abs, tag = 'smem constant byte address 0x4 - core index']
  #allocation1 [shape = 'u32[144,128]{1,0:T(1,128)}', space=vmem, size = 0x12000, scoped, tag = 'internal scratch']
  #allocation2 [shape = 'f32[48,128]{1,0:T(8,128)}', space=vmem, size = 0x6000, scoped, tag = 'scratch operand']
  %s0 = inlined_call_operand.vmem [shape: bf16[48,128], index: 0, kind: input, shape index: {}]
  %s1 = inlined_call_operand.vmem [shape: bf16[128,128], index: 1, kind: input, shape index: {}]
  %s2 = inlined_call_operand.vmem [shape: f32[1,128], index: 2, kind: input, shape index: {}]
  %s3 = inlined_call_operand.vmem [shape: f32[48,128], index: 3, kind: output, shape index: {}]
  %s4 = sld [smem:[#allocation0]]
  $region30: #{unet1d_flattening_forward.103} parent=0
    _
  %s6 = ssub.s32 1, %s4
  %s7 = scalar_select 0, %s6, %s4
  // Predicated region
  $region2: #{unet1d_flattening_forward.103} parent=0 // pred_check
    _
  $region3: #{unet1d_flattening_forward.103} parent=0 // pred_check_branch
    %9 = sbr.rel (0) target = $region5
  $region4: #{unet1d_flattening_forward.103} parent=0 // pred_region
    _
  $region5: #{unet1d_flattening_forward.103} parent=0 // pred_fallthru
    _
  // Predicated region
  $region6: #{unet1d_flattening_forward.103} parent=0 // pred_check
    _
  $region7: #{unet1d_flattening_forward.103} parent=0 // pred_check_branch
    %11 = sbr.rel (0) target = $region9
  $region8: #{unet1d_flattening_forward.103} parent=0 // pred_region
    _
  $region9: #{unet1d_flattening_forward.103} parent=0 // pred_fallthru
    _
  // Predicated region
  $region10: #{unet1d_flattening_forward.103} parent=0 // pred_check
    _
  $region11: #{unet1d_flattening_forward.103} parent=0 // pred_check_branch
    %13 = sbr.rel (0) target = $region13
  $region12: #{unet1d_flattening_forward.103} parent=0 // pred_region
    _
  $region13: #{unet1d_flattening_forward.103} parent=0 // pred_fallthru
    _
  %p15 = scmp.eq.s32.totalorder 0, 0
  // Predicated region
  $region14: #{unet1d_flattening_forward.103} parent=0 // pred_check
    %p16 = pneg %p15
  $region15: #{unet1d_flattening_forward.103} parent=0 // pred_check_branch
    %18 = sbr.rel (%p16) target = $region17
  $region16: #{unet1d_flattening_forward.103} parent=0 // pred_region
    %19 = vst [vmem:[#allocation2] sm:$0xff] 0.0
    %20 = vst [vmem:[#allocation2 + $0x8] sm:$0xff] 0.0
    %21 = vst [vmem:[#allocation2 + $0x10] sm:$0xff] 0.0
    %22 = vst [vmem:[#allocation2 + $0x18] sm:$0xff] 0.0
    %23 = vst [vmem:[#allocation2 + $0x20] sm:$0xff] 0.0
    %24 = vst [vmem:[#allocation2 + $0x28] sm:$0xff] 0.0
  $region17: #{unet1d_flattening_forward.103} parent=0 // pred_fallthru
    _
  %v25 = vld [vmem:[#allocation2] sm:$0xff]
  %v26 = vld [vmem:[#allocation2 + $0x8] sm:$0xff]
  %v27 = vld [vmem:[#allocation2 + $0x10] sm:$0xff]
  %v28 = vld [vmem:[#allocation2 + $0x18] sm:$0xff]
  %v29 = vld [vmem:[#allocation2 + $0x20] sm:$0xff]
  %v30 = vld [vmem:[#allocation2 + $0x28] sm:$0xff]
  %v31 = vld [vmem:[%s0] sm:$0xf]
  %v32 = vld [vmem:[%s0 + $0x4] sm:$0xf]
  %v33 = vld [vmem:[%s0 + $0x8] sm:$0xf]
  %v34 = vld [vmem:[%s0 + $0xc] sm:$0xf]
  %v35 = vld [vmem:[%s0 + $0x10] sm:$0xf]
  %v36 = vld [vmem:[%s0 + $0x14] sm:$0xf]
  %v37 = vld [vmem:[%s1] sm:$0xf]
  %v38 = vld [vmem:[%s1 + $0x4] sm:$0xf]
  %v39 = vld [vmem:[%s1 + $0x8] sm:$0xf]
  %v40 = vld [vmem:[%s1 + $0xc] sm:$0xf]
  %v41 = vld [vmem:[%s1 + $0x10] sm:$0xf]
  %v42 = vld [vmem:[%s1 + $0x14] sm:$0xf]
  %v43 = vld [vmem:[%s1 + $0x18] sm:$0xf]
  %v44 = vld [vmem:[%s1 + $0x1c] sm:$0xf]
  %v45 = vld [vmem:[%s1 + $0x20] sm:$0xf]
  %v46 = vld [vmem:[%s1 + $0x24] sm:$0xf]
  %v47 = vld [vmem:[%s1 + $0x28] sm:$0xf]
  %v48 = vld [vmem:[%s1 + $0x2c] sm:$0xf]
  %v49 = vld [vmem:[%s1 + $0x30] sm:$0xf]
  %v50 = vld [vmem:[%s1 + $0x34] sm:$0xf]
  %v51 = vld [vmem:[%s1 + $0x38] sm:$0xf]
  %v52 = vld [vmem:[%s1 + $0x3c] sm:$0xf]
  %v59 = vunpack.c.l.b16 %v31
  %v60 = vunpack.c.l.b16 %v32
  %v61 = vunpack.c.l.b16 %v33
  %v62 = vunpack.c.l.b16 %v34
  %v63 = vunpack.c.l.b16 %v35
  %v64 = vunpack.c.l.b16 %v36
  %v65 = vpack.c.b16 %v60, %v59
  %v66 = vpack.c.b16 %v62, %v61
  %v67 = vpack.c.b16 %v64, %v63
  %v87 = vunpack.c.l.b16 %v37
  %v88 = vunpack.c.l.b16 %v38
  %v89 = vunpack.c.l.b16 %v39
  %v90 = vunpack.c.l.b16 %v40
  %v91 = vunpack.c.l.b16 %v41
  %v92 = vunpack.c.l.b16 %v42
  %v93 = vunpack.c.l.b16 %v43
  %v94 = vunpack.c.l.b16 %v44
  %v95 = vunpack.c.l.b16 %v45
  %v96 = vunpack.c.l.b16 %v46
  %v97 = vunpack.c.l.b16 %v47
  %v98 = vunpack.c.l.b16 %v48
  %v99 = vunpack.c.l.b16 %v49
  %v100 = vunpack.c.l.b16 %v50
  %v101 = vunpack.c.l.b16 %v51
  %v102 = vunpack.c.l.b16 %v52
  %v103 = vpack.c.b16 %v88, %v87
  %v104 = vpack.c.b16 %v90, %v89
  %v105 = vpack.c.b16 %v92, %v91
  %v106 = vpack.c.b16 %v94, %v93
  %v107 = vpack.c.b16 %v96, %v95
  %v108 = vpack.c.b16 %v98, %v97
  %v109 = vpack.c.b16 %v100, %v99
  %v110 = vpack.c.b16 %v102, %v101
  %119 = vmatprep.subr.bf16.mxu0 0
  %120 = vmatpush1.bf16.msra.mxu0 %v103
  %121 = vmatprep.subr.bf16.mxu0 0
  %122 = vmatpush1.bf16.msra.mxu0 %v104
  %123 = vmatprep.subr.bf16.mxu0 0
  %124 = vmatpush1.bf16.msra.mxu0 %v105
  %125 = vmatprep.subr.bf16.mxu0 0
  %126 = vmatpush1.bf16.msra.mxu0 %v106
  %127 = vmatprep.subr.bf16.mxu0 0
  %128 = vmatpush1.bf16.msra.mxu0 %v107
  %129 = vmatprep.subr.bf16.mxu0 0
  %130 = vmatpush1.bf16.msra.mxu0 %v108
  %131 = vmatprep.subr.bf16.mxu0 0
  %132 = vmatpush1.bf16.msra.mxu0 %v109
  %133 = vmatprep.subr.bf16.mxu0 0
  %134 = vmatpush1.bf16.msra.mxu0 %v110
  %135 = vmatprep.subr.bf16.mxu0 0
  %136 = vmatpush1.bf16.msra.mxu0 0
  %137 = vmatprep.subr.bf16.mxu0 0
  %138 = vmatpush1.bf16.msra.mxu0 0
  %139 = vmatprep.subr.bf16.mxu0 0
  %140 = vmatpush1.bf16.msra.mxu0 0
  %141 = vmatprep.subr.bf16.mxu0 0
  %142 = vmatpush1.bf16.msra.mxu0 0
  %143 = vmatprep.subr.bf16.mxu0 0
  %144 = vmatpush1.bf16.msra.mxu0 0
  %145 = vmatprep.subr.bf16.mxu0 0
  %146 = vmatpush1.bf16.msra.mxu0 0
  %147 = vmatprep.subr.bf16.mxu0 0
  %148 = vmatpush1.bf16.msra.mxu0 0
  %149 = vmatprep.subr.bf16.mxu0 0
  %150 = vmatpush1.bf16.msra.mxu0 0
  %151 = vmatprep.mubr.bf16.mxu0 0
  %152 = vmatmul.mubr.bf16.gmra.mrb[0].mxu0 %v65
  %v153 = vpop.f32.mrb[0].mxu0
  %v154 = vadd.f32 0.0, %v153
  %v155 = vpop.f32.mrb[0].mxu0
  %v156 = vpop.f32.mrb[0].mxu0
  %v157 = vadd.f32 0.0, %v156
  %v158 = vpop.f32.mrb[0].mxu0
  %159 = vmatprep.mubr.bf16.mxu0 0
  %160 = vmatmul.mubr.bf16.gmra.mrb[0].mxu0 %v66
  %v161 = vpop.f32.mrb[0].mxu0
  %v162 = vadd.f32 0.0, %v161
  %v163 = vpop.f32.mrb[0].mxu0
  %v164 = vpop.f32.mrb[0].mxu0
  %v165 = vadd.f32 0.0, %v164
  %v166 = vpop.f32.mrb[0].mxu0
  %167 = vmatprep.mubr.bf16.mxu0 0
  %168 = vmatmul.mubr.bf16.gmra.mrb[0].mxu0 %v67
  %v169 = vpop.f32.mrb[0].mxu0
  %v170 = vadd.f32 0.0, %v169
  %v171 = vpop.f32.mrb[0].mxu0
  %v172 = vpop.f32.mrb[0].mxu0
  %v173 = vadd.f32 0.0, %v172
  %v174 = vpop.f32.mrb[0].mxu0
  %175 = vdwg.mxu0
  %v176 = vadd.f32 %v25, %v154
  %v177 = vadd.f32 %v26, %v157
  %v178 = vadd.f32 %v27, %v162
  %v179 = vadd.f32 %v28, %v165
  %v180 = vadd.f32 %v29, %v170
  %v181 = vadd.f32 %v30, %v173
  %182 = vst [vmem:[#allocation2] sm:$0xff] %v176
  %183 = vst [vmem:[#allocation2 + $0x8] sm:$0xff] %v177
  %184 = vst [vmem:[#allocation2 + $0x10] sm:$0xff] %v178
  %185 = vst [vmem:[#allocation2 + $0x18] sm:$0xff] %v179
  %186 = vst [vmem:[#allocation2 + $0x20] sm:$0xff] %v180
  %187 = vst [vmem:[#allocation2 + $0x28] sm:$0xff] %v181
  // Predicated region
  $region18: #{unet1d_flattening_forward.103} parent=0 // pred_check
    %p188 = pneg %p15
  $region19: #{unet1d_flattening_forward.103} parent=0 // pred_check_branch
    %190 = sbr.rel (%p188) target = $region21
  $region20: #{unet1d_flattening_forward.103} parent=0 // pred_region
    %v191 = vld [vmem:[#allocation2] sm:$0xff]
    %v192 = vld [vmem:[#allocation2 + $0x8] sm:$0xff]
    %v193 = vld [vmem:[#allocation2 + $0x10] sm:$0xff]
    %v194 = vld [vmem:[#allocation2 + $0x18] sm:$0xff]
    %v195 = vld [vmem:[#allocation2 + $0x20] sm:$0xff]
    %v196 = vld [vmem:[#allocation2 + $0x28] sm:$0xff]
    %v197 = vld [vmem:[%s2] sm:$0x1]
    %v199 = vlaneseq
    %v200 = vshrl.u32 %v199, 7
    %v201 = vsub.s32 0, %v200
    %v202 = vrot.slane %v197, %v201
    %v204 = vadd.f32 %v191, %v202
    %v205 = vadd.f32 %v192, %v202
    %v206 = vadd.f32 %v193, %v202
    %v207 = vadd.f32 %v194, %v202
    %v208 = vadd.f32 %v195, %v202
    %v209 = vadd.f32 %v196, %v202
    %210 = vst [vmem:[%s3] sm:$0xff] %v204
    %211 = vst [vmem:[%s3 + $0x8] sm:$0xff] %v205
    %212 = vst [vmem:[%s3 + $0x10] sm:$0xff] %v206
    %213 = vst [vmem:[%s3 + $0x18] sm:$0xff] %v207
    %214 = vst [vmem:[%s3 + $0x20] sm:$0xff] %v208
    %215 = vst [vmem:[%s3 + $0x28] sm:$0xff] %v209
  $region21: #{unet1d_flattening_forward.103} parent=0 // pred_fallthru
    _
  // Predicated region
  $region22: #{unet1d_flattening_forward.103} parent=0 // pred_check
    _
  $region23: #{unet1d_flattening_forward.103} parent=0 // pred_check_branch
    %217 = sbr.rel (0) target = $region25
  $region24: #{unet1d_flattening_forward.103} parent=0 // pred_region
    _
  $region25: #{unet1d_flattening_forward.103} parent=0 // pred_fallthru
    _
  // Predicated region
  $region26: #{unet1d_flattening_forward.103} parent=0 // pred_check
    _
  $region27: #{unet1d_flattening_forward.103} parent=0 // pred_check_branch
    %219 = sbr.rel (0) target = $region29
  $region28: #{unet1d_flattening_forward.103} parent=0 // pred_region
    _
  $region29: #{unet1d_flattening_forward.103} parent=0 // pred_fallthru
    _

// kernel: unet1d_flattening_forward.104
$region0: #{unet1d_flattening_forward.104}
  #allocation0 [shape = 'u32[]', space=smem, size = 0x4, offset = 0x4, fixed_abs, tag = 'smem constant byte address 0x4 - core index']
  #allocation1 [shape = 'u32[144,128]{1,0:T(1,128)}', space=vmem, size = 0x12000, scoped, tag = 'internal scratch']
  #allocation2 [shape = 'f32[8,128]{1,0:T(8,128)}', space=vmem, size = 0x1000, scoped, tag = 'scratch operand']
  %s0 = inlined_call_operand.vmem [shape: bf16[8,128], index: 0, kind: input, shape index: {}]
  %s1 = inlined_call_operand.vmem [shape: bf16[128,128], index: 1, kind: input, shape index: {}]
  %s2 = inlined_call_operand.vmem [shape: f32[1,128], index: 2, kind: input, shape index: {}]
  %s3 = inlined_call_operand.vmem [shape: f32[8,128], index: 3, kind: output, shape index: {}]
  %s4 = sld [smem:[#allocation0]]
  $region30: #{unet1d_flattening_forward.104} parent=0
    _
  %s6 = ssub.s32 1, %s4
  %s7 = scalar_select 0, %s6, %s4
  // Predicated region
  $region2: #{unet1d_flattening_forward.104} parent=0 // pred_check
    _
  $region3: #{unet1d_flattening_forward.104} parent=0 // pred_check_branch
    %9 = sbr.rel (0) target = $region5
  $region4: #{unet1d_flattening_forward.104} parent=0 // pred_region
    _
  $region5: #{unet1d_flattening_forward.104} parent=0 // pred_fallthru
    _
  // Predicated region
  $region6: #{unet1d_flattening_forward.104} parent=0 // pred_check
    _
  $region7: #{unet1d_flattening_forward.104} parent=0 // pred_check_branch
    %11 = sbr.rel (0) target = $region9
  $region8: #{unet1d_flattening_forward.104} parent=0 // pred_region
    _
  $region9: #{unet1d_flattening_forward.104} parent=0 // pred_fallthru
    _
  // Predicated region
  $region10: #{unet1d_flattening_forward.104} parent=0 // pred_check
    _
  $region11: #{unet1d_flattening_forward.104} parent=0 // pred_check_branch
    %13 = sbr.rel (0) target = $region13
  $region12: #{unet1d_flattening_forward.104} parent=0 // pred_region
    _
  $region13: #{unet1d_flattening_forward.104} parent=0 // pred_fallthru
    _
  %p15 = scmp.eq.s32.totalorder 0, 0
  // Predicated region
  $region14: #{unet1d_flattening_forward.104} parent=0 // pred_check
    %p16 = pneg %p15
  $region15: #{unet1d_flattening_forward.104} parent=0 // pred_check_branch
    %18 = sbr.rel (%p16) target = $region17
  $region16: #{unet1d_flattening_forward.104} parent=0 // pred_region
    %19 = vst [vmem:[#allocation2] sm:$0xff] 0.0
  $region17: #{unet1d_flattening_forward.104} parent=0 // pred_fallthru
    _
  %v20 = vld [vmem:[#allocation2] sm:$0xff]
  %v21 = vld [vmem:[%s0] sm:$0xf]
  %v22 = vld [vmem:[%s1] sm:$0xf]
  %v23 = vld [vmem:[%s1 + $0x4] sm:$0xf]
  %v24 = vld [vmem:[%s1 + $0x8] sm:$0xf]
  %v25 = vld [vmem:[%s1 + $0xc] sm:$0xf]
  %v26 = vld [vmem:[%s1 + $0x10] sm:$0xf]
  %v27 = vld [vmem:[%s1 + $0x14] sm:$0xf]
  %v28 = vld [vmem:[%s1 + $0x18] sm:$0xf]
  %v29 = vld [vmem:[%s1 + $0x1c] sm:$0xf]
  %v30 = vld [vmem:[%s1 + $0x20] sm:$0xf]
  %v31 = vld [vmem:[%s1 + $0x24] sm:$0xf]
  %v32 = vld [vmem:[%s1 + $0x28] sm:$0xf]
  %v33 = vld [vmem:[%s1 + $0x2c] sm:$0xf]
  %v34 = vld [vmem:[%s1 + $0x30] sm:$0xf]
  %v35 = vld [vmem:[%s1 + $0x34] sm:$0xf]
  %v36 = vld [vmem:[%s1 + $0x38] sm:$0xf]
  %v37 = vld [vmem:[%s1 + $0x3c] sm:$0xf]
  %v54 = vunpack.c.l.b16 %v22
  %v55 = vunpack.c.l.b16 %v23
  %v56 = vunpack.c.l.b16 %v24
  %v57 = vunpack.c.l.b16 %v25
  %v58 = vunpack.c.l.b16 %v26
  %v59 = vunpack.c.l.b16 %v27
  %v60 = vunpack.c.l.b16 %v28
  %v61 = vunpack.c.l.b16 %v29
  %v62 = vunpack.c.l.b16 %v30
  %v63 = vunpack.c.l.b16 %v31
  %v64 = vunpack.c.l.b16 %v32
  %v65 = vunpack.c.l.b16 %v33
  %v66 = vunpack.c.l.b16 %v34
  %v67 = vunpack.c.l.b16 %v35
  %v68 = vunpack.c.l.b16 %v36
  %v69 = vunpack.c.l.b16 %v37
  %v70 = vpack.c.b16 %v55, %v54
  %v71 = vpack.c.b16 %v57, %v56
  %v72 = vpack.c.b16 %v59, %v58
  %v73 = vpack.c.b16 %v61, %v60
  %v74 = vpack.c.b16 %v63, %v62
  %v75 = vpack.c.b16 %v65, %v64
  %v76 = vpack.c.b16 %v67, %v66
  %v77 = vpack.c.b16 %v69, %v68
  %86 = vmatprep.subr.bf16.mxu0 0
  %87 = vmatpush1.bf16.msra.mxu0 %v70
  %88 = vmatprep.subr.bf16.mxu0 0
  %89 = vmatpush1.bf16.msra.mxu0 %v71
  %90 = vmatprep.subr.bf16.mxu0 0
  %91 = vmatpush1.bf16.msra.mxu0 %v72
  %92 = vmatprep.subr.bf16.mxu0 0
  %93 = vmatpush1.bf16.msra.mxu0 %v73
  %94 = vmatprep.subr.bf16.mxu0 0
  %95 = vmatpush1.bf16.msra.mxu0 %v74
  %96 = vmatprep.subr.bf16.mxu0 0
  %97 = vmatpush1.bf16.msra.mxu0 %v75
  %98 = vmatprep.subr.bf16.mxu0 0
  %99 = vmatpush1.bf16.msra.mxu0 %v76
  %100 = vmatprep.subr.bf16.mxu0 0
  %101 = vmatpush1.bf16.msra.mxu0 %v77
  %102 = vmatprep.subr.bf16.mxu0 0
  %103 = vmatpush1.bf16.msra.mxu0 0
  %104 = vmatprep.subr.bf16.mxu0 0
  %105 = vmatpush1.bf16.msra.mxu0 0
  %106 = vmatprep.subr.bf16.mxu0 0
  %107 = vmatpush1.bf16.msra.mxu0 0
  %108 = vmatprep.subr.bf16.mxu0 0
  %109 = vmatpush1.bf16.msra.mxu0 0
  %110 = vmatprep.subr.bf16.mxu0 0
  %111 = vmatpush1.bf16.msra.mxu0 0
  %112 = vmatprep.subr.bf16.mxu0 0
  %113 = vmatpush1.bf16.msra.mxu0 0
  %114 = vmatprep.subr.bf16.mxu0 0
  %115 = vmatpush1.bf16.msra.mxu0 0
  %116 = vmatprep.subr.bf16.mxu0 0
  %117 = vmatpush1.bf16.msra.mxu0 0
  %118 = vmatprep.mubr.bf16.mxu0 0
  %119 = vmatmul.mubr.bf16.gmra.mrb[0].mxu0 %v21
  %v120 = vpop.f32.mrb[0].mxu0
  %v121 = vadd.f32 0.0, %v120
  %v122 = vpop.f32.mrb[0].mxu0
  %v123 = vpop.f32.mrb[0].mxu0
  %v124 = vpop.f32.mrb[0].mxu0
  %125 = vdwg.mxu0
  %v126 = vadd.f32 %v20, %v121
  %127 = vst [vmem:[#allocation2] sm:$0xff] %v126
  // Predicated region
  $region18: #{unet1d_flattening_forward.104} parent=0 // pred_check
    %p128 = pneg %p15
  $region19: #{unet1d_flattening_forward.104} parent=0 // pred_check_branch
    %130 = sbr.rel (%p128) target = $region21
  $region20: #{unet1d_flattening_forward.104} parent=0 // pred_region
    %v131 = vld [vmem:[#allocation2] sm:$0xff]
    %v132 = vld [vmem:[%s2] sm:$0x1]
    %v134 = vlaneseq
    %v135 = vshrl.u32 %v134, 7
    %v136 = vsub.s32 0, %v135
    %v137 = vrot.slane %v132, %v136
    %v139 = vadd.f32 %v131, %v137
    %140 = vst [vmem:[%s3] sm:$0xff] %v139
  $region21: #{unet1d_flattening_forward.104} parent=0 // pred_fallthru
    _
  // Predicated region
  $region22: #{unet1d_flattening_forward.104} parent=0 // pred_check
    _
  $region23: #{unet1d_flattening_forward.104} parent=0 // pred_check_branch
    %142 = sbr.rel (0) target = $region25
  $region24: #{unet1d_flattening_forward.104} parent=0 // pred_region
    _
  $region25: #{unet1d_flattening_forward.104} parent=0 // pred_fallthru
    _
  // Predicated region
  $region26: #{unet1d_flattening_forward.104} parent=0 // pred_check
    _
  $region27: #{unet1d_flattening_forward.104} parent=0 // pred_check_branch
    %144 = sbr.rel (0) target = $region29
  $region28: #{unet1d_flattening_forward.104} parent=0 // pred_region
    _
  $region29: #{unet1d_flattening_forward.104} parent=0 // pred_fallthru
    _

// kernel: unet1d_flattening_forward.108
$region0: #{unet1d_flattening_forward.108}
  #allocation0 [shape = 'u32[]', space=smem, size = 0x4, offset = 0x4, fixed_abs, tag = 'smem constant byte address 0x4 - core index']
  #allocation1 [shape = 'u32[144,128]{1,0:T(1,128)}', space=vmem, size = 0x12000, scoped, tag = 'internal scratch']
  #allocation2 [shape = 'f32[8,128]{1,0:T(8,128)}', space=vmem, size = 0x1000, scoped, tag = 'scratch operand']
  %s0 = inlined_call_operand.vmem [shape: bf16[8,256], index: 0, kind: input, shape index: {}]
  %s1 = inlined_call_operand.vmem [shape: bf16[256,128], index: 1, kind: input, shape index: {}]
  %s2 = inlined_call_operand.vmem [shape: f32[1,128], index: 2, kind: input, shape index: {}]
  %s3 = inlined_call_operand.vmem [shape: f32[8,128], index: 3, kind: output, shape index: {}]
  %s4 = sld [smem:[#allocation0]]
  $region30: #{unet1d_flattening_forward.108} parent=0
    _
  %s6 = ssub.s32 1, %s4
  %s7 = scalar_select 0, %s6, %s4
  // Predicated region
  $region2: #{unet1d_flattening_forward.108} parent=0 // pred_check
    _
  $region3: #{unet1d_flattening_forward.108} parent=0 // pred_check_branch
    %9 = sbr.rel (0) target = $region5
  $region4: #{unet1d_flattening_forward.108} parent=0 // pred_region
    _
  $region5: #{unet1d_flattening_forward.108} parent=0 // pred_fallthru
    _
  // Predicated region
  $region6: #{unet1d_flattening_forward.108} parent=0 // pred_check
    _
  $region7: #{unet1d_flattening_forward.108} parent=0 // pred_check_branch
    %11 = sbr.rel (0) target = $region9
  $region8: #{unet1d_flattening_forward.108} parent=0 // pred_region
    _
  $region9: #{unet1d_flattening_forward.108} parent=0 // pred_fallthru
    _
  // Predicated region
  $region10: #{unet1d_flattening_forward.108} parent=0 // pred_check
    _
  $region11: #{unet1d_flattening_forward.108} parent=0 // pred_check_branch
    %13 = sbr.rel (0) target = $region13
  $region12: #{unet1d_flattening_forward.108} parent=0 // pred_region
    _
  $region13: #{unet1d_flattening_forward.108} parent=0 // pred_fallthru
    _
  %p15 = scmp.eq.s32.totalorder 0, 0
  // Predicated region
  $region14: #{unet1d_flattening_forward.108} parent=0 // pred_check
    %p16 = pneg %p15
  $region15: #{unet1d_flattening_forward.108} parent=0 // pred_check_branch
    %18 = sbr.rel (%p16) target = $region17
  $region16: #{unet1d_flattening_forward.108} parent=0 // pred_region
    %19 = vst [vmem:[#allocation2] sm:$0xff] 0.0
  $region17: #{unet1d_flattening_forward.108} parent=0 // pred_fallthru
    _
  %v20 = vld [vmem:[#allocation2] sm:$0xff]
  %v21 = vld [vmem:[%s0] sm:$0xff]
  %v22 = vld [vmem:[%s1] sm:$0xf]
  %v23 = vld [vmem:[%s1 + $0x4] sm:$0xf]
  %v24 = vld [vmem:[%s1 + $0x8] sm:$0xf]
  %v25 = vld [vmem:[%s1 + $0xc] sm:$0xf]
  %v26 = vld [vmem:[%s1 + $0x10] sm:$0xf]
  %v27 = vld [vmem:[%s1 + $0x14] sm:$0xf]
  %v28 = vld [vmem:[%s1 + $0x18] sm:$0xf]
  %v29 = vld [vmem:[%s1 + $0x1c] sm:$0xf]
  %v30 = vld [vmem:[%s1 + $0x20] sm:$0xf]
  %v31 = vld [vmem:[%s1 + $0x24] sm:$0xf]
  %v32 = vld [vmem:[%s1 + $0x28] sm:$0xf]
  %v33 = vld [vmem:[%s1 + $0x2c] sm:$0xf]
  %v34 = vld [vmem:[%s1 + $0x30] sm:$0xf]
  %v35 = vld [vmem:[%s1 + $0x34] sm:$0xf]
  %v36 = vld [vmem:[%s1 + $0x38] sm:$0xf]
  %v37 = vld [vmem:[%s1 + $0x3c] sm:$0xf]
  %v38 = vld [vmem:[%s1 + $0x40] sm:$0xf]
  %v39 = vld [vmem:[%s1 + $0x44] sm:$0xf]
  %v40 = vld [vmem:[%s1 + $0x48] sm:$0xf]
  %v41 = vld [vmem:[%s1 + $0x4c] sm:$0xf]
  %v42 = vld [vmem:[%s1 + $0x50] sm:$0xf]
  %v43 = vld [vmem:[%s1 + $0x54] sm:$0xf]
  %v44 = vld [vmem:[%s1 + $0x58] sm:$0xf]
  %v45 = vld [vmem:[%s1 + $0x5c] sm:$0xf]
  %v46 = vld [vmem:[%s1 + $0x60] sm:$0xf]
  %v47 = vld [vmem:[%s1 + $0x64] sm:$0xf]
  %v48 = vld [vmem:[%s1 + $0x68] sm:$0xf]
  %v49 = vld [vmem:[%s1 + $0x6c] sm:$0xf]
  %v50 = vld [vmem:[%s1 + $0x70] sm:$0xf]
  %v51 = vld [vmem:[%s1 + $0x74] sm:$0xf]
  %v52 = vld [vmem:[%s1 + $0x78] sm:$0xf]
  %v53 = vld [vmem:[%s1 + $0x7c] sm:$0xf]
  %v55 = vunpack.c.l.b16 %v21
  %v56 = vunpack.c.h.b16 %v21
  %v57 = vpack.c.b16 %v55, %v55
  %v58 = vpack.c.b16 %v56, %v56
  %v93 = vunpack.c.l.b16 %v22
  %v94 = vunpack.c.l.b16 %v23
  %v95 = vunpack.c.l.b16 %v24
  %v96 = vunpack.c.l.b16 %v25
  %v97 = vunpack.c.l.b16 %v26
  %v98 = vunpack.c.l.b16 %v27
  %v99 = vunpack.c.l.b16 %v28
  %v100 = vunpack.c.l.b16 %v29
  %v101 = vunpack.c.l.b16 %v30
  %v102 = vunpack.c.l.b16 %v31
  %v103 = vunpack.c.l.b16 %v32
  %v104 = vunpack.c.l.b16 %v33
  %v105 = vunpack.c.l.b16 %v34
  %v106 = vunpack.c.l.b16 %v35
  %v107 = vunpack.c.l.b16 %v36
  %v108 = vunpack.c.l.b16 %v37
  %v109 = vunpack.c.l.b16 %v38
  %v110 = vunpack.c.l.b16 %v39
  %v111 = vunpack.c.l.b16 %v40
  %v112 = vunpack.c.l.b16 %v41
  %v113 = vunpack.c.l.b16 %v42
  %v114 = vunpack.c.l.b16 %v43
  %v115 = vunpack.c.l.b16 %v44
  %v116 = vunpack.c.l.b16 %v45
  %v117 = vunpack.c.l.b16 %v46
  %v118 = vunpack.c.l.b16 %v47
  %v119 = vunpack.c.l.b16 %v48
  %v120 = vunpack.c.l.b16 %v49
  %v121 = vunpack.c.l.b16 %v50
  %v122 = vunpack.c.l.b16 %v51
  %v123 = vunpack.c.l.b16 %v52
  %v124 = vunpack.c.l.b16 %v53
  %v125 = vpack.c.b16 %v94, %v93
  %v126 = vpack.c.b16 %v96, %v95
  %v127 = vpack.c.b16 %v98, %v97
  %v128 = vpack.c.b16 %v100, %v99
  %v129 = vpack.c.b16 %v102, %v101
  %v130 = vpack.c.b16 %v104, %v103
  %v131 = vpack.c.b16 %v106, %v105
  %v132 = vpack.c.b16 %v108, %v107
  %v133 = vpack.c.b16 %v110, %v109
  %v134 = vpack.c.b16 %v112, %v111
  %v135 = vpack.c.b16 %v114, %v113
  %v136 = vpack.c.b16 %v116, %v115
  %v137 = vpack.c.b16 %v118, %v117
  %v138 = vpack.c.b16 %v120, %v119
  %v139 = vpack.c.b16 %v122, %v121
  %v140 = vpack.c.b16 %v124, %v123
  %157 = vmatprep.subr.bf16.mxu0 0
  %158 = vmatpush1.bf16.msra.mxu0 %v125
  %159 = vmatprep.subr.bf16.mxu0 0
  %160 = vmatpush1.bf16.msra.mxu0 %v126
  %161 = vmatprep.subr.bf16.mxu0 0
  %162 = vmatpush1.bf16.msra.mxu0 %v127
  %163 = vmatprep.subr.bf16.mxu0 0
  %164 = vmatpush1.bf16.msra.mxu0 %v128
  %165 = vmatprep.subr.bf16.mxu0 0
  %166 = vmatpush1.bf16.msra.mxu0 %v129
  %167 = vmatprep.subr.bf16.mxu0 0
  %168 = vmatpush1.bf16.msra.mxu0 %v130
  %169 = vmatprep.subr.bf16.mxu0 0
  %170 = vmatpush1.bf16.msra.mxu0 %v131
  %171 = vmatprep.subr.bf16.mxu0 0
  %172 = vmatpush1.bf16.msra.mxu0 %v132
  %173 = vmatprep.subr.bf16.mxu0 0
  %174 = vmatpush1.bf16.msra.mxu0 %v133
  %175 = vmatprep.subr.bf16.mxu0 0
  %176 = vmatpush1.bf16.msra.mxu0 %v134
  %177 = vmatprep.subr.bf16.mxu0 0
  %178 = vmatpush1.bf16.msra.mxu0 %v135
  %179 = vmatprep.subr.bf16.mxu0 0
  %180 = vmatpush1.bf16.msra.mxu0 %v136
  %181 = vmatprep.subr.bf16.mxu0 0
  %182 = vmatpush1.bf16.msra.mxu0 %v137
  %183 = vmatprep.subr.bf16.mxu0 0
  %184 = vmatpush1.bf16.msra.mxu0 %v138
  %185 = vmatprep.subr.bf16.mxu0 0
  %186 = vmatpush1.bf16.msra.mxu0 %v139
  %187 = vmatprep.subr.bf16.mxu0 0
  %188 = vmatpush1.bf16.msra.mxu0 %v140
  %189 = vmatprep.mubr.bf16.mxu0 %v58
  %190 = vmatmul.mubr.bf16.gmra.mrb[0].mxu0 %v57
  %v191 = vpop.f32.mrb[0].mxu0
  %v192 = vadd.f32 0.0, %v191
  %v193 = vpop.f32.mrb[0].mxu0
  %v194 = vpop.f32.mrb[0].mxu0
  %v195 = vpop.f32.mrb[0].mxu0
  %196 = vdwg.mxu0
  %v197 = vadd.f32 %v20, %v192
  %198 = vst [vmem:[#allocation2] sm:$0xff] %v197
  // Predicated region
  $region18: #{unet1d_flattening_forward.108} parent=0 // pred_check
    %p199 = pneg %p15
  $region19: #{unet1d_flattening_forward.108} parent=0 // pred_check_branch
    %201 = sbr.rel (%p199) target = $region21
  $region20: #{unet1d_flattening_forward.108} parent=0 // pred_region
    %v202 = vld [vmem:[#allocation2] sm:$0xff]
    %v203 = vld [vmem:[%s2] sm:$0x1]
    %v205 = vlaneseq
    %v206 = vshrl.u32 %v205, 7
    %v207 = vsub.s32 0, %v206
    %v208 = vrot.slane %v203, %v207
    %v210 = vadd.f32 %v202, %v208
    %211 = vst [vmem:[%s3] sm:$0xff] %v210
  $region21: #{unet1d_flattening_forward.108} parent=0 // pred_fallthru
    _
  // Predicated region
  $region22: #{unet1d_flattening_forward.108} parent=0 // pred_check
    _
  $region23: #{unet1d_flattening_forward.108} parent=0 // pred_check_branch
    %213 = sbr.rel (0) target = $region25
  $region24: #{unet1d_flattening_forward.108} parent=0 // pred_region
    _
  $region25: #{unet1d_flattening_forward.108} parent=0 // pred_fallthru
    _
  // Predicated region
  $region26: #{unet1d_flattening_forward.108} parent=0 // pred_check
    _
  $region27: #{unet1d_flattening_forward.108} parent=0 // pred_check_branch
    %215 = sbr.rel (0) target = $region29
  $region28: #{unet1d_flattening_forward.108} parent=0 // pred_region
    _
  $region29: #{unet1d_flattening_forward.108} parent=0 // pred_fallthru
    _

// kernel: unet1d_flattening_forward.114
$region0: #{unet1d_flattening_forward.114}
  #allocation0 [shape = 'u32[]', space=smem, size = 0x4, offset = 0x4, fixed_abs, tag = 'smem constant byte address 0x4 - core index']
  #allocation1 [shape = 'u32[144,128]{1,0:T(1,128)}', space=vmem, size = 0x12000, scoped, tag = 'internal scratch']
  #allocation2 [shape = 'f32[48,128]{1,0:T(8,128)}', space=vmem, size = 0x6000, scoped, tag = 'scratch operand']
  %s0 = inlined_call_operand.vmem [shape: bf16[48,128], index: 0, kind: input, shape index: {}]
  %s1 = inlined_call_operand.vmem [shape: bf16[128,384], index: 1, kind: input, shape index: {}]
  %s2 = inlined_call_operand.vmem [shape: f32[1,384], index: 2, kind: input, shape index: {}]
  %s3 = inlined_call_operand.vmem [shape: f32[48,384], index: 3, kind: output, shape index: {}]
  %s4 = sld [smem:[#allocation0]]
  $region128: #{unet1d_flattening_forward.114} parent=0
    _
  %s6 = ssub.s32 1, %s4
  %s7 = scalar_select 0, %s6, %s4
  $region1: #{unet1d_flattening_forward.114} parent=0
    #allocation3 [shape = 'u8[65536]{0}', space=vmem, size = 0x10000, scoped, tag = 'input window, operand 1']
    #allocation4 [shape = 'u8[49152]{0}', space=vmem, size = 0xc000, scoped, tag = 'output window, operand 0']
    loop: start=0, step=1, limit=5
    $region2: #{unet1d_flattening_forward.114} parent=1 // loop_pre_header
      _
    $region3: #{unet1d_flattening_forward.114} parent=1 // loop_header
      %s9 = sphi 0, %s13
      %p10 = scmp.ge.s32.totalorder %s9, 5
      %s16 = sphi 0, %s35
      %s17 = sphi 0, %s31
      %s18 = sphi 0, %s27
      %s19 = sphi 0, %s16
      %s20 = sphi 0, %s17
      %s21 = sphi 0, %s18
      %s22 = sphi 0, %s19
      %s23 = sphi 0, %s20
      %s24 = sphi 0, %s21
      %s40 = sphi 0, %s42
      %s43 = sphi 0, %s40
      %s44 = sphi 0, %s43
      %s60 = sphi 0, %s44
      %s68 = sphi 0, %s70
      %s71 = sphi 0, %s68
      %s72 = sphi 0, %s71
      %s88 = sphi 0, %s72
      %s94 = sphi 0, %s96
      %s97 = sphi 0, %s94
      %s98 = sphi 0, %s97
      %s114 = sphi 0, %s98
      %s122 = sphi 0, %s124
      %s125 = sphi 0, %s122
      %s126 = sphi 0, %s125
      %s142 = sphi 0, %s126
    $region4: #{unet1d_flattening_forward.114} parent=1 // loop_header_branch
      %12 = sbr.rel (%p10) target = $region8
    $region5: #{unet1d_flattening_forward.114} parent=1 // loop_body
      %s14 = ssub.s32 %s9, 1
      %s15 = ssub.s32 %s9, 2
      %s25 = sadd.s32 1, %s18
      %p26 = scmp.ge.s32.totalorder %s25, 1
      %s27 = scalar_select %p26, 0, %s25
      %s28 = sadd.s32 1, %s17
      %s29 = scalar_select %p26, %s28, %s17
      %p30 = scmp.ge.s32.totalorder %s29, 3
      %s31 = scalar_select %p30, 0, %s29
      %s32 = sadd.s32 1, %s16
      %s33 = scalar_select %p30, %s32, %s16
      %p34 = scmp.ge.s32.totalorder %s33, 1
      %s35 = scalar_select %p34, 0, %s33
      %s36 = ssub.s32 %s16, %s35
      %s37 = ssub.s32 %s18, %s27
      %s38 = sor.u32 %s36, %s37
      %p39 = scmp.eq.s32.totalorder %s38, 0
      %s41 = sadd.s32 %s40, 1
      %s42 = scalar_select %p39, %s40, %s41
      %p45 = pneg %p39
      %p46 = scmp.eq.s32.totalorder %s9, 2
      %p47 = por %p45, %p46
      %p48 = scmp.ne.s32.totalorder %s40, %s43
      %p49 = scmp.eq.s32.totalorder %s9, 0
      %p50 = por %p48, %p49
      %p51 = scmp.ne.s32.totalorder %s40, %s43
      %p52 = scmp.eq.s32.totalorder %s14, 2
      %p53 = por %p51, %p52
      %p54 = scmp.ne.s32.totalorder %s43, %s44
      %p55 = scmp.eq.s32.totalorder %s14, 0
      %p56 = por %p54, %p55
      %p57 = scmp.ne.s32.totalorder %s43, %s44
      %p58 = scmp.eq.s32.totalorder %s15, 2
      %p59 = por %p57, %p58
      %p61 = scmp.ne.s32.totalorder %s44, %s60
      %p62 = scmp.eq.s32.totalorder %s15, 0
      %p63 = por %p61, %p62
      %s64 = ssub.s32 %s18, %s27
      %s65 = ssub.s32 %s17, %s31
      %s66 = sor.u32 %s64, %s65
      %p67 = scmp.eq.s32.totalorder %s66, 0
      %s69 = sadd.s32 %s68, 1
      %s70 = scalar_select %p67, %s68, %s69
      %p73 = pneg %p67
      %p74 = scmp.eq.s32.totalorder %s9, 2
      %p75 = por %p73, %p74
      %p76 = scmp.ne.s32.totalorder %s68, %s71
      %p77 = scmp.eq.s32.totalorder %s9, 0
      %p78 = por %p76, %p77
      %p79 = scmp.ne.s32.totalorder %s68, %s71
      %p80 = scmp.eq.s32.totalorder %s14, 2
      %p81 = por %p79, %p80
      %p82 = scmp.ne.s32.totalorder %s71, %s72
      %p83 = scmp.eq.s32.totalorder %s14, 0
      %p84 = por %p82, %p83
      %p85 = scmp.ne.s32.totalorder %s71, %s72
      %p86 = scmp.eq.s32.totalorder %s15, 2
      %p87 = por %p85, %p86
      %p89 = scmp.ne.s32.totalorder %s72, %s88
      %p90 = scmp.eq.s32.totalorder %s15, 0
      %p91 = por %p89, %p90
      %s92 = ssub.s32 %s17, %s31
      %p93 = scmp.eq.s32.totalorder %s92, 0
      %s95 = sadd.s32 %s94, 1
      %s96 = scalar_select %p93, %s94, %s95
      %p99 = pneg %p93
      %p100 = scmp.eq.s32.totalorder %s9, 2
      %p101 = por %p99, %p100
      %p102 = scmp.ne.s32.totalorder %s94, %s97
      %p103 = scmp.eq.s32.totalorder %s9, 0
      %p104 = por %p102, %p103
      %p105 = scmp.ne.s32.totalorder %s94, %s97
      %p106 = scmp.eq.s32.totalorder %s14, 2
      %p107 = por %p105, %p106
      %p108 = scmp.ne.s32.totalorder %s97, %s98
      %p109 = scmp.eq.s32.totalorder %s14, 0
      %p110 = por %p108, %p109
      %p111 = scmp.ne.s32.totalorder %s97, %s98
      %p112 = scmp.eq.s32.totalorder %s15, 2
      %p113 = por %p111, %p112
      %p115 = scmp.ne.s32.totalorder %s98, %s114
      %p116 = scmp.eq.s32.totalorder %s15, 0
      %p117 = por %p115, %p116
      %s118 = ssub.s32 %s16, %s35
      %s119 = ssub.s32 %s17, %s31
      %s120 = sor.u32 %s118, %s119
      %p121 = scmp.eq.s32.totalorder %s120, 0
      %s123 = sadd.s32 %s122, 1
      %s124 = scalar_select %p121, %s122, %s123
      %p127 = pneg %p121
      %p128 = scmp.eq.s32.totalorder %s9, 2
      %p129 = por %p127, %p128
      %p130 = scmp.ne.s32.totalorder %s122, %s125
      %p131 = scmp.eq.s32.totalorder %s9, 0
      %p132 = por %p130, %p131
      %p133 = scmp.ne.s32.totalorder %s122, %s125
      %p134 = scmp.eq.s32.totalorder %s14, 2
      %p135 = por %p133, %p134
      %p136 = scmp.ne.s32.totalorder %s125, %s126
      %p137 = scmp.eq.s32.totalorder %s14, 0
      %p138 = por %p136, %p137
      %p139 = scmp.ne.s32.totalorder %s125, %s126
      %p140 = scmp.eq.s32.totalorder %s15, 2
      %p141 = por %p139, %p140
      %p143 = scmp.ne.s32.totalorder %s126, %s142
      %p144 = scmp.eq.s32.totalorder %s15, 0
      %p145 = por %p143, %p144
      %p146 = scmp.le.s32.totalorder 1, %s9
      %p147 = scmp.lt.s32.totalorder %s9, 4
      %p148 = pnand %p146, %p147
      %p149 = pneg %p148
      // Predicated region
      $region9: #{unet1d_flattening_forward.114} parent=5 // pred_check
        _
      $region10: #{unet1d_flattening_forward.114} parent=5 // pred_check_branch
        %151 = sbr.rel (%p148) target = $region12
      $region11: #{unet1d_flattening_forward.114} parent=5 // pred_region
        %s152 = ssub.s32 %s9, 1
        // Predicated region
        $region13: #{unet1d_flattening_forward.114} parent=11 // pred_check
          %p153 = pneg %p56
        $region14: #{unet1d_flattening_forward.114} parent=11 // pred_check_branch
          %155 = sbr.rel (%p153) target = $region16
        $region15: #{unet1d_flattening_forward.114} parent=11 // pred_region
          %s156 = smul.u32 6, %s19
          %p157 = scmp.lt.s32.totalorder %s156, 5
          %s158 = scalar_select %p157, %s156, 5
          %p159 = scmp.lt.s32.totalorder %s21, 0
          %s160 = scalar_select %p159, %s21, 0
          %s161 = sadd.s32 %s160, %s158
          %s162 = smul.addr %s161, 4
          %s163 = scalar_lea.vmem %s0, %s162
          %s164 = smul.u32 6, %s19
        $region16: #{unet1d_flattening_forward.114} parent=11 // pred_fallthru
          _
      $region12: #{unet1d_flattening_forward.114} parent=5 // pred_fallthru
        _
      %p165 = scmp.lt.s32.totalorder %s9, 3
      // Predicated region
      $region17: #{unet1d_flattening_forward.114} parent=5 // pred_check
        %p166 = pneg %p165
      $region18: #{unet1d_flattening_forward.114} parent=5 // pred_check_branch
        %168 = sbr.rel (%p166) target = $region20
      $region19: #{unet1d_flattening_forward.114} parent=5 // pred_region
        // Predicated region
        $region21: #{unet1d_flattening_forward.114} parent=19 // pred_check
          %p169 = pneg %p78
        $region22: #{unet1d_flattening_forward.114} parent=19 // pred_check_branch
          %171 = sbr.rel (%p169) target = $region24
        $region23: #{unet1d_flattening_forward.114} parent=19 // pred_region
          %s172 = sand.u32 %s68, 1
          %s173 = sand.u32 %s68, 1
          %s174 = smul.addr %s173, 64
          %s175 = scalar_lea.vmem [#allocation3], %s174
          %s176 = smul.u32 16, %s18
          %s177 = smul.addr %s176, 3
          %s178 = sadd.s32 %s17, %s177
          %s179 = smul.addr %s178, 4
          %s180 = scalar_lea.vmem %s1, %s179
          // Predicated region
          $region25: #{unet1d_flattening_forward.114} parent=23 // pred_check
            _
          $region26: #{unet1d_flattening_forward.114} parent=23 // pred_check_branch
            %182 = sbr.rel (0) target = $region28
          $region27: #{unet1d_flattening_forward.114} parent=23 // pred_region
            // Predicated region
            $region29: #{unet1d_flattening_forward.114} parent=27 // pred_check
              _
            $region30: #{unet1d_flattening_forward.114} parent=27 // pred_check_branch
              %184 = sbr.rel target = $region32
            $region31: #{unet1d_flattening_forward.114} parent=27 // pred_region
              // Predicated region
              $region44: #{unet1d_flattening_forward.114} parent=31 // pred_check
                _
              $region45: #{unet1d_flattening_forward.114} parent=31 // pred_check_branch
                %229 = sbr.rel (0) target = $region47
              $region46: #{unet1d_flattening_forward.114} parent=31 // pred_region
                loop: start=0, step=1, limit=1
                $region48: #{unet1d_flattening_forward.114} parent=46 // loop_pre_header
                  _
                $region49: #{unet1d_flattening_forward.114} parent=46 // loop_header
                  %s231 = sphi 0, %s235
                  %p232 = scmp.ge.s32.totalorder %s231, 1
                  %s236 = sphi %s180, %s180
                  %s237 = sphi %s175, %s175
                $region50: #{unet1d_flattening_forward.114} parent=46 // loop_header_branch
                  %234 = sbr.rel (%p232) target = $region54
                $region51: #{unet1d_flattening_forward.114} parent=46 // loop_body
                  _
                $region52: #{unet1d_flattening_forward.114} parent=46 // loop_footer
                  %s235 = sadd.s32 1, %s231
                $region53: #{unet1d_flattening_forward.114} parent=46 // loop_footer_branch
                  %230 = sbr.rel target = $region49
                $region54: #{unet1d_flattening_forward.114} parent=46 // loop_exit
                  _
                loop: start=0, step=1, limit=1
                $region55: #{unet1d_flattening_forward.114} parent=46 // loop_pre_header
                  _
                $region56: #{unet1d_flattening_forward.114} parent=46 // loop_header
                  %s240 = sphi 0, %s244
                  %p241 = scmp.ge.s32.totalorder %s240, 1
                  %s245 = sphi %s180, %s180
                  %s246 = sphi %s175, %s175
                $region57: #{unet1d_flattening_forward.114} parent=46 // loop_header_branch
                  %243 = sbr.rel (%p241) target = $region61
                $region58: #{unet1d_flattening_forward.114} parent=46 // loop_body
                  %v247 = vld [vmem:[%s245] sm:$0xf]
                  %248 = vst [vmem:[%s246] sm:$0xf] %v247
                  %v249 = vld [vmem:[%s245 + $0xc] sm:$0xf]
                  %250 = vst [vmem:[%s246 + $0x4] sm:$0xf] %v249
                  %v251 = vld [vmem:[%s245 + $0x18] sm:$0xf]
                  %252 = vst [vmem:[%s246 + $0x8] sm:$0xf] %v251
                  %v253 = vld [vmem:[%s245 + $0x24] sm:$0xf]
                  %254 = vst [vmem:[%s246 + $0xc] sm:$0xf] %v253
                  %v255 = vld [vmem:[%s245 + $0x30] sm:$0xf]
                  %256 = vst [vmem:[%s246 + $0x10] sm:$0xf] %v255
                  %v257 = vld [vmem:[%s245 + $0x3c] sm:$0xf]
                  %258 = vst [vmem:[%s246 + $0x14] sm:$0xf] %v257
                  %v259 = vld [vmem:[%s245 + $0x48] sm:$0xf]
                  %260 = vst [vmem:[%s246 + $0x18] sm:$0xf] %v259
                  %v261 = vld [vmem:[%s245 + $0x54] sm:$0xf]
                  %262 = vst [vmem:[%s246 + $0x1c] sm:$0xf] %v261
                  %v263 = vld [vmem:[%s245 + $0x60] sm:$0xf]
                  %264 = vst [vmem:[%s246 + $0x20] sm:$0xf] %v263
                  %v265 = vld [vmem:[%s245 + $0x6c] sm:$0xf]
                  %266 = vst [vmem:[%s246 + $0x24] sm:$0xf] %v265
                  %v267 = vld [vmem:[%s245 + $0x78] sm:$0xf]
                  %268 = vst [vmem:[%s246 + $0x28] sm:$0xf] %v267
                  %v269 = vld [vmem:[%s245 + $0x84] sm:$0xf]
                  %270 = vst [vmem:[%s246 + $0x2c] sm:$0xf] %v269
                  %v271 = vld [vmem:[%s245 + $0x90] sm:$0xf]
                  %272 = vst [vmem:[%s246 + $0x30] sm:$0xf] %v271
                  %v273 = vld [vmem:[%s245 + $0x9c] sm:$0xf]
                  %274 = vst [vmem:[%s246 + $0x34] sm:$0xf] %v273
                  %v275 = vld [vmem:[%s245 + $0xa8] sm:$0xf]
                  %276 = vst [vmem:[%s246 + $0x38] sm:$0xf] %v275
                  %v277 = vld [vmem:[%s245 + $0xb4] sm:$0xf]
                  %278 = vst [vmem:[%s246 + $0x3c] sm:$0xf] %v277
                $region59: #{unet1d_flattening_forward.114} parent=46 // loop_footer
                  %s244 = sadd.s32 1, %s240
                $region60: #{unet1d_flattening_forward.114} parent=46 // loop_footer_branch
                  %239 = sbr.rel target = $region56
                $region61: #{unet1d_flattening_forward.114} parent=46 // loop_exit
                  _
              $region47: #{unet1d_flattening_forward.114} parent=31 // pred_fallthru
                _
            $region32: #{unet1d_flattening_forward.114} parent=27 // pred_fallthru
              _
            // Predicated region
            $region33: #{unet1d_flattening_forward.114} parent=27 // pred_check
              _
            $region34: #{unet1d_flattening_forward.114} parent=27 // pred_check_branch
              %186 = sbr.rel (0) target = $region36
            $region35: #{unet1d_flattening_forward.114} parent=27 // pred_region
              loop: start=0, step=1, limit=1
              $region37: #{unet1d_flattening_forward.114} parent=35 // loop_pre_header
                _
              $region38: #{unet1d_flattening_forward.114} parent=35 // loop_header
                %s189 = sphi 0, %s193
                %p190 = scmp.ge.s32.totalorder %s189, 1
                %s194 = sphi %s180, %s180
                %s195 = sphi %s175, %s175
              $region39: #{unet1d_flattening_forward.114} parent=35 // loop_header_branch
                %192 = sbr.rel (%p190) target = $region43
              $region40: #{unet1d_flattening_forward.114} parent=35 // loop_body
                %v196 = vld [vmem:[%s194] sm:$0xf]
                %197 = vst [vmem:[%s195] sm:$0xf] %v196
                %v198 = vld [vmem:[%s194 + $0xc] sm:$0xf]
                %199 = vst [vmem:[%s195 + $0x4] sm:$0xf] %v198
                %v200 = vld [vmem:[%s194 + $0x18] sm:$0xf]
                %201 = vst [vmem:[%s195 + $0x8] sm:$0xf] %v200
                %v202 = vld [vmem:[%s194 + $0x24] sm:$0xf]
                %203 = vst [vmem:[%s195 + $0xc] sm:$0xf] %v202
                %v204 = vld [vmem:[%s194 + $0x30] sm:$0xf]
                %205 = vst [vmem:[%s195 + $0x10] sm:$0xf] %v204
                %v206 = vld [vmem:[%s194 + $0x3c] sm:$0xf]
                %207 = vst [vmem:[%s195 + $0x14] sm:$0xf] %v206
                %v208 = vld [vmem:[%s194 + $0x48] sm:$0xf]
                %209 = vst [vmem:[%s195 + $0x18] sm:$0xf] %v208
                %v210 = vld [vmem:[%s194 + $0x54] sm:$0xf]
                %211 = vst [vmem:[%s195 + $0x1c] sm:$0xf] %v210
                %v212 = vld [vmem:[%s194 + $0x60] sm:$0xf]
                %213 = vst [vmem:[%s195 + $0x20] sm:$0xf] %v212
                %v214 = vld [vmem:[%s194 + $0x6c] sm:$0xf]
                %215 = vst [vmem:[%s195 + $0x24] sm:$0xf] %v214
                %v216 = vld [vmem:[%s194 + $0x78] sm:$0xf]
                %217 = vst [vmem:[%s195 + $0x28] sm:$0xf] %v216
                %v218 = vld [vmem:[%s194 + $0x84] sm:$0xf]
                %219 = vst [vmem:[%s195 + $0x2c] sm:$0xf] %v218
                %v220 = vld [vmem:[%s194 + $0x90] sm:$0xf]
                %221 = vst [vmem:[%s195 + $0x30] sm:$0xf] %v220
                %v222 = vld [vmem:[%s194 + $0x9c] sm:$0xf]
                %223 = vst [vmem:[%s195 + $0x34] sm:$0xf] %v222
                %v224 = vld [vmem:[%s194 + $0xa8] sm:$0xf]
                %225 = vst [vmem:[%s195 + $0x38] sm:$0xf] %v224
                %v226 = vld [vmem:[%s194 + $0xb4] sm:$0xf]
                %227 = vst [vmem:[%s195 + $0x3c] sm:$0xf] %v226
              $region41: #{unet1d_flattening_forward.114} parent=35 // loop_footer
                %s193 = sadd.s32 1, %s189
              $region42: #{unet1d_flattening_forward.114} parent=35 // loop_footer_branch
                %188 = sbr.rel target = $region38
              $region43: #{unet1d_flattening_forward.114} parent=35 // loop_exit
                _
            $region36: #{unet1d_flattening_forward.114} parent=27 // pred_fallthru
              _
          $region28: #{unet1d_flattening_forward.114} parent=23 // pred_fallthru
            _
          %279 = vnop
        $region24: #{unet1d_flattening_forward.114} parent=19 // pred_fallthru
          _
        // Predicated region
        $region62: #{unet1d_flattening_forward.114} parent=19 // pred_check
          %p280 = pneg %p104
        $region63: #{unet1d_flattening_forward.114} parent=19 // pred_check_branch
          %282 = sbr.rel (%p280) target = $region65
        $region64: #{unet1d_flattening_forward.114} parent=19 // pred_region
          %p283 = scmp.lt.s32.totalorder %s17, 2
          %s284 = scalar_select %p283, %s17, 2
          %s285 = scalar_lea.vmem %s2, %s284
        $region65: #{unet1d_flattening_forward.114} parent=19 // pred_fallthru
          _
      $region20: #{unet1d_flattening_forward.114} parent=5 // pred_fallthru
        _
      %p286 = scmp.le.s32.totalorder 1, %s9
      %p287 = scmp.lt.s32.totalorder %s9, 4
      %p288 = pnand %p286, %p287
      %p289 = pneg %p288
      // Predicated region
      $region66: #{unet1d_flattening_forward.114} parent=5 // pred_check
        _
      $region67: #{unet1d_flattening_forward.114} parent=5 // pred_check_branch
        %291 = sbr.rel (%p288) target = $region69
      $region68: #{unet1d_flattening_forward.114} parent=5 // pred_region
        %s292 = ssub.s32 %s9, 1
        %s293 = sand.u32 %s71, 1
        %s294 = sand.u32 %s71, 1
        %s295 = smul.addr %s294, 64
        %s296 = scalar_lea.vmem [#allocation3], %s295
        // Predicated region
        $region70: #{unet1d_flattening_forward.114} parent=68 // pred_check
          %p297 = pneg %p84
        $region71: #{unet1d_flattening_forward.114} parent=68 // pred_check_branch
          %299 = sbr.rel (%p297) target = $region73
        $region72: #{unet1d_flattening_forward.114} parent=68 // pred_region
          _
        $region73: #{unet1d_flattening_forward.114} parent=68 // pred_fallthru
          _
        %s300 = smul.u32 6, %s19
        %p301 = scmp.lt.s32.totalorder %s300, 5
        %s302 = scalar_select %p301, %s300, 5
        %p303 = scmp.lt.s32.totalorder %s21, 0
        %s304 = scalar_select %p303, %s21, 0
        %s305 = sadd.s32 %s304, %s302
        %s306 = smul.addr %s305, 4
        %s307 = scalar_lea.vmem %s0, %s306
        %p308 = pneg %p56
        %p309 = pneg %p53
        %s310 = sand.u32 %s71, 1
        %s311 = sand.u32 %s71, 1
        %s312 = smul.addr %s311, 64
        %s313 = scalar_lea.vmem [#allocation3], %s312
        %p314 = pneg %p84
        %p315 = pneg %p81
        %p316 = scmp.lt.s32.totalorder %s20, 2
        %s317 = scalar_select %p316, %s20, 2
        %s318 = scalar_lea.vmem %s2, %s317
        %p319 = pneg %p110
        %p320 = pneg %p107
        %p321 = pneg %p138
        %p322 = pneg %p135
        %s323 = sand.u32 %s125, 1
        %s324 = sand.u32 %s125, 1
        %s325 = smul.addr %s324, 48
        %s326 = scalar_lea.vmem [#allocation4], %s325
        %s327 = smul.u32 6, %s19
        %p328 = scmp.lt.s32.totalorder %s327, 5
        %s329 = scalar_select %p328, %s327, 5
        %p330 = scmp.lt.s32.totalorder %s21, 0
        %s331 = scalar_select %p330, %s21, 0
        %s332 = sadd.s32 %s331, %s329
        %s333 = smul.addr %s332, 4
        %s334 = scalar_lea.vmem %s0, %s333
        %s335 = smul.u32 6, %s19
        %s336 = smul.u32 16, %s21
        %p337 = scmp.lt.s32.totalorder %s20, 2
        %s338 = scalar_select %p337, %s20, 2
        %s339 = scalar_lea.vmem %s2, %s338
        %s340 = smul.u32 6, %s19
        %p342 = scmp.eq.s32.totalorder %s21, 0
        // Predicated region
        $region74: #{unet1d_flattening_forward.114} parent=68 // pred_check
          %p343 = pneg %p342
        $region75: #{unet1d_flattening_forward.114} parent=68 // pred_check_branch
          %345 = sbr.rel (%p343) target = $region77
        $region76: #{unet1d_flattening_forward.114} parent=68 // pred_region
          %346 = vst [vmem:[#allocation2] sm:$0xff] 0.0
          %347 = vst [vmem:[#allocation2 + $0x8] sm:$0xff] 0.0
          %348 = vst [vmem:[#allocation2 + $0x10] sm:$0xff] 0.0
          %349 = vst [vmem:[#allocation2 + $0x18] sm:$0xff] 0.0
          %350 = vst [vmem:[#allocation2 + $0x20] sm:$0xff] 0.0
          %351 = vst [vmem:[#allocation2 + $0x28] sm:$0xff] 0.0
        $region77: #{unet1d_flattening_forward.114} parent=68 // pred_fallthru
          _
        %v352 = vld [vmem:[#allocation2] sm:$0xff]
        %v353 = vld [vmem:[#allocation2 + $0x8] sm:$0xff]
        %v354 = vld [vmem:[#allocation2 + $0x10] sm:$0xff]
        %v355 = vld [vmem:[#allocation2 + $0x18] sm:$0xff]
        %v356 = vld [vmem:[#allocation2 + $0x20] sm:$0xff]
        %v357 = vld [vmem:[#allocation2 + $0x28] sm:$0xff]
        %v358 = vld [vmem:[%s334] sm:$0xf]
        %v359 = vld [vmem:[%s334 + $0x4] sm:$0xf]
        %v360 = vld [vmem:[%s334 + $0x8] sm:$0xf]
        %v361 = vld [vmem:[%s334 + $0xc] sm:$0xf]
        %v362 = vld [vmem:[%s334 + $0x10] sm:$0xf]
        %v363 = vld [vmem:[%s334 + $0x14] sm:$0xf]
        %v364 = vld [vmem:[%s296] sm:$0xf]
        %v365 = vld [vmem:[%s296 + $0x4] sm:$0xf]
        %v366 = vld [vmem:[%s296 + $0x8] sm:$0xf]
        %v367 = vld [vmem:[%s296 + $0xc] sm:$0xf]
        %v368 = vld [vmem:[%s296 + $0x10] sm:$0xf]
        %v369 = vld [vmem:[%s296 + $0x14] sm:$0xf]
        %v370 = vld [vmem:[%s296 + $0x18] sm:$0xf]
        %v371 = vld [vmem:[%s296 + $0x1c] sm:$0xf]
        %v372 = vld [vmem:[%s296 + $0x20] sm:$0xf]
        %v373 = vld [vmem:[%s296 + $0x24] sm:$0xf]
        %v374 = vld [vmem:[%s296 + $0x28] sm:$0xf]
        %v375 = vld [vmem:[%s296 + $0x2c] sm:$0xf]
        %v376 = vld [vmem:[%s296 + $0x30] sm:$0xf]
        %v377 = vld [vmem:[%s296 + $0x34] sm:$0xf]
        %v378 = vld [vmem:[%s296 + $0x38] sm:$0xf]
        %v379 = vld [vmem:[%s296 + $0x3c] sm:$0xf]
        %v386 = vunpack.c.l.b16 %v358
        %v387 = vunpack.c.l.b16 %v359
        %v388 = vunpack.c.l.b16 %v360
        %v389 = vunpack.c.l.b16 %v361
        %v390 = vunpack.c.l.b16 %v362
        %v391 = vunpack.c.l.b16 %v363
        %v392 = vpack.c.b16 %v387, %v386
        %v393 = vpack.c.b16 %v389, %v388
        %v394 = vpack.c.b16 %v391, %v390
        %v414 = vunpack.c.l.b16 %v364
        %v415 = vunpack.c.l.b16 %v365
        %v416 = vunpack.c.l.b16 %v366
        %v417 = vunpack.c.l.b16 %v367
        %v418 = vunpack.c.l.b16 %v368
        %v419 = vunpack.c.l.b16 %v369
        %v420 = vunpack.c.l.b16 %v370
        %v421 = vunpack.c.l.b16 %v371
        %v422 = vunpack.c.l.b16 %v372
        %v423 = vunpack.c.l.b16 %v373
        %v424 = vunpack.c.l.b16 %v374
        %v425 = vunpack.c.l.b16 %v375
        %v426 = vunpack.c.l.b16 %v376
        %v427 = vunpack.c.l.b16 %v377
        %v428 = vunpack.c.l.b16 %v378
        %v429 = vunpack.c.l.b16 %v379
        %v430 = vpack.c.b16 %v415, %v414
        %v431 = vpack.c.b16 %v417, %v416
        %v432 = vpack.c.b16 %v419, %v418
        %v433 = vpack.c.b16 %v421, %v420
        %v434 = vpack.c.b16 %v423, %v422
        %v435 = vpack.c.b16 %v425, %v424
        %v436 = vpack.c.b16 %v427, %v426
        %v437 = vpack.c.b16 %v429, %v428
        %446 = vmatprep.subr.bf16.mxu0 0
        %447 = vmatpush1.bf16.msra.mxu0 %v430
        %448 = vmatprep.subr.bf16.mxu0 0
        %449 = vmatpush1.bf16.msra.mxu0 %v431
        %450 = vmatprep.subr.bf16.mxu0 0
        %451 = vmatpush1.bf16.msra.mxu0 %v432
        %452 = vmatprep.subr.bf16.mxu0 0
        %453 = vmatpush1.bf16.msra.mxu0 %v433
        %454 = vmatprep.subr.bf16.mxu0 0
        %455 = vmatpush1.bf16.msra.mxu0 %v434
        %456 = vmatprep.subr.bf16.mxu0 0
        %457 = vmatpush1.bf16.msra.mxu0 %v435
        %458 = vmatprep.subr.bf16.mxu0 0
        %459 = vmatpush1.bf16.msra.mxu0 %v436
        %460 = vmatprep.subr.bf16.mxu0 0
        %461 = vmatpush1.bf16.msra.mxu0 %v437
        %462 = vmatprep.subr.bf16.mxu0 0
        %463 = vmatpush1.bf16.msra.mxu0 0
        %464 = vmatprep.subr.bf16.mxu0 0
        %465 = vmatpush1.bf16.msra.mxu0 0
        %466 = vmatprep.subr.bf16.mxu0 0
        %467 = vmatpush1.bf16.msra.mxu0 0
        %468 = vmatprep.subr.bf16.mxu0 0
        %469 = vmatpush1.bf16.msra.mxu0 0
        %470 = vmatprep.subr.bf16.mxu0 0
        %471 = vmatpush1.bf16.msra.mxu0 0
        %472 = vmatprep.subr.bf16.mxu0 0
        %473 = vmatpush1.bf16.msra.mxu0 0
        %474 = vmatprep.subr.bf16.mxu0 0
        %475 = vmatpush1.bf16.msra.mxu0 0
        %476 = vmatprep.subr.bf16.mxu0 0
        %477 = vmatpush1.bf16.msra.mxu0 0
        %478 = vmatprep.mubr.bf16.mxu0 0
        %479 = vmatmul.mubr.bf16.gmra.mrb[0].mxu0 %v392
        %v480 = vpop.f32.mrb[0].mxu0
        %v481 = vadd.f32 0.0, %v480
        %v482 = vpop.f32.mrb[0].mxu0
        %v483 = vpop.f32.mrb[0].mxu0
        %v484 = vadd.f32 0.0, %v483
        %v485 = vpop.f32.mrb[0].mxu0
        %486 = vmatprep.mubr.bf16.mxu0 0
        %487 = vmatmul.mubr.bf16.gmra.mrb[0].mxu0 %v393
        %v488 = vpop.f32.mrb[0].mxu0
        %v489 = vadd.f32 0.0, %v488
        %v490 = vpop.f32.mrb[0].mxu0
        %v491 = vpop.f32.mrb[0].mxu0
        %v492 = vadd.f32 0.0, %v491
        %v493 = vpop.f32.mrb[0].mxu0
        %494 = vmatprep.mubr.bf16.mxu0 0
        %495 = vmatmul.mubr.bf16.gmra.mrb[0].mxu0 %v394
        %v496 = vpop.f32.mrb[0].mxu0
        %v497 = vadd.f32 0.0, %v496
        %v498 = vpop.f32.mrb[0].mxu0
        %v499 = vpop.f32.mrb[0].mxu0
        %v500 = vadd.f32 0.0, %v499
        %v501 = vpop.f32.mrb[0].mxu0
        %502 = vdwg.mxu0
        %v503 = vadd.f32 %v352, %v481
        %v504 = vadd.f32 %v353, %v484
        %v505 = vadd.f32 %v354, %v489
        %v506 = vadd.f32 %v355, %v492
        %v507 = vadd.f32 %v356, %v497
        %v508 = vadd.f32 %v357, %v500
        %509 = vst [vmem:[#allocation2] sm:$0xff] %v503
        %510 = vst [vmem:[#allocation2 + $0x8] sm:$0xff] %v504
        %511 = vst [vmem:[#allocation2 + $0x10] sm:$0xff] %v505
        %512 = vst [vmem:[#allocation2 + $0x18] sm:$0xff] %v506
        %513 = vst [vmem:[#allocation2 + $0x20] sm:$0xff] %v507
        %514 = vst [vmem:[#allocation2 + $0x28] sm:$0xff] %v508
        // Predicated region
        $region78: #{unet1d_flattening_forward.114} parent=68 // pred_check
          %p515 = pneg %p342
        $region79: #{unet1d_flattening_forward.114} parent=68 // pred_check_branch
          %517 = sbr.rel (%p515) target = $region81
        $region80: #{unet1d_flattening_forward.114} parent=68 // pred_region
          %v518 = vld [vmem:[#allocation2] sm:$0xff]
          %v519 = vld [vmem:[#allocation2 + $0x8] sm:$0xff]
          %v520 = vld [vmem:[#allocation2 + $0x10] sm:$0xff]
          %v521 = vld [vmem:[#allocation2 + $0x18] sm:$0xff]
          %v522 = vld [vmem:[#allocation2 + $0x20] sm:$0xff]
          %v523 = vld [vmem:[#allocation2 + $0x28] sm:$0xff]
          %v524 = vld [vmem:[%s339] sm:$0x1]
          %v526 = vlaneseq
          %v527 = vshrl.u32 %v526, 7
          %v528 = vsub.s32 0, %v527
          %v529 = vrot.slane %v524, %v528
          %v531 = vadd.f32 %v518, %v529
          %v532 = vadd.f32 %v519, %v529
          %v533 = vadd.f32 %v520, %v529
          %v534 = vadd.f32 %v521, %v529
          %v535 = vadd.f32 %v522, %v529
          %v536 = vadd.f32 %v523, %v529
          %537 = vst [vmem:[%s326] sm:$0xff] %v531
          %538 = vst [vmem:[%s326 + $0x8] sm:$0xff] %v532
          %539 = vst [vmem:[%s326 + $0x10] sm:$0xff] %v533
          %540 = vst [vmem:[%s326 + $0x18] sm:$0xff] %v534
          %541 = vst [vmem:[%s326 + $0x20] sm:$0xff] %v535
          %542 = vst [vmem:[%s326 + $0x28] sm:$0xff] %v536
        $region81: #{unet1d_flattening_forward.114} parent=68 // pred_fallthru
          _
        %s543 = sand.u32 %s125, 1
        %s544 = sand.u32 %s125, 1
        %s545 = smul.addr %s544, 48
        %s546 = scalar_lea.vmem [#allocation4], %s545
        // Predicated region
        $region82: #{unet1d_flattening_forward.114} parent=68 // pred_check
          %p547 = pneg %p135
        $region83: #{unet1d_flattening_forward.114} parent=68 // pred_check_branch
          %549 = sbr.rel (%p547) target = $region85
        $region84: #{unet1d_flattening_forward.114} parent=68 // pred_region
          %s550 = smul.u32 6, %s19
          %s551 = smul.addr %s550, 3
          %s552 = sadd.s32 %s20, %s551
          %s553 = smul.addr %s552, 8
          %s554 = scalar_lea.vmem %s3, %s553
          // Predicated region
          $region86: #{unet1d_flattening_forward.114} parent=84 // pred_check
            _
          $region87: #{unet1d_flattening_forward.114} parent=84 // pred_check_branch
            %556 = sbr.rel (0) target = $region89
          $region88: #{unet1d_flattening_forward.114} parent=84 // pred_region
            // Predicated region
            $region90: #{unet1d_flattening_forward.114} parent=88 // pred_check
              _
            $region91: #{unet1d_flattening_forward.114} parent=88 // pred_check_branch
              %558 = sbr.rel (0) target = $region93
            $region92: #{unet1d_flattening_forward.114} parent=88 // pred_region
              // Predicated region
              $region105: #{unet1d_flattening_forward.114} parent=92 // pred_check
                _
              $region106: #{unet1d_flattening_forward.114} parent=92 // pred_check_branch
                %583 = sbr.rel (0) target = $region108
              $region107: #{unet1d_flattening_forward.114} parent=92 // pred_region
                loop: start=0, step=1, limit=1
                $region109: #{unet1d_flattening_forward.114} parent=107 // loop_pre_header
                  _
                $region110: #{unet1d_flattening_forward.114} parent=107 // loop_header
                  %s585 = sphi 0, %s589
                  %p586 = scmp.ge.s32.totalorder %s585, 1
                  %s590 = sphi %s546, %s546
                  %s591 = sphi %s554, %s554
                $region111: #{unet1d_flattening_forward.114} parent=107 // loop_header_branch
                  %588 = sbr.rel (%p586) target = $region115
                $region112: #{unet1d_flattening_forward.114} parent=107 // loop_body
                  %v592 = vld [vmem:[%s590] sm:$0xff]
                  %593 = vst [vmem:[%s591] sm:$0xff] %v592
                  %v594 = vld [vmem:[%s590 + $0x8] sm:$0xff]
                  %595 = vst [vmem:[%s591 + $0x18] sm:$0xff] %v594
                  %v596 = vld [vmem:[%s590 + $0x10] sm:$0xff]
                  %597 = vst [vmem:[%s591 + $0x30] sm:$0xff] %v596
                  %v598 = vld [vmem:[%s590 + $0x18] sm:$0xff]
                  %599 = vst [vmem:[%s591 + $0x48] sm:$0xff] %v598
                  %v600 = vld [vmem:[%s590 + $0x20] sm:$0xff]
                  %601 = vst [vmem:[%s591 + $0x60] sm:$0xff] %v600
                  %v602 = vld [vmem:[%s590 + $0x28] sm:$0xff]
                  %603 = vst [vmem:[%s591 + $0x78] sm:$0xff] %v602
                $region113: #{unet1d_flattening_forward.114} parent=107 // loop_footer
                  %s589 = sadd.s32 1, %s585
                $region114: #{unet1d_flattening_forward.114} parent=107 // loop_footer_branch
                  %584 = sbr.rel target = $region110
                $region115: #{unet1d_flattening_forward.114} parent=107 // loop_exit
                  _
              $region108: #{unet1d_flattening_forward.114} parent=92 // pred_fallthru
                _
              // Predicated region
              $region116: #{unet1d_flattening_forward.114} parent=92 // pred_check
                _
              $region117: #{unet1d_flattening_forward.114} parent=92 // pred_check_branch
                %605 = sbr.rel target = $region119
              $region118: #{unet1d_flattening_forward.114} parent=92 // pred_region
                _
              $region119: #{unet1d_flattening_forward.114} parent=92 // pred_fallthru
                _
            $region93: #{unet1d_flattening_forward.114} parent=88 // pred_fallthru
              _
            // Predicated region
            $region94: #{unet1d_flattening_forward.114} parent=88 // pred_check
              _
            $region95: #{unet1d_flattening_forward.114} parent=88 // pred_check_branch
              %560 = sbr.rel target = $region97
            $region96: #{unet1d_flattening_forward.114} parent=88 // pred_region
              loop: start=0, step=1, limit=1
              $region98: #{unet1d_flattening_forward.114} parent=96 // loop_pre_header
                _
              $region99: #{unet1d_flattening_forward.114} parent=96 // loop_header
                %s563 = sphi 0, %s567
                %p564 = scmp.ge.s32.totalorder %s563, 1
                %s568 = sphi %s546, %s546
                %s569 = sphi %s554, %s554
              $region100: #{unet1d_flattening_forward.114} parent=96 // loop_header_branch
                %566 = sbr.rel (%p564) target = $region104
              $region101: #{unet1d_flattening_forward.114} parent=96 // loop_body
                %v570 = vld [vmem:[%s568] sm:$0xff]
                %571 = vst [vmem:[%s569] sm:$0xff] %v570
                %v572 = vld [vmem:[%s568 + $0x8] sm:$0xff]
                %573 = vst [vmem:[%s569 + $0x18] sm:$0xff] %v572
                %v574 = vld [vmem:[%s568 + $0x10] sm:$0xff]
                %575 = vst [vmem:[%s569 + $0x30] sm:$0xff] %v574
                %v576 = vld [vmem:[%s568 + $0x18] sm:$0xff]
                %577 = vst [vmem:[%s569 + $0x48] sm:$0xff] %v576
                %v578 = vld [vmem:[%s568 + $0x20] sm:$0xff]
                %579 = vst [vmem:[%s569 + $0x60] sm:$0xff] %v578
                %v580 = vld [vmem:[%s568 + $0x28] sm:$0xff]
                %581 = vst [vmem:[%s569 + $0x78] sm:$0xff] %v580
              $region102: #{unet1d_flattening_forward.114} parent=96 // loop_footer
                %s567 = sadd.s32 1, %s563
              $region103: #{unet1d_flattening_forward.114} parent=96 // loop_footer_branch
                %562 = sbr.rel target = $region99
              $region104: #{unet1d_flattening_forward.114} parent=96 // loop_exit
                _
            $region97: #{unet1d_flattening_forward.114} parent=88 // pred_fallthru
              _
          $region89: #{unet1d_flattening_forward.114} parent=84 // pred_fallthru
            _
          %606 = vnop
        $region85: #{unet1d_flattening_forward.114} parent=68 // pred_fallthru
          _
      $region69: #{unet1d_flattening_forward.114} parent=5 // pred_fallthru
        _
      %p607 = scmp.le.s32.totalorder 2, %s9
      // Predicated region
      $region120: #{unet1d_flattening_forward.114} parent=5 // pred_check
        %p608 = pneg %p607
      $region121: #{unet1d_flattening_forward.114} parent=5 // pred_check_branch
        %610 = sbr.rel (%p608) target = $region123
      $region122: #{unet1d_flattening_forward.114} parent=5 // pred_region
        %s611 = ssub.s32 %s9, 2
        // Predicated region
        $region124: #{unet1d_flattening_forward.114} parent=122 // pred_check
          %p612 = pneg %p141
        $region125: #{unet1d_flattening_forward.114} parent=122 // pred_check_branch
          %614 = sbr.rel (%p612) target = $region127
        $region126: #{unet1d_flattening_forward.114} parent=122 // pred_region
          %s615 = sand.u32 %s126, 1
          %s616 = sand.u32 %s126, 1
          %s617 = smul.addr %s616, 48
          %s618 = scalar_lea.vmem [#allocation4], %s617
        $region127: #{unet1d_flattening_forward.114} parent=122 // pred_fallthru
          _
      $region123: #{unet1d_flattening_forward.114} parent=5 // pred_fallthru
        _
    $region6: #{unet1d_flattening_forward.114} parent=1 // loop_footer
      %s13 = sadd.s32 1, %s9
    $region7: #{unet1d_flattening_forward.114} parent=1 // loop_footer_branch
      %8 = sbr.rel target = $region3
    $region8: #{unet1d_flattening_forward.114} parent=1 // loop_exit
      _

// kernel: unet1d_flattening_forward.115
$region0: #{unet1d_flattening_forward.115}
  #allocation0 [shape = 'u32[]', space=smem, size = 0x4, offset = 0x4, fixed_abs, tag = 'smem constant byte address 0x4 - core index']
  #allocation1 [shape = 'u32[144,128]{1,0:T(1,128)}', space=vmem, size = 0x12000, scoped, tag = 'internal scratch']
  %s0 = inlined_call_operand.vmem [shape: bf16[2,3,32,24], index: 0, kind: input, shape index: {}]
  %s1 = inlined_call_operand.vmem [shape: bf16[2,3,32,24], index: 1, kind: input, shape index: {}]
  %s2 = inlined_call_operand.vmem [shape: bf16[2,3,32,24], index: 2, kind: input, shape index: {}]
  %s3 = inlined_call_operand.vmem [shape: f32[2,3,32,24], index: 3, kind: output, shape index: {}]
  %s4 = sld [smem:[#allocation0]]
  $region45: #{unet1d_flattening_forward.115} parent=0
    _
  %s6 = ssub.s32 1, %s4
  %s7 = scalar_select 0, %s6, %s4
  loop: start=0, step=1, limit=4
  $region2: #{unet1d_flattening_forward.115} parent=0 // loop_pre_header
    _
  $region3: #{unet1d_flattening_forward.115} parent=0 // loop_header
    %s9 = sphi 0, %s13
    %p10 = scmp.ge.s32.totalorder %s9, 4
    %s19 = sphi 0, %s21
    %s22 = sphi 0, %s19
    %s23 = sphi 0, %s22
    %s39 = sphi 0, %s23
    %s45 = sphi 0, %s47
    %s48 = sphi 0, %s45
    %s49 = sphi 0, %s48
    %s65 = sphi 0, %s49
    %s71 = sphi 0, %s73
    %s74 = sphi 0, %s71
    %s75 = sphi 0, %s74
    %s91 = sphi 0, %s75
    %s97 = sphi 0, %s99
    %s100 = sphi 0, %s97
    %s101 = sphi 0, %s100
    %s117 = sphi 0, %s101
  $region4: #{unet1d_flattening_forward.115} parent=0 // loop_header_branch
    %12 = sbr.rel (%p10) target = $region8
  $region5: #{unet1d_flattening_forward.115} parent=0 // loop_body
    %s14 = ssub.s32 %s9, 1
    %s15 = ssub.s32 %s9, 2
    %s16 = sadd.s32 %s9, 1
    %s17 = ssub.s32 %s9, %s16
    %p18 = scmp.eq.s32.totalorder %s17, 0
    %s20 = sadd.s32 %s19, 1
    %s21 = scalar_select %p18, %s19, %s20
    %p24 = pneg %p18
    %p25 = scmp.eq.s32.totalorder %s9, 1
    %p26 = por %p24, %p25
    %p27 = scmp.ne.s32.totalorder %s19, %s22
    %p28 = scmp.eq.s32.totalorder %s9, 0
    %p29 = por %p27, %p28
    %p30 = scmp.ne.s32.totalorder %s19, %s22
    %p31 = scmp.eq.s32.totalorder %s14, 1
    %p32 = por %p30, %p31
    %p33 = scmp.ne.s32.totalorder %s22, %s23
    %p34 = scmp.eq.s32.totalorder %s14, 0
    %p35 = por %p33, %p34
    %p36 = scmp.ne.s32.totalorder %s22, %s23
    %p37 = scmp.eq.s32.totalorder %s15, 1
    %p38 = por %p36, %p37
    %p40 = scmp.ne.s32.totalorder %s23, %s39
    %p41 = scmp.eq.s32.totalorder %s15, 0
    %p42 = por %p40, %p41
    %s43 = ssub.s32 %s9, %s16
    %p44 = scmp.eq.s32.totalorder %s43, 0
    %s46 = sadd.s32 %s45, 1
    %s47 = scalar_select %p44, %s45, %s46
    %p50 = pneg %p44
    %p51 = scmp.eq.s32.totalorder %s9, 1
    %p52 = por %p50, %p51
    %p53 = scmp.ne.s32.totalorder %s45, %s48
    %p54 = scmp.eq.s32.totalorder %s9, 0
    %p55 = por %p53, %p54
    %p56 = scmp.ne.s32.totalorder %s45, %s48
    %p57 = scmp.eq.s32.totalorder %s14, 1
    %p58 = por %p56, %p57
    %p59 = scmp.ne.s32.totalorder %s48, %s49
    %p60 = scmp.eq.s32.totalorder %s14, 0
    %p61 = por %p59, %p60
    %p62 = scmp.ne.s32.totalorder %s48, %s49
    %p63 = scmp.eq.s32.totalorder %s15, 1
    %p64 = por %p62, %p63
    %p66 = scmp.ne.s32.totalorder %s49, %s65
    %p67 = scmp.eq.s32.totalorder %s15, 0
    %p68 = por %p66, %p67
    %s69 = ssub.s32 %s9, %s16
    %p70 = scmp.eq.s32.totalorder %s69, 0
    %s72 = sadd.s32 %s71, 1
    %s73 = scalar_select %p70, %s71, %s72
    %p76 = pneg %p70
    %p77 = scmp.eq.s32.totalorder %s9, 1
    %p78 = por %p76, %p77
    %p79 = scmp.ne.s32.totalorder %s71, %s74
    %p80 = scmp.eq.s32.totalorder %s9, 0
    %p81 = por %p79, %p80
    %p82 = scmp.ne.s32.totalorder %s71, %s74
    %p83 = scmp.eq.s32.totalorder %s14, 1
    %p84 = por %p82, %p83
    %p85 = scmp.ne.s32.totalorder %s74, %s75
    %p86 = scmp.eq.s32.totalorder %s14, 0
    %p87 = por %p85, %p86
    %p88 = scmp.ne.s32.totalorder %s74, %s75
    %p89 = scmp.eq.s32.totalorder %s15, 1
    %p90 = por %p88, %p89
    %p92 = scmp.ne.s32.totalorder %s75, %s91
    %p93 = scmp.eq.s32.totalorder %s15, 0
    %p94 = por %p92, %p93
    %s95 = ssub.s32 %s9, %s16
    %p96 = scmp.eq.s32.totalorder %s95, 0
    %s98 = sadd.s32 %s97, 1
    %s99 = scalar_select %p96, %s97, %s98
    %p102 = pneg %p96
    %p103 = scmp.eq.s32.totalorder %s9, 1
    %p104 = por %p102, %p103
    %p105 = scmp.ne.s32.totalorder %s97, %s100
    %p106 = scmp.eq.s32.totalorder %s9, 0
    %p107 = por %p105, %p106
    %p108 = scmp.ne.s32.totalorder %s97, %s100
    %p109 = scmp.eq.s32.totalorder %s14, 1
    %p110 = por %p108, %p109
    %p111 = scmp.ne.s32.totalorder %s100, %s101
    %p112 = scmp.eq.s32.totalorder %s14, 0
    %p113 = por %p111, %p112
    %p114 = scmp.ne.s32.totalorder %s100, %s101
    %p115 = scmp.eq.s32.totalorder %s15, 1
    %p116 = por %p114, %p115
    %p118 = scmp.ne.s32.totalorder %s101, %s117
    %p119 = scmp.eq.s32.totalorder %s15, 0
    %p120 = por %p118, %p119
    %p121 = scmp.le.s32.totalorder 1, %s9
    %p122 = scmp.lt.s32.totalorder %s9, 3
    %p123 = pnand %p121, %p122
    %p124 = pneg %p123
    // Predicated region
    $region9: #{unet1d_flattening_forward.115} parent=5 // pred_check
      _
    $region10: #{unet1d_flattening_forward.115} parent=5 // pred_check_branch
      %126 = sbr.rel (%p123) target = $region12
    $region11: #{unet1d_flattening_forward.115} parent=5 // pred_region
      %s127 = ssub.s32 %s9, 1
    $region12: #{unet1d_flattening_forward.115} parent=5 // pred_fallthru
      _
    %p128 = scmp.lt.s32.totalorder %s9, 2
    // Predicated region
    $region13: #{unet1d_flattening_forward.115} parent=5 // pred_check
      %p129 = pneg %p128
    $region14: #{unet1d_flattening_forward.115} parent=5 // pred_check_branch
      %131 = sbr.rel (%p129) target = $region16
    $region15: #{unet1d_flattening_forward.115} parent=5 // pred_region
      // Predicated region
      $region17: #{unet1d_flattening_forward.115} parent=15 // pred_check
        %p132 = pneg %p29
      $region18: #{unet1d_flattening_forward.115} parent=15 // pred_check_branch
        %134 = sbr.rel (%p132) target = $region20
      $region19: #{unet1d_flattening_forward.115} parent=15 // pred_region
        %p135 = scmp.lt.s32.totalorder %s9, 1
        %s136 = scalar_select %p135, %s9, 1
        %s137 = smul.addr %s136, 12
        %s138 = smul.addr %s137, 4
        %s139 = scalar_lea.vmem %s0, %s138
      $region20: #{unet1d_flattening_forward.115} parent=15 // pred_fallthru
        _
      // Predicated region
      $region21: #{unet1d_flattening_forward.115} parent=15 // pred_check
        %p140 = pneg %p55
      $region22: #{unet1d_flattening_forward.115} parent=15 // pred_check_branch
        %142 = sbr.rel (%p140) target = $region24
      $region23: #{unet1d_flattening_forward.115} parent=15 // pred_region
        %p143 = scmp.lt.s32.totalorder %s9, 1
        %s144 = scalar_select %p143, %s9, 1
        %s145 = smul.addr %s144, 12
        %s146 = smul.addr %s145, 4
        %s147 = scalar_lea.vmem %s1, %s146
      $region24: #{unet1d_flattening_forward.115} parent=15 // pred_fallthru
        _
      // Predicated region
      $region25: #{unet1d_flattening_forward.115} parent=15 // pred_check
        %p148 = pneg %p81
      $region26: #{unet1d_flattening_forward.115} parent=15 // pred_check_branch
        %150 = sbr.rel (%p148) target = $region28
      $region27: #{unet1d_flattening_forward.115} parent=15 // pred_region
        %p151 = scmp.lt.s32.totalorder %s9, 1
        %s152 = scalar_select %p151, %s9, 1
        %s153 = smul.addr %s152, 12
        %s154 = smul.addr %s153, 4
        %s155 = scalar_lea.vmem %s2, %s154
      $region28: #{unet1d_flattening_forward.115} parent=15 // pred_fallthru
        _
    $region16: #{unet1d_flattening_forward.115} parent=5 // pred_fallthru
      _
    %p156 = scmp.le.s32.totalorder 1, %s9
    %p157 = scmp.lt.s32.totalorder %s9, 3
    %p158 = pnand %p156, %p157
    %p159 = pneg %p158
    // Predicated region
    $region29: #{unet1d_flattening_forward.115} parent=5 // pred_check
      _
    $region30: #{unet1d_flattening_forward.115} parent=5 // pred_check_branch
      %161 = sbr.rel (%p158) target = $region32
    $region31: #{unet1d_flattening_forward.115} parent=5 // pred_region
      %s162 = ssub.s32 %s9, 1
      %p163 = scmp.lt.s32.totalorder %s14, 1
      %s164 = scalar_select %p163, %s14, 1
      %s165 = smul.addr %s164, 12
      %s166 = smul.addr %s165, 4
      %s167 = scalar_lea.vmem %s0, %s166
      %p168 = pneg %p35
      %p169 = pneg %p32
      %p170 = scmp.lt.s32.totalorder %s14, 1
      %s171 = scalar_select %p170, %s14, 1
      %s172 = smul.addr %s171, 12
      %s173 = smul.addr %s172, 4
      %s174 = scalar_lea.vmem %s1, %s173
      %p175 = pneg %p61
      %p176 = pneg %p58
      %p177 = scmp.lt.s32.totalorder %s14, 1
      %s178 = scalar_select %p177, %s14, 1
      %s179 = smul.addr %s178, 12
      %s180 = smul.addr %s179, 4
      %s181 = scalar_lea.vmem %s2, %s180
      %p182 = pneg %p87
      %p183 = pneg %p84
      %p184 = pneg %p113
      %p185 = pneg %p110
      %p186 = scmp.lt.s32.totalorder %s14, 1
      %s187 = scalar_select %p186, %s14, 1
      %s188 = smul.addr %s187, 12
      %s189 = smul.addr %s188, 8
      %s190 = scalar_lea.vmem %s3, %s189
      %p191 = scmp.lt.s32.totalorder %s14, 1
      %s192 = scalar_select %p191, %s14, 1
      %s193 = smul.addr %s192, 12
      %s194 = smul.addr %s193, 4
      %s195 = scalar_lea.vmem %s0, %s194
      %p196 = scmp.lt.s32.totalorder %s14, 1
      %s197 = scalar_select %p196, %s14, 1
      %s198 = smul.addr %s197, 12
      %s199 = smul.addr %s198, 4
      %s200 = scalar_lea.vmem %s1, %s199
      %p201 = scmp.lt.s32.totalorder %s14, 1
      %s202 = scalar_select %p201, %s14, 1
      %s203 = smul.addr %s202, 12
      %s204 = smul.addr %s203, 4
      %s205 = scalar_lea.vmem %s2, %s204
      %p206 = scmp.lt.s32.totalorder %s14, 1
      %s207 = scalar_select %p206, %s14, 1
      %s208 = smul.addr %s207, 12
      %s209 = smul.addr %s208, 8
      %s210 = scalar_lea.vmem %s3, %s209
      %v212 = vld [vmem:[%s195] sm:$0xf]
      %v213 = vld [vmem:[%s195 + $0x4] sm:$0xf]
      %v214 = vld [vmem:[%s195 + $0x8] sm:$0xf]
      %v215 = vld [vmem:[%s195 + $0xc] sm:$0xf]
      %v216 = vld [vmem:[%s195 + $0x10] sm:$0xf]
      %v217 = vld [vmem:[%s195 + $0x14] sm:$0xf]
      %v218 = vld [vmem:[%s195 + $0x18] sm:$0xf]
      %v219 = vld [vmem:[%s195 + $0x1c] sm:$0xf]
      %v220 = vld [vmem:[%s195 + $0x20] sm:$0xf]
      %v221 = vld [vmem:[%s195 + $0x24] sm:$0xf]
      %v222 = vld [vmem:[%s195 + $0x28] sm:$0xf]
      %v223 = vld [vmem:[%s195 + $0x2c] sm:$0xf]
      %v224 = vunpack.c.l.bf16 %v212
      %v225 = vunpack.c.l.bf16 %v213
      %v226 = vunpack.c.l.bf16 %v214
      %v227 = vunpack.c.l.bf16 %v215
      %v228 = vunpack.c.l.bf16 %v216
      %v229 = vunpack.c.l.bf16 %v217
      %v230 = vunpack.c.l.bf16 %v218
      %v231 = vunpack.c.l.bf16 %v219
      %v232 = vunpack.c.l.bf16 %v220
      %v233 = vunpack.c.l.bf16 %v221
      %v234 = vunpack.c.l.bf16 %v222
      %v235 = vunpack.c.l.bf16 %v223
      %v236 = vld [vmem:[%s200] sm:$0xf]
      %v237 = vld [vmem:[%s200 + $0x4] sm:$0xf]
      %v238 = vld [vmem:[%s200 + $0x8] sm:$0xf]
      %v239 = vld [vmem:[%s200 + $0xc] sm:$0xf]
      %v240 = vld [vmem:[%s200 + $0x10] sm:$0xf]
      %v241 = vld [vmem:[%s200 + $0x14] sm:$0xf]
      %v242 = vld [vmem:[%s200 + $0x18] sm:$0xf]
      %v243 = vld [vmem:[%s200 + $0x1c] sm:$0xf]
      %v244 = vld [vmem:[%s200 + $0x20] sm:$0xf]
      %v245 = vld [vmem:[%s200 + $0x24] sm:$0xf]
      %v246 = vld [vmem:[%s200 + $0x28] sm:$0xf]
      %v247 = vld [vmem:[%s200 + $0x2c] sm:$0xf]
      %v248 = vunpack.c.l.bf16 %v236
      %v249 = vunpack.c.l.bf16 %v237
      %v250 = vunpack.c.l.bf16 %v238
      %v251 = vunpack.c.l.bf16 %v239
      %v252 = vunpack.c.l.bf16 %v240
      %v253 = vunpack.c.l.bf16 %v241
      %v254 = vunpack.c.l.bf16 %v242
      %v255 = vunpack.c.l.bf16 %v243
      %v256 = vunpack.c.l.bf16 %v244
      %v257 = vunpack.c.l.bf16 %v245
      %v258 = vunpack.c.l.bf16 %v246
      %v259 = vunpack.c.l.bf16 %v247
      %v260 = vld [vmem:[%s205] sm:$0xf]
      %v261 = vld [vmem:[%s205 + $0x4] sm:$0xf]
      %v262 = vld [vmem:[%s205 + $0x8] sm:$0xf]
      %v263 = vld [vmem:[%s205 + $0xc] sm:$0xf]
      %v264 = vld [vmem:[%s205 + $0x10] sm:$0xf]
      %v265 = vld [vmem:[%s205 + $0x14] sm:$0xf]
      %v266 = vld [vmem:[%s205 + $0x18] sm:$0xf]
      %v267 = vld [vmem:[%s205 + $0x1c] sm:$0xf]
      %v268 = vld [vmem:[%s205 + $0x20] sm:$0xf]
      %v269 = vld [vmem:[%s205 + $0x24] sm:$0xf]
      %v270 = vld [vmem:[%s205 + $0x28] sm:$0xf]
      %v271 = vld [vmem:[%s205 + $0x2c] sm:$0xf]
      %vm272 = vcmask 195584
      %v273 = vsel %vm272, %v224, -inf
      %v274 = vsel %vm272, %v225, -inf
      %v275 = vsel %vm272, %v226, -inf
      %v276 = vmax.f32 %v273, %v275
      %v277 = vsel %vm272, %v227, -inf
      %v278 = vmax.f32 %v274, %v277
      %v279 = vmax.f32 %v276, %v278
      %v280 = vrot.slane %v279, 4
      %v281 = vmax.f32 %v279, %v280
      %v282 = vrot.slane %v281, 2
      %v283 = vmax.f32 %v281, %v282
      %v284 = vrot.slane %v283, 1
      %v285 = vmax.f32 %v283, %v284
      %v286 = vsel %vm272, %v228, -inf
      %v287 = vsel %vm272, %v229, -inf
      %v288 = vsel %vm272, %v230, -inf
      %v289 = vmax.f32 %v286, %v288
      %v290 = vsel %vm272, %v231, -inf
      %v291 = vmax.f32 %v287, %v290
      %v292 = vmax.f32 %v289, %v291
      %v293 = vrot.slane %v292, 4
      %v294 = vmax.f32 %v292, %v293
      %v295 = vrot.slane %v294, 2
      %v296 = vmax.f32 %v294, %v295
      %v297 = vrot.slane %v296, 1
      %v298 = vmax.f32 %v296, %v297
      %v299 = vsel %vm272, %v232, -inf
      %v300 = vsel %vm272, %v233, -inf
      %v301 = vsel %vm272, %v234, -inf
      %v302 = vmax.f32 %v299, %v301
      %v303 = vsel %vm272, %v235, -inf
      %v304 = vmax.f32 %v300, %v303
      %v305 = vmax.f32 %v302, %v304
      %v306 = vrot.slane %v305, 4
      %v307 = vmax.f32 %v305, %v306
      %v308 = vrot.slane %v307, 2
      %v309 = vmax.f32 %v307, %v308
      %v310 = vrot.slane %v309, 1
      %v311 = vmax.f32 %v309, %v310
      %v312 = vsub.f32 %v224, %v285
      %v313 = vsub.f32 %v225, %v285
      %v314 = vsub.f32 %v226, %v285
      %v315 = vsub.f32 %v227, %v285
      %v316 = vsub.f32 %v228, %v298
      %v317 = vsub.f32 %v229, %v298
      %v318 = vsub.f32 %v230, %v298
      %v319 = vsub.f32 %v231, %v298
      %v320 = vsub.f32 %v232, %v311
      %v321 = vsub.f32 %v233, %v311
      %v322 = vsub.f32 %v234, %v311
      %v323 = vsub.f32 %v235, %v311
      %v324 = vmul.f32 %v312, 1.442695
      %v325 = vpow.pop %v324
      %v326 = vmul.f32 %v313, 1.442695
      %v327 = vpow.pop %v326
      %v328 = vmul.f32 %v314, 1.442695
      %v329 = vpow.pop %v328
      %v330 = vmul.f32 %v315, 1.442695
      %v331 = vpow.pop %v330
      %v332 = vmul.f32 %v316, 1.442695
      %v333 = vpow.pop %v332
      %v334 = vmul.f32 %v317, 1.442695
      %v335 = vpow.pop %v334
      %v336 = vmul.f32 %v318, 1.442695
      %v337 = vpow.pop %v336
      %v338 = vmul.f32 %v319, 1.442695
      %v339 = vpow.pop %v338
      %v340 = vmul.f32 %v320, 1.442695
      %v341 = vpow.pop %v340
      %v342 = vmul.f32 %v321, 1.442695
      %v343 = vpow.pop %v342
      %v344 = vmul.f32 %v322, 1.442695
      %v345 = vpow.pop %v344
      %v346 = vmul.f32 %v323, 1.442695
      %v347 = vpow.pop %v346
      %v348 = vsel %vm272, %v325, 0.0
      %v349 = vsel %vm272, %v327, 0.0
      %v350 = vadd.f32 %v348, %v349
      %v351 = vsel %vm272, %v329, 0.0
      %v352 = vadd.f32 %v350, %v351
      %v353 = vsel %vm272, %v331, 0.0
      %v354 = vadd.f32 %v352, %v353
      %v355 = vrot.slane %v354, 4
      %v356 = vadd.f32 %v354, %v355
      %v357 = vrot.slane %v356, 2
      %v358 = vadd.f32 %v356, %v357
      %v359 = vrot.slane %v358, 1
      %v360 = vadd.f32 %v358, %v359
      %v361 = vsel %vm272, %v333, 0.0
      %v362 = vsel %vm272, %v335, 0.0
      %v363 = vadd.f32 %v361, %v362
      %v364 = vsel %vm272, %v337, 0.0
      %v365 = vadd.f32 %v363, %v364
      %v366 = vsel %vm272, %v339, 0.0
      %v367 = vadd.f32 %v365, %v366
      %v368 = vrot.slane %v367, 4
      %v369 = vadd.f32 %v367, %v368
      %v370 = vrot.slane %v369, 2
      %v371 = vadd.f32 %v369, %v370
      %v372 = vrot.slane %v371, 1
      %v373 = vadd.f32 %v371, %v372
      %v374 = vsel %vm272, %v341, 0.0
      %v375 = vsel %vm272, %v343, 0.0
      %v376 = vadd.f32 %v374, %v375
      %v377 = vsel %vm272, %v345, 0.0
      %v378 = vadd.f32 %v376, %v377
      %v379 = vsel %vm272, %v347, 0.0
      %v380 = vadd.f32 %v378, %v379
      %v381 = vrot.slane %v380, 4
      %v382 = vadd.f32 %v380, %v381
      %v383 = vrot.slane %v382, 2
      %v384 = vadd.f32 %v382, %v383
      %v385 = vrot.slane %v384, 1
      %v386 = vadd.f32 %v384, %v385
      %v387 = vrcp.pop %v360
      %v388 = vmul.f32 %v325, %v387
      %v389 = vmul.f32 %v327, %v387
      %v390 = vmul.f32 %v329, %v387
      %v391 = vmul.f32 %v331, %v387
      %v392 = vrcp.pop %v373
      %v393 = vmul.f32 %v333, %v392
      %v394 = vmul.f32 %v335, %v392
      %v395 = vmul.f32 %v337, %v392
      %v396 = vmul.f32 %v339, %v392
      %v397 = vrcp.pop %v386
      %v398 = vmul.f32 %v341, %v397
      %v399 = vmul.f32 %v343, %v397
      %v400 = vmul.f32 %v345, %v397
      %v401 = vmul.f32 %v347, %v397
      %v402 = vmul.f32 %v388, 0.17677669
      %v403 = vmul.f32 %v389, 0.17677669
      %v404 = vmul.f32 %v390, 0.17677669
      %v405 = vmul.f32 %v391, 0.17677669
      %v406 = vmul.f32 %v393, 0.17677669
      %v407 = vmul.f32 %v394, 0.17677669
      %v408 = vmul.f32 %v395, 0.17677669
      %v409 = vmul.f32 %v396, 0.17677669
      %v410 = vmul.f32 %v398, 0.17677669
      %v411 = vmul.f32 %v399, 0.17677669
      %v412 = vmul.f32 %v400, 0.17677669
      %v413 = vmul.f32 %v401, 0.17677669
      %v414 = vsel %vm272, %v248, -inf
      %415 = vmax.xlane.f32.xlu0 %v414
      %v416 = vpop.xlane.xlu0 %415
      %v417 = vsel %vm272, %v249, -inf
      %418 = vmax.xlane.f32.xlu0 %v417
      %v419 = vpop.xlane.xlu0 %418
      %v420 = vsel %vm272, %v250, -inf
      %421 = vmax.xlane.f32.xlu0 %v420
      %v422 = vpop.xlane.xlu0 %421
      %v423 = vsel %vm272, %v251, -inf
      %424 = vmax.xlane.f32.xlu0 %v423
      %v425 = vpop.xlane.xlu0 %424
      %v426 = vsel %vm272, %v252, -inf
      %427 = vmax.xlane.f32.xlu0 %v426
      %v428 = vpop.xlane.xlu0 %427
      %v429 = vsel %vm272, %v253, -inf
      %430 = vmax.xlane.f32.xlu0 %v429
      %v431 = vpop.xlane.xlu0 %430
      %v432 = vsel %vm272, %v254, -inf
      %433 = vmax.xlane.f32.xlu0 %v432
      %v434 = vpop.xlane.xlu0 %433
      %v435 = vsel %vm272, %v255, -inf
      %436 = vmax.xlane.f32.xlu0 %v435
      %v437 = vpop.xlane.xlu0 %436
      %v438 = vsel %vm272, %v256, -inf
      %439 = vmax.xlane.f32.xlu0 %v438
      %v440 = vpop.xlane.xlu0 %439
      %v441 = vsel %vm272, %v257, -inf
      %442 = vmax.xlane.f32.xlu0 %v441
      %v443 = vpop.xlane.xlu0 %442
      %v444 = vsel %vm272, %v258, -inf
      %445 = vmax.xlane.f32.xlu0 %v444
      %v446 = vpop.xlane.xlu0 %445
      %v447 = vsel %vm272, %v259, -inf
      %448 = vmax.xlane.f32.xlu0 %v447
      %v449 = vpop.xlane.xlu0 %448
      %v450 = vsub.f32 %v248, %v416
      %v451 = vsub.f32 %v249, %v419
      %v452 = vsub.f32 %v250, %v422
      %v453 = vsub.f32 %v251, %v425
      %v454 = vsub.f32 %v252, %v428
      %v455 = vsub.f32 %v253, %v431
      %v456 = vsub.f32 %v254, %v434
      %v457 = vsub.f32 %v255, %v437
      %v458 = vsub.f32 %v256, %v440
      %v459 = vsub.f32 %v257, %v443
      %v460 = vsub.f32 %v258, %v446
      %v461 = vsub.f32 %v259, %v449
      %v462 = vmul.f32 %v450, 1.442695
      %v463 = vpow.pop %v462
      %v464 = vmul.f32 %v451, 1.442695
      %v465 = vpow.pop %v464
      %v466 = vmul.f32 %v452, 1.442695
      %v467 = vpow.pop %v466
      %v468 = vmul.f32 %v453, 1.442695
      %v469 = vpow.pop %v468
      %v470 = vmul.f32 %v454, 1.442695
      %v471 = vpow.pop %v470
      %v472 = vmul.f32 %v455, 1.442695
      %v473 = vpow.pop %v472
      %v474 = vmul.f32 %v456, 1.442695
      %v475 = vpow.pop %v474
      %v476 = vmul.f32 %v457, 1.442695
      %v477 = vpow.pop %v476
      %v478 = vmul.f32 %v458, 1.442695
      %v479 = vpow.pop %v478
      %v480 = vmul.f32 %v459, 1.442695
      %v481 = vpow.pop %v480
      %v482 = vmul.f32 %v460, 1.442695
      %v483 = vpow.pop %v482
      %v484 = vmul.f32 %v461, 1.442695
      %v485 = vpow.pop %v484
      %v486 = vsel %vm272, %v463, 0.0
      %487 = vadd.xlane.f32.xlu0 %v486
      %v488 = vpop.xlane.xlu0 %487
      %v489 = vsel %vm272, %v465, 0.0
      %490 = vadd.xlane.f32.xlu0 %v489
      %v491 = vpop.xlane.xlu0 %490
      %v492 = vsel %vm272, %v467, 0.0
      %493 = vadd.xlane.f32.xlu0 %v492
      %v494 = vpop.xlane.xlu0 %493
      %v495 = vsel %vm272, %v469, 0.0
      %496 = vadd.xlane.f32.xlu0 %v495
      %v497 = vpop.xlane.xlu0 %496
      %v498 = vsel %vm272, %v471, 0.0
      %499 = vadd.xlane.f32.xlu0 %v498
      %v500 = vpop.xlane.xlu0 %499
      %v501 = vsel %vm272, %v473, 0.0
      %502 = vadd.xlane.f32.xlu0 %v501
      %v503 = vpop.xlane.xlu0 %502
      %v504 = vsel %vm272, %v475, 0.0
      %505 = vadd.xlane.f32.xlu0 %v504
      %v506 = vpop.xlane.xlu0 %505
      %v507 = vsel %vm272, %v477, 0.0
      %508 = vadd.xlane.f32.xlu0 %v507
      %v509 = vpop.xlane.xlu0 %508
      %v510 = vsel %vm272, %v479, 0.0
      %511 = vadd.xlane.f32.xlu0 %v510
      %v512 = vpop.xlane.xlu0 %511
      %v513 = vsel %vm272, %v481, 0.0
      %514 = vadd.xlane.f32.xlu0 %v513
      %v515 = vpop.xlane.xlu0 %514
      %v516 = vsel %vm272, %v483, 0.0
      %517 = vadd.xlane.f32.xlu0 %v516
      %v518 = vpop.xlane.xlu0 %517
      %v519 = vsel %vm272, %v485, 0.0
      %520 = vadd.xlane.f32.xlu0 %v519
      %v521 = vpop.xlane.xlu0 %520
      %v522 = vrcp.pop %v488
      %v523 = vmul.f32 %v463, %v522
      %v524 = vrcp.pop %v491
      %v525 = vmul.f32 %v465, %v524
      %v526 = vrcp.pop %v494
      %v527 = vmul.f32 %v467, %v526
      %v528 = vrcp.pop %v497
      %v529 = vmul.f32 %v469, %v528
      %v530 = vrcp.pop %v500
      %v531 = vmul.f32 %v471, %v530
      %v532 = vrcp.pop %v503
      %v533 = vmul.f32 %v473, %v532
      %v534 = vrcp.pop %v506
      %v535 = vmul.f32 %v475, %v534
      %v536 = vrcp.pop %v509
      %v537 = vmul.f32 %v477, %v536
      %v538 = vrcp.pop %v512
      %v539 = vmul.f32 %v479, %v538
      %v540 = vrcp.pop %v515
      %v541 = vmul.f32 %v481, %v540
      %v542 = vrcp.pop %v518
      %v543 = vmul.f32 %v483, %v542
      %v544 = vrcp.pop %v521
      %v545 = vmul.f32 %v485, %v544
      %v546 = vpack.c.bf16 %v525, %v523
      %v547 = vpack.c.bf16 %v529, %v527
      %v548 = vpack.c.bf16 %v533, %v531
      %v549 = vpack.c.bf16 %v537, %v535
      %v550 = vpack.c.bf16 %v541, %v539
      %v551 = vpack.c.bf16 %v545, %v543
      %v556 = vunpack.c.l.b16 %v260
      %v557 = vunpack.c.l.b16 %v261
      %v558 = vunpack.c.l.b16 %v262
      %v559 = vunpack.c.l.b16 %v263
      %v560 = vpack.c.b16 %v557, %v556
      %v561 = vpack.c.b16 %v559, %v558
      %v563 = vsel %vm272, %v546, 0
      %v566 = vsel %vm272, %v547, 0
      %v569 = vsel %vm272, %v560, 0
      %v572 = vsel %vm272, %v561, 0
      %574 = vmatprep.subr.bf16.mxu0 0
      %575 = vmatpush1.bf16.xpose.msra.mxu0 %v569
      %576 = vmatprep.subr.bf16.mxu0 0
      %577 = vmatpush1.bf16.xpose.msra.mxu0 %v572
      %578 = vmatprep.subr.bf16.mxu0 0
      %579 = vmatpush1.bf16.xpose.msra.mxu0 0
      %580 = vmatprep.subr.bf16.mxu0 0
      %581 = vmatpush1.bf16.xpose.msra.mxu0 0
      %582 = vmatprep.subr.bf16.mxu0 0
      %583 = vmatpush1.bf16.xpose.msra.mxu0 0
      %584 = vmatprep.subr.bf16.mxu0 0
      %585 = vmatpush1.bf16.xpose.msra.mxu0 0
      %586 = vmatprep.subr.bf16.mxu0 0
      %587 = vmatpush1.bf16.xpose.msra.mxu0 0
      %588 = vmatprep.subr.bf16.mxu0 0
      %589 = vmatpush1.bf16.xpose.msra.mxu0 0
      %590 = vmatprep.subr.bf16.mxu0 0
      %591 = vmatpush1.bf16.xpose.msra.mxu0 0
      %592 = vmatprep.subr.bf16.mxu0 0
      %593 = vmatpush1.bf16.xpose.msra.mxu0 0
      %594 = vmatprep.subr.bf16.mxu0 0
      %595 = vmatpush1.bf16.xpose.msra.mxu0 0
      %596 = vmatprep.subr.bf16.mxu0 0
      %597 = vmatpush1.bf16.xpose.msra.mxu0 0
      %598 = vmatprep.subr.bf16.mxu0 0
      %599 = vmatpush1.bf16.xpose.msra.mxu0 0
      %600 = vmatprep.subr.bf16.mxu0 0
      %601 = vmatpush1.bf16.xpose.msra.mxu0 0
      %602 = vmatprep.subr.bf16.mxu0 0
      %603 = vmatpush1.bf16.xpose.msra.mxu0 0
      %604 = vmatprep.subr.bf16.mxu0 0
      %605 = vmatpush1.bf16.xpose.msra.mxu0 0
      %606 = vmatprep.mubr.bf16.mxu0 0
      %607 = vmatmul.mubr.bf16.gmra.mrb[0].mxu0 %v563
      %v608 = vpop.f32.mrb[0].mxu0
      %v609 = vadd.f32 0.0, %v608
      %v610 = vpop.f32.mrb[0].mxu0
      %v611 = vpop.f32.mrb[0].mxu0
      %v612 = vadd.f32 0.0, %v611
      %v613 = vpop.f32.mrb[0].mxu0
      %614 = vmatprep.mubr.bf16.mxu0 0
      %615 = vmatmul.mubr.bf16.gmra.mrb[0].mxu0 %v566
      %v616 = vpop.f32.mrb[0].mxu0
      %v617 = vadd.f32 0.0, %v616
      %v618 = vpop.f32.mrb[0].mxu0
      %v619 = vpop.f32.mrb[0].mxu0
      %v620 = vadd.f32 0.0, %v619
      %v621 = vpop.f32.mrb[0].mxu0
      %622 = vdwg.mxu0
      %v627 = vunpack.c.l.b16 %v264
      %v628 = vunpack.c.l.b16 %v265
      %v629 = vunpack.c.l.b16 %v266
      %v630 = vunpack.c.l.b16 %v267
      %v631 = vpack.c.b16 %v628, %v627
      %v632 = vpack.c.b16 %v630, %v629
      %v634 = vsel %vm272, %v548, 0
      %v637 = vsel %vm272, %v549, 0
      %v640 = vsel %vm272, %v631, 0
      %v643 = vsel %vm272, %v632, 0
      %645 = vmatprep.subr.bf16.mxu0 0
      %646 = vmatpush1.bf16.xpose.msra.mxu0 %v640
      %647 = vmatprep.subr.bf16.mxu0 0
      %648 = vmatpush1.bf16.xpose.msra.mxu0 %v643
      %649 = vmatprep.subr.bf16.mxu0 0
      %650 = vmatpush1.bf16.xpose.msra.mxu0 0
      %651 = vmatprep.subr.bf16.mxu0 0
      %652 = vmatpush1.bf16.xpose.msra.mxu0 0
      %653 = vmatprep.subr.bf16.mxu0 0
      %654 = vmatpush1.bf16.xpose.msra.mxu0 0
      %655 = vmatprep.subr.bf16.mxu0 0
      %656 = vmatpush1.bf16.xpose.msra.mxu0 0
      %657 = vmatprep.subr.bf16.mxu0 0
      %658 = vmatpush1.bf16.xpose.msra.mxu0 0
      %659 = vmatprep.subr.bf16.mxu0 0
      %660 = vmatpush1.bf16.xpose.msra.mxu0 0
      %661 = vmatprep.subr.bf16.mxu0 0
      %662 = vmatpush1.bf16.xpose.msra.mxu0 0
      %663 = vmatprep.subr.bf16.mxu0 0
      %664 = vmatpush1.bf16.xpose.msra.mxu0 0
      %665 = vmatprep.subr.bf16.mxu0 0
      %666 = vmatpush1.bf16.xpose.msra.mxu0 0
      %667 = vmatprep.subr.bf16.mxu0 0
      %668 = vmatpush1.bf16.xpose.msra.mxu0 0
      %669 = vmatprep.subr.bf16.mxu0 0
      %670 = vmatpush1.bf16.xpose.msra.mxu0 0
      %671 = vmatprep.subr.bf16.mxu0 0
      %672 = vmatpush1.bf16.xpose.msra.mxu0 0
      %673 = vmatprep.subr.bf16.mxu0 0
      %674 = vmatpush1.bf16.xpose.msra.mxu0 0
      %675 = vmatprep.subr.bf16.mxu0 0
      %676 = vmatpush1.bf16.xpose.msra.mxu0 0
      %677 = vmatprep.mubr.bf16.mxu0 0
      %678 = vmatmul.mubr.bf16.gmra.mrb[0].mxu0 %v634
      %v679 = vpop.f32.mrb[0].mxu0
      %v680 = vadd.f32 0.0, %v679
      %v681 = vpop.f32.mrb[0].mxu0
      %v682 = vpop.f32.mrb[0].mxu0
      %v683 = vadd.f32 0.0, %v682
      %v684 = vpop.f32.mrb[0].mxu0
      %685 = vmatprep.mubr.bf16.mxu0 0
      %686 = vmatmul.mubr.bf16.gmra.mrb[0].mxu0 %v637
      %v687 = vpop.f32.mrb[0].mxu0
      %v688 = vadd.f32 0.0, %v687
      %v689 = vpop.f32.mrb[0].mxu0
      %v690 = vpop.f32.mrb[0].mxu0
      %v691 = vadd.f32 0.0, %v690
      %v692 = vpop.f32.mrb[0].mxu0
      %693 = vdwg.mxu0
      %v698 = vunpack.c.l.b16 %v268
      %v699 = vunpack.c.l.b16 %v269
      %v700 = vunpack.c.l.b16 %v270
      %v701 = vunpack.c.l.b16 %v271
      %v702 = vpack.c.b16 %v699, %v698
      %v703 = vpack.c.b16 %v701, %v700
      %v705 = vsel %vm272, %v550, 0
      %v708 = vsel %vm272, %v551, 0
      %v711 = vsel %vm272, %v702, 0
      %v714 = vsel %vm272, %v703, 0
      %716 = vmatprep.subr.bf16.mxu0 0
      %717 = vmatpush1.bf16.xpose.msra.mxu0 %v711
      %718 = vmatprep.subr.bf16.mxu0 0
      %719 = vmatpush1.bf16.xpose.msra.mxu0 %v714
      %720 = vmatprep.subr.bf16.mxu0 0
      %721 = vmatpush1.bf16.xpose.msra.mxu0 0
      %722 = vmatprep.subr.bf16.mxu0 0
      %723 = vmatpush1.bf16.xpose.msra.mxu0 0
      %724 = vmatprep.subr.bf16.mxu0 0
      %725 = vmatpush1.bf16.xpose.msra.mxu0 0
      %726 = vmatprep.subr.bf16.mxu0 0
      %727 = vmatpush1.bf16.xpose.msra.mxu0 0
      %728 = vmatprep.subr.bf16.mxu0 0
      %729 = vmatpush1.bf16.xpose.msra.mxu0 0
      %730 = vmatprep.subr.bf16.mxu0 0
      %731 = vmatpush1.bf16.xpose.msra.mxu0 0
      %732 = vmatprep.subr.bf16.mxu0 0
      %733 = vmatpush1.bf16.xpose.msra.mxu0 0
      %734 = vmatprep.subr.bf16.mxu0 0
      %735 = vmatpush1.bf16.xpose.msra.mxu0 0
      %736 = vmatprep.subr.bf16.mxu0 0
      %737 = vmatpush1.bf16.xpose.msra.mxu0 0
      %738 = vmatprep.subr.bf16.mxu0 0
      %739 = vmatpush1.bf16.xpose.msra.mxu0 0
      %740 = vmatprep.subr.bf16.mxu0 0
      %741 = vmatpush1.bf16.xpose.msra.mxu0 0
      %742 = vmatprep.subr.bf16.mxu0 0
      %743 = vmatpush1.bf16.xpose.msra.mxu0 0
      %744 = vmatprep.subr.bf16.mxu0 0
      %745 = vmatpush1.bf16.xpose.msra.mxu0 0
      %746 = vmatprep.subr.bf16.mxu0 0
      %747 = vmatpush1.bf16.xpose.msra.mxu0 0
      %748 = vmatprep.mubr.bf16.mxu0 0
      %749 = vmatmul.mubr.bf16.gmra.mrb[0].mxu0 %v705
      %v750 = vpop.f32.mrb[0].mxu0
      %v751 = vadd.f32 0.0, %v750
      %v752 = vpop.f32.mrb[0].mxu0
      %v753 = vpop.f32.mrb[0].mxu0
      %v754 = vadd.f32 0.0, %v753
      %v755 = vpop.f32.mrb[0].mxu0
      %756 = vmatprep.mubr.bf16.mxu0 0
      %757 = vmatmul.mubr.bf16.gmra.mrb[0].mxu0 %v708
      %v758 = vpop.f32.mrb[0].mxu0
      %v759 = vadd.f32 0.0, %v758
      %v760 = vpop.f32.mrb[0].mxu0
      %v761 = vpop.f32.mrb[0].mxu0
      %v762 = vadd.f32 0.0, %v761
      %v763 = vpop.f32.mrb[0].mxu0
      %764 = vdwg.mxu0
      %v765 = vpack.c.bf16 %v612, %v609
      %v766 = vpack.c.bf16 %v620, %v617
      %v767 = vpack.c.bf16 %v683, %v680
      %v768 = vpack.c.bf16 %v691, %v688
      %v769 = vpack.c.bf16 %v754, %v751
      %v770 = vpack.c.bf16 %v762, %v759
      %v771 = vpack.c.bf16 %v403, %v402
      %v772 = vpack.c.bf16 %v405, %v404
      %v773 = vpack.c.bf16 %v407, %v406
      %v774 = vpack.c.bf16 %v409, %v408
      %v775 = vpack.c.bf16 %v411, %v410
      %v776 = vpack.c.bf16 %v413, %v412
      %777 = vxpose.xlu0.c.b16.start [1/8] %v765, 128
      %778 = vxpose.xlu0.c.b16.cont [2/8] %v766, 128
      %779 = vxpose.xlu0.c.b16.cont [3/8] 0, 128
      %780 = vxpose.xlu0.c.b16.cont [4/8] 0, 128
      %781 = vxpose.xlu0.c.b16.cont [5/8] 0, 128
      %782 = vxpose.xlu0.c.b16.cont [6/8] 0, 128
      %783 = vxpose.xlu0.c.b16.cont [7/8] 0, 128
      %784 = vxpose.xlu0.c.b16.end [8/8] 0, 128
      %v785 = vpop.trf.xlu0
      %v786 = vpop.trf.xlu0
      %v787 = vpop.trf.xlu0
      %v788 = vpop.trf.xlu0
      %v789 = vpop.trf.xlu0
      %v790 = vpop.trf.xlu0
      %v791 = vpop.trf.xlu0
      %v792 = vpop.trf.xlu0
      %vm793 = vcmask 261120
      %v795 = vsel %vm793, %v785, 0
      %v798 = vsel %vm793, %v786, 0
      %800 = vmatprep.subr.bf16.mxu0 0
      %801 = vmatpush1.bf16.msra.mxu0 %v771
      %802 = vmatprep.subr.bf16.mxu0 0
      %803 = vmatpush1.bf16.msra.mxu0 %v772
      %804 = vmatprep.subr.bf16.mxu0 0
      %805 = vmatpush1.bf16.msra.mxu0 0
      %806 = vmatprep.subr.bf16.mxu0 0
      %807 = vmatpush1.bf16.msra.mxu0 0
      %808 = vmatprep.subr.bf16.mxu0 0
      %809 = vmatpush1.bf16.msra.mxu0 0
      %810 = vmatprep.subr.bf16.mxu0 0
      %811 = vmatpush1.bf16.msra.mxu0 0
      %812 = vmatprep.subr.bf16.mxu0 0
      %813 = vmatpush1.bf16.msra.mxu0 0
      %814 = vmatprep.subr.bf16.mxu0 0
      %815 = vmatpush1.bf16.msra.mxu0 0
      %816 = vmatprep.subr.bf16.mxu0 0
      %817 = vmatpush1.bf16.msra.mxu0 0
      %818 = vmatprep.subr.bf16.mxu0 0
      %819 = vmatpush1.bf16.msra.mxu0 0
      %820 = vmatprep.subr.bf16.mxu0 0
      %821 = vmatpush1.bf16.msra.mxu0 0
      %822 = vmatprep.subr.bf16.mxu0 0
      %823 = vmatpush1.bf16.msra.mxu0 0
      %824 = vmatprep.subr.bf16.mxu0 0
      %825 = vmatpush1.bf16.msra.mxu0 0
      %826 = vmatprep.subr.bf16.mxu0 0
      %827 = vmatpush1.bf16.msra.mxu0 0
      %828 = vmatprep.subr.bf16.mxu0 0
      %829 = vmatpush1.bf16.msra.mxu0 0
      %830 = vmatprep.subr.bf16.mxu0 0
      %831 = vmatpush1.bf16.msra.mxu0 0
      %832 = vmatprep.mubr.bf16.mxu0 0
      %833 = vmatmul.mubr.bf16.gmra.mrb[0].mxu0 %v795
      %v834 = vpop.f32.mrb[0].mxu0
      %v835 = vadd.f32 0.0, %v834
      %v836 = vpop.f32.mrb[0].mxu0
      %v837 = vpop.f32.mrb[0].mxu0
      %v838 = vadd.f32 0.0, %v837
      %v839 = vpop.f32.mrb[0].mxu0
      %840 = vmatprep.mubr.bf16.mxu0 0
      %841 = vmatmul.mubr.bf16.gmra.mrb[0].mxu0 %v798
      %v842 = vpop.f32.mrb[0].mxu0
      %v843 = vadd.f32 0.0, %v842
      %v844 = vpop.f32.mrb[0].mxu0
      %v845 = vpop.f32.mrb[0].mxu0
      %v846 = vadd.f32 0.0, %v845
      %v847 = vpop.f32.mrb[0].mxu0
      %848 = vdwg.mxu0
      %849 = vxpose.xlu0.c.b16.start [1/8] %v767, 128
      %850 = vxpose.xlu0.c.b16.cont [2/8] %v768, 128
      %851 = vxpose.xlu0.c.b16.cont [3/8] 0, 128
      %852 = vxpose.xlu0.c.b16.cont [4/8] 0, 128
      %853 = vxpose.xlu0.c.b16.cont [5/8] 0, 128
      %854 = vxpose.xlu0.c.b16.cont [6/8] 0, 128
      %855 = vxpose.xlu0.c.b16.cont [7/8] 0, 128
      %856 = vxpose.xlu0.c.b16.end [8/8] 0, 128
      %v857 = vpop.trf.xlu0
      %v858 = vpop.trf.xlu0
      %v859 = vpop.trf.xlu0
      %v860 = vpop.trf.xlu0
      %v861 = vpop.trf.xlu0
      %v862 = vpop.trf.xlu0
      %v863 = vpop.trf.xlu0
      %v864 = vpop.trf.xlu0
      %v866 = vsel %vm793, %v857, 0
      %v869 = vsel %vm793, %v858, 0
      %871 = vmatprep.subr.bf16.mxu0 0
      %872 = vmatpush1.bf16.msra.mxu0 %v773
      %873 = vmatprep.subr.bf16.mxu0 0
      %874 = vmatpush1.bf16.msra.mxu0 %v774
      %875 = vmatprep.subr.bf16.mxu0 0
      %876 = vmatpush1.bf16.msra.mxu0 0
      %877 = vmatprep.subr.bf16.mxu0 0
      %878 = vmatpush1.bf16.msra.mxu0 0
      %879 = vmatprep.subr.bf16.mxu0 0
      %880 = vmatpush1.bf16.msra.mxu0 0
      %881 = vmatprep.subr.bf16.mxu0 0
      %882 = vmatpush1.bf16.msra.mxu0 0
      %883 = vmatprep.subr.bf16.mxu0 0
      %884 = vmatpush1.bf16.msra.mxu0 0
      %885 = vmatprep.subr.bf16.mxu0 0
      %886 = vmatpush1.bf16.msra.mxu0 0
      %887 = vmatprep.subr.bf16.mxu0 0
      %888 = vmatpush1.bf16.msra.mxu0 0
      %889 = vmatprep.subr.bf16.mxu0 0
      %890 = vmatpush1.bf16.msra.mxu0 0
      %891 = vmatprep.subr.bf16.mxu0 0
      %892 = vmatpush1.bf16.msra.mxu0 0
      %893 = vmatprep.subr.bf16.mxu0 0
      %894 = vmatpush1.bf16.msra.mxu0 0
      %895 = vmatprep.subr.bf16.mxu0 0
      %896 = vmatpush1.bf16.msra.mxu0 0
      %897 = vmatprep.subr.bf16.mxu0 0
      %898 = vmatpush1.bf16.msra.mxu0 0
      %899 = vmatprep.subr.bf16.mxu0 0
      %900 = vmatpush1.bf16.msra.mxu0 0
      %901 = vmatprep.subr.bf16.mxu0 0
      %902 = vmatpush1.bf16.msra.mxu0 0
      %903 = vmatprep.mubr.bf16.mxu0 0
      %904 = vmatmul.mubr.bf16.gmra.mrb[0].mxu0 %v866
      %v905 = vpop.f32.mrb[0].mxu0
      %v906 = vadd.f32 0.0, %v905
      %v907 = vpop.f32.mrb[0].mxu0
      %v908 = vpop.f32.mrb[0].mxu0
      %v909 = vadd.f32 0.0, %v908
      %v910 = vpop.f32.mrb[0].mxu0
      %911 = vmatprep.mubr.bf16.mxu0 0
      %912 = vmatmul.mubr.bf16.gmra.mrb[0].mxu0 %v869
      %v913 = vpop.f32.mrb[0].mxu0
      %v914 = vadd.f32 0.0, %v913
      %v915 = vpop.f32.mrb[0].mxu0
      %v916 = vpop.f32.mrb[0].mxu0
      %v917 = vadd.f32 0.0, %v916
      %v918 = vpop.f32.mrb[0].mxu0
      %919 = vdwg.mxu0
      %920 = vxpose.xlu0.c.b16.start [1/8] %v769, 128
      %921 = vxpose.xlu0.c.b16.cont [2/8] %v770, 128
      %922 = vxpose.xlu0.c.b16.cont [3/8] 0, 128
      %923 = vxpose.xlu0.c.b16.cont [4/8] 0, 128
      %924 = vxpose.xlu0.c.b16.cont [5/8] 0, 128
      %925 = vxpose.xlu0.c.b16.cont [6/8] 0, 128
      %926 = vxpose.xlu0.c.b16.cont [7/8] 0, 128
      %927 = vxpose.xlu0.c.b16.end [8/8] 0, 128
      %v928 = vpop.trf.xlu0
      %v929 = vpop.trf.xlu0
      %v930 = vpop.trf.xlu0
      %v931 = vpop.trf.xlu0
      %v932 = vpop.trf.xlu0
      %v933 = vpop.trf.xlu0
      %v934 = vpop.trf.xlu0
      %v935 = vpop.trf.xlu0
      %v937 = vsel %vm793, %v928, 0
      %v940 = vsel %vm793, %v929, 0
      %942 = vmatprep.subr.bf16.mxu0 0
      %943 = vmatpush1.bf16.msra.mxu0 %v775
      %944 = vmatprep.subr.bf16.mxu0 0
      %945 = vmatpush1.bf16.msra.mxu0 %v776
      %946 = vmatprep.subr.bf16.mxu0 0
      %947 = vmatpush1.bf16.msra.mxu0 0
      %948 = vmatprep.subr.bf16.mxu0 0
      %949 = vmatpush1.bf16.msra.mxu0 0
      %950 = vmatprep.subr.bf16.mxu0 0
      %951 = vmatpush1.bf16.msra.mxu0 0
      %952 = vmatprep.subr.bf16.mxu0 0
      %953 = vmatpush1.bf16.msra.mxu0 0
      %954 = vmatprep.subr.bf16.mxu0 0
      %955 = vmatpush1.bf16.msra.mxu0 0
      %956 = vmatprep.subr.bf16.mxu0 0
      %957 = vmatpush1.bf16.msra.mxu0 0
      %958 = vmatprep.subr.bf16.mxu0 0
      %959 = vmatpush1.bf16.msra.mxu0 0
      %960 = vmatprep.subr.bf16.mxu0 0
      %961 = vmatpush1.bf16.msra.mxu0 0
      %962 = vmatprep.subr.bf16.mxu0 0
      %963 = vmatpush1.bf16.msra.mxu0 0
      %964 = vmatprep.subr.bf16.mxu0 0
      %965 = vmatpush1.bf16.msra.mxu0 0
      %966 = vmatprep.subr.bf16.mxu0 0
      %967 = vmatpush1.bf16.msra.mxu0 0
      %968 = vmatprep.subr.bf16.mxu0 0
      %969 = vmatpush1.bf16.msra.mxu0 0
      %970 = vmatprep.subr.bf16.mxu0 0
      %971 = vmatpush1.bf16.msra.mxu0 0
      %972 = vmatprep.subr.bf16.mxu0 0
      %973 = vmatpush1.bf16.msra.mxu0 0
      %974 = vmatprep.mubr.bf16.mxu0 0
      %975 = vmatmul.mubr.bf16.gmra.mrb[0].mxu0 %v937
      %v976 = vpop.f32.mrb[0].mxu0
      %v977 = vadd.f32 0.0, %v976
      %v978 = vpop.f32.mrb[0].mxu0
      %v979 = vpop.f32.mrb[0].mxu0
      %v980 = vadd.f32 0.0, %v979
      %v981 = vpop.f32.mrb[0].mxu0
      %982 = vmatprep.mubr.bf16.mxu0 0
      %983 = vmatmul.mubr.bf16.gmra.mrb[0].mxu0 %v940
      %v984 = vpop.f32.mrb[0].mxu0
      %v985 = vadd.f32 0.0, %v984
      %v986 = vpop.f32.mrb[0].mxu0
      %v987 = vpop.f32.mrb[0].mxu0
      %v988 = vadd.f32 0.0, %v987
      %v989 = vpop.f32.mrb[0].mxu0
      %990 = vdwg.mxu0
      %991 = vst.msk [vmem:[%s210] sm:$0xff] %vm272, %v835
      %992 = vst.msk [vmem:[%s210 + $0x8] sm:$0xff] %vm272, %v838
      %993 = vst.msk [vmem:[%s210 + $0x10] sm:$0xff] %vm272, %v843
      %994 = vst.msk [vmem:[%s210 + $0x18] sm:$0xff] %vm272, %v846
      %995 = vst.msk [vmem:[%s210 + $0x20] sm:$0xff] %vm272, %v906
      %996 = vst.msk [vmem:[%s210 + $0x28] sm:$0xff] %vm272, %v909
      %997 = vst.msk [vmem:[%s210 + $0x30] sm:$0xff] %vm272, %v914
      %998 = vst.msk [vmem:[%s210 + $0x38] sm:$0xff] %vm272, %v917
      %999 = vst.msk [vmem:[%s210 + $0x40] sm:$0xff] %vm272, %v977
      %1000 = vst.msk [vmem:[%s210 + $0x48] sm:$0xff] %vm272, %v980
      %1001 = vst.msk [vmem:[%s210 + $0x50] sm:$0xff] %vm272, %v985
      %1002 = vst.msk [vmem:[%s210 + $0x58] sm:$0xff] %vm272, %v988
      %p1003 = scmp.lt.s32.totalorder %s14, 1
      %s1004 = scalar_select %p1003, %s14, 1
      %s1005 = smul.addr %s1004, 12
      %s1006 = smul.addr %s1005, 8
      %s1007 = scalar_lea.vmem %s3, %s1006
      // Predicated region
      $region33: #{unet1d_flattening_forward.115} parent=31 // pred_check
        %p1008 = pneg %p110
      $region34: #{unet1d_flattening_forward.115} parent=31 // pred_check_branch
        %1010 = sbr.rel (%p1008) target = $region36
      $region35: #{unet1d_flattening_forward.115} parent=31 // pred_region
        _
      $region36: #{unet1d_flattening_forward.115} parent=31 // pred_fallthru
        _
    $region32: #{unet1d_flattening_forward.115} parent=5 // pred_fallthru
      _
    %p1011 = scmp.le.s32.totalorder 2, %s9
    // Predicated region
    $region37: #{unet1d_flattening_forward.115} parent=5 // pred_check
      %p1012 = pneg %p1011
    $region38: #{unet1d_flattening_forward.115} parent=5 // pred_check_branch
      %1014 = sbr.rel (%p1012) target = $region40
    $region39: #{unet1d_flattening_forward.115} parent=5 // pred_region
      %s1015 = ssub.s32 %s9, 2
      // Predicated region
      $region41: #{unet1d_flattening_forward.115} parent=39 // pred_check
        %p1016 = pneg %p116
      $region42: #{unet1d_flattening_forward.115} parent=39 // pred_check_branch
        %1018 = sbr.rel (%p1016) target = $region44
      $region43: #{unet1d_flattening_forward.115} parent=39 // pred_region
        %p1019 = scmp.lt.s32.totalorder %s15, 1
        %s1020 = scalar_select %p1019, %s15, 1
        %s1021 = smul.addr %s1020, 12
        %s1022 = smul.addr %s1021, 8
        %s1023 = scalar_lea.vmem %s3, %s1022
      $region44: #{unet1d_flattening_forward.115} parent=39 // pred_fallthru
        _
    $region40: #{unet1d_flattening_forward.115} parent=5 // pred_fallthru
      _
  $region6: #{unet1d_flattening_forward.115} parent=0 // loop_footer
    %s13 = sadd.s32 1, %s9
  $region7: #{unet1d_flattening_forward.115} parent=0 // loop_footer_branch
    %8 = sbr.rel target = $region3
  $region8: #{unet1d_flattening_forward.115} parent=0 // loop_exit
    _

// kernel: unet1d_flattening_forward.128
$region0: #{unet1d_flattening_forward.128}
  #allocation0 [shape = 'u32[]', space=smem, size = 0x4, offset = 0x4, fixed_abs, tag = 'smem constant byte address 0x4 - core index']
  #allocation1 [shape = 'u32[144,128]{1,0:T(1,128)}', space=vmem, size = 0x12000, scoped, tag = 'internal scratch']
  %s0 = inlined_call_operand.vmem [shape: bf16[2,14,24], index: 0, kind: input, shape index: {}]
  %s1 = inlined_call_operand.vmem [shape: bf16[3,24,24], index: 1, kind: input, shape index: {}]
  %s2 = inlined_call_operand.vmem [shape: f32[1,24], index: 2, kind: input, shape index: {}]
  %s3 = inlined_call_operand.vmem [shape: f32[2,12,24], index: 3, kind: output, shape index: {}]
  %s4 = sld [smem:[#allocation0]]
  $region45: #{unet1d_flattening_forward.128} parent=0
    _
  %s6 = ssub.s32 1, %s4
  %s7 = scalar_select 0, %s6, %s4
  loop: start=0, step=1, limit=4
  $region2: #{unet1d_flattening_forward.128} parent=0 // loop_pre_header
    _
  $region3: #{unet1d_flattening_forward.128} parent=0 // loop_header
    %s9 = sphi 0, %s13
    %p10 = scmp.ge.s32.totalorder %s9, 4
    %s19 = sphi 0, %s21
    %s22 = sphi 0, %s19
    %s23 = sphi 0, %s22
    %s39 = sphi 0, %s23
    %s43 = sphi 0, %s43
    %s45 = sphi 0, %s43
    %s46 = sphi 0, %s45
    %s60 = sphi 0, %s46
    %s64 = sphi 0, %s64
    %s66 = sphi 0, %s64
    %s67 = sphi 0, %s66
    %s81 = sphi 0, %s67
    %s87 = sphi 0, %s89
    %s90 = sphi 0, %s87
    %s91 = sphi 0, %s90
    %s107 = sphi 0, %s91
  $region4: #{unet1d_flattening_forward.128} parent=0 // loop_header_branch
    %12 = sbr.rel (%p10) target = $region8
  $region5: #{unet1d_flattening_forward.128} parent=0 // loop_body
    %s14 = ssub.s32 %s9, 1
    %s15 = ssub.s32 %s9, 2
    %s16 = sadd.s32 %s9, 1
    %s17 = ssub.s32 %s9, %s16
    %p18 = scmp.eq.s32.totalorder %s17, 0
    %s20 = sadd.s32 %s19, 1
    %s21 = scalar_select %p18, %s19, %s20
    %p24 = pneg %p18
    %p25 = scmp.eq.s32.totalorder %s9, 1
    %p26 = por %p24, %p25
    %p27 = scmp.ne.s32.totalorder %s19, %s22
    %p28 = scmp.eq.s32.totalorder %s9, 0
    %p29 = por %p27, %p28
    %p30 = scmp.ne.s32.totalorder %s19, %s22
    %p31 = scmp.eq.s32.totalorder %s14, 1
    %p32 = por %p30, %p31
    %p33 = scmp.ne.s32.totalorder %s22, %s23
    %p34 = scmp.eq.s32.totalorder %s14, 0
    %p35 = por %p33, %p34
    %p36 = scmp.ne.s32.totalorder %s22, %s23
    %p37 = scmp.eq.s32.totalorder %s15, 1
    %p38 = por %p36, %p37
    %p40 = scmp.ne.s32.totalorder %s23, %s39
    %p41 = scmp.eq.s32.totalorder %s15, 0
    %p42 = por %p40, %p41
    %s44 = sadd.s32 %s43, 1
    %p47 = scmp.eq.s32.totalorder %s9, 1
    %p48 = scmp.ne.s32.totalorder %s43, %s45
    %p49 = scmp.eq.s32.totalorder %s9, 0
    %p50 = por %p48, %p49
    %p51 = scmp.ne.s32.totalorder %s43, %s45
    %p52 = scmp.eq.s32.totalorder %s14, 1
    %p53 = por %p51, %p52
    %p54 = scmp.ne.s32.totalorder %s45, %s46
    %p55 = scmp.eq.s32.totalorder %s14, 0
    %p56 = por %p54, %p55
    %p57 = scmp.ne.s32.totalorder %s45, %s46
    %p58 = scmp.eq.s32.totalorder %s15, 1
    %p59 = por %p57, %p58
    %p61 = scmp.ne.s32.totalorder %s46, %s60
    %p62 = scmp.eq.s32.totalorder %s15, 0
    %p63 = por %p61, %p62
    %s65 = sadd.s32 %s64, 1
    %p68 = scmp.eq.s32.totalorder %s9, 1
    %p69 = scmp.ne.s32.totalorder %s64, %s66
    %p70 = scmp.eq.s32.totalorder %s9, 0
    %p71 = por %p69, %p70
    %p72 = scmp.ne.s32.totalorder %s64, %s66
    %p73 = scmp.eq.s32.totalorder %s14, 1
    %p74 = por %p72, %p73
    %p75 = scmp.ne.s32.totalorder %s66, %s67
    %p76 = scmp.eq.s32.totalorder %s14, 0
    %p77 = por %p75, %p76
    %p78 = scmp.ne.s32.totalorder %s66, %s67
    %p79 = scmp.eq.s32.totalorder %s15, 1
    %p80 = por %p78, %p79
    %p82 = scmp.ne.s32.totalorder %s67, %s81
    %p83 = scmp.eq.s32.totalorder %s15, 0
    %p84 = por %p82, %p83
    %s85 = ssub.s32 %s9, %s16
    %p86 = scmp.eq.s32.totalorder %s85, 0
    %s88 = sadd.s32 %s87, 1
    %s89 = scalar_select %p86, %s87, %s88
    %p92 = pneg %p86
    %p93 = scmp.eq.s32.totalorder %s9, 1
    %p94 = por %p92, %p93
    %p95 = scmp.ne.s32.totalorder %s87, %s90
    %p96 = scmp.eq.s32.totalorder %s9, 0
    %p97 = por %p95, %p96
    %p98 = scmp.ne.s32.totalorder %s87, %s90
    %p99 = scmp.eq.s32.totalorder %s14, 1
    %p100 = por %p98, %p99
    %p101 = scmp.ne.s32.totalorder %s90, %s91
    %p102 = scmp.eq.s32.totalorder %s14, 0
    %p103 = por %p101, %p102
    %p104 = scmp.ne.s32.totalorder %s90, %s91
    %p105 = scmp.eq.s32.totalorder %s15, 1
    %p106 = por %p104, %p105
    %p108 = scmp.ne.s32.totalorder %s91, %s107
    %p109 = scmp.eq.s32.totalorder %s15, 0
    %p110 = por %p108, %p109
    %p111 = scmp.le.s32.totalorder 1, %s9
    %p112 = scmp.lt.s32.totalorder %s9, 3
    %p113 = pnand %p111, %p112
    %p114 = pneg %p113
    // Predicated region
    $region9: #{unet1d_flattening_forward.128} parent=5 // pred_check
      _
    $region10: #{unet1d_flattening_forward.128} parent=5 // pred_check_branch
      %116 = sbr.rel (%p113) target = $region12
    $region11: #{unet1d_flattening_forward.128} parent=5 // pred_region
      %s117 = ssub.s32 %s9, 1
      // Predicated region
      $region13: #{unet1d_flattening_forward.128} parent=11 // pred_check
        %p118 = pneg %p56
      $region14: #{unet1d_flattening_forward.128} parent=11 // pred_check_branch
        %120 = sbr.rel (%p118) target = $region16
      $region15: #{unet1d_flattening_forward.128} parent=11 // pred_region
        _
      $region16: #{unet1d_flattening_forward.128} parent=11 // pred_fallthru
        _
      // Predicated region
      $region17: #{unet1d_flattening_forward.128} parent=11 // pred_check
        %p121 = pneg %p77
      $region18: #{unet1d_flattening_forward.128} parent=11 // pred_check_branch
        %123 = sbr.rel (%p121) target = $region20
      $region19: #{unet1d_flattening_forward.128} parent=11 // pred_region
        _
      $region20: #{unet1d_flattening_forward.128} parent=11 // pred_fallthru
        _
    $region12: #{unet1d_flattening_forward.128} parent=5 // pred_fallthru
      _
    %p124 = scmp.lt.s32.totalorder %s9, 2
    // Predicated region
    $region21: #{unet1d_flattening_forward.128} parent=5 // pred_check
      %p125 = pneg %p124
    $region22: #{unet1d_flattening_forward.128} parent=5 // pred_check_branch
      %127 = sbr.rel (%p125) target = $region24
    $region23: #{unet1d_flattening_forward.128} parent=5 // pred_region
      // Predicated region
      $region25: #{unet1d_flattening_forward.128} parent=23 // pred_check
        %p128 = pneg %p29
      $region26: #{unet1d_flattening_forward.128} parent=23 // pred_check_branch
        %130 = sbr.rel (%p128) target = $region28
      $region27: #{unet1d_flattening_forward.128} parent=23 // pred_region
        %p131 = scmp.lt.s32.totalorder %s9, 1
        %s132 = scalar_select %p131, %s9, 1
        %s133 = smul.addr %s132, 2
        %s134 = smul.addr %s133, 4
        %s135 = scalar_lea.vmem %s0, %s134
      $region28: #{unet1d_flattening_forward.128} parent=23 // pred_fallthru
        _
    $region24: #{unet1d_flattening_forward.128} parent=5 // pred_fallthru
      _
    %p136 = scmp.le.s32.totalorder 1, %s9
    %p137 = scmp.lt.s32.totalorder %s9, 3
    %p138 = pnand %p136, %p137
    %p139 = pneg %p138
    // Predicated region
    $region29: #{unet1d_flattening_forward.128} parent=5 // pred_check
      _
    $region30: #{unet1d_flattening_forward.128} parent=5 // pred_check_branch
      %141 = sbr.rel (%p138) target = $region32
    $region31: #{unet1d_flattening_forward.128} parent=5 // pred_region
      %s142 = ssub.s32 %s9, 1
      %p143 = scmp.lt.s32.totalorder %s14, 1
      %s144 = scalar_select %p143, %s14, 1
      %s145 = smul.addr %s144, 2
      %s146 = smul.addr %s145, 4
      %s147 = scalar_lea.vmem %s0, %s146
      %p148 = pneg %p35
      %p149 = pneg %p32
      %p150 = pneg %p56
      %p151 = pneg %p53
      %p152 = pneg %p77
      %p153 = pneg %p74
      %p154 = pneg %p103
      %p155 = pneg %p100
      %p156 = scmp.lt.s32.totalorder %s14, 1
      %s157 = scalar_select %p156, %s14, 1
      %s158 = smul.addr %s157, 2
      %s159 = smul.addr %s158, 8
      %s160 = scalar_lea.vmem %s3, %s159
      %p161 = scmp.lt.s32.totalorder %s14, 1
      %s162 = scalar_select %p161, %s14, 1
      %s163 = smul.addr %s162, 2
      %s164 = smul.addr %s163, 4
      %s165 = scalar_lea.vmem %s0, %s164
      %p166 = scmp.lt.s32.totalorder %s14, 1
      %s167 = scalar_select %p166, %s14, 1
      %s168 = smul.addr %s167, 2
      %s169 = smul.addr %s168, 8
      %s170 = scalar_lea.vmem %s3, %s169
      %v172 = vld [vmem:[%s165] sm:$0xf]
      %v173 = vld [vmem:[%s165 + $0x4] sm:$0x3]
      %v174 = vld [vmem:[%s1] sm:$0xf]
      %v175 = vld [vmem:[%s1 + $0x4] sm:$0xf]
      %v176 = vld [vmem:[%s1 + $0x8] sm:$0xf]
      %v177 = vld [vmem:[%s165 + $0x4] sm:$0x7]
      %s178 = scalar_lea.vmem %s1, 12
      %v179 = vld [vmem:[%s178] sm:$0xf]
      %v180 = vld [vmem:[%s178 + $0x4] sm:$0xf]
      %v181 = vld [vmem:[%s178 + $0x8] sm:$0xf]
      %v184 = vunpack.c.l.b16 %v172
      %v185 = vunpack.c.l.b16 %v177
      %v186 = vpack.c.b16 %v185, %v184
      %v188 = vshrl.u32 %v186, 16
      %v190 = vshll.u32 %v186, 16
      %v192 = vrot.slane %v190, 1
      %v193 = vor.u32 %v188, %v192
      %v197 = vunpack.c.l.b16 %v179
      %v198 = vunpack.c.l.b16 %v180
      %v199 = vunpack.c.l.b16 %v181
      %v200 = vpack.c.b16 %v198, %v197
      %v201 = vpack.c.b16 %v199, %v199
      %vm203 = vcmask 195584
      %v205 = vsel %vm203, %v193, 0
      %vm207 = vcmask 1043456
      %v209 = vsel %vm207, %v201, 0
      %211 = vmatprep.subr.bf16.mxu0 0
      %212 = vmatpush1.bf16.msra.mxu0 %v200
      %213 = vmatprep.subr.bf16.mxu0 0
      %214 = vmatpush1.bf16.msra.mxu0 %v209
      %215 = vmatprep.subr.bf16.mxu0 0
      %216 = vmatpush1.bf16.msra.mxu0 0
      %217 = vmatprep.subr.bf16.mxu0 0
      %218 = vmatpush1.bf16.msra.mxu0 0
      %219 = vmatprep.subr.bf16.mxu0 0
      %220 = vmatpush1.bf16.msra.mxu0 0
      %221 = vmatprep.subr.bf16.mxu0 0
      %222 = vmatpush1.bf16.msra.mxu0 0
      %223 = vmatprep.subr.bf16.mxu0 0
      %224 = vmatpush1.bf16.msra.mxu0 0
      %225 = vmatprep.subr.bf16.mxu0 0
      %226 = vmatpush1.bf16.msra.mxu0 0
      %227 = vmatprep.subr.bf16.mxu0 0
      %228 = vmatpush1.bf16.msra.mxu0 0
      %229 = vmatprep.subr.bf16.mxu0 0
      %230 = vmatpush1.bf16.msra.mxu0 0
      %231 = vmatprep.subr.bf16.mxu0 0
      %232 = vmatpush1.bf16.msra.mxu0 0
      %233 = vmatprep.subr.bf16.mxu0 0
      %234 = vmatpush1.bf16.msra.mxu0 0
      %235 = vmatprep.subr.bf16.mxu0 0
      %236 = vmatpush1.bf16.msra.mxu0 0
      %237 = vmatprep.subr.bf16.mxu0 0
      %238 = vmatpush1.bf16.msra.mxu0 0
      %239 = vmatprep.subr.bf16.mxu0 0
      %240 = vmatpush1.bf16.msra.mxu0 0
      %241 = vmatprep.subr.bf16.mxu0 0
      %242 = vmatpush1.bf16.msra.mxu0 0
      %243 = vmatprep.mubr.bf16.mxu0 0
      %244 = vmatmul.mubr.bf16.gmra.mrb[0].mxu0 %v205
      %v245 = vpop.f32.mrb[0].mxu0
      %v246 = vadd.f32 0.0, %v245
      %v247 = vpop.f32.mrb[0].mxu0
      %v248 = vpop.f32.mrb[0].mxu0
      %v249 = vadd.f32 0.0, %v248
      %v250 = vpop.f32.mrb[0].mxu0
      %251 = vdwg.mxu0
      %v253 = vunpack.c.l.b16 %v173
      %v254 = vpack.c.b16 %v253, %v184
      %v258 = vunpack.c.l.b16 %v174
      %v259 = vunpack.c.l.b16 %v175
      %v260 = vunpack.c.l.b16 %v176
      %v261 = vpack.c.b16 %v259, %v258
      %v262 = vpack.c.b16 %v260, %v260
      %v265 = vsel %vm203, %v254, 0
      %v268 = vsel %vm207, %v262, 0
      %270 = vmatprep.subr.bf16.mxu0 0
      %271 = vmatpush1.bf16.msra.mxu0 %v261
      %272 = vmatprep.subr.bf16.mxu0 0
      %273 = vmatpush1.bf16.msra.mxu0 %v268
      %274 = vmatprep.subr.bf16.mxu0 0
      %275 = vmatpush1.bf16.msra.mxu0 0
      %276 = vmatprep.subr.bf16.mxu0 0
      %277 = vmatpush1.bf16.msra.mxu0 0
      %278 = vmatprep.subr.bf16.mxu0 0
      %279 = vmatpush1.bf16.msra.mxu0 0
      %280 = vmatprep.subr.bf16.mxu0 0
      %281 = vmatpush1.bf16.msra.mxu0 0
      %282 = vmatprep.subr.bf16.mxu0 0
      %283 = vmatpush1.bf16.msra.mxu0 0
      %284 = vmatprep.subr.bf16.mxu0 0
      %285 = vmatpush1.bf16.msra.mxu0 0
      %286 = vmatprep.subr.bf16.mxu0 0
      %287 = vmatpush1.bf16.msra.mxu0 0
      %288 = vmatprep.subr.bf16.mxu0 0
      %289 = vmatpush1.bf16.msra.mxu0 0
      %290 = vmatprep.subr.bf16.mxu0 0
      %291 = vmatpush1.bf16.msra.mxu0 0
      %292 = vmatprep.subr.bf16.mxu0 0
      %293 = vmatpush1.bf16.msra.mxu0 0
      %294 = vmatprep.subr.bf16.mxu0 0
      %295 = vmatpush1.bf16.msra.mxu0 0
      %296 = vmatprep.subr.bf16.mxu0 0
      %297 = vmatpush1.bf16.msra.mxu0 0
      %298 = vmatprep.subr.bf16.mxu0 0
      %299 = vmatpush1.bf16.msra.mxu0 0
      %300 = vmatprep.subr.bf16.mxu0 0
      %301 = vmatpush1.bf16.msra.mxu0 0
      %302 = vmatprep.mubr.bf16.mxu0 0
      %303 = vmatmul.mubr.bf16.gmra.mrb[0].mxu0 %v265
      %v304 = vpop.f32.mrb[0].mxu0
      %v305 = vadd.f32 %v246, %v304
      %v306 = vpop.f32.mrb[0].mxu0
      %v307 = vpop.f32.mrb[0].mxu0
      %v308 = vadd.f32 %v249, %v307
      %v309 = vpop.f32.mrb[0].mxu0
      %310 = vdwg.mxu0
      %v311 = vld [vmem:[%s165] sm:$0xe]
      %s312 = scalar_lea.vmem %s1, 24
      %v313 = vld [vmem:[%s312] sm:$0xf]
      %v314 = vld [vmem:[%s312 + $0x4] sm:$0xf]
      %v315 = vld [vmem:[%s312 + $0x8] sm:$0xf]
      %v317 = vunpack.c.l.b16 %v311
      %v318 = vpack.c.b16 %v185, %v317
      %v319 = vrot.slane %v318, 1
      %v323 = vunpack.c.l.b16 %v313
      %v324 = vunpack.c.l.b16 %v314
      %v325 = vunpack.c.l.b16 %v315
      %v326 = vpack.c.b16 %v324, %v323
      %v327 = vpack.c.b16 %v325, %v325
      %v330 = vsel %vm203, %v319, 0
      %v333 = vsel %vm207, %v327, 0
      %335 = vmatprep.subr.bf16.mxu0 0
      %336 = vmatpush1.bf16.msra.mxu0 %v326
      %337 = vmatprep.subr.bf16.mxu0 0
      %338 = vmatpush1.bf16.msra.mxu0 %v333
      %339 = vmatprep.subr.bf16.mxu0 0
      %340 = vmatpush1.bf16.msra.mxu0 0
      %341 = vmatprep.subr.bf16.mxu0 0
      %342 = vmatpush1.bf16.msra.mxu0 0
      %343 = vmatprep.subr.bf16.mxu0 0
      %344 = vmatpush1.bf16.msra.mxu0 0
      %345 = vmatprep.subr.bf16.mxu0 0
      %346 = vmatpush1.bf16.msra.mxu0 0
      %347 = vmatprep.subr.bf16.mxu0 0
      %348 = vmatpush1.bf16.msra.mxu0 0
      %349 = vmatprep.subr.bf16.mxu0 0
      %350 = vmatpush1.bf16.msra.mxu0 0
      %351 = vmatprep.subr.bf16.mxu0 0
      %352 = vmatpush1.bf16.msra.mxu0 0
      %353 = vmatprep.subr.bf16.mxu0 0
      %354 = vmatpush1.bf16.msra.mxu0 0
      %355 = vmatprep.subr.bf16.mxu0 0
      %356 = vmatpush1.bf16.msra.mxu0 0
      %357 = vmatprep.subr.bf16.mxu0 0
      %358 = vmatpush1.bf16.msra.mxu0 0
      %359 = vmatprep.subr.bf16.mxu0 0
      %360 = vmatpush1.bf16.msra.mxu0 0
      %361 = vmatprep.subr.bf16.mxu0 0
      %362 = vmatpush1.bf16.msra.mxu0 0
      %363 = vmatprep.subr.bf16.mxu0 0
      %364 = vmatpush1.bf16.msra.mxu0 0
      %365 = vmatprep.subr.bf16.mxu0 0
      %366 = vmatpush1.bf16.msra.mxu0 0
      %367 = vmatprep.mubr.bf16.mxu0 0
      %368 = vmatmul.mubr.bf16.gmra.mrb[0].mxu0 %v330
      %v369 = vpop.f32.mrb[0].mxu0
      %v370 = vadd.f32 0.0, %v369
      %v371 = vpop.f32.mrb[0].mxu0
      %v372 = vpop.f32.mrb[0].mxu0
      %v373 = vadd.f32 0.0, %v372
      %v374 = vpop.f32.mrb[0].mxu0
      %375 = vdwg.mxu0
      %v376 = vadd.f32 %v305, %v370
      %v377 = vadd.f32 %v308, %v373
      %v378 = vld [vmem:[%s2] sm:$0x1]
      %v380 = vlaneseq
      %v381 = vshrl.u32 %v380, 7
      %v382 = vsub.s32 0, %v381
      %v383 = vrot.slane %v378, %v382
      %v385 = vadd.f32 %v376, %v383
      %v386 = vadd.f32 %v377, %v383
      %387 = vst.msk [vmem:[%s170] sm:$0xff] %vm203, %v385
      %vm388 = vcmask 191488
      %389 = vst.msk [vmem:[%s170 + $0x8] sm:$0xf] %vm388, %v386
      %p390 = scmp.lt.s32.totalorder %s14, 1
      %s391 = scalar_select %p390, %s14, 1
      %s392 = smul.addr %s391, 2
      %s393 = smul.addr %s392, 8
      %s394 = scalar_lea.vmem %s3, %s393
      // Predicated region
      $region33: #{unet1d_flattening_forward.128} parent=31 // pred_check
        %p395 = pneg %p100
      $region34: #{unet1d_flattening_forward.128} parent=31 // pred_check_branch
        %397 = sbr.rel (%p395) target = $region36
      $region35: #{unet1d_flattening_forward.128} parent=31 // pred_region
        _
      $region36: #{unet1d_flattening_forward.128} parent=31 // pred_fallthru
        _
    $region32: #{unet1d_flattening_forward.128} parent=5 // pred_fallthru
      _
    %p398 = scmp.le.s32.totalorder 2, %s9
    // Predicated region
    $region37: #{unet1d_flattening_forward.128} parent=5 // pred_check
      %p399 = pneg %p398
    $region38: #{unet1d_flattening_forward.128} parent=5 // pred_check_branch
      %401 = sbr.rel (%p399) target = $region40
    $region39: #{unet1d_flattening_forward.128} parent=5 // pred_region
      %s402 = ssub.s32 %s9, 2
      // Predicated region
      $region41: #{unet1d_flattening_forward.128} parent=39 // pred_check
        %p403 = pneg %p106
      $region42: #{unet1d_flattening_forward.128} parent=39 // pred_check_branch
        %405 = sbr.rel (%p403) target = $region44
      $region43: #{unet1d_flattening_forward.128} parent=39 // pred_region
        %p406 = scmp.lt.s32.totalorder %s15, 1
        %s407 = scalar_select %p406, %s15, 1
        %s408 = smul.addr %s407, 2
        %s409 = smul.addr %s408, 8
        %s410 = scalar_lea.vmem %s3, %s409
      $region44: #{unet1d_flattening_forward.128} parent=39 // pred_fallthru
        _
    $region40: #{unet1d_flattening_forward.128} parent=5 // pred_fallthru
      _
  $region6: #{unet1d_flattening_forward.128} parent=0 // loop_footer
    %s13 = sadd.s32 1, %s9
  $region7: #{unet1d_flattening_forward.128} parent=0 // loop_footer_branch
    %8 = sbr.rel target = $region3
  $region8: #{unet1d_flattening_forward.128} parent=0 // loop_exit
    _

// kernel: unet1d_flattening_forward.126
$region0: #{unet1d_flattening_forward.126}
  #allocation0 [shape = 'u32[]', space=smem, size = 0x4, offset = 0x4, fixed_abs, tag = 'smem constant byte address 0x4 - core index']
  #allocation1 [shape = 'u32[144,128]{1,0:T(1,128)}', space=vmem, size = 0x12000, scoped, tag = 'internal scratch']
  %s0 = inlined_call_operand.vmem [shape: bf16[2,26,24], index: 0, kind: input, shape index: {}]
  %s1 = inlined_call_operand.vmem [shape: bf16[4,24,24], index: 1, kind: input, shape index: {}]
  %s2 = inlined_call_operand.vmem [shape: f32[1,24], index: 2, kind: input, shape index: {}]
  %s3 = inlined_call_operand.vmem [shape: f32[2,12,24], index: 3, kind: output, shape index: {}]
  %s4 = sld [smem:[#allocation0]]
  $region45: #{unet1d_flattening_forward.126} parent=0
    _
  %s6 = ssub.s32 1, %s4
  %s7 = scalar_select 0, %s6, %s4
  loop: start=0, step=1, limit=4
  $region2: #{unet1d_flattening_forward.126} parent=0 // loop_pre_header
    _
  $region3: #{unet1d_flattening_forward.126} parent=0 // loop_header
    %s9 = sphi 0, %s13
    %p10 = scmp.ge.s32.totalorder %s9, 4
    %s19 = sphi 0, %s21
    %s22 = sphi 0, %s19
    %s23 = sphi 0, %s22
    %s39 = sphi 0, %s23
    %s43 = sphi 0, %s43
    %s45 = sphi 0, %s43
    %s46 = sphi 0, %s45
    %s60 = sphi 0, %s46
    %s64 = sphi 0, %s64
    %s66 = sphi 0, %s64
    %s67 = sphi 0, %s66
    %s81 = sphi 0, %s67
    %s87 = sphi 0, %s89
    %s90 = sphi 0, %s87
    %s91 = sphi 0, %s90
    %s107 = sphi 0, %s91
  $region4: #{unet1d_flattening_forward.126} parent=0 // loop_header_branch
    %12 = sbr.rel (%p10) target = $region8
  $region5: #{unet1d_flattening_forward.126} parent=0 // loop_body
    %s14 = ssub.s32 %s9, 1
    %s15 = ssub.s32 %s9, 2
    %s16 = sadd.s32 %s9, 1
    %s17 = ssub.s32 %s9, %s16
    %p18 = scmp.eq.s32.totalorder %s17, 0
    %s20 = sadd.s32 %s19, 1
    %s21 = scalar_select %p18, %s19, %s20
    %p24 = pneg %p18
    %p25 = scmp.eq.s32.totalorder %s9, 1
    %p26 = por %p24, %p25
    %p27 = scmp.ne.s32.totalorder %s19, %s22
    %p28 = scmp.eq.s32.totalorder %s9, 0
    %p29 = por %p27, %p28
    %p30 = scmp.ne.s32.totalorder %s19, %s22
    %p31 = scmp.eq.s32.totalorder %s14, 1
    %p32 = por %p30, %p31
    %p33 = scmp.ne.s32.totalorder %s22, %s23
    %p34 = scmp.eq.s32.totalorder %s14, 0
    %p35 = por %p33, %p34
    %p36 = scmp.ne.s32.totalorder %s22, %s23
    %p37 = scmp.eq.s32.totalorder %s15, 1
    %p38 = por %p36, %p37
    %p40 = scmp.ne.s32.totalorder %s23, %s39
    %p41 = scmp.eq.s32.totalorder %s15, 0
    %p42 = por %p40, %p41
    %s44 = sadd.s32 %s43, 1
    %p47 = scmp.eq.s32.totalorder %s9, 1
    %p48 = scmp.ne.s32.totalorder %s43, %s45
    %p49 = scmp.eq.s32.totalorder %s9, 0
    %p50 = por %p48, %p49
    %p51 = scmp.ne.s32.totalorder %s43, %s45
    %p52 = scmp.eq.s32.totalorder %s14, 1
    %p53 = por %p51, %p52
    %p54 = scmp.ne.s32.totalorder %s45, %s46
    %p55 = scmp.eq.s32.totalorder %s14, 0
    %p56 = por %p54, %p55
    %p57 = scmp.ne.s32.totalorder %s45, %s46
    %p58 = scmp.eq.s32.totalorder %s15, 1
    %p59 = por %p57, %p58
    %p61 = scmp.ne.s32.totalorder %s46, %s60
    %p62 = scmp.eq.s32.totalorder %s15, 0
    %p63 = por %p61, %p62
    %s65 = sadd.s32 %s64, 1
    %p68 = scmp.eq.s32.totalorder %s9, 1
    %p69 = scmp.ne.s32.totalorder %s64, %s66
    %p70 = scmp.eq.s32.totalorder %s9, 0
    %p71 = por %p69, %p70
    %p72 = scmp.ne.s32.totalorder %s64, %s66
    %p73 = scmp.eq.s32.totalorder %s14, 1
    %p74 = por %p72, %p73
    %p75 = scmp.ne.s32.totalorder %s66, %s67
    %p76 = scmp.eq.s32.totalorder %s14, 0
    %p77 = por %p75, %p76
    %p78 = scmp.ne.s32.totalorder %s66, %s67
    %p79 = scmp.eq.s32.totalorder %s15, 1
    %p80 = por %p78, %p79
    %p82 = scmp.ne.s32.totalorder %s67, %s81
    %p83 = scmp.eq.s32.totalorder %s15, 0
    %p84 = por %p82, %p83
    %s85 = ssub.s32 %s9, %s16
    %p86 = scmp.eq.s32.totalorder %s85, 0
    %s88 = sadd.s32 %s87, 1
    %s89 = scalar_select %p86, %s87, %s88
    %p92 = pneg %p86
    %p93 = scmp.eq.s32.totalorder %s9, 1
    %p94 = por %p92, %p93
    %p95 = scmp.ne.s32.totalorder %s87, %s90
    %p96 = scmp.eq.s32.totalorder %s9, 0
    %p97 = por %p95, %p96
    %p98 = scmp.ne.s32.totalorder %s87, %s90
    %p99 = scmp.eq.s32.totalorder %s14, 1
    %p100 = por %p98, %p99
    %p101 = scmp.ne.s32.totalorder %s90, %s91
    %p102 = scmp.eq.s32.totalorder %s14, 0
    %p103 = por %p101, %p102
    %p104 = scmp.ne.s32.totalorder %s90, %s91
    %p105 = scmp.eq.s32.totalorder %s15, 1
    %p106 = por %p104, %p105
    %p108 = scmp.ne.s32.totalorder %s91, %s107
    %p109 = scmp.eq.s32.totalorder %s15, 0
    %p110 = por %p108, %p109
    %p111 = scmp.le.s32.totalorder 1, %s9
    %p112 = scmp.lt.s32.totalorder %s9, 3
    %p113 = pnand %p111, %p112
    %p114 = pneg %p113
    // Predicated region
    $region9: #{unet1d_flattening_forward.126} parent=5 // pred_check
      _
    $region10: #{unet1d_flattening_forward.126} parent=5 // pred_check_branch
      %116 = sbr.rel (%p113) target = $region12
    $region11: #{unet1d_flattening_forward.126} parent=5 // pred_region
      %s117 = ssub.s32 %s9, 1
      // Predicated region
      $region13: #{unet1d_flattening_forward.126} parent=11 // pred_check
        %p118 = pneg %p56
      $region14: #{unet1d_flattening_forward.126} parent=11 // pred_check_branch
        %120 = sbr.rel (%p118) target = $region16
      $region15: #{unet1d_flattening_forward.126} parent=11 // pred_region
        _
      $region16: #{unet1d_flattening_forward.126} parent=11 // pred_fallthru
        _
      // Predicated region
      $region17: #{unet1d_flattening_forward.126} parent=11 // pred_check
        %p121 = pneg %p77
      $region18: #{unet1d_flattening_forward.126} parent=11 // pred_check_branch
        %123 = sbr.rel (%p121) target = $region20
      $region19: #{unet1d_flattening_forward.126} parent=11 // pred_region
        _
      $region20: #{unet1d_flattening_forward.126} parent=11 // pred_fallthru
        _
    $region12: #{unet1d_flattening_forward.126} parent=5 // pred_fallthru
      _
    %p124 = scmp.lt.s32.totalorder %s9, 2
    // Predicated region
    $region21: #{unet1d_flattening_forward.126} parent=5 // pred_check
      %p125 = pneg %p124
    $region22: #{unet1d_flattening_forward.126} parent=5 // pred_check_branch
      %127 = sbr.rel (%p125) target = $region24
    $region23: #{unet1d_flattening_forward.126} parent=5 // pred_region
      // Predicated region
      $region25: #{unet1d_flattening_forward.126} parent=23 // pred_check
        %p128 = pneg %p29
      $region26: #{unet1d_flattening_forward.126} parent=23 // pred_check_branch
        %130 = sbr.rel (%p128) target = $region28
      $region27: #{unet1d_flattening_forward.126} parent=23 // pred_region
        %p131 = scmp.lt.s32.totalorder %s9, 1
        %s132 = scalar_select %p131, %s9, 1
        %s133 = smul.addr %s132, 4
        %s134 = smul.addr %s133, 4
        %s135 = scalar_lea.vmem %s0, %s134
      $region28: #{unet1d_flattening_forward.126} parent=23 // pred_fallthru
        _
    $region24: #{unet1d_flattening_forward.126} parent=5 // pred_fallthru
      _
    %p136 = scmp.le.s32.totalorder 1, %s9
    %p137 = scmp.lt.s32.totalorder %s9, 3
    %p138 = pnand %p136, %p137
    %p139 = pneg %p138
    // Predicated region
    $region29: #{unet1d_flattening_forward.126} parent=5 // pred_check
      _
    $region30: #{unet1d_flattening_forward.126} parent=5 // pred_check_branch
      %141 = sbr.rel (%p138) target = $region32
    $region31: #{unet1d_flattening_forward.126} parent=5 // pred_region
      %s142 = ssub.s32 %s9, 1
      %p143 = scmp.lt.s32.totalorder %s14, 1
      %s144 = scalar_select %p143, %s14, 1
      %s145 = smul.addr %s144, 4
      %s146 = smul.addr %s145, 4
      %s147 = scalar_lea.vmem %s0, %s146
      %p148 = pneg %p35
      %p149 = pneg %p32
      %p150 = pneg %p56
      %p151 = pneg %p53
      %p152 = pneg %p77
      %p153 = pneg %p74
      %p154 = pneg %p103
      %p155 = pneg %p100
      %p156 = scmp.lt.s32.totalorder %s14, 1
      %s157 = scalar_select %p156, %s14, 1
      %s158 = smul.addr %s157, 2
      %s159 = smul.addr %s158, 8
      %s160 = scalar_lea.vmem %s3, %s159
      %p161 = scmp.lt.s32.totalorder %s14, 1
      %s162 = scalar_select %p161, %s14, 1
      %s163 = smul.addr %s162, 4
      %s164 = smul.addr %s163, 4
      %s165 = scalar_lea.vmem %s0, %s164
      %p166 = scmp.lt.s32.totalorder %s14, 1
      %s167 = scalar_select %p166, %s14, 1
      %s168 = smul.addr %s167, 2
      %s169 = smul.addr %s168, 8
      %s170 = scalar_lea.vmem %s3, %s169
      %v172 = vld [vmem:[%s165] sm:$0xf]
      %v173 = vld [vmem:[%s165 + $0x4] sm:$0x3]
      %v174 = vld [vmem:[%s1] sm:$0xf]
      %v175 = vld [vmem:[%s1 + $0x4] sm:$0xf]
      %v176 = vld [vmem:[%s1 + $0x8] sm:$0xf]
      %v177 = vld [vmem:[%s165 + $0x4] sm:$0xc]
      %v178 = vld [vmem:[%s165 + $0x8] sm:$0xf]
      %v179 = vld [vmem:[%s165 + $0xc] sm:$0x1]
      %s180 = scalar_lea.vmem %s1, 12
      %v181 = vld [vmem:[%s180] sm:$0xf]
      %v182 = vld [vmem:[%s180 + $0x4] sm:$0xf]
      %v183 = vld [vmem:[%s180 + $0x8] sm:$0xf]
      %v187 = vunpack.c.l.b16 %v177
      %v188 = vunpack.c.l.b16 %v178
      %v189 = vunpack.c.l.b16 %v179
      %v190 = vpack.c.b16 %v188, %v187
      %v191 = vpack.c.b16 %v189, %v189
      %vm192 = vsmask.f32 5376
      %v194 = vshrl.u32 %v190, 16
      %v196 = vrot.slane %v194, 2
      %v197 = vshll.u32 %v190, 16
      %v199 = vrot.slane %v197, 3
      %v200 = vor.u32 %v196, %v199
      %v202 = vshll.u32 %v191, 16
      %v204 = vrot.slane %v202, 3
      %v205 = vsel %vm192, %v200, %v204
      %v209 = vunpack.c.l.b16 %v181
      %v210 = vunpack.c.l.b16 %v182
      %v211 = vunpack.c.l.b16 %v183
      %v212 = vpack.c.b16 %v210, %v209
      %v213 = vpack.c.b16 %v211, %v211
      %vm215 = vcmask 195584
      %v217 = vsel %vm215, %v205, 0
      %vm219 = vcmask 1043456
      %v221 = vsel %vm219, %v213, 0
      %223 = vmatprep.subr.bf16.mxu0 0
      %224 = vmatpush1.bf16.msra.mxu0 %v212
      %225 = vmatprep.subr.bf16.mxu0 0
      %226 = vmatpush1.bf16.msra.mxu0 %v221
      %227 = vmatprep.subr.bf16.mxu0 0
      %228 = vmatpush1.bf16.msra.mxu0 0
      %229 = vmatprep.subr.bf16.mxu0 0
      %230 = vmatpush1.bf16.msra.mxu0 0
      %231 = vmatprep.subr.bf16.mxu0 0
      %232 = vmatpush1.bf16.msra.mxu0 0
      %233 = vmatprep.subr.bf16.mxu0 0
      %234 = vmatpush1.bf16.msra.mxu0 0
      %235 = vmatprep.subr.bf16.mxu0 0
      %236 = vmatpush1.bf16.msra.mxu0 0
      %237 = vmatprep.subr.bf16.mxu0 0
      %238 = vmatpush1.bf16.msra.mxu0 0
      %239 = vmatprep.subr.bf16.mxu0 0
      %240 = vmatpush1.bf16.msra.mxu0 0
      %241 = vmatprep.subr.bf16.mxu0 0
      %242 = vmatpush1.bf16.msra.mxu0 0
      %243 = vmatprep.subr.bf16.mxu0 0
      %244 = vmatpush1.bf16.msra.mxu0 0
      %245 = vmatprep.subr.bf16.mxu0 0
      %246 = vmatpush1.bf16.msra.mxu0 0
      %247 = vmatprep.subr.bf16.mxu0 0
      %248 = vmatpush1.bf16.msra.mxu0 0
      %249 = vmatprep.subr.bf16.mxu0 0
      %250 = vmatpush1.bf16.msra.mxu0 0
      %251 = vmatprep.subr.bf16.mxu0 0
      %252 = vmatpush1.bf16.msra.mxu0 0
      %253 = vmatprep.subr.bf16.mxu0 0
      %254 = vmatpush1.bf16.msra.mxu0 0
      %255 = vmatprep.mubr.bf16.mxu0 0
      %256 = vmatmul.mubr.bf16.gmra.mrb[0].mxu0 %v217
      %v257 = vpop.f32.mrb[0].mxu0
      %v258 = vadd.f32 0.0, %v257
      %v259 = vpop.f32.mrb[0].mxu0
      %v260 = vpop.f32.mrb[0].mxu0
      %v261 = vadd.f32 0.0, %v260
      %v262 = vpop.f32.mrb[0].mxu0
      %263 = vdwg.mxu0
      %v266 = vunpack.c.l.b16 %v172
      %v267 = vunpack.c.l.b16 %v173
      %v268 = vpack.c.b16 %v267, %v266
      %v272 = vunpack.c.l.b16 %v174
      %v273 = vunpack.c.l.b16 %v175
      %v274 = vunpack.c.l.b16 %v176
      %v275 = vpack.c.b16 %v273, %v272
      %v276 = vpack.c.b16 %v274, %v274
      %v279 = vsel %vm215, %v268, 0
      %v282 = vsel %vm219, %v276, 0
      %284 = vmatprep.subr.bf16.mxu0 0
      %285 = vmatpush1.bf16.msra.mxu0 %v275
      %286 = vmatprep.subr.bf16.mxu0 0
      %287 = vmatpush1.bf16.msra.mxu0 %v282
      %288 = vmatprep.subr.bf16.mxu0 0
      %289 = vmatpush1.bf16.msra.mxu0 0
      %290 = vmatprep.subr.bf16.mxu0 0
      %291 = vmatpush1.bf16.msra.mxu0 0
      %292 = vmatprep.subr.bf16.mxu0 0
      %293 = vmatpush1.bf16.msra.mxu0 0
      %294 = vmatprep.subr.bf16.mxu0 0
      %295 = vmatpush1.bf16.msra.mxu0 0
      %296 = vmatprep.subr.bf16.mxu0 0
      %297 = vmatpush1.bf16.msra.mxu0 0
      %298 = vmatprep.subr.bf16.mxu0 0
      %299 = vmatpush1.bf16.msra.mxu0 0
      %300 = vmatprep.subr.bf16.mxu0 0
      %301 = vmatpush1.bf16.msra.mxu0 0
      %302 = vmatprep.subr.bf16.mxu0 0
      %303 = vmatpush1.bf16.msra.mxu0 0
      %304 = vmatprep.subr.bf16.mxu0 0
      %305 = vmatpush1.bf16.msra.mxu0 0
      %306 = vmatprep.subr.bf16.mxu0 0
      %307 = vmatpush1.bf16.msra.mxu0 0
      %308 = vmatprep.subr.bf16.mxu0 0
      %309 = vmatpush1.bf16.msra.mxu0 0
      %310 = vmatprep.subr.bf16.mxu0 0
      %311 = vmatpush1.bf16.msra.mxu0 0
      %312 = vmatprep.subr.bf16.mxu0 0
      %313 = vmatpush1.bf16.msra.mxu0 0
      %314 = vmatprep.subr.bf16.mxu0 0
      %315 = vmatpush1.bf16.msra.mxu0 0
      %316 = vmatprep.mubr.bf16.mxu0 0
      %317 = vmatmul.mubr.bf16.gmra.mrb[0].mxu0 %v279
      %v318 = vpop.f32.mrb[0].mxu0
      %v319 = vadd.f32 %v258, %v318
      %v320 = vpop.f32.mrb[0].mxu0
      %v321 = vpop.f32.mrb[0].mxu0
      %v322 = vadd.f32 %v261, %v321
      %v323 = vpop.f32.mrb[0].mxu0
      %324 = vdwg.mxu0
      %v325 = vld [vmem:[%s165 + $0x4] sm:$0x7]
      %s326 = scalar_lea.vmem %s1, 24
      %v327 = vld [vmem:[%s326] sm:$0xf]
      %v328 = vld [vmem:[%s326 + $0x4] sm:$0xf]
      %v329 = vld [vmem:[%s326 + $0x8] sm:$0xf]
      %v331 = vunpack.c.l.b16 %v325
      %v332 = vpack.c.b16 %v331, %v266
      %v334 = vshrl.u32 %v332, 16
      %v336 = vshll.u32 %v332, 16
      %v338 = vrot.slane %v336, 1
      %v339 = vor.u32 %v334, %v338
      %v343 = vunpack.c.l.b16 %v327
      %v344 = vunpack.c.l.b16 %v328
      %v345 = vunpack.c.l.b16 %v329
      %v346 = vpack.c.b16 %v344, %v343
      %v347 = vpack.c.b16 %v345, %v345
      %v350 = vsel %vm215, %v339, 0
      %v353 = vsel %vm219, %v347, 0
      %355 = vmatprep.subr.bf16.mxu0 0
      %356 = vmatpush1.bf16.msra.mxu0 %v346
      %357 = vmatprep.subr.bf16.mxu0 0
      %358 = vmatpush1.bf16.msra.mxu0 %v353
      %359 = vmatprep.subr.bf16.mxu0 0
      %360 = vmatpush1.bf16.msra.mxu0 0
      %361 = vmatprep.subr.bf16.mxu0 0
      %362 = vmatpush1.bf16.msra.mxu0 0
      %363 = vmatprep.subr.bf16.mxu0 0
      %364 = vmatpush1.bf16.msra.mxu0 0
      %365 = vmatprep.subr.bf16.mxu0 0
      %366 = vmatpush1.bf16.msra.mxu0 0
      %367 = vmatprep.subr.bf16.mxu0 0
      %368 = vmatpush1.bf16.msra.mxu0 0
      %369 = vmatprep.subr.bf16.mxu0 0
      %370 = vmatpush1.bf16.msra.mxu0 0
      %371 = vmatprep.subr.bf16.mxu0 0
      %372 = vmatpush1.bf16.msra.mxu0 0
      %373 = vmatprep.subr.bf16.mxu0 0
      %374 = vmatpush1.bf16.msra.mxu0 0
      %375 = vmatprep.subr.bf16.mxu0 0
      %376 = vmatpush1.bf16.msra.mxu0 0
      %377 = vmatprep.subr.bf16.mxu0 0
      %378 = vmatpush1.bf16.msra.mxu0 0
      %379 = vmatprep.subr.bf16.mxu0 0
      %380 = vmatpush1.bf16.msra.mxu0 0
      %381 = vmatprep.subr.bf16.mxu0 0
      %382 = vmatpush1.bf16.msra.mxu0 0
      %383 = vmatprep.subr.bf16.mxu0 0
      %384 = vmatpush1.bf16.msra.mxu0 0
      %385 = vmatprep.subr.bf16.mxu0 0
      %386 = vmatpush1.bf16.msra.mxu0 0
      %387 = vmatprep.mubr.bf16.mxu0 0
      %388 = vmatmul.mubr.bf16.gmra.mrb[0].mxu0 %v350
      %v389 = vpop.f32.mrb[0].mxu0
      %v390 = vadd.f32 0.0, %v389
      %v391 = vpop.f32.mrb[0].mxu0
      %v392 = vpop.f32.mrb[0].mxu0
      %v393 = vadd.f32 0.0, %v392
      %v394 = vpop.f32.mrb[0].mxu0
      %395 = vdwg.mxu0
      %v396 = vadd.f32 %v319, %v390
      %v397 = vadd.f32 %v322, %v393
      %v398 = vld [vmem:[%s165 + $0x4] sm:$0x8]
      %s399 = scalar_lea.vmem %s1, 36
      %v400 = vld [vmem:[%s399] sm:$0xf]
      %v401 = vld [vmem:[%s399 + $0x4] sm:$0xf]
      %v402 = vld [vmem:[%s399 + $0x8] sm:$0xf]
      %v404 = vunpack.c.l.b16 %v398
      %v405 = vpack.c.b16 %v188, %v404
      %vm406 = vcmask 1044480
      %v407 = vrot.slane %v405, 3
      %v408 = vrot.slane %v191, 3
      %v409 = vsel %vm406, %v407, %v408
      %v413 = vunpack.c.l.b16 %v400
      %v414 = vunpack.c.l.b16 %v401
      %v415 = vunpack.c.l.b16 %v402
      %v416 = vpack.c.b16 %v414, %v413
      %v417 = vpack.c.b16 %v415, %v415
      %v420 = vsel %vm215, %v409, 0
      %v423 = vsel %vm219, %v417, 0
      %425 = vmatprep.subr.bf16.mxu0 0
      %426 = vmatpush1.bf16.msra.mxu0 %v416
      %427 = vmatprep.subr.bf16.mxu0 0
      %428 = vmatpush1.bf16.msra.mxu0 %v423
      %429 = vmatprep.subr.bf16.mxu0 0
      %430 = vmatpush1.bf16.msra.mxu0 0
      %431 = vmatprep.subr.bf16.mxu0 0
      %432 = vmatpush1.bf16.msra.mxu0 0
      %433 = vmatprep.subr.bf16.mxu0 0
      %434 = vmatpush1.bf16.msra.mxu0 0
      %435 = vmatprep.subr.bf16.mxu0 0
      %436 = vmatpush1.bf16.msra.mxu0 0
      %437 = vmatprep.subr.bf16.mxu0 0
      %438 = vmatpush1.bf16.msra.mxu0 0
      %439 = vmatprep.subr.bf16.mxu0 0
      %440 = vmatpush1.bf16.msra.mxu0 0
      %441 = vmatprep.subr.bf16.mxu0 0
      %442 = vmatpush1.bf16.msra.mxu0 0
      %443 = vmatprep.subr.bf16.mxu0 0
      %444 = vmatpush1.bf16.msra.mxu0 0
      %445 = vmatprep.subr.bf16.mxu0 0
      %446 = vmatpush1.bf16.msra.mxu0 0
      %447 = vmatprep.subr.bf16.mxu0 0
      %448 = vmatpush1.bf16.msra.mxu0 0
      %449 = vmatprep.subr.bf16.mxu0 0
      %450 = vmatpush1.bf16.msra.mxu0 0
      %451 = vmatprep.subr.bf16.mxu0 0
      %452 = vmatpush1.bf16.msra.mxu0 0
      %453 = vmatprep.subr.bf16.mxu0 0
      %454 = vmatpush1.bf16.msra.mxu0 0
      %455 = vmatprep.subr.bf16.mxu0 0
      %456 = vmatpush1.bf16.msra.mxu0 0
      %457 = vmatprep.mubr.bf16.mxu0 0
      %458 = vmatmul.mubr.bf16.gmra.mrb[0].mxu0 %v420
      %v459 = vpop.f32.mrb[0].mxu0
      %v460 = vadd.f32 0.0, %v459
      %v461 = vpop.f32.mrb[0].mxu0
      %v462 = vpop.f32.mrb[0].mxu0
      %v463 = vadd.f32 0.0, %v462
      %v464 = vpop.f32.mrb[0].mxu0
      %465 = vdwg.mxu0
      %v466 = vadd.f32 %v396, %v460
      %v467 = vadd.f32 %v397, %v463
      %v468 = vld [vmem:[%s2] sm:$0x1]
      %v470 = vlaneseq
      %v471 = vshrl.u32 %v470, 7
      %v472 = vsub.s32 0, %v471
      %v473 = vrot.slane %v468, %v472
      %v475 = vadd.f32 %v466, %v473
      %v476 = vadd.f32 %v467, %v473
      %477 = vst.msk [vmem:[%s170] sm:$0xff] %vm215, %v475
      %vm478 = vcmask 191488
      %479 = vst.msk [vmem:[%s170 + $0x8] sm:$0xf] %vm478, %v476
      %p480 = scmp.lt.s32.totalorder %s14, 1
      %s481 = scalar_select %p480, %s14, 1
      %s482 = smul.addr %s481, 2
      %s483 = smul.addr %s482, 8
      %s484 = scalar_lea.vmem %s3, %s483
      // Predicated region
      $region33: #{unet1d_flattening_forward.126} parent=31 // pred_check
        %p485 = pneg %p100
      $region34: #{unet1d_flattening_forward.126} parent=31 // pred_check_branch
        %487 = sbr.rel (%p485) target = $region36
      $region35: #{unet1d_flattening_forward.126} parent=31 // pred_region
        _
      $region36: #{unet1d_flattening_forward.126} parent=31 // pred_fallthru
        _
    $region32: #{unet1d_flattening_forward.126} parent=5 // pred_fallthru
      _
    %p488 = scmp.le.s32.totalorder 2, %s9
    // Predicated region
    $region37: #{unet1d_flattening_forward.126} parent=5 // pred_check
      %p489 = pneg %p488
    $region38: #{unet1d_flattening_forward.126} parent=5 // pred_check_branch
      %491 = sbr.rel (%p489) target = $region40
    $region39: #{unet1d_flattening_forward.126} parent=5 // pred_region
      %s492 = ssub.s32 %s9, 2
      // Predicated region
      $region41: #{unet1d_flattening_forward.126} parent=39 // pred_check
        %p493 = pneg %p106
      $region42: #{unet1d_flattening_forward.126} parent=39 // pred_check_branch
        %495 = sbr.rel (%p493) target = $region44
      $region43: #{unet1d_flattening_forward.126} parent=39 // pred_region
        %p496 = scmp.lt.s32.totalorder %s15, 1
        %s497 = scalar_select %p496, %s15, 1
        %s498 = smul.addr %s497, 2
        %s499 = smul.addr %s498, 8
        %s500 = scalar_lea.vmem %s3, %s499
      $region44: #{unet1d_flattening_forward.126} parent=39 // pred_fallthru
        _
    $region40: #{unet1d_flattening_forward.126} parent=5 // pred_fallthru
      _
  $region6: #{unet1d_flattening_forward.126} parent=0 // loop_footer
    %s13 = sadd.s32 1, %s9
  $region7: #{unet1d_flattening_forward.126} parent=0 // loop_footer_branch
    %8 = sbr.rel target = $region3
  $region8: #{unet1d_flattening_forward.126} parent=0 // loop_exit
    _

// kernel: unet1d_flattening_forward.133
$region0: #{unet1d_flattening_forward.133}
  #allocation0 [shape = 'u32[]', space=smem, size = 0x4, offset = 0x4, fixed_abs, tag = 'smem constant byte address 0x4 - core index']
  #allocation1 [shape = 'u32[144,128]{1,0:T(1,128)}', space=vmem, size = 0x12000, scoped, tag = 'internal scratch']
  #allocation2 [shape = 'f32[24,128]{1,0:T(8,128)}', space=vmem, size = 0x3000, scoped, tag = 'scratch operand']
  %s0 = inlined_call_operand.vmem [shape: bf16[24,128], index: 0, kind: input, shape index: {}]
  %s1 = inlined_call_operand.vmem [shape: bf16[128,384], index: 1, kind: input, shape index: {}]
  %s2 = inlined_call_operand.vmem [shape: f32[1,384], index: 2, kind: input, shape index: {}]
  %s3 = inlined_call_operand.vmem [shape: f32[24,384], index: 3, kind: output, shape index: {}]
  %s4 = sld [smem:[#allocation0]]
  $region128: #{unet1d_flattening_forward.133} parent=0
    _
  %s6 = ssub.s32 1, %s4
  %s7 = scalar_select 0, %s6, %s4
  $region1: #{unet1d_flattening_forward.133} parent=0
    #allocation3 [shape = 'u8[65536]{0}', space=vmem, size = 0x10000, scoped, tag = 'input window, operand 1']
    #allocation4 [shape = 'u8[24576]{0}', space=vmem, size = 0x6000, scoped, tag = 'output window, operand 0']
    loop: start=0, step=1, limit=5
    $region2: #{unet1d_flattening_forward.133} parent=1 // loop_pre_header
      _
    $region3: #{unet1d_flattening_forward.133} parent=1 // loop_header
      %s9 = sphi 0, %s13
      %p10 = scmp.ge.s32.totalorder %s9, 5
      %s16 = sphi 0, %s35
      %s17 = sphi 0, %s31
      %s18 = sphi 0, %s27
      %s19 = sphi 0, %s16
      %s20 = sphi 0, %s17
      %s21 = sphi 0, %s18
      %s22 = sphi 0, %s19
      %s23 = sphi 0, %s20
      %s24 = sphi 0, %s21
      %s40 = sphi 0, %s42
      %s43 = sphi 0, %s40
      %s44 = sphi 0, %s43
      %s60 = sphi 0, %s44
      %s68 = sphi 0, %s70
      %s71 = sphi 0, %s68
      %s72 = sphi 0, %s71
      %s88 = sphi 0, %s72
      %s94 = sphi 0, %s96
      %s97 = sphi 0, %s94
      %s98 = sphi 0, %s97
      %s114 = sphi 0, %s98
      %s122 = sphi 0, %s124
      %s125 = sphi 0, %s122
      %s126 = sphi 0, %s125
      %s142 = sphi 0, %s126
    $region4: #{unet1d_flattening_forward.133} parent=1 // loop_header_branch
      %12 = sbr.rel (%p10) target = $region8
    $region5: #{unet1d_flattening_forward.133} parent=1 // loop_body
      %s14 = ssub.s32 %s9, 1
      %s15 = ssub.s32 %s9, 2
      %s25 = sadd.s32 1, %s18
      %p26 = scmp.ge.s32.totalorder %s25, 1
      %s27 = scalar_select %p26, 0, %s25
      %s28 = sadd.s32 1, %s17
      %s29 = scalar_select %p26, %s28, %s17
      %p30 = scmp.ge.s32.totalorder %s29, 3
      %s31 = scalar_select %p30, 0, %s29
      %s32 = sadd.s32 1, %s16
      %s33 = scalar_select %p30, %s32, %s16
      %p34 = scmp.ge.s32.totalorder %s33, 1
      %s35 = scalar_select %p34, 0, %s33
      %s36 = ssub.s32 %s16, %s35
      %s37 = ssub.s32 %s18, %s27
      %s38 = sor.u32 %s36, %s37
      %p39 = scmp.eq.s32.totalorder %s38, 0
      %s41 = sadd.s32 %s40, 1
      %s42 = scalar_select %p39, %s40, %s41
      %p45 = pneg %p39
      %p46 = scmp.eq.s32.totalorder %s9, 2
      %p47 = por %p45, %p46
      %p48 = scmp.ne.s32.totalorder %s40, %s43
      %p49 = scmp.eq.s32.totalorder %s9, 0
      %p50 = por %p48, %p49
      %p51 = scmp.ne.s32.totalorder %s40, %s43
      %p52 = scmp.eq.s32.totalorder %s14, 2
      %p53 = por %p51, %p52
      %p54 = scmp.ne.s32.totalorder %s43, %s44
      %p55 = scmp.eq.s32.totalorder %s14, 0
      %p56 = por %p54, %p55
      %p57 = scmp.ne.s32.totalorder %s43, %s44
      %p58 = scmp.eq.s32.totalorder %s15, 2
      %p59 = por %p57, %p58
      %p61 = scmp.ne.s32.totalorder %s44, %s60
      %p62 = scmp.eq.s32.totalorder %s15, 0
      %p63 = por %p61, %p62
      %s64 = ssub.s32 %s18, %s27
      %s65 = ssub.s32 %s17, %s31
      %s66 = sor.u32 %s64, %s65
      %p67 = scmp.eq.s32.totalorder %s66, 0
      %s69 = sadd.s32 %s68, 1
      %s70 = scalar_select %p67, %s68, %s69
      %p73 = pneg %p67
      %p74 = scmp.eq.s32.totalorder %s9, 2
      %p75 = por %p73, %p74
      %p76 = scmp.ne.s32.totalorder %s68, %s71
      %p77 = scmp.eq.s32.totalorder %s9, 0
      %p78 = por %p76, %p77
      %p79 = scmp.ne.s32.totalorder %s68, %s71
      %p80 = scmp.eq.s32.totalorder %s14, 2
      %p81 = por %p79, %p80
      %p82 = scmp.ne.s32.totalorder %s71, %s72
      %p83 = scmp.eq.s32.totalorder %s14, 0
      %p84 = por %p82, %p83
      %p85 = scmp.ne.s32.totalorder %s71, %s72
      %p86 = scmp.eq.s32.totalorder %s15, 2
      %p87 = por %p85, %p86
      %p89 = scmp.ne.s32.totalorder %s72, %s88
      %p90 = scmp.eq.s32.totalorder %s15, 0
      %p91 = por %p89, %p90
      %s92 = ssub.s32 %s17, %s31
      %p93 = scmp.eq.s32.totalorder %s92, 0
      %s95 = sadd.s32 %s94, 1
      %s96 = scalar_select %p93, %s94, %s95
      %p99 = pneg %p93
      %p100 = scmp.eq.s32.totalorder %s9, 2
      %p101 = por %p99, %p100
      %p102 = scmp.ne.s32.totalorder %s94, %s97
      %p103 = scmp.eq.s32.totalorder %s9, 0
      %p104 = por %p102, %p103
      %p105 = scmp.ne.s32.totalorder %s94, %s97
      %p106 = scmp.eq.s32.totalorder %s14, 2
      %p107 = por %p105, %p106
      %p108 = scmp.ne.s32.totalorder %s97, %s98
      %p109 = scmp.eq.s32.totalorder %s14, 0
      %p110 = por %p108, %p109
      %p111 = scmp.ne.s32.totalorder %s97, %s98
      %p112 = scmp.eq.s32.totalorder %s15, 2
      %p113 = por %p111, %p112
      %p115 = scmp.ne.s32.totalorder %s98, %s114
      %p116 = scmp.eq.s32.totalorder %s15, 0
      %p117 = por %p115, %p116
      %s118 = ssub.s32 %s16, %s35
      %s119 = ssub.s32 %s17, %s31
      %s120 = sor.u32 %s118, %s119
      %p121 = scmp.eq.s32.totalorder %s120, 0
      %s123 = sadd.s32 %s122, 1
      %s124 = scalar_select %p121, %s122, %s123
      %p127 = pneg %p121
      %p128 = scmp.eq.s32.totalorder %s9, 2
      %p129 = por %p127, %p128
      %p130 = scmp.ne.s32.totalorder %s122, %s125
      %p131 = scmp.eq.s32.totalorder %s9, 0
      %p132 = por %p130, %p131
      %p133 = scmp.ne.s32.totalorder %s122, %s125
      %p134 = scmp.eq.s32.totalorder %s14, 2
      %p135 = por %p133, %p134
      %p136 = scmp.ne.s32.totalorder %s125, %s126
      %p137 = scmp.eq.s32.totalorder %s14, 0
      %p138 = por %p136, %p137
      %p139 = scmp.ne.s32.totalorder %s125, %s126
      %p140 = scmp.eq.s32.totalorder %s15, 2
      %p141 = por %p139, %p140
      %p143 = scmp.ne.s32.totalorder %s126, %s142
      %p144 = scmp.eq.s32.totalorder %s15, 0
      %p145 = por %p143, %p144
      %p146 = scmp.le.s32.totalorder 1, %s9
      %p147 = scmp.lt.s32.totalorder %s9, 4
      %p148 = pnand %p146, %p147
      %p149 = pneg %p148
      // Predicated region
      $region9: #{unet1d_flattening_forward.133} parent=5 // pred_check
        _
      $region10: #{unet1d_flattening_forward.133} parent=5 // pred_check_branch
        %151 = sbr.rel (%p148) target = $region12
      $region11: #{unet1d_flattening_forward.133} parent=5 // pred_region
        %s152 = ssub.s32 %s9, 1
        // Predicated region
        $region13: #{unet1d_flattening_forward.133} parent=11 // pred_check
          %p153 = pneg %p56
        $region14: #{unet1d_flattening_forward.133} parent=11 // pred_check_branch
          %155 = sbr.rel (%p153) target = $region16
        $region15: #{unet1d_flattening_forward.133} parent=11 // pred_region
          %s156 = smul.u32 3, %s19
          %p157 = scmp.lt.s32.totalorder %s156, 2
          %s158 = scalar_select %p157, %s156, 2
          %p159 = scmp.lt.s32.totalorder %s21, 0
          %s160 = scalar_select %p159, %s21, 0
          %s161 = sadd.s32 %s160, %s158
          %s162 = smul.addr %s161, 4
          %s163 = scalar_lea.vmem %s0, %s162
          %s164 = smul.u32 3, %s19
        $region16: #{unet1d_flattening_forward.133} parent=11 // pred_fallthru
          _
      $region12: #{unet1d_flattening_forward.133} parent=5 // pred_fallthru
        _
      %p165 = scmp.lt.s32.totalorder %s9, 3
      // Predicated region
      $region17: #{unet1d_flattening_forward.133} parent=5 // pred_check
        %p166 = pneg %p165
      $region18: #{unet1d_flattening_forward.133} parent=5 // pred_check_branch
        %168 = sbr.rel (%p166) target = $region20
      $region19: #{unet1d_flattening_forward.133} parent=5 // pred_region
        // Predicated region
        $region21: #{unet1d_flattening_forward.133} parent=19 // pred_check
          %p169 = pneg %p78
        $region22: #{unet1d_flattening_forward.133} parent=19 // pred_check_branch
          %171 = sbr.rel (%p169) target = $region24
        $region23: #{unet1d_flattening_forward.133} parent=19 // pred_region
          %s172 = sand.u32 %s68, 1
          %s173 = sand.u32 %s68, 1
          %s174 = smul.addr %s173, 64
          %s175 = scalar_lea.vmem [#allocation3], %s174
          %s176 = smul.u32 16, %s18
          %s177 = smul.addr %s176, 3
          %s178 = sadd.s32 %s17, %s177
          %s179 = smul.addr %s178, 4
          %s180 = scalar_lea.vmem %s1, %s179
          // Predicated region
          $region25: #{unet1d_flattening_forward.133} parent=23 // pred_check
            _
          $region26: #{unet1d_flattening_forward.133} parent=23 // pred_check_branch
            %182 = sbr.rel (0) target = $region28
          $region27: #{unet1d_flattening_forward.133} parent=23 // pred_region
            // Predicated region
            $region29: #{unet1d_flattening_forward.133} parent=27 // pred_check
              _
            $region30: #{unet1d_flattening_forward.133} parent=27 // pred_check_branch
              %184 = sbr.rel target = $region32
            $region31: #{unet1d_flattening_forward.133} parent=27 // pred_region
              // Predicated region
              $region44: #{unet1d_flattening_forward.133} parent=31 // pred_check
                _
              $region45: #{unet1d_flattening_forward.133} parent=31 // pred_check_branch
                %229 = sbr.rel (0) target = $region47
              $region46: #{unet1d_flattening_forward.133} parent=31 // pred_region
                loop: start=0, step=1, limit=1
                $region48: #{unet1d_flattening_forward.133} parent=46 // loop_pre_header
                  _
                $region49: #{unet1d_flattening_forward.133} parent=46 // loop_header
                  %s231 = sphi 0, %s235
                  %p232 = scmp.ge.s32.totalorder %s231, 1
                  %s236 = sphi %s180, %s180
                  %s237 = sphi %s175, %s175
                $region50: #{unet1d_flattening_forward.133} parent=46 // loop_header_branch
                  %234 = sbr.rel (%p232) target = $region54
                $region51: #{unet1d_flattening_forward.133} parent=46 // loop_body
                  _
                $region52: #{unet1d_flattening_forward.133} parent=46 // loop_footer
                  %s235 = sadd.s32 1, %s231
                $region53: #{unet1d_flattening_forward.133} parent=46 // loop_footer_branch
                  %230 = sbr.rel target = $region49
                $region54: #{unet1d_flattening_forward.133} parent=46 // loop_exit
                  _
                loop: start=0, step=1, limit=1
                $region55: #{unet1d_flattening_forward.133} parent=46 // loop_pre_header
                  _
                $region56: #{unet1d_flattening_forward.133} parent=46 // loop_header
                  %s240 = sphi 0, %s244
                  %p241 = scmp.ge.s32.totalorder %s240, 1
                  %s245 = sphi %s180, %s180
                  %s246 = sphi %s175, %s175
                $region57: #{unet1d_flattening_forward.133} parent=46 // loop_header_branch
                  %243 = sbr.rel (%p241) target = $region61
                $region58: #{unet1d_flattening_forward.133} parent=46 // loop_body
                  %v247 = vld [vmem:[%s245] sm:$0xf]
                  %248 = vst [vmem:[%s246] sm:$0xf] %v247
                  %v249 = vld [vmem:[%s245 + $0xc] sm:$0xf]
                  %250 = vst [vmem:[%s246 + $0x4] sm:$0xf] %v249
                  %v251 = vld [vmem:[%s245 + $0x18] sm:$0xf]
                  %252 = vst [vmem:[%s246 + $0x8] sm:$0xf] %v251
                  %v253 = vld [vmem:[%s245 + $0x24] sm:$0xf]
                  %254 = vst [vmem:[%s246 + $0xc] sm:$0xf] %v253
                  %v255 = vld [vmem:[%s245 + $0x30] sm:$0xf]
                  %256 = vst [vmem:[%s246 + $0x10] sm:$0xf] %v255
                  %v257 = vld [vmem:[%s245 + $0x3c] sm:$0xf]
                  %258 = vst [vmem:[%s246 + $0x14] sm:$0xf] %v257
                  %v259 = vld [vmem:[%s245 + $0x48] sm:$0xf]
                  %260 = vst [vmem:[%s246 + $0x18] sm:$0xf] %v259
                  %v261 = vld [vmem:[%s245 + $0x54] sm:$0xf]
                  %262 = vst [vmem:[%s246 + $0x1c] sm:$0xf] %v261
                  %v263 = vld [vmem:[%s245 + $0x60] sm:$0xf]
                  %264 = vst [vmem:[%s246 + $0x20] sm:$0xf] %v263
                  %v265 = vld [vmem:[%s245 + $0x6c] sm:$0xf]
                  %266 = vst [vmem:[%s246 + $0x24] sm:$0xf] %v265
                  %v267 = vld [vmem:[%s245 + $0x78] sm:$0xf]
                  %268 = vst [vmem:[%s246 + $0x28] sm:$0xf] %v267
                  %v269 = vld [vmem:[%s245 + $0x84] sm:$0xf]
                  %270 = vst [vmem:[%s246 + $0x2c] sm:$0xf] %v269
                  %v271 = vld [vmem:[%s245 + $0x90] sm:$0xf]
                  %272 = vst [vmem:[%s246 + $0x30] sm:$0xf] %v271
                  %v273 = vld [vmem:[%s245 + $0x9c] sm:$0xf]
                  %274 = vst [vmem:[%s246 + $0x34] sm:$0xf] %v273
                  %v275 = vld [vmem:[%s245 + $0xa8] sm:$0xf]
                  %276 = vst [vmem:[%s246 + $0x38] sm:$0xf] %v275
                  %v277 = vld [vmem:[%s245 + $0xb4] sm:$0xf]
                  %278 = vst [vmem:[%s246 + $0x3c] sm:$0xf] %v277
                $region59: #{unet1d_flattening_forward.133} parent=46 // loop_footer
                  %s244 = sadd.s32 1, %s240
                $region60: #{unet1d_flattening_forward.133} parent=46 // loop_footer_branch
                  %239 = sbr.rel target = $region56
                $region61: #{unet1d_flattening_forward.133} parent=46 // loop_exit
                  _
              $region47: #{unet1d_flattening_forward.133} parent=31 // pred_fallthru
                _
            $region32: #{unet1d_flattening_forward.133} parent=27 // pred_fallthru
              _
            // Predicated region
            $region33: #{unet1d_flattening_forward.133} parent=27 // pred_check
              _
            $region34: #{unet1d_flattening_forward.133} parent=27 // pred_check_branch
              %186 = sbr.rel (0) target = $region36
            $region35: #{unet1d_flattening_forward.133} parent=27 // pred_region
              loop: start=0, step=1, limit=1
              $region37: #{unet1d_flattening_forward.133} parent=35 // loop_pre_header
                _
              $region38: #{unet1d_flattening_forward.133} parent=35 // loop_header
                %s189 = sphi 0, %s193
                %p190 = scmp.ge.s32.totalorder %s189, 1
                %s194 = sphi %s180, %s180
                %s195 = sphi %s175, %s175
              $region39: #{unet1d_flattening_forward.133} parent=35 // loop_header_branch
                %192 = sbr.rel (%p190) target = $region43
              $region40: #{unet1d_flattening_forward.133} parent=35 // loop_body
                %v196 = vld [vmem:[%s194] sm:$0xf]
                %197 = vst [vmem:[%s195] sm:$0xf] %v196
                %v198 = vld [vmem:[%s194 + $0xc] sm:$0xf]
                %199 = vst [vmem:[%s195 + $0x4] sm:$0xf] %v198
                %v200 = vld [vmem:[%s194 + $0x18] sm:$0xf]
                %201 = vst [vmem:[%s195 + $0x8] sm:$0xf] %v200
                %v202 = vld [vmem:[%s194 + $0x24] sm:$0xf]
                %203 = vst [vmem:[%s195 + $0xc] sm:$0xf] %v202
                %v204 = vld [vmem:[%s194 + $0x30] sm:$0xf]
                %205 = vst [vmem:[%s195 + $0x10] sm:$0xf] %v204
                %v206 = vld [vmem:[%s194 + $0x3c] sm:$0xf]
                %207 = vst [vmem:[%s195 + $0x14] sm:$0xf] %v206
                %v208 = vld [vmem:[%s194 + $0x48] sm:$0xf]
                %209 = vst [vmem:[%s195 + $0x18] sm:$0xf] %v208
                %v210 = vld [vmem:[%s194 + $0x54] sm:$0xf]
                %211 = vst [vmem:[%s195 + $0x1c] sm:$0xf] %v210
                %v212 = vld [vmem:[%s194 + $0x60] sm:$0xf]
                %213 = vst [vmem:[%s195 + $0x20] sm:$0xf] %v212
                %v214 = vld [vmem:[%s194 + $0x6c] sm:$0xf]
                %215 = vst [vmem:[%s195 + $0x24] sm:$0xf] %v214
                %v216 = vld [vmem:[%s194 + $0x78] sm:$0xf]
                %217 = vst [vmem:[%s195 + $0x28] sm:$0xf] %v216
                %v218 = vld [vmem:[%s194 + $0x84] sm:$0xf]
                %219 = vst [vmem:[%s195 + $0x2c] sm:$0xf] %v218
                %v220 = vld [vmem:[%s194 + $0x90] sm:$0xf]
                %221 = vst [vmem:[%s195 + $0x30] sm:$0xf] %v220
                %v222 = vld [vmem:[%s194 + $0x9c] sm:$0xf]
                %223 = vst [vmem:[%s195 + $0x34] sm:$0xf] %v222
                %v224 = vld [vmem:[%s194 + $0xa8] sm:$0xf]
                %225 = vst [vmem:[%s195 + $0x38] sm:$0xf] %v224
                %v226 = vld [vmem:[%s194 + $0xb4] sm:$0xf]
                %227 = vst [vmem:[%s195 + $0x3c] sm:$0xf] %v226
              $region41: #{unet1d_flattening_forward.133} parent=35 // loop_footer
                %s193 = sadd.s32 1, %s189
              $region42: #{unet1d_flattening_forward.133} parent=35 // loop_footer_branch
                %188 = sbr.rel target = $region38
              $region43: #{unet1d_flattening_forward.133} parent=35 // loop_exit
                _
            $region36: #{unet1d_flattening_forward.133} parent=27 // pred_fallthru
              _
          $region28: #{unet1d_flattening_forward.133} parent=23 // pred_fallthru
            _
          %279 = vnop
        $region24: #{unet1d_flattening_forward.133} parent=19 // pred_fallthru
          _
        // Predicated region
        $region62: #{unet1d_flattening_forward.133} parent=19 // pred_check
          %p280 = pneg %p104
        $region63: #{unet1d_flattening_forward.133} parent=19 // pred_check_branch
          %282 = sbr.rel (%p280) target = $region65
        $region64: #{unet1d_flattening_forward.133} parent=19 // pred_region
          %p283 = scmp.lt.s32.totalorder %s17, 2
          %s284 = scalar_select %p283, %s17, 2
          %s285 = scalar_lea.vmem %s2, %s284
        $region65: #{unet1d_flattening_forward.133} parent=19 // pred_fallthru
          _
      $region20: #{unet1d_flattening_forward.133} parent=5 // pred_fallthru
        _
      %p286 = scmp.le.s32.totalorder 1, %s9
      %p287 = scmp.lt.s32.totalorder %s9, 4
      %p288 = pnand %p286, %p287
      %p289 = pneg %p288
      // Predicated region
      $region66: #{unet1d_flattening_forward.133} parent=5 // pred_check
        _
      $region67: #{unet1d_flattening_forward.133} parent=5 // pred_check_branch
        %291 = sbr.rel (%p288) target = $region69
      $region68: #{unet1d_flattening_forward.133} parent=5 // pred_region
        %s292 = ssub.s32 %s9, 1
        %s293 = sand.u32 %s71, 1
        %s294 = sand.u32 %s71, 1
        %s295 = smul.addr %s294, 64
        %s296 = scalar_lea.vmem [#allocation3], %s295
        // Predicated region
        $region70: #{unet1d_flattening_forward.133} parent=68 // pred_check
          %p297 = pneg %p84
        $region71: #{unet1d_flattening_forward.133} parent=68 // pred_check_branch
          %299 = sbr.rel (%p297) target = $region73
        $region72: #{unet1d_flattening_forward.133} parent=68 // pred_region
          _
        $region73: #{unet1d_flattening_forward.133} parent=68 // pred_fallthru
          _
        %s300 = smul.u32 3, %s19
        %p301 = scmp.lt.s32.totalorder %s300, 2
        %s302 = scalar_select %p301, %s300, 2
        %p303 = scmp.lt.s32.totalorder %s21, 0
        %s304 = scalar_select %p303, %s21, 0
        %s305 = sadd.s32 %s304, %s302
        %s306 = smul.addr %s305, 4
        %s307 = scalar_lea.vmem %s0, %s306
        %p308 = pneg %p56
        %p309 = pneg %p53
        %s310 = sand.u32 %s71, 1
        %s311 = sand.u32 %s71, 1
        %s312 = smul.addr %s311, 64
        %s313 = scalar_lea.vmem [#allocation3], %s312
        %p314 = pneg %p84
        %p315 = pneg %p81
        %p316 = scmp.lt.s32.totalorder %s20, 2
        %s317 = scalar_select %p316, %s20, 2
        %s318 = scalar_lea.vmem %s2, %s317
        %p319 = pneg %p110
        %p320 = pneg %p107
        %p321 = pneg %p138
        %p322 = pneg %p135
        %s323 = sand.u32 %s125, 1
        %s324 = sand.u32 %s125, 1
        %s325 = smul.addr %s324, 24
        %s326 = scalar_lea.vmem [#allocation4], %s325
        %s327 = smul.u32 3, %s19
        %p328 = scmp.lt.s32.totalorder %s327, 2
        %s329 = scalar_select %p328, %s327, 2
        %p330 = scmp.lt.s32.totalorder %s21, 0
        %s331 = scalar_select %p330, %s21, 0
        %s332 = sadd.s32 %s331, %s329
        %s333 = smul.addr %s332, 4
        %s334 = scalar_lea.vmem %s0, %s333
        %s335 = smul.u32 3, %s19
        %s336 = smul.u32 16, %s21
        %p337 = scmp.lt.s32.totalorder %s20, 2
        %s338 = scalar_select %p337, %s20, 2
        %s339 = scalar_lea.vmem %s2, %s338
        %s340 = smul.u32 3, %s19
        %p342 = scmp.eq.s32.totalorder %s21, 0
        // Predicated region
        $region74: #{unet1d_flattening_forward.133} parent=68 // pred_check
          %p343 = pneg %p342
        $region75: #{unet1d_flattening_forward.133} parent=68 // pred_check_branch
          %345 = sbr.rel (%p343) target = $region77
        $region76: #{unet1d_flattening_forward.133} parent=68 // pred_region
          %346 = vst [vmem:[#allocation2] sm:$0xff] 0.0
          %347 = vst [vmem:[#allocation2 + $0x8] sm:$0xff] 0.0
          %348 = vst [vmem:[#allocation2 + $0x10] sm:$0xff] 0.0
        $region77: #{unet1d_flattening_forward.133} parent=68 // pred_fallthru
          _
        %v349 = vld [vmem:[#allocation2] sm:$0xff]
        %v350 = vld [vmem:[#allocation2 + $0x8] sm:$0xff]
        %v351 = vld [vmem:[#allocation2 + $0x10] sm:$0xff]
        %v352 = vld [vmem:[%s334] sm:$0xf]
        %v353 = vld [vmem:[%s334 + $0x4] sm:$0xf]
        %v354 = vld [vmem:[%s334 + $0x8] sm:$0xf]
        %v355 = vld [vmem:[%s296] sm:$0xf]
        %v356 = vld [vmem:[%s296 + $0x4] sm:$0xf]
        %v357 = vld [vmem:[%s296 + $0x8] sm:$0xf]
        %v358 = vld [vmem:[%s296 + $0xc] sm:$0xf]
        %v359 = vld [vmem:[%s296 + $0x10] sm:$0xf]
        %v360 = vld [vmem:[%s296 + $0x14] sm:$0xf]
        %v361 = vld [vmem:[%s296 + $0x18] sm:$0xf]
        %v362 = vld [vmem:[%s296 + $0x1c] sm:$0xf]
        %v363 = vld [vmem:[%s296 + $0x20] sm:$0xf]
        %v364 = vld [vmem:[%s296 + $0x24] sm:$0xf]
        %v365 = vld [vmem:[%s296 + $0x28] sm:$0xf]
        %v366 = vld [vmem:[%s296 + $0x2c] sm:$0xf]
        %v367 = vld [vmem:[%s296 + $0x30] sm:$0xf]
        %v368 = vld [vmem:[%s296 + $0x34] sm:$0xf]
        %v369 = vld [vmem:[%s296 + $0x38] sm:$0xf]
        %v370 = vld [vmem:[%s296 + $0x3c] sm:$0xf]
        %v374 = vunpack.c.l.b16 %v352
        %v375 = vunpack.c.l.b16 %v353
        %v376 = vunpack.c.l.b16 %v354
        %v377 = vpack.c.b16 %v375, %v374
        %v378 = vpack.c.b16 %v376, %v376
        %v397 = vunpack.c.l.b16 %v355
        %v398 = vunpack.c.l.b16 %v356
        %v399 = vunpack.c.l.b16 %v357
        %v400 = vunpack.c.l.b16 %v358
        %v401 = vunpack.c.l.b16 %v359
        %v402 = vunpack.c.l.b16 %v360
        %v403 = vunpack.c.l.b16 %v361
        %v404 = vunpack.c.l.b16 %v362
        %v405 = vunpack.c.l.b16 %v363
        %v406 = vunpack.c.l.b16 %v364
        %v407 = vunpack.c.l.b16 %v365
        %v408 = vunpack.c.l.b16 %v366
        %v409 = vunpack.c.l.b16 %v367
        %v410 = vunpack.c.l.b16 %v368
        %v411 = vunpack.c.l.b16 %v369
        %v412 = vunpack.c.l.b16 %v370
        %v413 = vpack.c.b16 %v398, %v397
        %v414 = vpack.c.b16 %v400, %v399
        %v415 = vpack.c.b16 %v402, %v401
        %v416 = vpack.c.b16 %v404, %v403
        %v417 = vpack.c.b16 %v406, %v405
        %v418 = vpack.c.b16 %v408, %v407
        %v419 = vpack.c.b16 %v410, %v409
        %v420 = vpack.c.b16 %v412, %v411
        %429 = vmatprep.subr.bf16.mxu0 0
        %430 = vmatpush1.bf16.msra.mxu0 %v413
        %431 = vmatprep.subr.bf16.mxu0 0
        %432 = vmatpush1.bf16.msra.mxu0 %v414
        %433 = vmatprep.subr.bf16.mxu0 0
        %434 = vmatpush1.bf16.msra.mxu0 %v415
        %435 = vmatprep.subr.bf16.mxu0 0
        %436 = vmatpush1.bf16.msra.mxu0 %v416
        %437 = vmatprep.subr.bf16.mxu0 0
        %438 = vmatpush1.bf16.msra.mxu0 %v417
        %439 = vmatprep.subr.bf16.mxu0 0
        %440 = vmatpush1.bf16.msra.mxu0 %v418
        %441 = vmatprep.subr.bf16.mxu0 0
        %442 = vmatpush1.bf16.msra.mxu0 %v419
        %443 = vmatprep.subr.bf16.mxu0 0
        %444 = vmatpush1.bf16.msra.mxu0 %v420
        %445 = vmatprep.subr.bf16.mxu0 0
        %446 = vmatpush1.bf16.msra.mxu0 0
        %447 = vmatprep.subr.bf16.mxu0 0
        %448 = vmatpush1.bf16.msra.mxu0 0
        %449 = vmatprep.subr.bf16.mxu0 0
        %450 = vmatpush1.bf16.msra.mxu0 0
        %451 = vmatprep.subr.bf16.mxu0 0
        %452 = vmatpush1.bf16.msra.mxu0 0
        %453 = vmatprep.subr.bf16.mxu0 0
        %454 = vmatpush1.bf16.msra.mxu0 0
        %455 = vmatprep.subr.bf16.mxu0 0
        %456 = vmatpush1.bf16.msra.mxu0 0
        %457 = vmatprep.subr.bf16.mxu0 0
        %458 = vmatpush1.bf16.msra.mxu0 0
        %459 = vmatprep.subr.bf16.mxu0 0
        %460 = vmatpush1.bf16.msra.mxu0 0
        %461 = vmatprep.mubr.bf16.mxu0 0
        %462 = vmatmul.mubr.bf16.gmra.mrb[0].mxu0 %v377
        %v463 = vpop.f32.mrb[0].mxu0
        %v464 = vadd.f32 0.0, %v463
        %v465 = vpop.f32.mrb[0].mxu0
        %v466 = vpop.f32.mrb[0].mxu0
        %v467 = vadd.f32 0.0, %v466
        %v468 = vpop.f32.mrb[0].mxu0
        %469 = vmatprep.mubr.bf16.mxu0 0
        %470 = vmatmul.mubr.bf16.gmra.mrb[0].mxu0 %v378
        %v471 = vpop.f32.mrb[0].mxu0
        %v472 = vadd.f32 0.0, %v471
        %v473 = vpop.f32.mrb[0].mxu0
        %v474 = vpop.f32.mrb[0].mxu0
        %v475 = vpop.f32.mrb[0].mxu0
        %476 = vdwg.mxu0
        %v477 = vadd.f32 %v349, %v464
        %v478 = vadd.f32 %v350, %v467
        %v479 = vadd.f32 %v351, %v472
        %480 = vst [vmem:[#allocation2] sm:$0xff] %v477
        %481 = vst [vmem:[#allocation2 + $0x8] sm:$0xff] %v478
        %482 = vst [vmem:[#allocation2 + $0x10] sm:$0xff] %v479
        // Predicated region
        $region78: #{unet1d_flattening_forward.133} parent=68 // pred_check
          %p483 = pneg %p342
        $region79: #{unet1d_flattening_forward.133} parent=68 // pred_check_branch
          %485 = sbr.rel (%p483) target = $region81
        $region80: #{unet1d_flattening_forward.133} parent=68 // pred_region
          %v486 = vld [vmem:[#allocation2] sm:$0xff]
          %v487 = vld [vmem:[#allocation2 + $0x8] sm:$0xff]
          %v488 = vld [vmem:[#allocation2 + $0x10] sm:$0xff]
          %v489 = vld [vmem:[%s339] sm:$0x1]
          %v491 = vlaneseq
          %v492 = vshrl.u32 %v491, 7
          %v493 = vsub.s32 0, %v492
          %v494 = vrot.slane %v489, %v493
          %v496 = vadd.f32 %v486, %v494
          %v497 = vadd.f32 %v487, %v494
          %v498 = vadd.f32 %v488, %v494
          %499 = vst [vmem:[%s326] sm:$0xff] %v496
          %500 = vst [vmem:[%s326 + $0x8] sm:$0xff] %v497
          %501 = vst [vmem:[%s326 + $0x10] sm:$0xff] %v498
        $region81: #{unet1d_flattening_forward.133} parent=68 // pred_fallthru
          _
        %s502 = sand.u32 %s125, 1
        %s503 = sand.u32 %s125, 1
        %s504 = smul.addr %s503, 24
        %s505 = scalar_lea.vmem [#allocation4], %s504
        // Predicated region
        $region82: #{unet1d_flattening_forward.133} parent=68 // pred_check
          %p506 = pneg %p135
        $region83: #{unet1d_flattening_forward.133} parent=68 // pred_check_branch
          %508 = sbr.rel (%p506) target = $region85
        $region84: #{unet1d_flattening_forward.133} parent=68 // pred_region
          %s509 = smul.u32 3, %s19
          %s510 = smul.addr %s509, 3
          %s511 = sadd.s32 %s20, %s510
          %s512 = smul.addr %s511, 8
          %s513 = scalar_lea.vmem %s3, %s512
          // Predicated region
          $region86: #{unet1d_flattening_forward.133} parent=84 // pred_check
            _
          $region87: #{unet1d_flattening_forward.133} parent=84 // pred_check_branch
            %515 = sbr.rel (0) target = $region89
          $region88: #{unet1d_flattening_forward.133} parent=84 // pred_region
            // Predicated region
            $region90: #{unet1d_flattening_forward.133} parent=88 // pred_check
              _
            $region91: #{unet1d_flattening_forward.133} parent=88 // pred_check_branch
              %517 = sbr.rel (0) target = $region93
            $region92: #{unet1d_flattening_forward.133} parent=88 // pred_region
              // Predicated region
              $region105: #{unet1d_flattening_forward.133} parent=92 // pred_check
                _
              $region106: #{unet1d_flattening_forward.133} parent=92 // pred_check_branch
                %536 = sbr.rel (0) target = $region108
              $region107: #{unet1d_flattening_forward.133} parent=92 // pred_region
                loop: start=0, step=1, limit=1
                $region109: #{unet1d_flattening_forward.133} parent=107 // loop_pre_header
                  _
                $region110: #{unet1d_flattening_forward.133} parent=107 // loop_header
                  %s538 = sphi 0, %s542
                  %p539 = scmp.ge.s32.totalorder %s538, 1
                  %s543 = sphi %s505, %s505
                  %s544 = sphi %s513, %s513
                $region111: #{unet1d_flattening_forward.133} parent=107 // loop_header_branch
                  %541 = sbr.rel (%p539) target = $region115
                $region112: #{unet1d_flattening_forward.133} parent=107 // loop_body
                  %v545 = vld [vmem:[%s543] sm:$0xff]
                  %546 = vst [vmem:[%s544] sm:$0xff] %v545
                  %v547 = vld [vmem:[%s543 + $0x8] sm:$0xff]
                  %548 = vst [vmem:[%s544 + $0x18] sm:$0xff] %v547
                  %v549 = vld [vmem:[%s543 + $0x10] sm:$0xff]
                  %550 = vst [vmem:[%s544 + $0x30] sm:$0xff] %v549
                $region113: #{unet1d_flattening_forward.133} parent=107 // loop_footer
                  %s542 = sadd.s32 1, %s538
                $region114: #{unet1d_flattening_forward.133} parent=107 // loop_footer_branch
                  %537 = sbr.rel target = $region110
                $region115: #{unet1d_flattening_forward.133} parent=107 // loop_exit
                  _
              $region108: #{unet1d_flattening_forward.133} parent=92 // pred_fallthru
                _
              // Predicated region
              $region116: #{unet1d_flattening_forward.133} parent=92 // pred_check
                _
              $region117: #{unet1d_flattening_forward.133} parent=92 // pred_check_branch
                %552 = sbr.rel target = $region119
              $region118: #{unet1d_flattening_forward.133} parent=92 // pred_region
                _
              $region119: #{unet1d_flattening_forward.133} parent=92 // pred_fallthru
                _
            $region93: #{unet1d_flattening_forward.133} parent=88 // pred_fallthru
              _
            // Predicated region
            $region94: #{unet1d_flattening_forward.133} parent=88 // pred_check
              _
            $region95: #{unet1d_flattening_forward.133} parent=88 // pred_check_branch
              %519 = sbr.rel target = $region97
            $region96: #{unet1d_flattening_forward.133} parent=88 // pred_region
              loop: start=0, step=1, limit=1
              $region98: #{unet1d_flattening_forward.133} parent=96 // loop_pre_header
                _
              $region99: #{unet1d_flattening_forward.133} parent=96 // loop_header
                %s522 = sphi 0, %s526
                %p523 = scmp.ge.s32.totalorder %s522, 1
                %s527 = sphi %s505, %s505
                %s528 = sphi %s513, %s513
              $region100: #{unet1d_flattening_forward.133} parent=96 // loop_header_branch
                %525 = sbr.rel (%p523) target = $region104
              $region101: #{unet1d_flattening_forward.133} parent=96 // loop_body
                %v529 = vld [vmem:[%s527] sm:$0xff]
                %530 = vst [vmem:[%s528] sm:$0xff] %v529
                %v531 = vld [vmem:[%s527 + $0x8] sm:$0xff]
                %532 = vst [vmem:[%s528 + $0x18] sm:$0xff] %v531
                %v533 = vld [vmem:[%s527 + $0x10] sm:$0xff]
                %534 = vst [vmem:[%s528 + $0x30] sm:$0xff] %v533
              $region102: #{unet1d_flattening_forward.133} parent=96 // loop_footer
                %s526 = sadd.s32 1, %s522
              $region103: #{unet1d_flattening_forward.133} parent=96 // loop_footer_branch
                %521 = sbr.rel target = $region99
              $region104: #{unet1d_flattening_forward.133} parent=96 // loop_exit
                _
            $region97: #{unet1d_flattening_forward.133} parent=88 // pred_fallthru
              _
          $region89: #{unet1d_flattening_forward.133} parent=84 // pred_fallthru
            _
          %553 = vnop
        $region85: #{unet1d_flattening_forward.133} parent=68 // pred_fallthru
          _
      $region69: #{unet1d_flattening_forward.133} parent=5 // pred_fallthru
        _
      %p554 = scmp.le.s32.totalorder 2, %s9
      // Predicated region
      $region120: #{unet1d_flattening_forward.133} parent=5 // pred_check
        %p555 = pneg %p554
      $region121: #{unet1d_flattening_forward.133} parent=5 // pred_check_branch
        %557 = sbr.rel (%p555) target = $region123
      $region122: #{unet1d_flattening_forward.133} parent=5 // pred_region
        %s558 = ssub.s32 %s9, 2
        // Predicated region
        $region124: #{unet1d_flattening_forward.133} parent=122 // pred_check
          %p559 = pneg %p141
        $region125: #{unet1d_flattening_forward.133} parent=122 // pred_check_branch
          %561 = sbr.rel (%p559) target = $region127
        $region126: #{unet1d_flattening_forward.133} parent=122 // pred_region
          %s562 = sand.u32 %s126, 1
          %s563 = sand.u32 %s126, 1
          %s564 = smul.addr %s563, 24
          %s565 = scalar_lea.vmem [#allocation4], %s564
        $region127: #{unet1d_flattening_forward.133} parent=122 // pred_fallthru
          _
      $region123: #{unet1d_flattening_forward.133} parent=5 // pred_fallthru
        _
    $region6: #{unet1d_flattening_forward.133} parent=1 // loop_footer
      %s13 = sadd.s32 1, %s9
    $region7: #{unet1d_flattening_forward.133} parent=1 // loop_footer_branch
      %8 = sbr.rel target = $region3
    $region8: #{unet1d_flattening_forward.133} parent=1 // loop_exit
      _

// kernel: unet1d_flattening_forward.134
$region0: #{unet1d_flattening_forward.134}
  #allocation0 [shape = 'u32[]', space=smem, size = 0x4, offset = 0x4, fixed_abs, tag = 'smem constant byte address 0x4 - core index']
  #allocation1 [shape = 'u32[144,128]{1,0:T(1,128)}', space=vmem, size = 0x12000, scoped, tag = 'internal scratch']
  %s0 = inlined_call_operand.vmem [shape: bf16[2,3,32,12], index: 0, kind: input, shape index: {}]
  %s1 = inlined_call_operand.vmem [shape: bf16[2,3,32,12], index: 1, kind: input, shape index: {}]
  %s2 = inlined_call_operand.vmem [shape: bf16[2,3,32,12], index: 2, kind: input, shape index: {}]
  %s3 = inlined_call_operand.vmem [shape: f32[2,3,32,12], index: 3, kind: output, shape index: {}]
  %s4 = sld [smem:[#allocation0]]
  $region45: #{unet1d_flattening_forward.134} parent=0
    _
  %s6 = ssub.s32 1, %s4
  %s7 = scalar_select 0, %s6, %s4
  loop: start=0, step=1, limit=4
  $region2: #{unet1d_flattening_forward.134} parent=0 // loop_pre_header
    _
  $region3: #{unet1d_flattening_forward.134} parent=0 // loop_header
    %s9 = sphi 0, %s13
    %p10 = scmp.ge.s32.totalorder %s9, 4
    %s19 = sphi 0, %s21
    %s22 = sphi 0, %s19
    %s23 = sphi 0, %s22
    %s39 = sphi 0, %s23
    %s45 = sphi 0, %s47
    %s48 = sphi 0, %s45
    %s49 = sphi 0, %s48
    %s65 = sphi 0, %s49
    %s71 = sphi 0, %s73
    %s74 = sphi 0, %s71
    %s75 = sphi 0, %s74
    %s91 = sphi 0, %s75
    %s97 = sphi 0, %s99
    %s100 = sphi 0, %s97
    %s101 = sphi 0, %s100
    %s117 = sphi 0, %s101
  $region4: #{unet1d_flattening_forward.134} parent=0 // loop_header_branch
    %12 = sbr.rel (%p10) target = $region8
  $region5: #{unet1d_flattening_forward.134} parent=0 // loop_body
    %s14 = ssub.s32 %s9, 1
    %s15 = ssub.s32 %s9, 2
    %s16 = sadd.s32 %s9, 1
    %s17 = ssub.s32 %s9, %s16
    %p18 = scmp.eq.s32.totalorder %s17, 0
    %s20 = sadd.s32 %s19, 1
    %s21 = scalar_select %p18, %s19, %s20
    %p24 = pneg %p18
    %p25 = scmp.eq.s32.totalorder %s9, 1
    %p26 = por %p24, %p25
    %p27 = scmp.ne.s32.totalorder %s19, %s22
    %p28 = scmp.eq.s32.totalorder %s9, 0
    %p29 = por %p27, %p28
    %p30 = scmp.ne.s32.totalorder %s19, %s22
    %p31 = scmp.eq.s32.totalorder %s14, 1
    %p32 = por %p30, %p31
    %p33 = scmp.ne.s32.totalorder %s22, %s23
    %p34 = scmp.eq.s32.totalorder %s14, 0
    %p35 = por %p33, %p34
    %p36 = scmp.ne.s32.totalorder %s22, %s23
    %p37 = scmp.eq.s32.totalorder %s15, 1
    %p38 = por %p36, %p37
    %p40 = scmp.ne.s32.totalorder %s23, %s39
    %p41 = scmp.eq.s32.totalorder %s15, 0
    %p42 = por %p40, %p41
    %s43 = ssub.s32 %s9, %s16
    %p44 = scmp.eq.s32.totalorder %s43, 0
    %s46 = sadd.s32 %s45, 1
    %s47 = scalar_select %p44, %s45, %s46
    %p50 = pneg %p44
    %p51 = scmp.eq.s32.totalorder %s9, 1
    %p52 = por %p50, %p51
    %p53 = scmp.ne.s32.totalorder %s45, %s48
    %p54 = scmp.eq.s32.totalorder %s9, 0
    %p55 = por %p53, %p54
    %p56 = scmp.ne.s32.totalorder %s45, %s48
    %p57 = scmp.eq.s32.totalorder %s14, 1
    %p58 = por %p56, %p57
    %p59 = scmp.ne.s32.totalorder %s48, %s49
    %p60 = scmp.eq.s32.totalorder %s14, 0
    %p61 = por %p59, %p60
    %p62 = scmp.ne.s32.totalorder %s48, %s49
    %p63 = scmp.eq.s32.totalorder %s15, 1
    %p64 = por %p62, %p63
    %p66 = scmp.ne.s32.totalorder %s49, %s65
    %p67 = scmp.eq.s32.totalorder %s15, 0
    %p68 = por %p66, %p67
    %s69 = ssub.s32 %s9, %s16
    %p70 = scmp.eq.s32.totalorder %s69, 0
    %s72 = sadd.s32 %s71, 1
    %s73 = scalar_select %p70, %s71, %s72
    %p76 = pneg %p70
    %p77 = scmp.eq.s32.totalorder %s9, 1
    %p78 = por %p76, %p77
    %p79 = scmp.ne.s32.totalorder %s71, %s74
    %p80 = scmp.eq.s32.totalorder %s9, 0
    %p81 = por %p79, %p80
    %p82 = scmp.ne.s32.totalorder %s71, %s74
    %p83 = scmp.eq.s32.totalorder %s14, 1
    %p84 = por %p82, %p83
    %p85 = scmp.ne.s32.totalorder %s74, %s75
    %p86 = scmp.eq.s32.totalorder %s14, 0
    %p87 = por %p85, %p86
    %p88 = scmp.ne.s32.totalorder %s74, %s75
    %p89 = scmp.eq.s32.totalorder %s15, 1
    %p90 = por %p88, %p89
    %p92 = scmp.ne.s32.totalorder %s75, %s91
    %p93 = scmp.eq.s32.totalorder %s15, 0
    %p94 = por %p92, %p93
    %s95 = ssub.s32 %s9, %s16
    %p96 = scmp.eq.s32.totalorder %s95, 0
    %s98 = sadd.s32 %s97, 1
    %s99 = scalar_select %p96, %s97, %s98
    %p102 = pneg %p96
    %p103 = scmp.eq.s32.totalorder %s9, 1
    %p104 = por %p102, %p103
    %p105 = scmp.ne.s32.totalorder %s97, %s100
    %p106 = scmp.eq.s32.totalorder %s9, 0
    %p107 = por %p105, %p106
    %p108 = scmp.ne.s32.totalorder %s97, %s100
    %p109 = scmp.eq.s32.totalorder %s14, 1
    %p110 = por %p108, %p109
    %p111 = scmp.ne.s32.totalorder %s100, %s101
    %p112 = scmp.eq.s32.totalorder %s14, 0
    %p113 = por %p111, %p112
    %p114 = scmp.ne.s32.totalorder %s100, %s101
    %p115 = scmp.eq.s32.totalorder %s15, 1
    %p116 = por %p114, %p115
    %p118 = scmp.ne.s32.totalorder %s101, %s117
    %p119 = scmp.eq.s32.totalorder %s15, 0
    %p120 = por %p118, %p119
    %p121 = scmp.le.s32.totalorder 1, %s9
    %p122 = scmp.lt.s32.totalorder %s9, 3
    %p123 = pnand %p121, %p122
    %p124 = pneg %p123
    // Predicated region
    $region9: #{unet1d_flattening_forward.134} parent=5 // pred_check
      _
    $region10: #{unet1d_flattening_forward.134} parent=5 // pred_check_branch
      %126 = sbr.rel (%p123) target = $region12
    $region11: #{unet1d_flattening_forward.134} parent=5 // pred_region
      %s127 = ssub.s32 %s9, 1
    $region12: #{unet1d_flattening_forward.134} parent=5 // pred_fallthru
      _
    %p128 = scmp.lt.s32.totalorder %s9, 2
    // Predicated region
    $region13: #{unet1d_flattening_forward.134} parent=5 // pred_check
      %p129 = pneg %p128
    $region14: #{unet1d_flattening_forward.134} parent=5 // pred_check_branch
      %131 = sbr.rel (%p129) target = $region16
    $region15: #{unet1d_flattening_forward.134} parent=5 // pred_region
      // Predicated region
      $region17: #{unet1d_flattening_forward.134} parent=15 // pred_check
        %p132 = pneg %p29
      $region18: #{unet1d_flattening_forward.134} parent=15 // pred_check_branch
        %134 = sbr.rel (%p132) target = $region20
      $region19: #{unet1d_flattening_forward.134} parent=15 // pred_region
        %p135 = scmp.lt.s32.totalorder %s9, 1
        %s136 = scalar_select %p135, %s9, 1
        %s137 = smul.addr %s136, 12
        %s138 = smul.addr %s137, 4
        %s139 = scalar_lea.vmem %s0, %s138
      $region20: #{unet1d_flattening_forward.134} parent=15 // pred_fallthru
        _
      // Predicated region
      $region21: #{unet1d_flattening_forward.134} parent=15 // pred_check
        %p140 = pneg %p55
      $region22: #{unet1d_flattening_forward.134} parent=15 // pred_check_branch
        %142 = sbr.rel (%p140) target = $region24
      $region23: #{unet1d_flattening_forward.134} parent=15 // pred_region
        %p143 = scmp.lt.s32.totalorder %s9, 1
        %s144 = scalar_select %p143, %s9, 1
        %s145 = smul.addr %s144, 12
        %s146 = smul.addr %s145, 4
        %s147 = scalar_lea.vmem %s1, %s146
      $region24: #{unet1d_flattening_forward.134} parent=15 // pred_fallthru
        _
      // Predicated region
      $region25: #{unet1d_flattening_forward.134} parent=15 // pred_check
        %p148 = pneg %p81
      $region26: #{unet1d_flattening_forward.134} parent=15 // pred_check_branch
        %150 = sbr.rel (%p148) target = $region28
      $region27: #{unet1d_flattening_forward.134} parent=15 // pred_region
        %p151 = scmp.lt.s32.totalorder %s9, 1
        %s152 = scalar_select %p151, %s9, 1
        %s153 = smul.addr %s152, 12
        %s154 = smul.addr %s153, 4
        %s155 = scalar_lea.vmem %s2, %s154
      $region28: #{unet1d_flattening_forward.134} parent=15 // pred_fallthru
        _
    $region16: #{unet1d_flattening_forward.134} parent=5 // pred_fallthru
      _
    %p156 = scmp.le.s32.totalorder 1, %s9
    %p157 = scmp.lt.s32.totalorder %s9, 3
    %p158 = pnand %p156, %p157
    %p159 = pneg %p158
    // Predicated region
    $region29: #{unet1d_flattening_forward.134} parent=5 // pred_check
      _
    $region30: #{unet1d_flattening_forward.134} parent=5 // pred_check_branch
      %161 = sbr.rel (%p158) target = $region32
    $region31: #{unet1d_flattening_forward.134} parent=5 // pred_region
      %s162 = ssub.s32 %s9, 1
      %p163 = scmp.lt.s32.totalorder %s14, 1
      %s164 = scalar_select %p163, %s14, 1
      %s165 = smul.addr %s164, 12
      %s166 = smul.addr %s165, 4
      %s167 = scalar_lea.vmem %s0, %s166
      %p168 = pneg %p35
      %p169 = pneg %p32
      %p170 = scmp.lt.s32.totalorder %s14, 1
      %s171 = scalar_select %p170, %s14, 1
      %s172 = smul.addr %s171, 12
      %s173 = smul.addr %s172, 4
      %s174 = scalar_lea.vmem %s1, %s173
      %p175 = pneg %p61
      %p176 = pneg %p58
      %p177 = scmp.lt.s32.totalorder %s14, 1
      %s178 = scalar_select %p177, %s14, 1
      %s179 = smul.addr %s178, 12
      %s180 = smul.addr %s179, 4
      %s181 = scalar_lea.vmem %s2, %s180
      %p182 = pneg %p87
      %p183 = pneg %p84
      %p184 = pneg %p113
      %p185 = pneg %p110
      %p186 = scmp.lt.s32.totalorder %s14, 1
      %s187 = scalar_select %p186, %s14, 1
      %s188 = smul.addr %s187, 12
      %s189 = smul.addr %s188, 8
      %s190 = scalar_lea.vmem %s3, %s189
      %p191 = scmp.lt.s32.totalorder %s14, 1
      %s192 = scalar_select %p191, %s14, 1
      %s193 = smul.addr %s192, 12
      %s194 = smul.addr %s193, 4
      %s195 = scalar_lea.vmem %s0, %s194
      %p196 = scmp.lt.s32.totalorder %s14, 1
      %s197 = scalar_select %p196, %s14, 1
      %s198 = smul.addr %s197, 12
      %s199 = smul.addr %s198, 4
      %s200 = scalar_lea.vmem %s1, %s199
      %p201 = scmp.lt.s32.totalorder %s14, 1
      %s202 = scalar_select %p201, %s14, 1
      %s203 = smul.addr %s202, 12
      %s204 = smul.addr %s203, 4
      %s205 = scalar_lea.vmem %s2, %s204
      %p206 = scmp.lt.s32.totalorder %s14, 1
      %s207 = scalar_select %p206, %s14, 1
      %s208 = smul.addr %s207, 12
      %s209 = smul.addr %s208, 8
      %s210 = scalar_lea.vmem %s3, %s209
      %v212 = vld [vmem:[%s195] sm:$0xf]
      %v213 = vld [vmem:[%s195 + $0x4] sm:$0xf]
      %v214 = vld [vmem:[%s195 + $0x8] sm:$0xf]
      %v215 = vld [vmem:[%s195 + $0xc] sm:$0xf]
      %v216 = vld [vmem:[%s195 + $0x10] sm:$0xf]
      %v217 = vld [vmem:[%s195 + $0x14] sm:$0xf]
      %v218 = vld [vmem:[%s195 + $0x18] sm:$0xf]
      %v219 = vld [vmem:[%s195 + $0x1c] sm:$0xf]
      %v220 = vld [vmem:[%s195 + $0x20] sm:$0xf]
      %v221 = vld [vmem:[%s195 + $0x24] sm:$0xf]
      %v222 = vld [vmem:[%s195 + $0x28] sm:$0xf]
      %v223 = vld [vmem:[%s195 + $0x2c] sm:$0xf]
      %v224 = vunpack.c.l.bf16 %v212
      %v225 = vunpack.c.l.bf16 %v213
      %v226 = vunpack.c.l.bf16 %v214
      %v227 = vunpack.c.l.bf16 %v215
      %v228 = vunpack.c.l.bf16 %v216
      %v229 = vunpack.c.l.bf16 %v217
      %v230 = vunpack.c.l.bf16 %v218
      %v231 = vunpack.c.l.bf16 %v219
      %v232 = vunpack.c.l.bf16 %v220
      %v233 = vunpack.c.l.bf16 %v221
      %v234 = vunpack.c.l.bf16 %v222
      %v235 = vunpack.c.l.bf16 %v223
      %v236 = vld [vmem:[%s200] sm:$0xf]
      %v237 = vld [vmem:[%s200 + $0x4] sm:$0xf]
      %v238 = vld [vmem:[%s200 + $0x8] sm:$0xf]
      %v239 = vld [vmem:[%s200 + $0xc] sm:$0xf]
      %v240 = vld [vmem:[%s200 + $0x10] sm:$0xf]
      %v241 = vld [vmem:[%s200 + $0x14] sm:$0xf]
      %v242 = vld [vmem:[%s200 + $0x18] sm:$0xf]
      %v243 = vld [vmem:[%s200 + $0x1c] sm:$0xf]
      %v244 = vld [vmem:[%s200 + $0x20] sm:$0xf]
      %v245 = vld [vmem:[%s200 + $0x24] sm:$0xf]
      %v246 = vld [vmem:[%s200 + $0x28] sm:$0xf]
      %v247 = vld [vmem:[%s200 + $0x2c] sm:$0xf]
      %v248 = vunpack.c.l.bf16 %v236
      %v249 = vunpack.c.l.bf16 %v237
      %v250 = vunpack.c.l.bf16 %v238
      %v251 = vunpack.c.l.bf16 %v239
      %v252 = vunpack.c.l.bf16 %v240
      %v253 = vunpack.c.l.bf16 %v241
      %v254 = vunpack.c.l.bf16 %v242
      %v255 = vunpack.c.l.bf16 %v243
      %v256 = vunpack.c.l.bf16 %v244
      %v257 = vunpack.c.l.bf16 %v245
      %v258 = vunpack.c.l.bf16 %v246
      %v259 = vunpack.c.l.bf16 %v247
      %v260 = vld [vmem:[%s205] sm:$0xf]
      %v261 = vld [vmem:[%s205 + $0x4] sm:$0xf]
      %v262 = vld [vmem:[%s205 + $0x8] sm:$0xf]
      %v263 = vld [vmem:[%s205 + $0xc] sm:$0xf]
      %v264 = vld [vmem:[%s205 + $0x10] sm:$0xf]
      %v265 = vld [vmem:[%s205 + $0x14] sm:$0xf]
      %v266 = vld [vmem:[%s205 + $0x18] sm:$0xf]
      %v267 = vld [vmem:[%s205 + $0x1c] sm:$0xf]
      %v268 = vld [vmem:[%s205 + $0x20] sm:$0xf]
      %v269 = vld [vmem:[%s205 + $0x24] sm:$0xf]
      %v270 = vld [vmem:[%s205 + $0x28] sm:$0xf]
      %v271 = vld [vmem:[%s205 + $0x2c] sm:$0xf]
      %vm272 = vcmask 97280
      %v273 = vsel %vm272, %v224, -inf
      %v274 = vsel %vm272, %v225, -inf
      %v275 = vsel %vm272, %v226, -inf
      %v276 = vmax.f32 %v273, %v275
      %v277 = vsel %vm272, %v227, -inf
      %v278 = vmax.f32 %v274, %v277
      %v279 = vmax.f32 %v276, %v278
      %v280 = vrot.slane %v279, 4
      %v281 = vmax.f32 %v279, %v280
      %v282 = vrot.slane %v281, 2
      %v283 = vmax.f32 %v281, %v282
      %v284 = vrot.slane %v283, 1
      %v285 = vmax.f32 %v283, %v284
      %v286 = vsel %vm272, %v228, -inf
      %v287 = vsel %vm272, %v229, -inf
      %v288 = vsel %vm272, %v230, -inf
      %v289 = vmax.f32 %v286, %v288
      %v290 = vsel %vm272, %v231, -inf
      %v291 = vmax.f32 %v287, %v290
      %v292 = vmax.f32 %v289, %v291
      %v293 = vrot.slane %v292, 4
      %v294 = vmax.f32 %v292, %v293
      %v295 = vrot.slane %v294, 2
      %v296 = vmax.f32 %v294, %v295
      %v297 = vrot.slane %v296, 1
      %v298 = vmax.f32 %v296, %v297
      %v299 = vsel %vm272, %v232, -inf
      %v300 = vsel %vm272, %v233, -inf
      %v301 = vsel %vm272, %v234, -inf
      %v302 = vmax.f32 %v299, %v301
      %v303 = vsel %vm272, %v235, -inf
      %v304 = vmax.f32 %v300, %v303
      %v305 = vmax.f32 %v302, %v304
      %v306 = vrot.slane %v305, 4
      %v307 = vmax.f32 %v305, %v306
      %v308 = vrot.slane %v307, 2
      %v309 = vmax.f32 %v307, %v308
      %v310 = vrot.slane %v309, 1
      %v311 = vmax.f32 %v309, %v310
      %v312 = vsub.f32 %v224, %v285
      %v313 = vsub.f32 %v225, %v285
      %v314 = vsub.f32 %v226, %v285
      %v315 = vsub.f32 %v227, %v285
      %v316 = vsub.f32 %v228, %v298
      %v317 = vsub.f32 %v229, %v298
      %v318 = vsub.f32 %v230, %v298
      %v319 = vsub.f32 %v231, %v298
      %v320 = vsub.f32 %v232, %v311
      %v321 = vsub.f32 %v233, %v311
      %v322 = vsub.f32 %v234, %v311
      %v323 = vsub.f32 %v235, %v311
      %v324 = vmul.f32 %v312, 1.442695
      %v325 = vpow.pop %v324
      %v326 = vmul.f32 %v313, 1.442695
      %v327 = vpow.pop %v326
      %v328 = vmul.f32 %v314, 1.442695
      %v329 = vpow.pop %v328
      %v330 = vmul.f32 %v315, 1.442695
      %v331 = vpow.pop %v330
      %v332 = vmul.f32 %v316, 1.442695
      %v333 = vpow.pop %v332
      %v334 = vmul.f32 %v317, 1.442695
      %v335 = vpow.pop %v334
      %v336 = vmul.f32 %v318, 1.442695
      %v337 = vpow.pop %v336
      %v338 = vmul.f32 %v319, 1.442695
      %v339 = vpow.pop %v338
      %v340 = vmul.f32 %v320, 1.442695
      %v341 = vpow.pop %v340
      %v342 = vmul.f32 %v321, 1.442695
      %v343 = vpow.pop %v342
      %v344 = vmul.f32 %v322, 1.442695
      %v345 = vpow.pop %v344
      %v346 = vmul.f32 %v323, 1.442695
      %v347 = vpow.pop %v346
      %v348 = vsel %vm272, %v325, 0.0
      %v349 = vsel %vm272, %v327, 0.0
      %v350 = vadd.f32 %v348, %v349
      %v351 = vsel %vm272, %v329, 0.0
      %v352 = vadd.f32 %v350, %v351
      %v353 = vsel %vm272, %v331, 0.0
      %v354 = vadd.f32 %v352, %v353
      %v355 = vrot.slane %v354, 4
      %v356 = vadd.f32 %v354, %v355
      %v357 = vrot.slane %v356, 2
      %v358 = vadd.f32 %v356, %v357
      %v359 = vrot.slane %v358, 1
      %v360 = vadd.f32 %v358, %v359
      %v361 = vsel %vm272, %v333, 0.0
      %v362 = vsel %vm272, %v335, 0.0
      %v363 = vadd.f32 %v361, %v362
      %v364 = vsel %vm272, %v337, 0.0
      %v365 = vadd.f32 %v363, %v364
      %v366 = vsel %vm272, %v339, 0.0
      %v367 = vadd.f32 %v365, %v366
      %v368 = vrot.slane %v367, 4
      %v369 = vadd.f32 %v367, %v368
      %v370 = vrot.slane %v369, 2
      %v371 = vadd.f32 %v369, %v370
      %v372 = vrot.slane %v371, 1
      %v373 = vadd.f32 %v371, %v372
      %v374 = vsel %vm272, %v341, 0.0
      %v375 = vsel %vm272, %v343, 0.0
      %v376 = vadd.f32 %v374, %v375
      %v377 = vsel %vm272, %v345, 0.0
      %v378 = vadd.f32 %v376, %v377
      %v379 = vsel %vm272, %v347, 0.0
      %v380 = vadd.f32 %v378, %v379
      %v381 = vrot.slane %v380, 4
      %v382 = vadd.f32 %v380, %v381
      %v383 = vrot.slane %v382, 2
      %v384 = vadd.f32 %v382, %v383
      %v385 = vrot.slane %v384, 1
      %v386 = vadd.f32 %v384, %v385
      %v387 = vrcp.pop %v360
      %v388 = vmul.f32 %v325, %v387
      %v389 = vmul.f32 %v327, %v387
      %v390 = vmul.f32 %v329, %v387
      %v391 = vmul.f32 %v331, %v387
      %v392 = vrcp.pop %v373
      %v393 = vmul.f32 %v333, %v392
      %v394 = vmul.f32 %v335, %v392
      %v395 = vmul.f32 %v337, %v392
      %v396 = vmul.f32 %v339, %v392
      %v397 = vrcp.pop %v386
      %v398 = vmul.f32 %v341, %v397
      %v399 = vmul.f32 %v343, %v397
      %v400 = vmul.f32 %v345, %v397
      %v401 = vmul.f32 %v347, %v397
      %v402 = vmul.f32 %v388, 0.17677669
      %v403 = vmul.f32 %v389, 0.17677669
      %v404 = vmul.f32 %v390, 0.17677669
      %v405 = vmul.f32 %v391, 0.17677669
      %v406 = vmul.f32 %v393, 0.17677669
      %v407 = vmul.f32 %v394, 0.17677669
      %v408 = vmul.f32 %v395, 0.17677669
      %v409 = vmul.f32 %v396, 0.17677669
      %v410 = vmul.f32 %v398, 0.17677669
      %v411 = vmul.f32 %v399, 0.17677669
      %v412 = vmul.f32 %v400, 0.17677669
      %v413 = vmul.f32 %v401, 0.17677669
      %v414 = vsel %vm272, %v248, -inf
      %415 = vmax.xlane.f32.xlu0 %v414
      %v416 = vpop.xlane.xlu0 %415
      %v417 = vsel %vm272, %v249, -inf
      %418 = vmax.xlane.f32.xlu0 %v417
      %v419 = vpop.xlane.xlu0 %418
      %v420 = vsel %vm272, %v250, -inf
      %421 = vmax.xlane.f32.xlu0 %v420
      %v422 = vpop.xlane.xlu0 %421
      %v423 = vsel %vm272, %v251, -inf
      %424 = vmax.xlane.f32.xlu0 %v423
      %v425 = vpop.xlane.xlu0 %424
      %v426 = vsel %vm272, %v252, -inf
      %427 = vmax.xlane.f32.xlu0 %v426
      %v428 = vpop.xlane.xlu0 %427
      %v429 = vsel %vm272, %v253, -inf
      %430 = vmax.xlane.f32.xlu0 %v429
      %v431 = vpop.xlane.xlu0 %430
      %v432 = vsel %vm272, %v254, -inf
      %433 = vmax.xlane.f32.xlu0 %v432
      %v434 = vpop.xlane.xlu0 %433
      %v435 = vsel %vm272, %v255, -inf
      %436 = vmax.xlane.f32.xlu0 %v435
      %v437 = vpop.xlane.xlu0 %436
      %v438 = vsel %vm272, %v256, -inf
      %439 = vmax.xlane.f32.xlu0 %v438
      %v440 = vpop.xlane.xlu0 %439
      %v441 = vsel %vm272, %v257, -inf
      %442 = vmax.xlane.f32.xlu0 %v441
      %v443 = vpop.xlane.xlu0 %442
      %v444 = vsel %vm272, %v258, -inf
      %445 = vmax.xlane.f32.xlu0 %v444
      %v446 = vpop.xlane.xlu0 %445
      %v447 = vsel %vm272, %v259, -inf
      %448 = vmax.xlane.f32.xlu0 %v447
      %v449 = vpop.xlane.xlu0 %448
      %v450 = vsub.f32 %v248, %v416
      %v451 = vsub.f32 %v249, %v419
      %v452 = vsub.f32 %v250, %v422
      %v453 = vsub.f32 %v251, %v425
      %v454 = vsub.f32 %v252, %v428
      %v455 = vsub.f32 %v253, %v431
      %v456 = vsub.f32 %v254, %v434
      %v457 = vsub.f32 %v255, %v437
      %v458 = vsub.f32 %v256, %v440
      %v459 = vsub.f32 %v257, %v443
      %v460 = vsub.f32 %v258, %v446
      %v461 = vsub.f32 %v259, %v449
      %v462 = vmul.f32 %v450, 1.442695
      %v463 = vpow.pop %v462
      %v464 = vmul.f32 %v451, 1.442695
      %v465 = vpow.pop %v464
      %v466 = vmul.f32 %v452, 1.442695
      %v467 = vpow.pop %v466
      %v468 = vmul.f32 %v453, 1.442695
      %v469 = vpow.pop %v468
      %v470 = vmul.f32 %v454, 1.442695
      %v471 = vpow.pop %v470
      %v472 = vmul.f32 %v455, 1.442695
      %v473 = vpow.pop %v472
      %v474 = vmul.f32 %v456, 1.442695
      %v475 = vpow.pop %v474
      %v476 = vmul.f32 %v457, 1.442695
      %v477 = vpow.pop %v476
      %v478 = vmul.f32 %v458, 1.442695
      %v479 = vpow.pop %v478
      %v480 = vmul.f32 %v459, 1.442695
      %v481 = vpow.pop %v480
      %v482 = vmul.f32 %v460, 1.442695
      %v483 = vpow.pop %v482
      %v484 = vmul.f32 %v461, 1.442695
      %v485 = vpow.pop %v484
      %v486 = vsel %vm272, %v463, 0.0
      %487 = vadd.xlane.f32.xlu0 %v486
      %v488 = vpop.xlane.xlu0 %487
      %v489 = vsel %vm272, %v465, 0.0
      %490 = vadd.xlane.f32.xlu0 %v489
      %v491 = vpop.xlane.xlu0 %490
      %v492 = vsel %vm272, %v467, 0.0
      %493 = vadd.xlane.f32.xlu0 %v492
      %v494 = vpop.xlane.xlu0 %493
      %v495 = vsel %vm272, %v469, 0.0
      %496 = vadd.xlane.f32.xlu0 %v495
      %v497 = vpop.xlane.xlu0 %496
      %v498 = vsel %vm272, %v471, 0.0
      %499 = vadd.xlane.f32.xlu0 %v498
      %v500 = vpop.xlane.xlu0 %499
      %v501 = vsel %vm272, %v473, 0.0
      %502 = vadd.xlane.f32.xlu0 %v501
      %v503 = vpop.xlane.xlu0 %502
      %v504 = vsel %vm272, %v475, 0.0
      %505 = vadd.xlane.f32.xlu0 %v504
      %v506 = vpop.xlane.xlu0 %505
      %v507 = vsel %vm272, %v477, 0.0
      %508 = vadd.xlane.f32.xlu0 %v507
      %v509 = vpop.xlane.xlu0 %508
      %v510 = vsel %vm272, %v479, 0.0
      %511 = vadd.xlane.f32.xlu0 %v510
      %v512 = vpop.xlane.xlu0 %511
      %v513 = vsel %vm272, %v481, 0.0
      %514 = vadd.xlane.f32.xlu0 %v513
      %v515 = vpop.xlane.xlu0 %514
      %v516 = vsel %vm272, %v483, 0.0
      %517 = vadd.xlane.f32.xlu0 %v516
      %v518 = vpop.xlane.xlu0 %517
      %v519 = vsel %vm272, %v485, 0.0
      %520 = vadd.xlane.f32.xlu0 %v519
      %v521 = vpop.xlane.xlu0 %520
      %v522 = vrcp.pop %v488
      %v523 = vmul.f32 %v463, %v522
      %v524 = vrcp.pop %v491
      %v525 = vmul.f32 %v465, %v524
      %v526 = vrcp.pop %v494
      %v527 = vmul.f32 %v467, %v526
      %v528 = vrcp.pop %v497
      %v529 = vmul.f32 %v469, %v528
      %v530 = vrcp.pop %v500
      %v531 = vmul.f32 %v471, %v530
      %v532 = vrcp.pop %v503
      %v533 = vmul.f32 %v473, %v532
      %v534 = vrcp.pop %v506
      %v535 = vmul.f32 %v475, %v534
      %v536 = vrcp.pop %v509
      %v537 = vmul.f32 %v477, %v536
      %v538 = vrcp.pop %v512
      %v539 = vmul.f32 %v479, %v538
      %v540 = vrcp.pop %v515
      %v541 = vmul.f32 %v481, %v540
      %v542 = vrcp.pop %v518
      %v543 = vmul.f32 %v483, %v542
      %v544 = vrcp.pop %v521
      %v545 = vmul.f32 %v485, %v544
      %v546 = vpack.c.bf16 %v525, %v523
      %v547 = vpack.c.bf16 %v529, %v527
      %v548 = vpack.c.bf16 %v533, %v531
      %v549 = vpack.c.bf16 %v537, %v535
      %v550 = vpack.c.bf16 %v541, %v539
      %v551 = vpack.c.bf16 %v545, %v543
      %v556 = vunpack.c.l.b16 %v260
      %v557 = vunpack.c.l.b16 %v261
      %v558 = vunpack.c.l.b16 %v262
      %v559 = vunpack.c.l.b16 %v263
      %v560 = vpack.c.b16 %v557, %v556
      %v561 = vpack.c.b16 %v559, %v558
      %v563 = vsel %vm272, %v546, 0
      %v566 = vsel %vm272, %v547, 0
      %v569 = vsel %vm272, %v560, 0
      %v572 = vsel %vm272, %v561, 0
      %574 = vmatprep.subr.bf16.mxu0 0
      %575 = vmatpush1.bf16.xpose.msra.mxu0 %v569
      %576 = vmatprep.subr.bf16.mxu0 0
      %577 = vmatpush1.bf16.xpose.msra.mxu0 %v572
      %578 = vmatprep.subr.bf16.mxu0 0
      %579 = vmatpush1.bf16.xpose.msra.mxu0 0
      %580 = vmatprep.subr.bf16.mxu0 0
      %581 = vmatpush1.bf16.xpose.msra.mxu0 0
      %582 = vmatprep.subr.bf16.mxu0 0
      %583 = vmatpush1.bf16.xpose.msra.mxu0 0
      %584 = vmatprep.subr.bf16.mxu0 0
      %585 = vmatpush1.bf16.xpose.msra.mxu0 0
      %586 = vmatprep.subr.bf16.mxu0 0
      %587 = vmatpush1.bf16.xpose.msra.mxu0 0
      %588 = vmatprep.subr.bf16.mxu0 0
      %589 = vmatpush1.bf16.xpose.msra.mxu0 0
      %590 = vmatprep.subr.bf16.mxu0 0
      %591 = vmatpush1.bf16.xpose.msra.mxu0 0
      %592 = vmatprep.subr.bf16.mxu0 0
      %593 = vmatpush1.bf16.xpose.msra.mxu0 0
      %594 = vmatprep.subr.bf16.mxu0 0
      %595 = vmatpush1.bf16.xpose.msra.mxu0 0
      %596 = vmatprep.subr.bf16.mxu0 0
      %597 = vmatpush1.bf16.xpose.msra.mxu0 0
      %598 = vmatprep.subr.bf16.mxu0 0
      %599 = vmatpush1.bf16.xpose.msra.mxu0 0
      %600 = vmatprep.subr.bf16.mxu0 0
      %601 = vmatpush1.bf16.xpose.msra.mxu0 0
      %602 = vmatprep.subr.bf16.mxu0 0
      %603 = vmatpush1.bf16.xpose.msra.mxu0 0
      %604 = vmatprep.subr.bf16.mxu0 0
      %605 = vmatpush1.bf16.xpose.msra.mxu0 0
      %606 = vmatprep.mubr.bf16.mxu0 0
      %607 = vmatmul.mubr.bf16.gmra.mrb[0].mxu0 %v563
      %v608 = vpop.f32.mrb[0].mxu0
      %v609 = vadd.f32 0.0, %v608
      %v610 = vpop.f32.mrb[0].mxu0
      %v611 = vpop.f32.mrb[0].mxu0
      %v612 = vadd.f32 0.0, %v611
      %v613 = vpop.f32.mrb[0].mxu0
      %614 = vmatprep.mubr.bf16.mxu0 0
      %615 = vmatmul.mubr.bf16.gmra.mrb[0].mxu0 %v566
      %v616 = vpop.f32.mrb[0].mxu0
      %v617 = vadd.f32 0.0, %v616
      %v618 = vpop.f32.mrb[0].mxu0
      %v619 = vpop.f32.mrb[0].mxu0
      %v620 = vadd.f32 0.0, %v619
      %v621 = vpop.f32.mrb[0].mxu0
      %622 = vdwg.mxu0
      %v627 = vunpack.c.l.b16 %v264
      %v628 = vunpack.c.l.b16 %v265
      %v629 = vunpack.c.l.b16 %v266
      %v630 = vunpack.c.l.b16 %v267
      %v631 = vpack.c.b16 %v628, %v627
      %v632 = vpack.c.b16 %v630, %v629
      %v634 = vsel %vm272, %v548, 0
      %v637 = vsel %vm272, %v549, 0
      %v640 = vsel %vm272, %v631, 0
      %v643 = vsel %vm272, %v632, 0
      %645 = vmatprep.subr.bf16.mxu0 0
      %646 = vmatpush1.bf16.xpose.msra.mxu0 %v640
      %647 = vmatprep.subr.bf16.mxu0 0
      %648 = vmatpush1.bf16.xpose.msra.mxu0 %v643
      %649 = vmatprep.subr.bf16.mxu0 0
      %650 = vmatpush1.bf16.xpose.msra.mxu0 0
      %651 = vmatprep.subr.bf16.mxu0 0
      %652 = vmatpush1.bf16.xpose.msra.mxu0 0
      %653 = vmatprep.subr.bf16.mxu0 0
      %654 = vmatpush1.bf16.xpose.msra.mxu0 0
      %655 = vmatprep.subr.bf16.mxu0 0
      %656 = vmatpush1.bf16.xpose.msra.mxu0 0
      %657 = vmatprep.subr.bf16.mxu0 0
      %658 = vmatpush1.bf16.xpose.msra.mxu0 0
      %659 = vmatprep.subr.bf16.mxu0 0
      %660 = vmatpush1.bf16.xpose.msra.mxu0 0
      %661 = vmatprep.subr.bf16.mxu0 0
      %662 = vmatpush1.bf16.xpose.msra.mxu0 0
      %663 = vmatprep.subr.bf16.mxu0 0
      %664 = vmatpush1.bf16.xpose.msra.mxu0 0
      %665 = vmatprep.subr.bf16.mxu0 0
      %666 = vmatpush1.bf16.xpose.msra.mxu0 0
      %667 = vmatprep.subr.bf16.mxu0 0
      %668 = vmatpush1.bf16.xpose.msra.mxu0 0
      %669 = vmatprep.subr.bf16.mxu0 0
      %670 = vmatpush1.bf16.xpose.msra.mxu0 0
      %671 = vmatprep.subr.bf16.mxu0 0
      %672 = vmatpush1.bf16.xpose.msra.mxu0 0
      %673 = vmatprep.subr.bf16.mxu0 0
      %674 = vmatpush1.bf16.xpose.msra.mxu0 0
      %675 = vmatprep.subr.bf16.mxu0 0
      %676 = vmatpush1.bf16.xpose.msra.mxu0 0
      %677 = vmatprep.mubr.bf16.mxu0 0
      %678 = vmatmul.mubr.bf16.gmra.mrb[0].mxu0 %v634
      %v679 = vpop.f32.mrb[0].mxu0
      %v680 = vadd.f32 0.0, %v679
      %v681 = vpop.f32.mrb[0].mxu0
      %v682 = vpop.f32.mrb[0].mxu0
      %v683 = vadd.f32 0.0, %v682
      %v684 = vpop.f32.mrb[0].mxu0
      %685 = vmatprep.mubr.bf16.mxu0 0
      %686 = vmatmul.mubr.bf16.gmra.mrb[0].mxu0 %v637
      %v687 = vpop.f32.mrb[0].mxu0
      %v688 = vadd.f32 0.0, %v687
      %v689 = vpop.f32.mrb[0].mxu0
      %v690 = vpop.f32.mrb[0].mxu0
      %v691 = vadd.f32 0.0, %v690
      %v692 = vpop.f32.mrb[0].mxu0
      %693 = vdwg.mxu0
      %v698 = vunpack.c.l.b16 %v268
      %v699 = vunpack.c.l.b16 %v269
      %v700 = vunpack.c.l.b16 %v270
      %v701 = vunpack.c.l.b16 %v271
      %v702 = vpack.c.b16 %v699, %v698
      %v703 = vpack.c.b16 %v701, %v700
      %v705 = vsel %vm272, %v550, 0
      %v708 = vsel %vm272, %v551, 0
      %v711 = vsel %vm272, %v702, 0
      %v714 = vsel %vm272, %v703, 0
      %716 = vmatprep.subr.bf16.mxu0 0
      %717 = vmatpush1.bf16.xpose.msra.mxu0 %v711
      %718 = vmatprep.subr.bf16.mxu0 0
      %719 = vmatpush1.bf16.xpose.msra.mxu0 %v714
      %720 = vmatprep.subr.bf16.mxu0 0
      %721 = vmatpush1.bf16.xpose.msra.mxu0 0
      %722 = vmatprep.subr.bf16.mxu0 0
      %723 = vmatpush1.bf16.xpose.msra.mxu0 0
      %724 = vmatprep.subr.bf16.mxu0 0
      %725 = vmatpush1.bf16.xpose.msra.mxu0 0
      %726 = vmatprep.subr.bf16.mxu0 0
      %727 = vmatpush1.bf16.xpose.msra.mxu0 0
      %728 = vmatprep.subr.bf16.mxu0 0
      %729 = vmatpush1.bf16.xpose.msra.mxu0 0
      %730 = vmatprep.subr.bf16.mxu0 0
      %731 = vmatpush1.bf16.xpose.msra.mxu0 0
      %732 = vmatprep.subr.bf16.mxu0 0
      %733 = vmatpush1.bf16.xpose.msra.mxu0 0
      %734 = vmatprep.subr.bf16.mxu0 0
      %735 = vmatpush1.bf16.xpose.msra.mxu0 0
      %736 = vmatprep.subr.bf16.mxu0 0
      %737 = vmatpush1.bf16.xpose.msra.mxu0 0
      %738 = vmatprep.subr.bf16.mxu0 0
      %739 = vmatpush1.bf16.xpose.msra.mxu0 0
      %740 = vmatprep.subr.bf16.mxu0 0
      %741 = vmatpush1.bf16.xpose.msra.mxu0 0
      %742 = vmatprep.subr.bf16.mxu0 0
      %743 = vmatpush1.bf16.xpose.msra.mxu0 0
      %744 = vmatprep.subr.bf16.mxu0 0
      %745 = vmatpush1.bf16.xpose.msra.mxu0 0
      %746 = vmatprep.subr.bf16.mxu0 0
      %747 = vmatpush1.bf16.xpose.msra.mxu0 0
      %748 = vmatprep.mubr.bf16.mxu0 0
      %749 = vmatmul.mubr.bf16.gmra.mrb[0].mxu0 %v705
      %v750 = vpop.f32.mrb[0].mxu0
      %v751 = vadd.f32 0.0, %v750
      %v752 = vpop.f32.mrb[0].mxu0
      %v753 = vpop.f32.mrb[0].mxu0
      %v754 = vadd.f32 0.0, %v753
      %v755 = vpop.f32.mrb[0].mxu0
      %756 = vmatprep.mubr.bf16.mxu0 0
      %757 = vmatmul.mubr.bf16.gmra.mrb[0].mxu0 %v708
      %v758 = vpop.f32.mrb[0].mxu0
      %v759 = vadd.f32 0.0, %v758
      %v760 = vpop.f32.mrb[0].mxu0
      %v761 = vpop.f32.mrb[0].mxu0
      %v762 = vadd.f32 0.0, %v761
      %v763 = vpop.f32.mrb[0].mxu0
      %764 = vdwg.mxu0
      %v765 = vpack.c.bf16 %v612, %v609
      %v766 = vpack.c.bf16 %v620, %v617
      %v767 = vpack.c.bf16 %v683, %v680
      %v768 = vpack.c.bf16 %v691, %v688
      %v769 = vpack.c.bf16 %v754, %v751
      %v770 = vpack.c.bf16 %v762, %v759
      %v771 = vpack.c.bf16 %v403, %v402
      %v772 = vpack.c.bf16 %v405, %v404
      %v773 = vpack.c.bf16 %v407, %v406
      %v774 = vpack.c.bf16 %v409, %v408
      %v775 = vpack.c.bf16 %v411, %v410
      %v776 = vpack.c.bf16 %v413, %v412
      %777 = vxpose.xlu0.c.b16.start [1/8] %v765, 128
      %778 = vxpose.xlu0.c.b16.cont [2/8] %v766, 128
      %779 = vxpose.xlu0.c.b16.cont [3/8] 0, 128
      %780 = vxpose.xlu0.c.b16.cont [4/8] 0, 128
      %781 = vxpose.xlu0.c.b16.cont [5/8] 0, 128
      %782 = vxpose.xlu0.c.b16.cont [6/8] 0, 128
      %783 = vxpose.xlu0.c.b16.cont [7/8] 0, 128
      %784 = vxpose.xlu0.c.b16.end [8/8] 0, 128
      %v785 = vpop.trf.xlu0
      %v786 = vpop.trf.xlu0
      %v787 = vpop.trf.xlu0
      %v788 = vpop.trf.xlu0
      %v789 = vpop.trf.xlu0
      %v790 = vpop.trf.xlu0
      %v791 = vpop.trf.xlu0
      %v792 = vpop.trf.xlu0
      %vm793 = vcmask 261120
      %v795 = vsel %vm793, %v785, 0
      %v798 = vsel %vm793, %v786, 0
      %800 = vmatprep.subr.bf16.mxu0 0
      %801 = vmatpush1.bf16.msra.mxu0 %v771
      %802 = vmatprep.subr.bf16.mxu0 0
      %803 = vmatpush1.bf16.msra.mxu0 %v772
      %804 = vmatprep.subr.bf16.mxu0 0
      %805 = vmatpush1.bf16.msra.mxu0 0
      %806 = vmatprep.subr.bf16.mxu0 0
      %807 = vmatpush1.bf16.msra.mxu0 0
      %808 = vmatprep.subr.bf16.mxu0 0
      %809 = vmatpush1.bf16.msra.mxu0 0
      %810 = vmatprep.subr.bf16.mxu0 0
      %811 = vmatpush1.bf16.msra.mxu0 0
      %812 = vmatprep.subr.bf16.mxu0 0
      %813 = vmatpush1.bf16.msra.mxu0 0
      %814 = vmatprep.subr.bf16.mxu0 0
      %815 = vmatpush1.bf16.msra.mxu0 0
      %816 = vmatprep.subr.bf16.mxu0 0
      %817 = vmatpush1.bf16.msra.mxu0 0
      %818 = vmatprep.subr.bf16.mxu0 0
      %819 = vmatpush1.bf16.msra.mxu0 0
      %820 = vmatprep.subr.bf16.mxu0 0
      %821 = vmatpush1.bf16.msra.mxu0 0
      %822 = vmatprep.subr.bf16.mxu0 0
      %823 = vmatpush1.bf16.msra.mxu0 0
      %824 = vmatprep.subr.bf16.mxu0 0
      %825 = vmatpush1.bf16.msra.mxu0 0
      %826 = vmatprep.subr.bf16.mxu0 0
      %827 = vmatpush1.bf16.msra.mxu0 0
      %828 = vmatprep.subr.bf16.mxu0 0
      %829 = vmatpush1.bf16.msra.mxu0 0
      %830 = vmatprep.subr.bf16.mxu0 0
      %831 = vmatpush1.bf16.msra.mxu0 0
      %832 = vmatprep.mubr.bf16.mxu0 0
      %833 = vmatmul.mubr.bf16.gmra.mrb[0].mxu0 %v795
      %v834 = vpop.f32.mrb[0].mxu0
      %v835 = vadd.f32 0.0, %v834
      %v836 = vpop.f32.mrb[0].mxu0
      %v837 = vpop.f32.mrb[0].mxu0
      %v838 = vadd.f32 0.0, %v837
      %v839 = vpop.f32.mrb[0].mxu0
      %840 = vmatprep.mubr.bf16.mxu0 0
      %841 = vmatmul.mubr.bf16.gmra.mrb[0].mxu0 %v798
      %v842 = vpop.f32.mrb[0].mxu0
      %v843 = vadd.f32 0.0, %v842
      %v844 = vpop.f32.mrb[0].mxu0
      %v845 = vpop.f32.mrb[0].mxu0
      %v846 = vadd.f32 0.0, %v845
      %v847 = vpop.f32.mrb[0].mxu0
      %848 = vdwg.mxu0
      %849 = vxpose.xlu0.c.b16.start [1/8] %v767, 128
      %850 = vxpose.xlu0.c.b16.cont [2/8] %v768, 128
      %851 = vxpose.xlu0.c.b16.cont [3/8] 0, 128
      %852 = vxpose.xlu0.c.b16.cont [4/8] 0, 128
      %853 = vxpose.xlu0.c.b16.cont [5/8] 0, 128
      %854 = vxpose.xlu0.c.b16.cont [6/8] 0, 128
      %855 = vxpose.xlu0.c.b16.cont [7/8] 0, 128
      %856 = vxpose.xlu0.c.b16.end [8/8] 0, 128
      %v857 = vpop.trf.xlu0
      %v858 = vpop.trf.xlu0
      %v859 = vpop.trf.xlu0
      %v860 = vpop.trf.xlu0
      %v861 = vpop.trf.xlu0
      %v862 = vpop.trf.xlu0
      %v863 = vpop.trf.xlu0
      %v864 = vpop.trf.xlu0
      %v866 = vsel %vm793, %v857, 0
      %v869 = vsel %vm793, %v858, 0
      %871 = vmatprep.subr.bf16.mxu0 0
      %872 = vmatpush1.bf16.msra.mxu0 %v773
      %873 = vmatprep.subr.bf16.mxu0 0
      %874 = vmatpush1.bf16.msra.mxu0 %v774
      %875 = vmatprep.subr.bf16.mxu0 0
      %876 = vmatpush1.bf16.msra.mxu0 0
      %877 = vmatprep.subr.bf16.mxu0 0
      %878 = vmatpush1.bf16.msra.mxu0 0
      %879 = vmatprep.subr.bf16.mxu0 0
      %880 = vmatpush1.bf16.msra.mxu0 0
      %881 = vmatprep.subr.bf16.mxu0 0
      %882 = vmatpush1.bf16.msra.mxu0 0
      %883 = vmatprep.subr.bf16.mxu0 0
      %884 = vmatpush1.bf16.msra.mxu0 0
      %885 = vmatprep.subr.bf16.mxu0 0
      %886 = vmatpush1.bf16.msra.mxu0 0
      %887 = vmatprep.subr.bf16.mxu0 0
      %888 = vmatpush1.bf16.msra.mxu0 0
      %889 = vmatprep.subr.bf16.mxu0 0
      %890 = vmatpush1.bf16.msra.mxu0 0
      %891 = vmatprep.subr.bf16.mxu0 0
      %892 = vmatpush1.bf16.msra.mxu0 0
      %893 = vmatprep.subr.bf16.mxu0 0
      %894 = vmatpush1.bf16.msra.mxu0 0
      %895 = vmatprep.subr.bf16.mxu0 0
      %896 = vmatpush1.bf16.msra.mxu0 0
      %897 = vmatprep.subr.bf16.mxu0 0
      %898 = vmatpush1.bf16.msra.mxu0 0
      %899 = vmatprep.subr.bf16.mxu0 0
      %900 = vmatpush1.bf16.msra.mxu0 0
      %901 = vmatprep.subr.bf16.mxu0 0
      %902 = vmatpush1.bf16.msra.mxu0 0
      %903 = vmatprep.mubr.bf16.mxu0 0
      %904 = vmatmul.mubr.bf16.gmra.mrb[0].mxu0 %v866
      %v905 = vpop.f32.mrb[0].mxu0
      %v906 = vadd.f32 0.0, %v905
      %v907 = vpop.f32.mrb[0].mxu0
      %v908 = vpop.f32.mrb[0].mxu0
      %v909 = vadd.f32 0.0, %v908
      %v910 = vpop.f32.mrb[0].mxu0
      %911 = vmatprep.mubr.bf16.mxu0 0
      %912 = vmatmul.mubr.bf16.gmra.mrb[0].mxu0 %v869
      %v913 = vpop.f32.mrb[0].mxu0
      %v914 = vadd.f32 0.0, %v913
      %v915 = vpop.f32.mrb[0].mxu0
      %v916 = vpop.f32.mrb[0].mxu0
      %v917 = vadd.f32 0.0, %v916
      %v918 = vpop.f32.mrb[0].mxu0
      %919 = vdwg.mxu0
      %920 = vxpose.xlu0.c.b16.start [1/8] %v769, 128
      %921 = vxpose.xlu0.c.b16.cont [2/8] %v770, 128
      %922 = vxpose.xlu0.c.b16.cont [3/8] 0, 128
      %923 = vxpose.xlu0.c.b16.cont [4/8] 0, 128
      %924 = vxpose.xlu0.c.b16.cont [5/8] 0, 128
      %925 = vxpose.xlu0.c.b16.cont [6/8] 0, 128
      %926 = vxpose.xlu0.c.b16.cont [7/8] 0, 128
      %927 = vxpose.xlu0.c.b16.end [8/8] 0, 128
      %v928 = vpop.trf.xlu0
      %v929 = vpop.trf.xlu0
      %v930 = vpop.trf.xlu0
      %v931 = vpop.trf.xlu0
      %v932 = vpop.trf.xlu0
      %v933 = vpop.trf.xlu0
      %v934 = vpop.trf.xlu0
      %v935 = vpop.trf.xlu0
      %v937 = vsel %vm793, %v928, 0
      %v940 = vsel %vm793, %v929, 0
      %942 = vmatprep.subr.bf16.mxu0 0
      %943 = vmatpush1.bf16.msra.mxu0 %v775
      %944 = vmatprep.subr.bf16.mxu0 0
      %945 = vmatpush1.bf16.msra.mxu0 %v776
      %946 = vmatprep.subr.bf16.mxu0 0
      %947 = vmatpush1.bf16.msra.mxu0 0
      %948 = vmatprep.subr.bf16.mxu0 0
      %949 = vmatpush1.bf16.msra.mxu0 0
      %950 = vmatprep.subr.bf16.mxu0 0
      %951 = vmatpush1.bf16.msra.mxu0 0
      %952 = vmatprep.subr.bf16.mxu0 0
      %953 = vmatpush1.bf16.msra.mxu0 0
      %954 = vmatprep.subr.bf16.mxu0 0
      %955 = vmatpush1.bf16.msra.mxu0 0
      %956 = vmatprep.subr.bf16.mxu0 0
      %957 = vmatpush1.bf16.msra.mxu0 0
      %958 = vmatprep.subr.bf16.mxu0 0
      %959 = vmatpush1.bf16.msra.mxu0 0
      %960 = vmatprep.subr.bf16.mxu0 0
      %961 = vmatpush1.bf16.msra.mxu0 0
      %962 = vmatprep.subr.bf16.mxu0 0
      %963 = vmatpush1.bf16.msra.mxu0 0
      %964 = vmatprep.subr.bf16.mxu0 0
      %965 = vmatpush1.bf16.msra.mxu0 0
      %966 = vmatprep.subr.bf16.mxu0 0
      %967 = vmatpush1.bf16.msra.mxu0 0
      %968 = vmatprep.subr.bf16.mxu0 0
      %969 = vmatpush1.bf16.msra.mxu0 0
      %970 = vmatprep.subr.bf16.mxu0 0
      %971 = vmatpush1.bf16.msra.mxu0 0
      %972 = vmatprep.subr.bf16.mxu0 0
      %973 = vmatpush1.bf16.msra.mxu0 0
      %974 = vmatprep.mubr.bf16.mxu0 0
      %975 = vmatmul.mubr.bf16.gmra.mrb[0].mxu0 %v937
      %v976 = vpop.f32.mrb[0].mxu0
      %v977 = vadd.f32 0.0, %v976
      %v978 = vpop.f32.mrb[0].mxu0
      %v979 = vpop.f32.mrb[0].mxu0
      %v980 = vadd.f32 0.0, %v979
      %v981 = vpop.f32.mrb[0].mxu0
      %982 = vmatprep.mubr.bf16.mxu0 0
      %983 = vmatmul.mubr.bf16.gmra.mrb[0].mxu0 %v940
      %v984 = vpop.f32.mrb[0].mxu0
      %v985 = vadd.f32 0.0, %v984
      %v986 = vpop.f32.mrb[0].mxu0
      %v987 = vpop.f32.mrb[0].mxu0
      %v988 = vadd.f32 0.0, %v987
      %v989 = vpop.f32.mrb[0].mxu0
      %990 = vdwg.mxu0
      %991 = vst.msk [vmem:[%s210] sm:$0xff] %vm272, %v835
      %992 = vst.msk [vmem:[%s210 + $0x8] sm:$0xff] %vm272, %v838
      %993 = vst.msk [vmem:[%s210 + $0x10] sm:$0xff] %vm272, %v843
      %994 = vst.msk [vmem:[%s210 + $0x18] sm:$0xff] %vm272, %v846
      %995 = vst.msk [vmem:[%s210 + $0x20] sm:$0xff] %vm272, %v906
      %996 = vst.msk [vmem:[%s210 + $0x28] sm:$0xff] %vm272, %v909
      %997 = vst.msk [vmem:[%s210 + $0x30] sm:$0xff] %vm272, %v914
      %998 = vst.msk [vmem:[%s210 + $0x38] sm:$0xff] %vm272, %v917
      %999 = vst.msk [vmem:[%s210 + $0x40] sm:$0xff] %vm272, %v977
      %1000 = vst.msk [vmem:[%s210 + $0x48] sm:$0xff] %vm272, %v980
      %1001 = vst.msk [vmem:[%s210 + $0x50] sm:$0xff] %vm272, %v985
      %1002 = vst.msk [vmem:[%s210 + $0x58] sm:$0xff] %vm272, %v988
      %p1003 = scmp.lt.s32.totalorder %s14, 1
      %s1004 = scalar_select %p1003, %s14, 1
      %s1005 = smul.addr %s1004, 12
      %s1006 = smul.addr %s1005, 8
      %s1007 = scalar_lea.vmem %s3, %s1006
      // Predicated region
      $region33: #{unet1d_flattening_forward.134} parent=31 // pred_check
        %p1008 = pneg %p110
      $region34: #{unet1d_flattening_forward.134} parent=31 // pred_check_branch
        %1010 = sbr.rel (%p1008) target = $region36
      $region35: #{unet1d_flattening_forward.134} parent=31 // pred_region
        _
      $region36: #{unet1d_flattening_forward.134} parent=31 // pred_fallthru
        _
    $region32: #{unet1d_flattening_forward.134} parent=5 // pred_fallthru
      _
    %p1011 = scmp.le.s32.totalorder 2, %s9
    // Predicated region
    $region37: #{unet1d_flattening_forward.134} parent=5 // pred_check
      %p1012 = pneg %p1011
    $region38: #{unet1d_flattening_forward.134} parent=5 // pred_check_branch
      %1014 = sbr.rel (%p1012) target = $region40
    $region39: #{unet1d_flattening_forward.134} parent=5 // pred_region
      %s1015 = ssub.s32 %s9, 2
      // Predicated region
      $region41: #{unet1d_flattening_forward.134} parent=39 // pred_check
        %p1016 = pneg %p116
      $region42: #{unet1d_flattening_forward.134} parent=39 // pred_check_branch
        %1018 = sbr.rel (%p1016) target = $region44
      $region43: #{unet1d_flattening_forward.134} parent=39 // pred_region
        %p1019 = scmp.lt.s32.totalorder %s15, 1
        %s1020 = scalar_select %p1019, %s15, 1
        %s1021 = smul.addr %s1020, 12
        %s1022 = smul.addr %s1021, 8
        %s1023 = scalar_lea.vmem %s3, %s1022
      $region44: #{unet1d_flattening_forward.134} parent=39 // pred_fallthru
        _
    $region40: #{unet1d_flattening_forward.134} parent=5 // pred_fallthru
      _
  $region6: #{unet1d_flattening_forward.134} parent=0 // loop_footer
    %s13 = sadd.s32 1, %s9
  $region7: #{unet1d_flattening_forward.134} parent=0 // loop_footer_branch
    %8 = sbr.rel target = $region3
  $region8: #{unet1d_flattening_forward.134} parent=0 // loop_exit
    _

// kernel: unet1d_flattening_forward.135
$region0: #{unet1d_flattening_forward.135}
  #allocation0 [shape = 'u32[]', space=smem, size = 0x4, offset = 0x4, fixed_abs, tag = 'smem constant byte address 0x4 - core index']
  #allocation1 [shape = 'u32[144,128]{1,0:T(1,128)}', space=vmem, size = 0x12000, scoped, tag = 'internal scratch']
  #allocation2 [shape = 'f32[24,128]{1,0:T(8,128)}', space=vmem, size = 0x3000, scoped, tag = 'scratch operand']
  %s0 = inlined_call_operand.vmem [shape: bf16[24,128], index: 0, kind: input, shape index: {}]
  %s1 = inlined_call_operand.vmem [shape: bf16[128,128], index: 1, kind: input, shape index: {}]
  %s2 = inlined_call_operand.vmem [shape: f32[1,128], index: 2, kind: input, shape index: {}]
  %s3 = inlined_call_operand.vmem [shape: f32[24,128], index: 3, kind: output, shape index: {}]
  %s4 = sld [smem:[#allocation0]]
  $region30: #{unet1d_flattening_forward.135} parent=0
    _
  %s6 = ssub.s32 1, %s4
  %s7 = scalar_select 0, %s6, %s4
  // Predicated region
  $region2: #{unet1d_flattening_forward.135} parent=0 // pred_check
    _
  $region3: #{unet1d_flattening_forward.135} parent=0 // pred_check_branch
    %9 = sbr.rel (0) target = $region5
  $region4: #{unet1d_flattening_forward.135} parent=0 // pred_region
    _
  $region5: #{unet1d_flattening_forward.135} parent=0 // pred_fallthru
    _
  // Predicated region
  $region6: #{unet1d_flattening_forward.135} parent=0 // pred_check
    _
  $region7: #{unet1d_flattening_forward.135} parent=0 // pred_check_branch
    %11 = sbr.rel (0) target = $region9
  $region8: #{unet1d_flattening_forward.135} parent=0 // pred_region
    _
  $region9: #{unet1d_flattening_forward.135} parent=0 // pred_fallthru
    _
  // Predicated region
  $region10: #{unet1d_flattening_forward.135} parent=0 // pred_check
    _
  $region11: #{unet1d_flattening_forward.135} parent=0 // pred_check_branch
    %13 = sbr.rel (0) target = $region13
  $region12: #{unet1d_flattening_forward.135} parent=0 // pred_region
    _
  $region13: #{unet1d_flattening_forward.135} parent=0 // pred_fallthru
    _
  %p15 = scmp.eq.s32.totalorder 0, 0
  // Predicated region
  $region14: #{unet1d_flattening_forward.135} parent=0 // pred_check
    %p16 = pneg %p15
  $region15: #{unet1d_flattening_forward.135} parent=0 // pred_check_branch
    %18 = sbr.rel (%p16) target = $region17
  $region16: #{unet1d_flattening_forward.135} parent=0 // pred_region
    %19 = vst [vmem:[#allocation2] sm:$0xff] 0.0
    %20 = vst [vmem:[#allocation2 + $0x8] sm:$0xff] 0.0
    %21 = vst [vmem:[#allocation2 + $0x10] sm:$0xff] 0.0
  $region17: #{unet1d_flattening_forward.135} parent=0 // pred_fallthru
    _
  %v22 = vld [vmem:[#allocation2] sm:$0xff]
  %v23 = vld [vmem:[#allocation2 + $0x8] sm:$0xff]
  %v24 = vld [vmem:[#allocation2 + $0x10] sm:$0xff]
  %v25 = vld [vmem:[%s0] sm:$0xf]
  %v26 = vld [vmem:[%s0 + $0x4] sm:$0xf]
  %v27 = vld [vmem:[%s0 + $0x8] sm:$0xf]
  %v28 = vld [vmem:[%s1] sm:$0xf]
  %v29 = vld [vmem:[%s1 + $0x4] sm:$0xf]
  %v30 = vld [vmem:[%s1 + $0x8] sm:$0xf]
  %v31 = vld [vmem:[%s1 + $0xc] sm:$0xf]
  %v32 = vld [vmem:[%s1 + $0x10] sm:$0xf]
  %v33 = vld [vmem:[%s1 + $0x14] sm:$0xf]
  %v34 = vld [vmem:[%s1 + $0x18] sm:$0xf]
  %v35 = vld [vmem:[%s1 + $0x1c] sm:$0xf]
  %v36 = vld [vmem:[%s1 + $0x20] sm:$0xf]
  %v37 = vld [vmem:[%s1 + $0x24] sm:$0xf]
  %v38 = vld [vmem:[%s1 + $0x28] sm:$0xf]
  %v39 = vld [vmem:[%s1 + $0x2c] sm:$0xf]
  %v40 = vld [vmem:[%s1 + $0x30] sm:$0xf]
  %v41 = vld [vmem:[%s1 + $0x34] sm:$0xf]
  %v42 = vld [vmem:[%s1 + $0x38] sm:$0xf]
  %v43 = vld [vmem:[%s1 + $0x3c] sm:$0xf]
  %v47 = vunpack.c.l.b16 %v25
  %v48 = vunpack.c.l.b16 %v26
  %v49 = vunpack.c.l.b16 %v27
  %v50 = vpack.c.b16 %v48, %v47
  %v51 = vpack.c.b16 %v49, %v49
  %v70 = vunpack.c.l.b16 %v28
  %v71 = vunpack.c.l.b16 %v29
  %v72 = vunpack.c.l.b16 %v30
  %v73 = vunpack.c.l.b16 %v31
  %v74 = vunpack.c.l.b16 %v32
  %v75 = vunpack.c.l.b16 %v33
  %v76 = vunpack.c.l.b16 %v34
  %v77 = vunpack.c.l.b16 %v35
  %v78 = vunpack.c.l.b16 %v36
  %v79 = vunpack.c.l.b16 %v37
  %v80 = vunpack.c.l.b16 %v38
  %v81 = vunpack.c.l.b16 %v39
  %v82 = vunpack.c.l.b16 %v40
  %v83 = vunpack.c.l.b16 %v41
  %v84 = vunpack.c.l.b16 %v42
  %v85 = vunpack.c.l.b16 %v43
  %v86 = vpack.c.b16 %v71, %v70
  %v87 = vpack.c.b16 %v73, %v72
  %v88 = vpack.c.b16 %v75, %v74
  %v89 = vpack.c.b16 %v77, %v76
  %v90 = vpack.c.b16 %v79, %v78
  %v91 = vpack.c.b16 %v81, %v80
  %v92 = vpack.c.b16 %v83, %v82
  %v93 = vpack.c.b16 %v85, %v84
  %102 = vmatprep.subr.bf16.mxu0 0
  %103 = vmatpush1.bf16.msra.mxu0 %v86
  %104 = vmatprep.subr.bf16.mxu0 0
  %105 = vmatpush1.bf16.msra.mxu0 %v87
  %106 = vmatprep.subr.bf16.mxu0 0
  %107 = vmatpush1.bf16.msra.mxu0 %v88
  %108 = vmatprep.subr.bf16.mxu0 0
  %109 = vmatpush1.bf16.msra.mxu0 %v89
  %110 = vmatprep.subr.bf16.mxu0 0
  %111 = vmatpush1.bf16.msra.mxu0 %v90
  %112 = vmatprep.subr.bf16.mxu0 0
  %113 = vmatpush1.bf16.msra.mxu0 %v91
  %114 = vmatprep.subr.bf16.mxu0 0
  %115 = vmatpush1.bf16.msra.mxu0 %v92
  %116 = vmatprep.subr.bf16.mxu0 0
  %117 = vmatpush1.bf16.msra.mxu0 %v93
  %118 = vmatprep.subr.bf16.mxu0 0
  %119 = vmatpush1.bf16.msra.mxu0 0
  %120 = vmatprep.subr.bf16.mxu0 0
  %121 = vmatpush1.bf16.msra.mxu0 0
  %122 = vmatprep.subr.bf16.mxu0 0
  %123 = vmatpush1.bf16.msra.mxu0 0
  %124 = vmatprep.subr.bf16.mxu0 0
  %125 = vmatpush1.bf16.msra.mxu0 0
  %126 = vmatprep.subr.bf16.mxu0 0
  %127 = vmatpush1.bf16.msra.mxu0 0
  %128 = vmatprep.subr.bf16.mxu0 0
  %129 = vmatpush1.bf16.msra.mxu0 0
  %130 = vmatprep.subr.bf16.mxu0 0
  %131 = vmatpush1.bf16.msra.mxu0 0
  %132 = vmatprep.subr.bf16.mxu0 0
  %133 = vmatpush1.bf16.msra.mxu0 0
  %134 = vmatprep.mubr.bf16.mxu0 0
  %135 = vmatmul.mubr.bf16.gmra.mrb[0].mxu0 %v50
  %v136 = vpop.f32.mrb[0].mxu0
  %v137 = vadd.f32 0.0, %v136
  %v138 = vpop.f32.mrb[0].mxu0
  %v139 = vpop.f32.mrb[0].mxu0
  %v140 = vadd.f32 0.0, %v139
  %v141 = vpop.f32.mrb[0].mxu0
  %142 = vmatprep.mubr.bf16.mxu0 0
  %143 = vmatmul.mubr.bf16.gmra.mrb[0].mxu0 %v51
  %v144 = vpop.f32.mrb[0].mxu0
  %v145 = vadd.f32 0.0, %v144
  %v146 = vpop.f32.mrb[0].mxu0
  %v147 = vpop.f32.mrb[0].mxu0
  %v148 = vpop.f32.mrb[0].mxu0
  %149 = vdwg.mxu0
  %v150 = vadd.f32 %v22, %v137
  %v151 = vadd.f32 %v23, %v140
  %v152 = vadd.f32 %v24, %v145
  %153 = vst [vmem:[#allocation2] sm:$0xff] %v150
  %154 = vst [vmem:[#allocation2 + $0x8] sm:$0xff] %v151
  %155 = vst [vmem:[#allocation2 + $0x10] sm:$0xff] %v152
  // Predicated region
  $region18: #{unet1d_flattening_forward.135} parent=0 // pred_check
    %p156 = pneg %p15
  $region19: #{unet1d_flattening_forward.135} parent=0 // pred_check_branch
    %158 = sbr.rel (%p156) target = $region21
  $region20: #{unet1d_flattening_forward.135} parent=0 // pred_region
    %v159 = vld [vmem:[#allocation2] sm:$0xff]
    %v160 = vld [vmem:[#allocation2 + $0x8] sm:$0xff]
    %v161 = vld [vmem:[#allocation2 + $0x10] sm:$0xff]
    %v162 = vld [vmem:[%s2] sm:$0x1]
    %v164 = vlaneseq
    %v165 = vshrl.u32 %v164, 7
    %v166 = vsub.s32 0, %v165
    %v167 = vrot.slane %v162, %v166
    %v169 = vadd.f32 %v159, %v167
    %v170 = vadd.f32 %v160, %v167
    %v171 = vadd.f32 %v161, %v167
    %172 = vst [vmem:[%s3] sm:$0xff] %v169
    %173 = vst [vmem:[%s3 + $0x8] sm:$0xff] %v170
    %174 = vst [vmem:[%s3 + $0x10] sm:$0xff] %v171
  $region21: #{unet1d_flattening_forward.135} parent=0 // pred_fallthru
    _
  // Predicated region
  $region22: #{unet1d_flattening_forward.135} parent=0 // pred_check
    _
  $region23: #{unet1d_flattening_forward.135} parent=0 // pred_check_branch
    %176 = sbr.rel (0) target = $region25
  $region24: #{unet1d_flattening_forward.135} parent=0 // pred_region
    _
  $region25: #{unet1d_flattening_forward.135} parent=0 // pred_fallthru
    _
  // Predicated region
  $region26: #{unet1d_flattening_forward.135} parent=0 // pred_check
    _
  $region27: #{unet1d_flattening_forward.135} parent=0 // pred_check_branch
    %178 = sbr.rel (0) target = $region29
  $region28: #{unet1d_flattening_forward.135} parent=0 // pred_region
    _
  $region29: #{unet1d_flattening_forward.135} parent=0 // pred_fallthru
    _

// kernel: unet1d_flattening_forward.145
$region0: #{unet1d_flattening_forward.145}
  #allocation0 [shape = 'u32[]', space=smem, size = 0x4, offset = 0x4, fixed_abs, tag = 'smem constant byte address 0x4 - core index']
  #allocation1 [shape = 'u32[144,128]{1,0:T(1,128)}', space=vmem, size = 0x12000, scoped, tag = 'internal scratch']
  %s0 = inlined_call_operand.vmem [shape: bf16[2,14,24], index: 0, kind: input, shape index: {}]
  %s1 = inlined_call_operand.vmem [shape: bf16[3,24,48], index: 1, kind: input, shape index: {}]
  %s2 = inlined_call_operand.vmem [shape: f32[1,48], index: 2, kind: input, shape index: {}]
  %s3 = inlined_call_operand.vmem [shape: f32[2,12,48], index: 3, kind: output, shape index: {}]
  %s4 = sld [smem:[#allocation0]]
  $region45: #{unet1d_flattening_forward.145} parent=0
    _
  %s6 = ssub.s32 1, %s4
  %s7 = scalar_select 0, %s6, %s4
  loop: start=0, step=1, limit=4
  $region2: #{unet1d_flattening_forward.145} parent=0 // loop_pre_header
    _
  $region3: #{unet1d_flattening_forward.145} parent=0 // loop_header
    %s9 = sphi 0, %s13
    %p10 = scmp.ge.s32.totalorder %s9, 4
    %s19 = sphi 0, %s21
    %s22 = sphi 0, %s19
    %s23 = sphi 0, %s22
    %s39 = sphi 0, %s23
    %s43 = sphi 0, %s43
    %s45 = sphi 0, %s43
    %s46 = sphi 0, %s45
    %s60 = sphi 0, %s46
    %s64 = sphi 0, %s64
    %s66 = sphi 0, %s64
    %s67 = sphi 0, %s66
    %s81 = sphi 0, %s67
    %s87 = sphi 0, %s89
    %s90 = sphi 0, %s87
    %s91 = sphi 0, %s90
    %s107 = sphi 0, %s91
  $region4: #{unet1d_flattening_forward.145} parent=0 // loop_header_branch
    %12 = sbr.rel (%p10) target = $region8
  $region5: #{unet1d_flattening_forward.145} parent=0 // loop_body
    %s14 = ssub.s32 %s9, 1
    %s15 = ssub.s32 %s9, 2
    %s16 = sadd.s32 %s9, 1
    %s17 = ssub.s32 %s9, %s16
    %p18 = scmp.eq.s32.totalorder %s17, 0
    %s20 = sadd.s32 %s19, 1
    %s21 = scalar_select %p18, %s19, %s20
    %p24 = pneg %p18
    %p25 = scmp.eq.s32.totalorder %s9, 1
    %p26 = por %p24, %p25
    %p27 = scmp.ne.s32.totalorder %s19, %s22
    %p28 = scmp.eq.s32.totalorder %s9, 0
    %p29 = por %p27, %p28
    %p30 = scmp.ne.s32.totalorder %s19, %s22
    %p31 = scmp.eq.s32.totalorder %s14, 1
    %p32 = por %p30, %p31
    %p33 = scmp.ne.s32.totalorder %s22, %s23
    %p34 = scmp.eq.s32.totalorder %s14, 0
    %p35 = por %p33, %p34
    %p36 = scmp.ne.s32.totalorder %s22, %s23
    %p37 = scmp.eq.s32.totalorder %s15, 1
    %p38 = por %p36, %p37
    %p40 = scmp.ne.s32.totalorder %s23, %s39
    %p41 = scmp.eq.s32.totalorder %s15, 0
    %p42 = por %p40, %p41
    %s44 = sadd.s32 %s43, 1
    %p47 = scmp.eq.s32.totalorder %s9, 1
    %p48 = scmp.ne.s32.totalorder %s43, %s45
    %p49 = scmp.eq.s32.totalorder %s9, 0
    %p50 = por %p48, %p49
    %p51 = scmp.ne.s32.totalorder %s43, %s45
    %p52 = scmp.eq.s32.totalorder %s14, 1
    %p53 = por %p51, %p52
    %p54 = scmp.ne.s32.totalorder %s45, %s46
    %p55 = scmp.eq.s32.totalorder %s14, 0
    %p56 = por %p54, %p55
    %p57 = scmp.ne.s32.totalorder %s45, %s46
    %p58 = scmp.eq.s32.totalorder %s15, 1
    %p59 = por %p57, %p58
    %p61 = scmp.ne.s32.totalorder %s46, %s60
    %p62 = scmp.eq.s32.totalorder %s15, 0
    %p63 = por %p61, %p62
    %s65 = sadd.s32 %s64, 1
    %p68 = scmp.eq.s32.totalorder %s9, 1
    %p69 = scmp.ne.s32.totalorder %s64, %s66
    %p70 = scmp.eq.s32.totalorder %s9, 0
    %p71 = por %p69, %p70
    %p72 = scmp.ne.s32.totalorder %s64, %s66
    %p73 = scmp.eq.s32.totalorder %s14, 1
    %p74 = por %p72, %p73
    %p75 = scmp.ne.s32.totalorder %s66, %s67
    %p76 = scmp.eq.s32.totalorder %s14, 0
    %p77 = por %p75, %p76
    %p78 = scmp.ne.s32.totalorder %s66, %s67
    %p79 = scmp.eq.s32.totalorder %s15, 1
    %p80 = por %p78, %p79
    %p82 = scmp.ne.s32.totalorder %s67, %s81
    %p83 = scmp.eq.s32.totalorder %s15, 0
    %p84 = por %p82, %p83
    %s85 = ssub.s32 %s9, %s16
    %p86 = scmp.eq.s32.totalorder %s85, 0
    %s88 = sadd.s32 %s87, 1
    %s89 = scalar_select %p86, %s87, %s88
    %p92 = pneg %p86
    %p93 = scmp.eq.s32.totalorder %s9, 1
    %p94 = por %p92, %p93
    %p95 = scmp.ne.s32.totalorder %s87, %s90
    %p96 = scmp.eq.s32.totalorder %s9, 0
    %p97 = por %p95, %p96
    %p98 = scmp.ne.s32.totalorder %s87, %s90
    %p99 = scmp.eq.s32.totalorder %s14, 1
    %p100 = por %p98, %p99
    %p101 = scmp.ne.s32.totalorder %s90, %s91
    %p102 = scmp.eq.s32.totalorder %s14, 0
    %p103 = por %p101, %p102
    %p104 = scmp.ne.s32.totalorder %s90, %s91
    %p105 = scmp.eq.s32.totalorder %s15, 1
    %p106 = por %p104, %p105
    %p108 = scmp.ne.s32.totalorder %s91, %s107
    %p109 = scmp.eq.s32.totalorder %s15, 0
    %p110 = por %p108, %p109
    %p111 = scmp.le.s32.totalorder 1, %s9
    %p112 = scmp.lt.s32.totalorder %s9, 3
    %p113 = pnand %p111, %p112
    %p114 = pneg %p113
    // Predicated region
    $region9: #{unet1d_flattening_forward.145} parent=5 // pred_check
      _
    $region10: #{unet1d_flattening_forward.145} parent=5 // pred_check_branch
      %116 = sbr.rel (%p113) target = $region12
    $region11: #{unet1d_flattening_forward.145} parent=5 // pred_region
      %s117 = ssub.s32 %s9, 1
      // Predicated region
      $region13: #{unet1d_flattening_forward.145} parent=11 // pred_check
        %p118 = pneg %p56
      $region14: #{unet1d_flattening_forward.145} parent=11 // pred_check_branch
        %120 = sbr.rel (%p118) target = $region16
      $region15: #{unet1d_flattening_forward.145} parent=11 // pred_region
        _
      $region16: #{unet1d_flattening_forward.145} parent=11 // pred_fallthru
        _
      // Predicated region
      $region17: #{unet1d_flattening_forward.145} parent=11 // pred_check
        %p121 = pneg %p77
      $region18: #{unet1d_flattening_forward.145} parent=11 // pred_check_branch
        %123 = sbr.rel (%p121) target = $region20
      $region19: #{unet1d_flattening_forward.145} parent=11 // pred_region
        _
      $region20: #{unet1d_flattening_forward.145} parent=11 // pred_fallthru
        _
    $region12: #{unet1d_flattening_forward.145} parent=5 // pred_fallthru
      _
    %p124 = scmp.lt.s32.totalorder %s9, 2
    // Predicated region
    $region21: #{unet1d_flattening_forward.145} parent=5 // pred_check
      %p125 = pneg %p124
    $region22: #{unet1d_flattening_forward.145} parent=5 // pred_check_branch
      %127 = sbr.rel (%p125) target = $region24
    $region23: #{unet1d_flattening_forward.145} parent=5 // pred_region
      // Predicated region
      $region25: #{unet1d_flattening_forward.145} parent=23 // pred_check
        %p128 = pneg %p29
      $region26: #{unet1d_flattening_forward.145} parent=23 // pred_check_branch
        %130 = sbr.rel (%p128) target = $region28
      $region27: #{unet1d_flattening_forward.145} parent=23 // pred_region
        %p131 = scmp.lt.s32.totalorder %s9, 1
        %s132 = scalar_select %p131, %s9, 1
        %s133 = smul.addr %s132, 2
        %s134 = smul.addr %s133, 4
        %s135 = scalar_lea.vmem %s0, %s134
      $region28: #{unet1d_flattening_forward.145} parent=23 // pred_fallthru
        _
    $region24: #{unet1d_flattening_forward.145} parent=5 // pred_fallthru
      _
    %p136 = scmp.le.s32.totalorder 1, %s9
    %p137 = scmp.lt.s32.totalorder %s9, 3
    %p138 = pnand %p136, %p137
    %p139 = pneg %p138
    // Predicated region
    $region29: #{unet1d_flattening_forward.145} parent=5 // pred_check
      _
    $region30: #{unet1d_flattening_forward.145} parent=5 // pred_check_branch
      %141 = sbr.rel (%p138) target = $region32
    $region31: #{unet1d_flattening_forward.145} parent=5 // pred_region
      %s142 = ssub.s32 %s9, 1
      %p143 = scmp.lt.s32.totalorder %s14, 1
      %s144 = scalar_select %p143, %s14, 1
      %s145 = smul.addr %s144, 2
      %s146 = smul.addr %s145, 4
      %s147 = scalar_lea.vmem %s0, %s146
      %p148 = pneg %p35
      %p149 = pneg %p32
      %p150 = pneg %p56
      %p151 = pneg %p53
      %p152 = pneg %p77
      %p153 = pneg %p74
      %p154 = pneg %p103
      %p155 = pneg %p100
      %p156 = scmp.lt.s32.totalorder %s14, 1
      %s157 = scalar_select %p156, %s14, 1
      %s158 = smul.addr %s157, 2
      %s159 = smul.addr %s158, 8
      %s160 = scalar_lea.vmem %s3, %s159
      %p161 = scmp.lt.s32.totalorder %s14, 1
      %s162 = scalar_select %p161, %s14, 1
      %s163 = smul.addr %s162, 2
      %s164 = smul.addr %s163, 4
      %s165 = scalar_lea.vmem %s0, %s164
      %p166 = scmp.lt.s32.totalorder %s14, 1
      %s167 = scalar_select %p166, %s14, 1
      %s168 = smul.addr %s167, 2
      %s169 = smul.addr %s168, 8
      %s170 = scalar_lea.vmem %s3, %s169
      %v172 = vld [vmem:[%s165] sm:$0xf]
      %v173 = vld [vmem:[%s165 + $0x4] sm:$0x3]
      %v174 = vld [vmem:[%s1] sm:$0xf]
      %v175 = vld [vmem:[%s1 + $0x4] sm:$0xf]
      %v176 = vld [vmem:[%s1 + $0x8] sm:$0xf]
      %v177 = vld [vmem:[%s165 + $0x4] sm:$0x7]
      %s178 = scalar_lea.vmem %s1, 12
      %v179 = vld [vmem:[%s178] sm:$0xf]
      %v180 = vld [vmem:[%s178 + $0x4] sm:$0xf]
      %v181 = vld [vmem:[%s178 + $0x8] sm:$0xf]
      %v184 = vunpack.c.l.b16 %v172
      %v185 = vunpack.c.l.b16 %v177
      %v186 = vpack.c.b16 %v185, %v184
      %v188 = vshrl.u32 %v186, 16
      %v190 = vshll.u32 %v186, 16
      %v192 = vrot.slane %v190, 1
      %v193 = vor.u32 %v188, %v192
      %v197 = vunpack.c.l.b16 %v179
      %v198 = vunpack.c.l.b16 %v180
      %v199 = vunpack.c.l.b16 %v181
      %v200 = vpack.c.b16 %v198, %v197
      %v201 = vpack.c.b16 %v199, %v199
      %vm203 = vcmask 195584
      %v205 = vsel %vm203, %v193, 0
      %vm207 = vcmask 1043456
      %v209 = vsel %vm207, %v201, 0
      %211 = vmatprep.subr.bf16.mxu0 0
      %212 = vmatpush1.bf16.msra.mxu0 %v200
      %213 = vmatprep.subr.bf16.mxu0 0
      %214 = vmatpush1.bf16.msra.mxu0 %v209
      %215 = vmatprep.subr.bf16.mxu0 0
      %216 = vmatpush1.bf16.msra.mxu0 0
      %217 = vmatprep.subr.bf16.mxu0 0
      %218 = vmatpush1.bf16.msra.mxu0 0
      %219 = vmatprep.subr.bf16.mxu0 0
      %220 = vmatpush1.bf16.msra.mxu0 0
      %221 = vmatprep.subr.bf16.mxu0 0
      %222 = vmatpush1.bf16.msra.mxu0 0
      %223 = vmatprep.subr.bf16.mxu0 0
      %224 = vmatpush1.bf16.msra.mxu0 0
      %225 = vmatprep.subr.bf16.mxu0 0
      %226 = vmatpush1.bf16.msra.mxu0 0
      %227 = vmatprep.subr.bf16.mxu0 0
      %228 = vmatpush1.bf16.msra.mxu0 0
      %229 = vmatprep.subr.bf16.mxu0 0
      %230 = vmatpush1.bf16.msra.mxu0 0
      %231 = vmatprep.subr.bf16.mxu0 0
      %232 = vmatpush1.bf16.msra.mxu0 0
      %233 = vmatprep.subr.bf16.mxu0 0
      %234 = vmatpush1.bf16.msra.mxu0 0
      %235 = vmatprep.subr.bf16.mxu0 0
      %236 = vmatpush1.bf16.msra.mxu0 0
      %237 = vmatprep.subr.bf16.mxu0 0
      %238 = vmatpush1.bf16.msra.mxu0 0
      %239 = vmatprep.subr.bf16.mxu0 0
      %240 = vmatpush1.bf16.msra.mxu0 0
      %241 = vmatprep.subr.bf16.mxu0 0
      %242 = vmatpush1.bf16.msra.mxu0 0
      %243 = vmatprep.mubr.bf16.mxu0 0
      %244 = vmatmul.mubr.bf16.gmra.mrb[0].mxu0 %v205
      %v245 = vpop.f32.mrb[0].mxu0
      %v246 = vadd.f32 0.0, %v245
      %v247 = vpop.f32.mrb[0].mxu0
      %v248 = vpop.f32.mrb[0].mxu0
      %v249 = vadd.f32 0.0, %v248
      %v250 = vpop.f32.mrb[0].mxu0
      %251 = vdwg.mxu0
      %v253 = vunpack.c.l.b16 %v173
      %v254 = vpack.c.b16 %v253, %v184
      %v258 = vunpack.c.l.b16 %v174
      %v259 = vunpack.c.l.b16 %v175
      %v260 = vunpack.c.l.b16 %v176
      %v261 = vpack.c.b16 %v259, %v258
      %v262 = vpack.c.b16 %v260, %v260
      %v265 = vsel %vm203, %v254, 0
      %v268 = vsel %vm207, %v262, 0
      %270 = vmatprep.subr.bf16.mxu0 0
      %271 = vmatpush1.bf16.msra.mxu0 %v261
      %272 = vmatprep.subr.bf16.mxu0 0
      %273 = vmatpush1.bf16.msra.mxu0 %v268
      %274 = vmatprep.subr.bf16.mxu0 0
      %275 = vmatpush1.bf16.msra.mxu0 0
      %276 = vmatprep.subr.bf16.mxu0 0
      %277 = vmatpush1.bf16.msra.mxu0 0
      %278 = vmatprep.subr.bf16.mxu0 0
      %279 = vmatpush1.bf16.msra.mxu0 0
      %280 = vmatprep.subr.bf16.mxu0 0
      %281 = vmatpush1.bf16.msra.mxu0 0
      %282 = vmatprep.subr.bf16.mxu0 0
      %283 = vmatpush1.bf16.msra.mxu0 0
      %284 = vmatprep.subr.bf16.mxu0 0
      %285 = vmatpush1.bf16.msra.mxu0 0
      %286 = vmatprep.subr.bf16.mxu0 0
      %287 = vmatpush1.bf16.msra.mxu0 0
      %288 = vmatprep.subr.bf16.mxu0 0
      %289 = vmatpush1.bf16.msra.mxu0 0
      %290 = vmatprep.subr.bf16.mxu0 0
      %291 = vmatpush1.bf16.msra.mxu0 0
      %292 = vmatprep.subr.bf16.mxu0 0
      %293 = vmatpush1.bf16.msra.mxu0 0
      %294 = vmatprep.subr.bf16.mxu0 0
      %295 = vmatpush1.bf16.msra.mxu0 0
      %296 = vmatprep.subr.bf16.mxu0 0
      %297 = vmatpush1.bf16.msra.mxu0 0
      %298 = vmatprep.subr.bf16.mxu0 0
      %299 = vmatpush1.bf16.msra.mxu0 0
      %300 = vmatprep.subr.bf16.mxu0 0
      %301 = vmatpush1.bf16.msra.mxu0 0
      %302 = vmatprep.mubr.bf16.mxu0 0
      %303 = vmatmul.mubr.bf16.gmra.mrb[0].mxu0 %v265
      %v304 = vpop.f32.mrb[0].mxu0
      %v305 = vadd.f32 %v246, %v304
      %v306 = vpop.f32.mrb[0].mxu0
      %v307 = vpop.f32.mrb[0].mxu0
      %v308 = vadd.f32 %v249, %v307
      %v309 = vpop.f32.mrb[0].mxu0
      %310 = vdwg.mxu0
      %v311 = vld [vmem:[%s165] sm:$0xe]
      %s312 = scalar_lea.vmem %s1, 24
      %v313 = vld [vmem:[%s312] sm:$0xf]
      %v314 = vld [vmem:[%s312 + $0x4] sm:$0xf]
      %v315 = vld [vmem:[%s312 + $0x8] sm:$0xf]
      %v317 = vunpack.c.l.b16 %v311
      %v318 = vpack.c.b16 %v185, %v317
      %v319 = vrot.slane %v318, 1
      %v323 = vunpack.c.l.b16 %v313
      %v324 = vunpack.c.l.b16 %v314
      %v325 = vunpack.c.l.b16 %v315
      %v326 = vpack.c.b16 %v324, %v323
      %v327 = vpack.c.b16 %v325, %v325
      %v330 = vsel %vm203, %v319, 0
      %v333 = vsel %vm207, %v327, 0
      %335 = vmatprep.subr.bf16.mxu0 0
      %336 = vmatpush1.bf16.msra.mxu0 %v326
      %337 = vmatprep.subr.bf16.mxu0 0
      %338 = vmatpush1.bf16.msra.mxu0 %v333
      %339 = vmatprep.subr.bf16.mxu0 0
      %340 = vmatpush1.bf16.msra.mxu0 0
      %341 = vmatprep.subr.bf16.mxu0 0
      %342 = vmatpush1.bf16.msra.mxu0 0
      %343 = vmatprep.subr.bf16.mxu0 0
      %344 = vmatpush1.bf16.msra.mxu0 0
      %345 = vmatprep.subr.bf16.mxu0 0
      %346 = vmatpush1.bf16.msra.mxu0 0
      %347 = vmatprep.subr.bf16.mxu0 0
      %348 = vmatpush1.bf16.msra.mxu0 0
      %349 = vmatprep.subr.bf16.mxu0 0
      %350 = vmatpush1.bf16.msra.mxu0 0
      %351 = vmatprep.subr.bf16.mxu0 0
      %352 = vmatpush1.bf16.msra.mxu0 0
      %353 = vmatprep.subr.bf16.mxu0 0
      %354 = vmatpush1.bf16.msra.mxu0 0
      %355 = vmatprep.subr.bf16.mxu0 0
      %356 = vmatpush1.bf16.msra.mxu0 0
      %357 = vmatprep.subr.bf16.mxu0 0
      %358 = vmatpush1.bf16.msra.mxu0 0
      %359 = vmatprep.subr.bf16.mxu0 0
      %360 = vmatpush1.bf16.msra.mxu0 0
      %361 = vmatprep.subr.bf16.mxu0 0
      %362 = vmatpush1.bf16.msra.mxu0 0
      %363 = vmatprep.subr.bf16.mxu0 0
      %364 = vmatpush1.bf16.msra.mxu0 0
      %365 = vmatprep.subr.bf16.mxu0 0
      %366 = vmatpush1.bf16.msra.mxu0 0
      %367 = vmatprep.mubr.bf16.mxu0 0
      %368 = vmatmul.mubr.bf16.gmra.mrb[0].mxu0 %v330
      %v369 = vpop.f32.mrb[0].mxu0
      %v370 = vadd.f32 0.0, %v369
      %v371 = vpop.f32.mrb[0].mxu0
      %v372 = vpop.f32.mrb[0].mxu0
      %v373 = vadd.f32 0.0, %v372
      %v374 = vpop.f32.mrb[0].mxu0
      %375 = vdwg.mxu0
      %v376 = vadd.f32 %v305, %v370
      %v377 = vadd.f32 %v308, %v373
      %v378 = vld [vmem:[%s2] sm:$0x1]
      %v380 = vlaneseq
      %v381 = vshrl.u32 %v380, 7
      %v382 = vsub.s32 0, %v381
      %v383 = vrot.slane %v378, %v382
      %v385 = vadd.f32 %v376, %v383
      %v386 = vadd.f32 %v377, %v383
      %vm387 = vcmask 392192
      %388 = vst.msk [vmem:[%s170] sm:$0xff] %vm387, %v385
      %vm389 = vcmask 388096
      %390 = vst.msk [vmem:[%s170 + $0x8] sm:$0xf] %vm389, %v386
      %p391 = scmp.lt.s32.totalorder %s14, 1
      %s392 = scalar_select %p391, %s14, 1
      %s393 = smul.addr %s392, 2
      %s394 = smul.addr %s393, 8
      %s395 = scalar_lea.vmem %s3, %s394
      // Predicated region
      $region33: #{unet1d_flattening_forward.145} parent=31 // pred_check
        %p396 = pneg %p100
      $region34: #{unet1d_flattening_forward.145} parent=31 // pred_check_branch
        %398 = sbr.rel (%p396) target = $region36
      $region35: #{unet1d_flattening_forward.145} parent=31 // pred_region
        _
      $region36: #{unet1d_flattening_forward.145} parent=31 // pred_fallthru
        _
    $region32: #{unet1d_flattening_forward.145} parent=5 // pred_fallthru
      _
    %p399 = scmp.le.s32.totalorder 2, %s9
    // Predicated region
    $region37: #{unet1d_flattening_forward.145} parent=5 // pred_check
      %p400 = pneg %p399
    $region38: #{unet1d_flattening_forward.145} parent=5 // pred_check_branch
      %402 = sbr.rel (%p400) target = $region40
    $region39: #{unet1d_flattening_forward.145} parent=5 // pred_region
      %s403 = ssub.s32 %s9, 2
      // Predicated region
      $region41: #{unet1d_flattening_forward.145} parent=39 // pred_check
        %p404 = pneg %p106
      $region42: #{unet1d_flattening_forward.145} parent=39 // pred_check_branch
        %406 = sbr.rel (%p404) target = $region44
      $region43: #{unet1d_flattening_forward.145} parent=39 // pred_region
        %p407 = scmp.lt.s32.totalorder %s15, 1
        %s408 = scalar_select %p407, %s15, 1
        %s409 = smul.addr %s408, 2
        %s410 = smul.addr %s409, 8
        %s411 = scalar_lea.vmem %s3, %s410
      $region44: #{unet1d_flattening_forward.145} parent=39 // pred_fallthru
        _
    $region40: #{unet1d_flattening_forward.145} parent=5 // pred_fallthru
      _
  $region6: #{unet1d_flattening_forward.145} parent=0 // loop_footer
    %s13 = sadd.s32 1, %s9
  $region7: #{unet1d_flattening_forward.145} parent=0 // loop_footer_branch
    %8 = sbr.rel target = $region3
  $region8: #{unet1d_flattening_forward.145} parent=0 // loop_exit
    _

// kernel: unet1d_flattening_forward.147
$region0: #{unet1d_flattening_forward.147}
  #allocation0 [shape = 'u32[]', space=smem, size = 0x4, offset = 0x4, fixed_abs, tag = 'smem constant byte address 0x4 - core index']
  #allocation1 [shape = 'u32[144,128]{1,0:T(1,128)}', space=vmem, size = 0x12000, scoped, tag = 'internal scratch']
  %s0 = inlined_call_operand.vmem [shape: bf16[2,14,48], index: 0, kind: input, shape index: {}]
  %s1 = inlined_call_operand.vmem [shape: bf16[3,48,48], index: 1, kind: input, shape index: {}]
  %s2 = inlined_call_operand.vmem [shape: f32[1,48], index: 2, kind: input, shape index: {}]
  %s3 = inlined_call_operand.vmem [shape: f32[2,12,48], index: 3, kind: output, shape index: {}]
  %s4 = sld [smem:[#allocation0]]
  $region45: #{unet1d_flattening_forward.147} parent=0
    _
  %s6 = ssub.s32 1, %s4
  %s7 = scalar_select 0, %s6, %s4
  loop: start=0, step=1, limit=4
  $region2: #{unet1d_flattening_forward.147} parent=0 // loop_pre_header
    _
  $region3: #{unet1d_flattening_forward.147} parent=0 // loop_header
    %s9 = sphi 0, %s13
    %p10 = scmp.ge.s32.totalorder %s9, 4
    %s19 = sphi 0, %s21
    %s22 = sphi 0, %s19
    %s23 = sphi 0, %s22
    %s39 = sphi 0, %s23
    %s43 = sphi 0, %s43
    %s45 = sphi 0, %s43
    %s46 = sphi 0, %s45
    %s60 = sphi 0, %s46
    %s64 = sphi 0, %s64
    %s66 = sphi 0, %s64
    %s67 = sphi 0, %s66
    %s81 = sphi 0, %s67
    %s87 = sphi 0, %s89
    %s90 = sphi 0, %s87
    %s91 = sphi 0, %s90
    %s107 = sphi 0, %s91
  $region4: #{unet1d_flattening_forward.147} parent=0 // loop_header_branch
    %12 = sbr.rel (%p10) target = $region8
  $region5: #{unet1d_flattening_forward.147} parent=0 // loop_body
    %s14 = ssub.s32 %s9, 1
    %s15 = ssub.s32 %s9, 2
    %s16 = sadd.s32 %s9, 1
    %s17 = ssub.s32 %s9, %s16
    %p18 = scmp.eq.s32.totalorder %s17, 0
    %s20 = sadd.s32 %s19, 1
    %s21 = scalar_select %p18, %s19, %s20
    %p24 = pneg %p18
    %p25 = scmp.eq.s32.totalorder %s9, 1
    %p26 = por %p24, %p25
    %p27 = scmp.ne.s32.totalorder %s19, %s22
    %p28 = scmp.eq.s32.totalorder %s9, 0
    %p29 = por %p27, %p28
    %p30 = scmp.ne.s32.totalorder %s19, %s22
    %p31 = scmp.eq.s32.totalorder %s14, 1
    %p32 = por %p30, %p31
    %p33 = scmp.ne.s32.totalorder %s22, %s23
    %p34 = scmp.eq.s32.totalorder %s14, 0
    %p35 = por %p33, %p34
    %p36 = scmp.ne.s32.totalorder %s22, %s23
    %p37 = scmp.eq.s32.totalorder %s15, 1
    %p38 = por %p36, %p37
    %p40 = scmp.ne.s32.totalorder %s23, %s39
    %p41 = scmp.eq.s32.totalorder %s15, 0
    %p42 = por %p40, %p41
    %s44 = sadd.s32 %s43, 1
    %p47 = scmp.eq.s32.totalorder %s9, 1
    %p48 = scmp.ne.s32.totalorder %s43, %s45
    %p49 = scmp.eq.s32.totalorder %s9, 0
    %p50 = por %p48, %p49
    %p51 = scmp.ne.s32.totalorder %s43, %s45
    %p52 = scmp.eq.s32.totalorder %s14, 1
    %p53 = por %p51, %p52
    %p54 = scmp.ne.s32.totalorder %s45, %s46
    %p55 = scmp.eq.s32.totalorder %s14, 0
    %p56 = por %p54, %p55
    %p57 = scmp.ne.s32.totalorder %s45, %s46
    %p58 = scmp.eq.s32.totalorder %s15, 1
    %p59 = por %p57, %p58
    %p61 = scmp.ne.s32.totalorder %s46, %s60
    %p62 = scmp.eq.s32.totalorder %s15, 0
    %p63 = por %p61, %p62
    %s65 = sadd.s32 %s64, 1
    %p68 = scmp.eq.s32.totalorder %s9, 1
    %p69 = scmp.ne.s32.totalorder %s64, %s66
    %p70 = scmp.eq.s32.totalorder %s9, 0
    %p71 = por %p69, %p70
    %p72 = scmp.ne.s32.totalorder %s64, %s66
    %p73 = scmp.eq.s32.totalorder %s14, 1
    %p74 = por %p72, %p73
    %p75 = scmp.ne.s32.totalorder %s66, %s67
    %p76 = scmp.eq.s32.totalorder %s14, 0
    %p77 = por %p75, %p76
    %p78 = scmp.ne.s32.totalorder %s66, %s67
    %p79 = scmp.eq.s32.totalorder %s15, 1
    %p80 = por %p78, %p79
    %p82 = scmp.ne.s32.totalorder %s67, %s81
    %p83 = scmp.eq.s32.totalorder %s15, 0
    %p84 = por %p82, %p83
    %s85 = ssub.s32 %s9, %s16
    %p86 = scmp.eq.s32.totalorder %s85, 0
    %s88 = sadd.s32 %s87, 1
    %s89 = scalar_select %p86, %s87, %s88
    %p92 = pneg %p86
    %p93 = scmp.eq.s32.totalorder %s9, 1
    %p94 = por %p92, %p93
    %p95 = scmp.ne.s32.totalorder %s87, %s90
    %p96 = scmp.eq.s32.totalorder %s9, 0
    %p97 = por %p95, %p96
    %p98 = scmp.ne.s32.totalorder %s87, %s90
    %p99 = scmp.eq.s32.totalorder %s14, 1
    %p100 = por %p98, %p99
    %p101 = scmp.ne.s32.totalorder %s90, %s91
    %p102 = scmp.eq.s32.totalorder %s14, 0
    %p103 = por %p101, %p102
    %p104 = scmp.ne.s32.totalorder %s90, %s91
    %p105 = scmp.eq.s32.totalorder %s15, 1
    %p106 = por %p104, %p105
    %p108 = scmp.ne.s32.totalorder %s91, %s107
    %p109 = scmp.eq.s32.totalorder %s15, 0
    %p110 = por %p108, %p109
    %p111 = scmp.le.s32.totalorder 1, %s9
    %p112 = scmp.lt.s32.totalorder %s9, 3
    %p113 = pnand %p111, %p112
    %p114 = pneg %p113
    // Predicated region
    $region9: #{unet1d_flattening_forward.147} parent=5 // pred_check
      _
    $region10: #{unet1d_flattening_forward.147} parent=5 // pred_check_branch
      %116 = sbr.rel (%p113) target = $region12
    $region11: #{unet1d_flattening_forward.147} parent=5 // pred_region
      %s117 = ssub.s32 %s9, 1
      // Predicated region
      $region13: #{unet1d_flattening_forward.147} parent=11 // pred_check
        %p118 = pneg %p56
      $region14: #{unet1d_flattening_forward.147} parent=11 // pred_check_branch
        %120 = sbr.rel (%p118) target = $region16
      $region15: #{unet1d_flattening_forward.147} parent=11 // pred_region
        _
      $region16: #{unet1d_flattening_forward.147} parent=11 // pred_fallthru
        _
      // Predicated region
      $region17: #{unet1d_flattening_forward.147} parent=11 // pred_check
        %p121 = pneg %p77
      $region18: #{unet1d_flattening_forward.147} parent=11 // pred_check_branch
        %123 = sbr.rel (%p121) target = $region20
      $region19: #{unet1d_flattening_forward.147} parent=11 // pred_region
        _
      $region20: #{unet1d_flattening_forward.147} parent=11 // pred_fallthru
        _
    $region12: #{unet1d_flattening_forward.147} parent=5 // pred_fallthru
      _
    %p124 = scmp.lt.s32.totalorder %s9, 2
    // Predicated region
    $region21: #{unet1d_flattening_forward.147} parent=5 // pred_check
      %p125 = pneg %p124
    $region22: #{unet1d_flattening_forward.147} parent=5 // pred_check_branch
      %127 = sbr.rel (%p125) target = $region24
    $region23: #{unet1d_flattening_forward.147} parent=5 // pred_region
      // Predicated region
      $region25: #{unet1d_flattening_forward.147} parent=23 // pred_check
        %p128 = pneg %p29
      $region26: #{unet1d_flattening_forward.147} parent=23 // pred_check_branch
        %130 = sbr.rel (%p128) target = $region28
      $region27: #{unet1d_flattening_forward.147} parent=23 // pred_region
        %p131 = scmp.lt.s32.totalorder %s9, 1
        %s132 = scalar_select %p131, %s9, 1
        %s133 = smul.addr %s132, 2
        %s134 = smul.addr %s133, 4
        %s135 = scalar_lea.vmem %s0, %s134
      $region28: #{unet1d_flattening_forward.147} parent=23 // pred_fallthru
        _
    $region24: #{unet1d_flattening_forward.147} parent=5 // pred_fallthru
      _
    %p136 = scmp.le.s32.totalorder 1, %s9
    %p137 = scmp.lt.s32.totalorder %s9, 3
    %p138 = pnand %p136, %p137
    %p139 = pneg %p138
    // Predicated region
    $region29: #{unet1d_flattening_forward.147} parent=5 // pred_check
      _
    $region30: #{unet1d_flattening_forward.147} parent=5 // pred_check_branch
      %141 = sbr.rel (%p138) target = $region32
    $region31: #{unet1d_flattening_forward.147} parent=5 // pred_region
      %s142 = ssub.s32 %s9, 1
      %p143 = scmp.lt.s32.totalorder %s14, 1
      %s144 = scalar_select %p143, %s14, 1
      %s145 = smul.addr %s144, 2
      %s146 = smul.addr %s145, 4
      %s147 = scalar_lea.vmem %s0, %s146
      %p148 = pneg %p35
      %p149 = pneg %p32
      %p150 = pneg %p56
      %p151 = pneg %p53
      %p152 = pneg %p77
      %p153 = pneg %p74
      %p154 = pneg %p103
      %p155 = pneg %p100
      %p156 = scmp.lt.s32.totalorder %s14, 1
      %s157 = scalar_select %p156, %s14, 1
      %s158 = smul.addr %s157, 2
      %s159 = smul.addr %s158, 8
      %s160 = scalar_lea.vmem %s3, %s159
      %p161 = scmp.lt.s32.totalorder %s14, 1
      %s162 = scalar_select %p161, %s14, 1
      %s163 = smul.addr %s162, 2
      %s164 = smul.addr %s163, 4
      %s165 = scalar_lea.vmem %s0, %s164
      %p166 = scmp.lt.s32.totalorder %s14, 1
      %s167 = scalar_select %p166, %s14, 1
      %s168 = smul.addr %s167, 2
      %s169 = smul.addr %s168, 8
      %s170 = scalar_lea.vmem %s3, %s169
      %v172 = vld [vmem:[%s165] sm:$0xf]
      %v173 = vld [vmem:[%s165 + $0x4] sm:$0x3]
      %v174 = vld [vmem:[%s1] sm:$0xf]
      %v175 = vld [vmem:[%s1 + $0x4] sm:$0xf]
      %v176 = vld [vmem:[%s1 + $0x8] sm:$0xf]
      %v177 = vld [vmem:[%s1 + $0xc] sm:$0xf]
      %v178 = vld [vmem:[%s1 + $0x10] sm:$0xf]
      %v179 = vld [vmem:[%s1 + $0x14] sm:$0xf]
      %v180 = vld [vmem:[%s165 + $0x4] sm:$0x7]
      %s181 = scalar_lea.vmem %s1, 24
      %v182 = vld [vmem:[%s181] sm:$0xf]
      %v183 = vld [vmem:[%s181 + $0x4] sm:$0xf]
      %v184 = vld [vmem:[%s181 + $0x8] sm:$0xf]
      %v185 = vld [vmem:[%s181 + $0xc] sm:$0xf]
      %v186 = vld [vmem:[%s181 + $0x10] sm:$0xf]
      %v187 = vld [vmem:[%s181 + $0x14] sm:$0xf]
      %v190 = vunpack.c.l.b16 %v172
      %v191 = vunpack.c.l.b16 %v180
      %v192 = vpack.c.b16 %v191, %v190
      %v194 = vshrl.u32 %v192, 16
      %v196 = vshll.u32 %v192, 16
      %v198 = vrot.slane %v196, 1
      %v199 = vor.u32 %v194, %v198
      %v206 = vunpack.c.l.b16 %v182
      %v207 = vunpack.c.l.b16 %v183
      %v208 = vunpack.c.l.b16 %v184
      %v209 = vunpack.c.l.b16 %v185
      %v210 = vunpack.c.l.b16 %v186
      %v211 = vunpack.c.l.b16 %v187
      %v212 = vpack.c.b16 %v207, %v206
      %v213 = vpack.c.b16 %v209, %v208
      %v214 = vpack.c.b16 %v211, %v210
      %vm218 = vcmask 392192
      %v220 = vsel %vm218, %v199, 0
      %222 = vmatprep.subr.bf16.mxu0 0
      %223 = vmatpush1.bf16.msra.mxu0 %v212
      %224 = vmatprep.subr.bf16.mxu0 0
      %225 = vmatpush1.bf16.msra.mxu0 %v213
      %226 = vmatprep.subr.bf16.mxu0 0
      %227 = vmatpush1.bf16.msra.mxu0 %v214
      %228 = vmatprep.subr.bf16.mxu0 0
      %229 = vmatpush1.bf16.msra.mxu0 0
      %230 = vmatprep.subr.bf16.mxu0 0
      %231 = vmatpush1.bf16.msra.mxu0 0
      %232 = vmatprep.subr.bf16.mxu0 0
      %233 = vmatpush1.bf16.msra.mxu0 0
      %234 = vmatprep.subr.bf16.mxu0 0
      %235 = vmatpush1.bf16.msra.mxu0 0
      %236 = vmatprep.subr.bf16.mxu0 0
      %237 = vmatpush1.bf16.msra.mxu0 0
      %238 = vmatprep.subr.bf16.mxu0 0
      %239 = vmatpush1.bf16.msra.mxu0 0
      %240 = vmatprep.subr.bf16.mxu0 0
      %241 = vmatpush1.bf16.msra.mxu0 0
      %242 = vmatprep.subr.bf16.mxu0 0
      %243 = vmatpush1.bf16.msra.mxu0 0
      %244 = vmatprep.subr.bf16.mxu0 0
      %245 = vmatpush1.bf16.msra.mxu0 0
      %246 = vmatprep.subr.bf16.mxu0 0
      %247 = vmatpush1.bf16.msra.mxu0 0
      %248 = vmatprep.subr.bf16.mxu0 0
      %249 = vmatpush1.bf16.msra.mxu0 0
      %250 = vmatprep.subr.bf16.mxu0 0
      %251 = vmatpush1.bf16.msra.mxu0 0
      %252 = vmatprep.subr.bf16.mxu0 0
      %253 = vmatpush1.bf16.msra.mxu0 0
      %254 = vmatprep.mubr.bf16.mxu0 0
      %255 = vmatmul.mubr.bf16.gmra.mrb[0].mxu0 %v220
      %v256 = vpop.f32.mrb[0].mxu0
      %v257 = vadd.f32 0.0, %v256
      %v258 = vpop.f32.mrb[0].mxu0
      %v259 = vpop.f32.mrb[0].mxu0
      %v260 = vadd.f32 0.0, %v259
      %v261 = vpop.f32.mrb[0].mxu0
      %262 = vdwg.mxu0
      %v264 = vunpack.c.l.b16 %v173
      %v265 = vpack.c.b16 %v264, %v190
      %v272 = vunpack.c.l.b16 %v174
      %v273 = vunpack.c.l.b16 %v175
      %v274 = vunpack.c.l.b16 %v176
      %v275 = vunpack.c.l.b16 %v177
      %v276 = vunpack.c.l.b16 %v178
      %v277 = vunpack.c.l.b16 %v179
      %v278 = vpack.c.b16 %v273, %v272
      %v279 = vpack.c.b16 %v275, %v274
      %v280 = vpack.c.b16 %v277, %v276
      %v285 = vsel %vm218, %v265, 0
      %287 = vmatprep.subr.bf16.mxu0 0
      %288 = vmatpush1.bf16.msra.mxu0 %v278
      %289 = vmatprep.subr.bf16.mxu0 0
      %290 = vmatpush1.bf16.msra.mxu0 %v279
      %291 = vmatprep.subr.bf16.mxu0 0
      %292 = vmatpush1.bf16.msra.mxu0 %v280
      %293 = vmatprep.subr.bf16.mxu0 0
      %294 = vmatpush1.bf16.msra.mxu0 0
      %295 = vmatprep.subr.bf16.mxu0 0
      %296 = vmatpush1.bf16.msra.mxu0 0
      %297 = vmatprep.subr.bf16.mxu0 0
      %298 = vmatpush1.bf16.msra.mxu0 0
      %299 = vmatprep.subr.bf16.mxu0 0
      %300 = vmatpush1.bf16.msra.mxu0 0
      %301 = vmatprep.subr.bf16.mxu0 0
      %302 = vmatpush1.bf16.msra.mxu0 0
      %303 = vmatprep.subr.bf16.mxu0 0
      %304 = vmatpush1.bf16.msra.mxu0 0
      %305 = vmatprep.subr.bf16.mxu0 0
      %306 = vmatpush1.bf16.msra.mxu0 0
      %307 = vmatprep.subr.bf16.mxu0 0
      %308 = vmatpush1.bf16.msra.mxu0 0
      %309 = vmatprep.subr.bf16.mxu0 0
      %310 = vmatpush1.bf16.msra.mxu0 0
      %311 = vmatprep.subr.bf16.mxu0 0
      %312 = vmatpush1.bf16.msra.mxu0 0
      %313 = vmatprep.subr.bf16.mxu0 0
      %314 = vmatpush1.bf16.msra.mxu0 0
      %315 = vmatprep.subr.bf16.mxu0 0
      %316 = vmatpush1.bf16.msra.mxu0 0
      %317 = vmatprep.subr.bf16.mxu0 0
      %318 = vmatpush1.bf16.msra.mxu0 0
      %319 = vmatprep.mubr.bf16.mxu0 0
      %320 = vmatmul.mubr.bf16.gmra.mrb[0].mxu0 %v285
      %v321 = vpop.f32.mrb[0].mxu0
      %v322 = vadd.f32 %v257, %v321
      %v323 = vpop.f32.mrb[0].mxu0
      %v324 = vpop.f32.mrb[0].mxu0
      %v325 = vadd.f32 %v260, %v324
      %v326 = vpop.f32.mrb[0].mxu0
      %327 = vdwg.mxu0
      %v328 = vld [vmem:[%s165] sm:$0xe]
      %s329 = scalar_lea.vmem %s1, 48
      %v330 = vld [vmem:[%s329] sm:$0xf]
      %v331 = vld [vmem:[%s329 + $0x4] sm:$0xf]
      %v332 = vld [vmem:[%s329 + $0x8] sm:$0xf]
      %v333 = vld [vmem:[%s329 + $0xc] sm:$0xf]
      %v334 = vld [vmem:[%s329 + $0x10] sm:$0xf]
      %v335 = vld [vmem:[%s329 + $0x14] sm:$0xf]
      %v337 = vunpack.c.l.b16 %v328
      %v338 = vpack.c.b16 %v191, %v337
      %v339 = vrot.slane %v338, 1
      %v346 = vunpack.c.l.b16 %v330
      %v347 = vunpack.c.l.b16 %v331
      %v348 = vunpack.c.l.b16 %v332
      %v349 = vunpack.c.l.b16 %v333
      %v350 = vunpack.c.l.b16 %v334
      %v351 = vunpack.c.l.b16 %v335
      %v352 = vpack.c.b16 %v347, %v346
      %v353 = vpack.c.b16 %v349, %v348
      %v354 = vpack.c.b16 %v351, %v350
      %v359 = vsel %vm218, %v339, 0
      %361 = vmatprep.subr.bf16.mxu0 0
      %362 = vmatpush1.bf16.msra.mxu0 %v352
      %363 = vmatprep.subr.bf16.mxu0 0
      %364 = vmatpush1.bf16.msra.mxu0 %v353
      %365 = vmatprep.subr.bf16.mxu0 0
      %366 = vmatpush1.bf16.msra.mxu0 %v354
      %367 = vmatprep.subr.bf16.mxu0 0
      %368 = vmatpush1.bf16.msra.mxu0 0
      %369 = vmatprep.subr.bf16.mxu0 0
      %370 = vmatpush1.bf16.msra.mxu0 0
      %371 = vmatprep.subr.bf16.mxu0 0
      %372 = vmatpush1.bf16.msra.mxu0 0
      %373 = vmatprep.subr.bf16.mxu0 0
      %374 = vmatpush1.bf16.msra.mxu0 0
      %375 = vmatprep.subr.bf16.mxu0 0
      %376 = vmatpush1.bf16.msra.mxu0 0
      %377 = vmatprep.subr.bf16.mxu0 0
      %378 = vmatpush1.bf16.msra.mxu0 0
      %379 = vmatprep.subr.bf16.mxu0 0
      %380 = vmatpush1.bf16.msra.mxu0 0
      %381 = vmatprep.subr.bf16.mxu0 0
      %382 = vmatpush1.bf16.msra.mxu0 0
      %383 = vmatprep.subr.bf16.mxu0 0
      %384 = vmatpush1.bf16.msra.mxu0 0
      %385 = vmatprep.subr.bf16.mxu0 0
      %386 = vmatpush1.bf16.msra.mxu0 0
      %387 = vmatprep.subr.bf16.mxu0 0
      %388 = vmatpush1.bf16.msra.mxu0 0
      %389 = vmatprep.subr.bf16.mxu0 0
      %390 = vmatpush1.bf16.msra.mxu0 0
      %391 = vmatprep.subr.bf16.mxu0 0
      %392 = vmatpush1.bf16.msra.mxu0 0
      %393 = vmatprep.mubr.bf16.mxu0 0
      %394 = vmatmul.mubr.bf16.gmra.mrb[0].mxu0 %v359
      %v395 = vpop.f32.mrb[0].mxu0
      %v396 = vadd.f32 0.0, %v395
      %v397 = vpop.f32.mrb[0].mxu0
      %v398 = vpop.f32.mrb[0].mxu0
      %v399 = vadd.f32 0.0, %v398
      %v400 = vpop.f32.mrb[0].mxu0
      %401 = vdwg.mxu0
      %v402 = vadd.f32 %v322, %v396
      %v403 = vadd.f32 %v325, %v399
      %v404 = vld [vmem:[%s2] sm:$0x1]
      %v406 = vlaneseq
      %v407 = vshrl.u32 %v406, 7
      %v408 = vsub.s32 0, %v407
      %v409 = vrot.slane %v404, %v408
      %v411 = vadd.f32 %v402, %v409
      %v412 = vadd.f32 %v403, %v409
      %413 = vst.msk [vmem:[%s170] sm:$0xff] %vm218, %v411
      %vm414 = vcmask 388096
      %415 = vst.msk [vmem:[%s170 + $0x8] sm:$0xf] %vm414, %v412
      %p416 = scmp.lt.s32.totalorder %s14, 1
      %s417 = scalar_select %p416, %s14, 1
      %s418 = smul.addr %s417, 2
      %s419 = smul.addr %s418, 8
      %s420 = scalar_lea.vmem %s3, %s419
      // Predicated region
      $region33: #{unet1d_flattening_forward.147} parent=31 // pred_check
        %p421 = pneg %p100
      $region34: #{unet1d_flattening_forward.147} parent=31 // pred_check_branch
        %423 = sbr.rel (%p421) target = $region36
      $region35: #{unet1d_flattening_forward.147} parent=31 // pred_region
        _
      $region36: #{unet1d_flattening_forward.147} parent=31 // pred_fallthru
        _
    $region32: #{unet1d_flattening_forward.147} parent=5 // pred_fallthru
      _
    %p424 = scmp.le.s32.totalorder 2, %s9
    // Predicated region
    $region37: #{unet1d_flattening_forward.147} parent=5 // pred_check
      %p425 = pneg %p424
    $region38: #{unet1d_flattening_forward.147} parent=5 // pred_check_branch
      %427 = sbr.rel (%p425) target = $region40
    $region39: #{unet1d_flattening_forward.147} parent=5 // pred_region
      %s428 = ssub.s32 %s9, 2
      // Predicated region
      $region41: #{unet1d_flattening_forward.147} parent=39 // pred_check
        %p429 = pneg %p106
      $region42: #{unet1d_flattening_forward.147} parent=39 // pred_check_branch
        %431 = sbr.rel (%p429) target = $region44
      $region43: #{unet1d_flattening_forward.147} parent=39 // pred_region
        %p432 = scmp.lt.s32.totalorder %s15, 1
        %s433 = scalar_select %p432, %s15, 1
        %s434 = smul.addr %s433, 2
        %s435 = smul.addr %s434, 8
        %s436 = scalar_lea.vmem %s3, %s435
      $region44: #{unet1d_flattening_forward.147} parent=39 // pred_fallthru
        _
    $region40: #{unet1d_flattening_forward.147} parent=5 // pred_fallthru
      _
  $region6: #{unet1d_flattening_forward.147} parent=0 // loop_footer
    %s13 = sadd.s32 1, %s9
  $region7: #{unet1d_flattening_forward.147} parent=0 // loop_footer_branch
    %8 = sbr.rel target = $region3
  $region8: #{unet1d_flattening_forward.147} parent=0 // loop_exit
    _

// kernel: unet1d_flattening_forward.150
$region0: #{unet1d_flattening_forward.150}
  #allocation0 [shape = 'u32[]', space=smem, size = 0x4, offset = 0x4, fixed_abs, tag = 'smem constant byte address 0x4 - core index']
  #allocation1 [shape = 'u32[144,128]{1,0:T(1,128)}', space=vmem, size = 0x12000, scoped, tag = 'internal scratch']
  %s0 = inlined_call_operand.vmem [shape: bf16[2,3,12,8], index: 0, kind: input, shape index: {}]
  %s1 = inlined_call_operand.vmem [shape: bf16[2,3,12,8], index: 1, kind: input, shape index: {}]
  %s2 = inlined_call_operand.vmem [shape: bf16[2,3,12,8], index: 2, kind: input, shape index: {}]
  %s3 = inlined_call_operand.vmem [shape: f32[2,3,12,8], index: 3, kind: output, shape index: {}]
  %s4 = sld [smem:[#allocation0]]
  $region45: #{unet1d_flattening_forward.150} parent=0
    _
  %s6 = ssub.s32 1, %s4
  %s7 = scalar_select 0, %s6, %s4
  loop: start=0, step=1, limit=4
  $region2: #{unet1d_flattening_forward.150} parent=0 // loop_pre_header
    _
  $region3: #{unet1d_flattening_forward.150} parent=0 // loop_header
    %s9 = sphi 0, %s13
    %p10 = scmp.ge.s32.totalorder %s9, 4
    %s19 = sphi 0, %s21
    %s22 = sphi 0, %s19
    %s23 = sphi 0, %s22
    %s39 = sphi 0, %s23
    %s45 = sphi 0, %s47
    %s48 = sphi 0, %s45
    %s49 = sphi 0, %s48
    %s65 = sphi 0, %s49
    %s71 = sphi 0, %s73
    %s74 = sphi 0, %s71
    %s75 = sphi 0, %s74
    %s91 = sphi 0, %s75
    %s97 = sphi 0, %s99
    %s100 = sphi 0, %s97
    %s101 = sphi 0, %s100
    %s117 = sphi 0, %s101
  $region4: #{unet1d_flattening_forward.150} parent=0 // loop_header_branch
    %12 = sbr.rel (%p10) target = $region8
  $region5: #{unet1d_flattening_forward.150} parent=0 // loop_body
    %s14 = ssub.s32 %s9, 1
    %s15 = ssub.s32 %s9, 2
    %s16 = sadd.s32 %s9, 1
    %s17 = ssub.s32 %s9, %s16
    %p18 = scmp.eq.s32.totalorder %s17, 0
    %s20 = sadd.s32 %s19, 1
    %s21 = scalar_select %p18, %s19, %s20
    %p24 = pneg %p18
    %p25 = scmp.eq.s32.totalorder %s9, 1
    %p26 = por %p24, %p25
    %p27 = scmp.ne.s32.totalorder %s19, %s22
    %p28 = scmp.eq.s32.totalorder %s9, 0
    %p29 = por %p27, %p28
    %p30 = scmp.ne.s32.totalorder %s19, %s22
    %p31 = scmp.eq.s32.totalorder %s14, 1
    %p32 = por %p30, %p31
    %p33 = scmp.ne.s32.totalorder %s22, %s23
    %p34 = scmp.eq.s32.totalorder %s14, 0
    %p35 = por %p33, %p34
    %p36 = scmp.ne.s32.totalorder %s22, %s23
    %p37 = scmp.eq.s32.totalorder %s15, 1
    %p38 = por %p36, %p37
    %p40 = scmp.ne.s32.totalorder %s23, %s39
    %p41 = scmp.eq.s32.totalorder %s15, 0
    %p42 = por %p40, %p41
    %s43 = ssub.s32 %s9, %s16
    %p44 = scmp.eq.s32.totalorder %s43, 0
    %s46 = sadd.s32 %s45, 1
    %s47 = scalar_select %p44, %s45, %s46
    %p50 = pneg %p44
    %p51 = scmp.eq.s32.totalorder %s9, 1
    %p52 = por %p50, %p51
    %p53 = scmp.ne.s32.totalorder %s45, %s48
    %p54 = scmp.eq.s32.totalorder %s9, 0
    %p55 = por %p53, %p54
    %p56 = scmp.ne.s32.totalorder %s45, %s48
    %p57 = scmp.eq.s32.totalorder %s14, 1
    %p58 = por %p56, %p57
    %p59 = scmp.ne.s32.totalorder %s48, %s49
    %p60 = scmp.eq.s32.totalorder %s14, 0
    %p61 = por %p59, %p60
    %p62 = scmp.ne.s32.totalorder %s48, %s49
    %p63 = scmp.eq.s32.totalorder %s15, 1
    %p64 = por %p62, %p63
    %p66 = scmp.ne.s32.totalorder %s49, %s65
    %p67 = scmp.eq.s32.totalorder %s15, 0
    %p68 = por %p66, %p67
    %s69 = ssub.s32 %s9, %s16
    %p70 = scmp.eq.s32.totalorder %s69, 0
    %s72 = sadd.s32 %s71, 1
    %s73 = scalar_select %p70, %s71, %s72
    %p76 = pneg %p70
    %p77 = scmp.eq.s32.totalorder %s9, 1
    %p78 = por %p76, %p77
    %p79 = scmp.ne.s32.totalorder %s71, %s74
    %p80 = scmp.eq.s32.totalorder %s9, 0
    %p81 = por %p79, %p80
    %p82 = scmp.ne.s32.totalorder %s71, %s74
    %p83 = scmp.eq.s32.totalorder %s14, 1
    %p84 = por %p82, %p83
    %p85 = scmp.ne.s32.totalorder %s74, %s75
    %p86 = scmp.eq.s32.totalorder %s14, 0
    %p87 = por %p85, %p86
    %p88 = scmp.ne.s32.totalorder %s74, %s75
    %p89 = scmp.eq.s32.totalorder %s15, 1
    %p90 = por %p88, %p89
    %p92 = scmp.ne.s32.totalorder %s75, %s91
    %p93 = scmp.eq.s32.totalorder %s15, 0
    %p94 = por %p92, %p93
    %s95 = ssub.s32 %s9, %s16
    %p96 = scmp.eq.s32.totalorder %s95, 0
    %s98 = sadd.s32 %s97, 1
    %s99 = scalar_select %p96, %s97, %s98
    %p102 = pneg %p96
    %p103 = scmp.eq.s32.totalorder %s9, 1
    %p104 = por %p102, %p103
    %p105 = scmp.ne.s32.totalorder %s97, %s100
    %p106 = scmp.eq.s32.totalorder %s9, 0
    %p107 = por %p105, %p106
    %p108 = scmp.ne.s32.totalorder %s97, %s100
    %p109 = scmp.eq.s32.totalorder %s14, 1
    %p110 = por %p108, %p109
    %p111 = scmp.ne.s32.totalorder %s100, %s101
    %p112 = scmp.eq.s32.totalorder %s14, 0
    %p113 = por %p111, %p112
    %p114 = scmp.ne.s32.totalorder %s100, %s101
    %p115 = scmp.eq.s32.totalorder %s15, 1
    %p116 = por %p114, %p115
    %p118 = scmp.ne.s32.totalorder %s101, %s117
    %p119 = scmp.eq.s32.totalorder %s15, 0
    %p120 = por %p118, %p119
    %p121 = scmp.le.s32.totalorder 1, %s9
    %p122 = scmp.lt.s32.totalorder %s9, 3
    %p123 = pnand %p121, %p122
    %p124 = pneg %p123
    // Predicated region
    $region9: #{unet1d_flattening_forward.150} parent=5 // pred_check
      _
    $region10: #{unet1d_flattening_forward.150} parent=5 // pred_check_branch
      %126 = sbr.rel (%p123) target = $region12
    $region11: #{unet1d_flattening_forward.150} parent=5 // pred_region
      %s127 = ssub.s32 %s9, 1
    $region12: #{unet1d_flattening_forward.150} parent=5 // pred_fallthru
      _
    %p128 = scmp.lt.s32.totalorder %s9, 2
    // Predicated region
    $region13: #{unet1d_flattening_forward.150} parent=5 // pred_check
      %p129 = pneg %p128
    $region14: #{unet1d_flattening_forward.150} parent=5 // pred_check_branch
      %131 = sbr.rel (%p129) target = $region16
    $region15: #{unet1d_flattening_forward.150} parent=5 // pred_region
      // Predicated region
      $region17: #{unet1d_flattening_forward.150} parent=15 // pred_check
        %p132 = pneg %p29
      $region18: #{unet1d_flattening_forward.150} parent=15 // pred_check_branch
        %134 = sbr.rel (%p132) target = $region20
      $region19: #{unet1d_flattening_forward.150} parent=15 // pred_region
        %p135 = scmp.lt.s32.totalorder %s9, 1
        %s136 = scalar_select %p135, %s9, 1
        %s137 = smul.addr %s136, 6
        %s138 = smul.addr %s137, 4
        %s139 = scalar_lea.vmem %s0, %s138
      $region20: #{unet1d_flattening_forward.150} parent=15 // pred_fallthru
        _
      // Predicated region
      $region21: #{unet1d_flattening_forward.150} parent=15 // pred_check
        %p140 = pneg %p55
      $region22: #{unet1d_flattening_forward.150} parent=15 // pred_check_branch
        %142 = sbr.rel (%p140) target = $region24
      $region23: #{unet1d_flattening_forward.150} parent=15 // pred_region
        %p143 = scmp.lt.s32.totalorder %s9, 1
        %s144 = scalar_select %p143, %s9, 1
        %s145 = smul.addr %s144, 6
        %s146 = smul.addr %s145, 4
        %s147 = scalar_lea.vmem %s1, %s146
      $region24: #{unet1d_flattening_forward.150} parent=15 // pred_fallthru
        _
      // Predicated region
      $region25: #{unet1d_flattening_forward.150} parent=15 // pred_check
        %p148 = pneg %p81
      $region26: #{unet1d_flattening_forward.150} parent=15 // pred_check_branch
        %150 = sbr.rel (%p148) target = $region28
      $region27: #{unet1d_flattening_forward.150} parent=15 // pred_region
        %p151 = scmp.lt.s32.totalorder %s9, 1
        %s152 = scalar_select %p151, %s9, 1
        %s153 = smul.addr %s152, 6
        %s154 = smul.addr %s153, 4
        %s155 = scalar_lea.vmem %s2, %s154
      $region28: #{unet1d_flattening_forward.150} parent=15 // pred_fallthru
        _
    $region16: #{unet1d_flattening_forward.150} parent=5 // pred_fallthru
      _
    %p156 = scmp.le.s32.totalorder 1, %s9
    %p157 = scmp.lt.s32.totalorder %s9, 3
    %p158 = pnand %p156, %p157
    %p159 = pneg %p158
    // Predicated region
    $region29: #{unet1d_flattening_forward.150} parent=5 // pred_check
      _
    $region30: #{unet1d_flattening_forward.150} parent=5 // pred_check_branch
      %161 = sbr.rel (%p158) target = $region32
    $region31: #{unet1d_flattening_forward.150} parent=5 // pred_region
      %s162 = ssub.s32 %s9, 1
      %p163 = scmp.lt.s32.totalorder %s14, 1
      %s164 = scalar_select %p163, %s14, 1
      %s165 = smul.addr %s164, 6
      %s166 = smul.addr %s165, 4
      %s167 = scalar_lea.vmem %s0, %s166
      %p168 = pneg %p35
      %p169 = pneg %p32
      %p170 = scmp.lt.s32.totalorder %s14, 1
      %s171 = scalar_select %p170, %s14, 1
      %s172 = smul.addr %s171, 6
      %s173 = smul.addr %s172, 4
      %s174 = scalar_lea.vmem %s1, %s173
      %p175 = pneg %p61
      %p176 = pneg %p58
      %p177 = scmp.lt.s32.totalorder %s14, 1
      %s178 = scalar_select %p177, %s14, 1
      %s179 = smul.addr %s178, 6
      %s180 = smul.addr %s179, 4
      %s181 = scalar_lea.vmem %s2, %s180
      %p182 = pneg %p87
      %p183 = pneg %p84
      %p184 = pneg %p113
      %p185 = pneg %p110
      %p186 = scmp.lt.s32.totalorder %s14, 1
      %s187 = scalar_select %p186, %s14, 1
      %s188 = smul.addr %s187, 6
      %s189 = smul.addr %s188, 8
      %s190 = scalar_lea.vmem %s3, %s189
      %p191 = scmp.lt.s32.totalorder %s14, 1
      %s192 = scalar_select %p191, %s14, 1
      %s193 = smul.addr %s192, 6
      %s194 = smul.addr %s193, 4
      %s195 = scalar_lea.vmem %s0, %s194
      %p196 = scmp.lt.s32.totalorder %s14, 1
      %s197 = scalar_select %p196, %s14, 1
      %s198 = smul.addr %s197, 6
      %s199 = smul.addr %s198, 4
      %s200 = scalar_lea.vmem %s1, %s199
      %p201 = scmp.lt.s32.totalorder %s14, 1
      %s202 = scalar_select %p201, %s14, 1
      %s203 = smul.addr %s202, 6
      %s204 = smul.addr %s203, 4
      %s205 = scalar_lea.vmem %s2, %s204
      %p206 = scmp.lt.s32.totalorder %s14, 1
      %s207 = scalar_select %p206, %s14, 1
      %s208 = smul.addr %s207, 6
      %s209 = smul.addr %s208, 8
      %s210 = scalar_lea.vmem %s3, %s209
      %v212 = vld [vmem:[%s195] sm:$0xf]
      %v213 = vld [vmem:[%s195 + $0x4] sm:$0x3]
      %v214 = vld [vmem:[%s195 + $0x8] sm:$0xf]
      %v215 = vld [vmem:[%s195 + $0xc] sm:$0x3]
      %v216 = vld [vmem:[%s195 + $0x10] sm:$0xf]
      %v217 = vld [vmem:[%s195 + $0x14] sm:$0x3]
      %v218 = vld [vmem:[%s200] sm:$0xf]
      %v219 = vld [vmem:[%s200 + $0x4] sm:$0x3]
      %v220 = vld [vmem:[%s200 + $0x8] sm:$0xf]
      %v221 = vld [vmem:[%s200 + $0xc] sm:$0x3]
      %v222 = vld [vmem:[%s200 + $0x10] sm:$0xf]
      %v223 = vld [vmem:[%s200 + $0x14] sm:$0x3]
      %v224 = vld [vmem:[%s205] sm:$0xf]
      %v225 = vld [vmem:[%s205 + $0x4] sm:$0x3]
      %v226 = vld [vmem:[%s205 + $0x8] sm:$0xf]
      %v227 = vld [vmem:[%s205 + $0xc] sm:$0x3]
      %v228 = vld [vmem:[%s205 + $0x10] sm:$0xf]
      %v229 = vld [vmem:[%s205 + $0x14] sm:$0x3]
      %v232 = vunpack.c.l.b16 %v212
      %v233 = vunpack.c.l.b16 %v213
      %v234 = vpack.c.b16 %v233, %v232
      %v237 = vunpack.c.l.b16 %v218
      %v238 = vunpack.c.l.b16 %v219
      %v239 = vpack.c.b16 %v238, %v237
      %vm240 = vcmask 64512
      %v242 = vsel %vm240, %v234, 0
      %v245 = vsel %vm240, %v239, 0
      %247 = vmatprep.subr.bf16.mxu0 0
      %248 = vmatpush1.bf16.xpose.msra.mxu0 %v245
      %249 = vmatprep.subr.bf16.mxu0 0
      %250 = vmatpush1.bf16.xpose.msra.mxu0 0
      %251 = vmatprep.subr.bf16.mxu0 0
      %252 = vmatpush1.bf16.xpose.msra.mxu0 0
      %253 = vmatprep.subr.bf16.mxu0 0
      %254 = vmatpush1.bf16.xpose.msra.mxu0 0
      %255 = vmatprep.subr.bf16.mxu0 0
      %256 = vmatpush1.bf16.xpose.msra.mxu0 0
      %257 = vmatprep.subr.bf16.mxu0 0
      %258 = vmatpush1.bf16.xpose.msra.mxu0 0
      %259 = vmatprep.subr.bf16.mxu0 0
      %260 = vmatpush1.bf16.xpose.msra.mxu0 0
      %261 = vmatprep.subr.bf16.mxu0 0
      %262 = vmatpush1.bf16.xpose.msra.mxu0 0
      %263 = vmatprep.subr.bf16.mxu0 0
      %264 = vmatpush1.bf16.xpose.msra.mxu0 0
      %265 = vmatprep.subr.bf16.mxu0 0
      %266 = vmatpush1.bf16.xpose.msra.mxu0 0
      %267 = vmatprep.subr.bf16.mxu0 0
      %268 = vmatpush1.bf16.xpose.msra.mxu0 0
      %269 = vmatprep.subr.bf16.mxu0 0
      %270 = vmatpush1.bf16.xpose.msra.mxu0 0
      %271 = vmatprep.subr.bf16.mxu0 0
      %272 = vmatpush1.bf16.xpose.msra.mxu0 0
      %273 = vmatprep.subr.bf16.mxu0 0
      %274 = vmatpush1.bf16.xpose.msra.mxu0 0
      %275 = vmatprep.subr.bf16.mxu0 0
      %276 = vmatpush1.bf16.xpose.msra.mxu0 0
      %277 = vmatprep.subr.bf16.mxu0 0
      %278 = vmatpush1.bf16.xpose.msra.mxu0 0
      %279 = vmatprep.mubr.bf16.mxu0 0
      %280 = vmatmul.mubr.bf16.gmra.mrb[0].mxu0 %v242
      %v281 = vpop.f32.mrb[0].mxu0
      %v282 = vadd.f32 0.0, %v281
      %v283 = vpop.f32.mrb[0].mxu0
      %v284 = vpop.f32.mrb[0].mxu0
      %v285 = vadd.f32 0.0, %v284
      %v286 = vpop.f32.mrb[0].mxu0
      %287 = vdwg.mxu0
      %v290 = vunpack.c.l.b16 %v214
      %v291 = vunpack.c.l.b16 %v215
      %v292 = vpack.c.b16 %v291, %v290
      %v295 = vunpack.c.l.b16 %v220
      %v296 = vunpack.c.l.b16 %v221
      %v297 = vpack.c.b16 %v296, %v295
      %v299 = vsel %vm240, %v292, 0
      %v302 = vsel %vm240, %v297, 0
      %304 = vmatprep.subr.bf16.mxu0 0
      %305 = vmatpush1.bf16.xpose.msra.mxu0 %v302
      %306 = vmatprep.subr.bf16.mxu0 0
      %307 = vmatpush1.bf16.xpose.msra.mxu0 0
      %308 = vmatprep.subr.bf16.mxu0 0
      %309 = vmatpush1.bf16.xpose.msra.mxu0 0
      %310 = vmatprep.subr.bf16.mxu0 0
      %311 = vmatpush1.bf16.xpose.msra.mxu0 0
      %312 = vmatprep.subr.bf16.mxu0 0
      %313 = vmatpush1.bf16.xpose.msra.mxu0 0
      %314 = vmatprep.subr.bf16.mxu0 0
      %315 = vmatpush1.bf16.xpose.msra.mxu0 0
      %316 = vmatprep.subr.bf16.mxu0 0
      %317 = vmatpush1.bf16.xpose.msra.mxu0 0
      %318 = vmatprep.subr.bf16.mxu0 0
      %319 = vmatpush1.bf16.xpose.msra.mxu0 0
      %320 = vmatprep.subr.bf16.mxu0 0
      %321 = vmatpush1.bf16.xpose.msra.mxu0 0
      %322 = vmatprep.subr.bf16.mxu0 0
      %323 = vmatpush1.bf16.xpose.msra.mxu0 0
      %324 = vmatprep.subr.bf16.mxu0 0
      %325 = vmatpush1.bf16.xpose.msra.mxu0 0
      %326 = vmatprep.subr.bf16.mxu0 0
      %327 = vmatpush1.bf16.xpose.msra.mxu0 0
      %328 = vmatprep.subr.bf16.mxu0 0
      %329 = vmatpush1.bf16.xpose.msra.mxu0 0
      %330 = vmatprep.subr.bf16.mxu0 0
      %331 = vmatpush1.bf16.xpose.msra.mxu0 0
      %332 = vmatprep.subr.bf16.mxu0 0
      %333 = vmatpush1.bf16.xpose.msra.mxu0 0
      %334 = vmatprep.subr.bf16.mxu0 0
      %335 = vmatpush1.bf16.xpose.msra.mxu0 0
      %336 = vmatprep.mubr.bf16.mxu0 0
      %337 = vmatmul.mubr.bf16.gmra.mrb[0].mxu0 %v299
      %v338 = vpop.f32.mrb[0].mxu0
      %v339 = vadd.f32 0.0, %v338
      %v340 = vpop.f32.mrb[0].mxu0
      %v341 = vpop.f32.mrb[0].mxu0
      %v342 = vadd.f32 0.0, %v341
      %v343 = vpop.f32.mrb[0].mxu0
      %344 = vdwg.mxu0
      %v347 = vunpack.c.l.b16 %v216
      %v348 = vunpack.c.l.b16 %v217
      %v349 = vpack.c.b16 %v348, %v347
      %v352 = vunpack.c.l.b16 %v222
      %v353 = vunpack.c.l.b16 %v223
      %v354 = vpack.c.b16 %v353, %v352
      %v356 = vsel %vm240, %v349, 0
      %v359 = vsel %vm240, %v354, 0
      %361 = vmatprep.subr.bf16.mxu0 0
      %362 = vmatpush1.bf16.xpose.msra.mxu0 %v359
      %363 = vmatprep.subr.bf16.mxu0 0
      %364 = vmatpush1.bf16.xpose.msra.mxu0 0
      %365 = vmatprep.subr.bf16.mxu0 0
      %366 = vmatpush1.bf16.xpose.msra.mxu0 0
      %367 = vmatprep.subr.bf16.mxu0 0
      %368 = vmatpush1.bf16.xpose.msra.mxu0 0
      %369 = vmatprep.subr.bf16.mxu0 0
      %370 = vmatpush1.bf16.xpose.msra.mxu0 0
      %371 = vmatprep.subr.bf16.mxu0 0
      %372 = vmatpush1.bf16.xpose.msra.mxu0 0
      %373 = vmatprep.subr.bf16.mxu0 0
      %374 = vmatpush1.bf16.xpose.msra.mxu0 0
      %375 = vmatprep.subr.bf16.mxu0 0
      %376 = vmatpush1.bf16.xpose.msra.mxu0 0
      %377 = vmatprep.subr.bf16.mxu0 0
      %378 = vmatpush1.bf16.xpose.msra.mxu0 0
      %379 = vmatprep.subr.bf16.mxu0 0
      %380 = vmatpush1.bf16.xpose.msra.mxu0 0
      %381 = vmatprep.subr.bf16.mxu0 0
      %382 = vmatpush1.bf16.xpose.msra.mxu0 0
      %383 = vmatprep.subr.bf16.mxu0 0
      %384 = vmatpush1.bf16.xpose.msra.mxu0 0
      %385 = vmatprep.subr.bf16.mxu0 0
      %386 = vmatpush1.bf16.xpose.msra.mxu0 0
      %387 = vmatprep.subr.bf16.mxu0 0
      %388 = vmatpush1.bf16.xpose.msra.mxu0 0
      %389 = vmatprep.subr.bf16.mxu0 0
      %390 = vmatpush1.bf16.xpose.msra.mxu0 0
      %391 = vmatprep.subr.bf16.mxu0 0
      %392 = vmatpush1.bf16.xpose.msra.mxu0 0
      %393 = vmatprep.mubr.bf16.mxu0 0
      %394 = vmatmul.mubr.bf16.gmra.mrb[0].mxu0 %v356
      %v395 = vpop.f32.mrb[0].mxu0
      %v396 = vadd.f32 0.0, %v395
      %v397 = vpop.f32.mrb[0].mxu0
      %v398 = vpop.f32.mrb[0].mxu0
      %v399 = vadd.f32 0.0, %v398
      %v400 = vpop.f32.mrb[0].mxu0
      %401 = vdwg.mxu0
      %v402 = vmul.f32 %v282, 0.35355338
      %v403 = vmul.f32 %v285, 0.35355338
      %v404 = vmul.f32 %v339, 0.35355338
      %v405 = vmul.f32 %v342, 0.35355338
      %v406 = vmul.f32 %v396, 0.35355338
      %v407 = vmul.f32 %v399, 0.35355338
      %vm408 = vcmask 97280
      %v409 = vsel %vm408, %v402, -inf
      %410 = vmax.xlane.f32.xlu0 %v409
      %v411 = vpop.xlane.xlu0 %410
      %vm412 = vcmask 93184
      %v413 = vsel %vm412, %v403, -inf
      %414 = vmax.xlane.f32.xlu0 %v413
      %v415 = vpop.xlane.xlu0 %414
      %v416 = vsel %vm408, %v404, -inf
      %417 = vmax.xlane.f32.xlu0 %v416
      %v418 = vpop.xlane.xlu0 %417
      %v419 = vsel %vm412, %v405, -inf
      %420 = vmax.xlane.f32.xlu0 %v419
      %v421 = vpop.xlane.xlu0 %420
      %v422 = vsel %vm408, %v406, -inf
      %423 = vmax.xlane.f32.xlu0 %v422
      %v424 = vpop.xlane.xlu0 %423
      %v425 = vsel %vm412, %v407, -inf
      %426 = vmax.xlane.f32.xlu0 %v425
      %v427 = vpop.xlane.xlu0 %426
      %v428 = vsub.f32 %v402, %v411
      %v429 = vsub.f32 %v403, %v415
      %v430 = vsub.f32 %v404, %v418
      %v431 = vsub.f32 %v405, %v421
      %v432 = vsub.f32 %v406, %v424
      %v433 = vsub.f32 %v407, %v427
      %v434 = vmul.f32 %v428, 1.442695
      %v435 = vpow.pop %v434
      %v436 = vmul.f32 %v429, 1.442695
      %v437 = vpow.pop %v436
      %v438 = vmul.f32 %v430, 1.442695
      %v439 = vpow.pop %v438
      %v440 = vmul.f32 %v431, 1.442695
      %v441 = vpow.pop %v440
      %v442 = vmul.f32 %v432, 1.442695
      %v443 = vpow.pop %v442
      %v444 = vmul.f32 %v433, 1.442695
      %v445 = vpow.pop %v444
      %v446 = vsel %vm408, %v435, 0.0
      %447 = vadd.xlane.f32.xlu0 %v446
      %v448 = vpop.xlane.xlu0 %447
      %v449 = vsel %vm412, %v437, 0.0
      %450 = vadd.xlane.f32.xlu0 %v449
      %v451 = vpop.xlane.xlu0 %450
      %v452 = vsel %vm408, %v439, 0.0
      %453 = vadd.xlane.f32.xlu0 %v452
      %v454 = vpop.xlane.xlu0 %453
      %v455 = vsel %vm412, %v441, 0.0
      %456 = vadd.xlane.f32.xlu0 %v455
      %v457 = vpop.xlane.xlu0 %456
      %v458 = vsel %vm408, %v443, 0.0
      %459 = vadd.xlane.f32.xlu0 %v458
      %v460 = vpop.xlane.xlu0 %459
      %v461 = vsel %vm412, %v445, 0.0
      %462 = vadd.xlane.f32.xlu0 %v461
      %v463 = vpop.xlane.xlu0 %462
      %v464 = vrcp.pop %v448
      %v465 = vrcp.pop %v451
      %v466 = vrcp.pop %v454
      %v467 = vrcp.pop %v457
      %v468 = vrcp.pop %v460
      %v469 = vrcp.pop %v463
      %v470 = vmul.f32 %v435, %v464
      %v471 = vmul.f32 %v437, %v465
      %v472 = vmul.f32 %v439, %v466
      %v473 = vmul.f32 %v441, %v467
      %v474 = vmul.f32 %v443, %v468
      %v475 = vmul.f32 %v445, %v469
      %v476 = vpack.c.bf16 %v471, %v470
      %v477 = vpack.c.bf16 %v473, %v472
      %v478 = vpack.c.bf16 %v475, %v474
      %v481 = vunpack.c.l.b16 %v224
      %v482 = vunpack.c.l.b16 %v225
      %v483 = vpack.c.b16 %v482, %v481
      %v485 = vsel %vm408, %v476, 0
      %vm487 = vcmask 1045504
      %v489 = vsel %vm487, %v483, 0
      %491 = vmatprep.subr.bf16.mxu0 0
      %492 = vmatpush1.bf16.msra.mxu0 %v489
      %493 = vmatprep.subr.bf16.mxu0 0
      %494 = vmatpush1.bf16.msra.mxu0 0
      %495 = vmatprep.subr.bf16.mxu0 0
      %496 = vmatpush1.bf16.msra.mxu0 0
      %497 = vmatprep.subr.bf16.mxu0 0
      %498 = vmatpush1.bf16.msra.mxu0 0
      %499 = vmatprep.subr.bf16.mxu0 0
      %500 = vmatpush1.bf16.msra.mxu0 0
      %501 = vmatprep.subr.bf16.mxu0 0
      %502 = vmatpush1.bf16.msra.mxu0 0
      %503 = vmatprep.subr.bf16.mxu0 0
      %504 = vmatpush1.bf16.msra.mxu0 0
      %505 = vmatprep.subr.bf16.mxu0 0
      %506 = vmatpush1.bf16.msra.mxu0 0
      %507 = vmatprep.subr.bf16.mxu0 0
      %508 = vmatpush1.bf16.msra.mxu0 0
      %509 = vmatprep.subr.bf16.mxu0 0
      %510 = vmatpush1.bf16.msra.mxu0 0
      %511 = vmatprep.subr.bf16.mxu0 0
      %512 = vmatpush1.bf16.msra.mxu0 0
      %513 = vmatprep.subr.bf16.mxu0 0
      %514 = vmatpush1.bf16.msra.mxu0 0
      %515 = vmatprep.subr.bf16.mxu0 0
      %516 = vmatpush1.bf16.msra.mxu0 0
      %517 = vmatprep.subr.bf16.mxu0 0
      %518 = vmatpush1.bf16.msra.mxu0 0
      %519 = vmatprep.subr.bf16.mxu0 0
      %520 = vmatpush1.bf16.msra.mxu0 0
      %521 = vmatprep.subr.bf16.mxu0 0
      %522 = vmatpush1.bf16.msra.mxu0 0
      %523 = vmatprep.mubr.bf16.mxu0 0
      %524 = vmatmul.mubr.bf16.gmra.mrb[0].mxu0 %v485
      %v525 = vpop.f32.mrb[0].mxu0
      %v526 = vadd.f32 0.0, %v525
      %v527 = vpop.f32.mrb[0].mxu0
      %v528 = vpop.f32.mrb[0].mxu0
      %v529 = vadd.f32 0.0, %v528
      %v530 = vpop.f32.mrb[0].mxu0
      %531 = vdwg.mxu0
      %v534 = vunpack.c.l.b16 %v226
      %v535 = vunpack.c.l.b16 %v227
      %v536 = vpack.c.b16 %v535, %v534
      %v538 = vsel %vm408, %v477, 0
      %v541 = vsel %vm487, %v536, 0
      %543 = vmatprep.subr.bf16.mxu0 0
      %544 = vmatpush1.bf16.msra.mxu0 %v541
      %545 = vmatprep.subr.bf16.mxu0 0
      %546 = vmatpush1.bf16.msra.mxu0 0
      %547 = vmatprep.subr.bf16.mxu0 0
      %548 = vmatpush1.bf16.msra.mxu0 0
      %549 = vmatprep.subr.bf16.mxu0 0
      %550 = vmatpush1.bf16.msra.mxu0 0
      %551 = vmatprep.subr.bf16.mxu0 0
      %552 = vmatpush1.bf16.msra.mxu0 0
      %553 = vmatprep.subr.bf16.mxu0 0
      %554 = vmatpush1.bf16.msra.mxu0 0
      %555 = vmatprep.subr.bf16.mxu0 0
      %556 = vmatpush1.bf16.msra.mxu0 0
      %557 = vmatprep.subr.bf16.mxu0 0
      %558 = vmatpush1.bf16.msra.mxu0 0
      %559 = vmatprep.subr.bf16.mxu0 0
      %560 = vmatpush1.bf16.msra.mxu0 0
      %561 = vmatprep.subr.bf16.mxu0 0
      %562 = vmatpush1.bf16.msra.mxu0 0
      %563 = vmatprep.subr.bf16.mxu0 0
      %564 = vmatpush1.bf16.msra.mxu0 0
      %565 = vmatprep.subr.bf16.mxu0 0
      %566 = vmatpush1.bf16.msra.mxu0 0
      %567 = vmatprep.subr.bf16.mxu0 0
      %568 = vmatpush1.bf16.msra.mxu0 0
      %569 = vmatprep.subr.bf16.mxu0 0
      %570 = vmatpush1.bf16.msra.mxu0 0
      %571 = vmatprep.subr.bf16.mxu0 0
      %572 = vmatpush1.bf16.msra.mxu0 0
      %573 = vmatprep.subr.bf16.mxu0 0
      %574 = vmatpush1.bf16.msra.mxu0 0
      %575 = vmatprep.mubr.bf16.mxu0 0
      %576 = vmatmul.mubr.bf16.gmra.mrb[0].mxu0 %v538
      %v577 = vpop.f32.mrb[0].mxu0
      %v578 = vadd.f32 0.0, %v577
      %v579 = vpop.f32.mrb[0].mxu0
      %v580 = vpop.f32.mrb[0].mxu0
      %v581 = vadd.f32 0.0, %v580
      %v582 = vpop.f32.mrb[0].mxu0
      %583 = vdwg.mxu0
      %v586 = vunpack.c.l.b16 %v228
      %v587 = vunpack.c.l.b16 %v229
      %v588 = vpack.c.b16 %v587, %v586
      %v590 = vsel %vm408, %v478, 0
      %v593 = vsel %vm487, %v588, 0
      %595 = vmatprep.subr.bf16.mxu0 0
      %596 = vmatpush1.bf16.msra.mxu0 %v593
      %597 = vmatprep.subr.bf16.mxu0 0
      %598 = vmatpush1.bf16.msra.mxu0 0
      %599 = vmatprep.subr.bf16.mxu0 0
      %600 = vmatpush1.bf16.msra.mxu0 0
      %601 = vmatprep.subr.bf16.mxu0 0
      %602 = vmatpush1.bf16.msra.mxu0 0
      %603 = vmatprep.subr.bf16.mxu0 0
      %604 = vmatpush1.bf16.msra.mxu0 0
      %605 = vmatprep.subr.bf16.mxu0 0
      %606 = vmatpush1.bf16.msra.mxu0 0
      %607 = vmatprep.subr.bf16.mxu0 0
      %608 = vmatpush1.bf16.msra.mxu0 0
      %609 = vmatprep.subr.bf16.mxu0 0
      %610 = vmatpush1.bf16.msra.mxu0 0
      %611 = vmatprep.subr.bf16.mxu0 0
      %612 = vmatpush1.bf16.msra.mxu0 0
      %613 = vmatprep.subr.bf16.mxu0 0
      %614 = vmatpush1.bf16.msra.mxu0 0
      %615 = vmatprep.subr.bf16.mxu0 0
      %616 = vmatpush1.bf16.msra.mxu0 0
      %617 = vmatprep.subr.bf16.mxu0 0
      %618 = vmatpush1.bf16.msra.mxu0 0
      %619 = vmatprep.subr.bf16.mxu0 0
      %620 = vmatpush1.bf16.msra.mxu0 0
      %621 = vmatprep.subr.bf16.mxu0 0
      %622 = vmatpush1.bf16.msra.mxu0 0
      %623 = vmatprep.subr.bf16.mxu0 0
      %624 = vmatpush1.bf16.msra.mxu0 0
      %625 = vmatprep.subr.bf16.mxu0 0
      %626 = vmatpush1.bf16.msra.mxu0 0
      %627 = vmatprep.mubr.bf16.mxu0 0
      %628 = vmatmul.mubr.bf16.gmra.mrb[0].mxu0 %v590
      %v629 = vpop.f32.mrb[0].mxu0
      %v630 = vadd.f32 0.0, %v629
      %v631 = vpop.f32.mrb[0].mxu0
      %v632 = vpop.f32.mrb[0].mxu0
      %v633 = vadd.f32 0.0, %v632
      %v634 = vpop.f32.mrb[0].mxu0
      %635 = vdwg.mxu0
      %636 = vst.msk [vmem:[%s210] sm:$0xff] %vm240, %v526
      %vm637 = vcmask 60416
      %638 = vst.msk [vmem:[%s210 + $0x8] sm:$0xf] %vm637, %v529
      %639 = vst.msk [vmem:[%s210 + $0x10] sm:$0xff] %vm240, %v578
      %640 = vst.msk [vmem:[%s210 + $0x18] sm:$0xf] %vm637, %v581
      %641 = vst.msk [vmem:[%s210 + $0x20] sm:$0xff] %vm240, %v630
      %642 = vst.msk [vmem:[%s210 + $0x28] sm:$0xf] %vm637, %v633
      %p643 = scmp.lt.s32.totalorder %s14, 1
      %s644 = scalar_select %p643, %s14, 1
      %s645 = smul.addr %s644, 6
      %s646 = smul.addr %s645, 8
      %s647 = scalar_lea.vmem %s3, %s646
      // Predicated region
      $region33: #{unet1d_flattening_forward.150} parent=31 // pred_check
        %p648 = pneg %p110
      $region34: #{unet1d_flattening_forward.150} parent=31 // pred_check_branch
        %650 = sbr.rel (%p648) target = $region36
      $region35: #{unet1d_flattening_forward.150} parent=31 // pred_region
        _
      $region36: #{unet1d_flattening_forward.150} parent=31 // pred_fallthru
        _
    $region32: #{unet1d_flattening_forward.150} parent=5 // pred_fallthru
      _
    %p651 = scmp.le.s32.totalorder 2, %s9
    // Predicated region
    $region37: #{unet1d_flattening_forward.150} parent=5 // pred_check
      %p652 = pneg %p651
    $region38: #{unet1d_flattening_forward.150} parent=5 // pred_check_branch
      %654 = sbr.rel (%p652) target = $region40
    $region39: #{unet1d_flattening_forward.150} parent=5 // pred_region
      %s655 = ssub.s32 %s9, 2
      // Predicated region
      $region41: #{unet1d_flattening_forward.150} parent=39 // pred_check
        %p656 = pneg %p116
      $region42: #{unet1d_flattening_forward.150} parent=39 // pred_check_branch
        %658 = sbr.rel (%p656) target = $region44
      $region43: #{unet1d_flattening_forward.150} parent=39 // pred_region
        %p659 = scmp.lt.s32.totalorder %s15, 1
        %s660 = scalar_select %p659, %s15, 1
        %s661 = smul.addr %s660, 6
        %s662 = smul.addr %s661, 8
        %s663 = scalar_lea.vmem %s3, %s662
      $region44: #{unet1d_flattening_forward.150} parent=39 // pred_fallthru
        _
    $region40: #{unet1d_flattening_forward.150} parent=5 // pred_fallthru
      _
  $region6: #{unet1d_flattening_forward.150} parent=0 // loop_footer
    %s13 = sadd.s32 1, %s9
  $region7: #{unet1d_flattening_forward.150} parent=0 // loop_footer_branch
    %8 = sbr.rel target = $region3
  $region8: #{unet1d_flattening_forward.150} parent=0 // loop_exit
    _

// kernel: unet1d_flattening_forward.156
$region0: #{unet1d_flattening_forward.156}
  #allocation0 [shape = 'u32[]', space=smem, size = 0x4, offset = 0x4, fixed_abs, tag = 'smem constant byte address 0x4 - core index']
  #allocation1 [shape = 'u32[144,128]{1,0:T(1,128)}', space=vmem, size = 0x12000, scoped, tag = 'internal scratch']
  %s0 = inlined_call_operand.vmem [shape: bf16[2,14,72], index: 0, kind: input, shape index: {}]
  %s1 = inlined_call_operand.vmem [shape: bf16[3,72,48], index: 1, kind: input, shape index: {}]
  %s2 = inlined_call_operand.vmem [shape: f32[1,48], index: 2, kind: input, shape index: {}]
  %s3 = inlined_call_operand.vmem [shape: f32[2,12,48], index: 3, kind: output, shape index: {}]
  %s4 = sld [smem:[#allocation0]]
  $region45: #{unet1d_flattening_forward.156} parent=0
    _
  %s6 = ssub.s32 1, %s4
  %s7 = scalar_select 0, %s6, %s4
  loop: start=0, step=1, limit=4
  $region2: #{unet1d_flattening_forward.156} parent=0 // loop_pre_header
    _
  $region3: #{unet1d_flattening_forward.156} parent=0 // loop_header
    %s9 = sphi 0, %s13
    %p10 = scmp.ge.s32.totalorder %s9, 4
    %s19 = sphi 0, %s21
    %s22 = sphi 0, %s19
    %s23 = sphi 0, %s22
    %s39 = sphi 0, %s23
    %s43 = sphi 0, %s43
    %s45 = sphi 0, %s43
    %s46 = sphi 0, %s45
    %s60 = sphi 0, %s46
    %s64 = sphi 0, %s64
    %s66 = sphi 0, %s64
    %s67 = sphi 0, %s66
    %s81 = sphi 0, %s67
    %s87 = sphi 0, %s89
    %s90 = sphi 0, %s87
    %s91 = sphi 0, %s90
    %s107 = sphi 0, %s91
  $region4: #{unet1d_flattening_forward.156} parent=0 // loop_header_branch
    %12 = sbr.rel (%p10) target = $region8
  $region5: #{unet1d_flattening_forward.156} parent=0 // loop_body
    %s14 = ssub.s32 %s9, 1
    %s15 = ssub.s32 %s9, 2
    %s16 = sadd.s32 %s9, 1
    %s17 = ssub.s32 %s9, %s16
    %p18 = scmp.eq.s32.totalorder %s17, 0
    %s20 = sadd.s32 %s19, 1
    %s21 = scalar_select %p18, %s19, %s20
    %p24 = pneg %p18
    %p25 = scmp.eq.s32.totalorder %s9, 1
    %p26 = por %p24, %p25
    %p27 = scmp.ne.s32.totalorder %s19, %s22
    %p28 = scmp.eq.s32.totalorder %s9, 0
    %p29 = por %p27, %p28
    %p30 = scmp.ne.s32.totalorder %s19, %s22
    %p31 = scmp.eq.s32.totalorder %s14, 1
    %p32 = por %p30, %p31
    %p33 = scmp.ne.s32.totalorder %s22, %s23
    %p34 = scmp.eq.s32.totalorder %s14, 0
    %p35 = por %p33, %p34
    %p36 = scmp.ne.s32.totalorder %s22, %s23
    %p37 = scmp.eq.s32.totalorder %s15, 1
    %p38 = por %p36, %p37
    %p40 = scmp.ne.s32.totalorder %s23, %s39
    %p41 = scmp.eq.s32.totalorder %s15, 0
    %p42 = por %p40, %p41
    %s44 = sadd.s32 %s43, 1
    %p47 = scmp.eq.s32.totalorder %s9, 1
    %p48 = scmp.ne.s32.totalorder %s43, %s45
    %p49 = scmp.eq.s32.totalorder %s9, 0
    %p50 = por %p48, %p49
    %p51 = scmp.ne.s32.totalorder %s43, %s45
    %p52 = scmp.eq.s32.totalorder %s14, 1
    %p53 = por %p51, %p52
    %p54 = scmp.ne.s32.totalorder %s45, %s46
    %p55 = scmp.eq.s32.totalorder %s14, 0
    %p56 = por %p54, %p55
    %p57 = scmp.ne.s32.totalorder %s45, %s46
    %p58 = scmp.eq.s32.totalorder %s15, 1
    %p59 = por %p57, %p58
    %p61 = scmp.ne.s32.totalorder %s46, %s60
    %p62 = scmp.eq.s32.totalorder %s15, 0
    %p63 = por %p61, %p62
    %s65 = sadd.s32 %s64, 1
    %p68 = scmp.eq.s32.totalorder %s9, 1
    %p69 = scmp.ne.s32.totalorder %s64, %s66
    %p70 = scmp.eq.s32.totalorder %s9, 0
    %p71 = por %p69, %p70
    %p72 = scmp.ne.s32.totalorder %s64, %s66
    %p73 = scmp.eq.s32.totalorder %s14, 1
    %p74 = por %p72, %p73
    %p75 = scmp.ne.s32.totalorder %s66, %s67
    %p76 = scmp.eq.s32.totalorder %s14, 0
    %p77 = por %p75, %p76
    %p78 = scmp.ne.s32.totalorder %s66, %s67
    %p79 = scmp.eq.s32.totalorder %s15, 1
    %p80 = por %p78, %p79
    %p82 = scmp.ne.s32.totalorder %s67, %s81
    %p83 = scmp.eq.s32.totalorder %s15, 0
    %p84 = por %p82, %p83
    %s85 = ssub.s32 %s9, %s16
    %p86 = scmp.eq.s32.totalorder %s85, 0
    %s88 = sadd.s32 %s87, 1
    %s89 = scalar_select %p86, %s87, %s88
    %p92 = pneg %p86
    %p93 = scmp.eq.s32.totalorder %s9, 1
    %p94 = por %p92, %p93
    %p95 = scmp.ne.s32.totalorder %s87, %s90
    %p96 = scmp.eq.s32.totalorder %s9, 0
    %p97 = por %p95, %p96
    %p98 = scmp.ne.s32.totalorder %s87, %s90
    %p99 = scmp.eq.s32.totalorder %s14, 1
    %p100 = por %p98, %p99
    %p101 = scmp.ne.s32.totalorder %s90, %s91
    %p102 = scmp.eq.s32.totalorder %s14, 0
    %p103 = por %p101, %p102
    %p104 = scmp.ne.s32.totalorder %s90, %s91
    %p105 = scmp.eq.s32.totalorder %s15, 1
    %p106 = por %p104, %p105
    %p108 = scmp.ne.s32.totalorder %s91, %s107
    %p109 = scmp.eq.s32.totalorder %s15, 0
    %p110 = por %p108, %p109
    %p111 = scmp.le.s32.totalorder 1, %s9
    %p112 = scmp.lt.s32.totalorder %s9, 3
    %p113 = pnand %p111, %p112
    %p114 = pneg %p113
    // Predicated region
    $region9: #{unet1d_flattening_forward.156} parent=5 // pred_check
      _
    $region10: #{unet1d_flattening_forward.156} parent=5 // pred_check_branch
      %116 = sbr.rel (%p113) target = $region12
    $region11: #{unet1d_flattening_forward.156} parent=5 // pred_region
      %s117 = ssub.s32 %s9, 1
      // Predicated region
      $region13: #{unet1d_flattening_forward.156} parent=11 // pred_check
        %p118 = pneg %p56
      $region14: #{unet1d_flattening_forward.156} parent=11 // pred_check_branch
        %120 = sbr.rel (%p118) target = $region16
      $region15: #{unet1d_flattening_forward.156} parent=11 // pred_region
        _
      $region16: #{unet1d_flattening_forward.156} parent=11 // pred_fallthru
        _
      // Predicated region
      $region17: #{unet1d_flattening_forward.156} parent=11 // pred_check
        %p121 = pneg %p77
      $region18: #{unet1d_flattening_forward.156} parent=11 // pred_check_branch
        %123 = sbr.rel (%p121) target = $region20
      $region19: #{unet1d_flattening_forward.156} parent=11 // pred_region
        _
      $region20: #{unet1d_flattening_forward.156} parent=11 // pred_fallthru
        _
    $region12: #{unet1d_flattening_forward.156} parent=5 // pred_fallthru
      _
    %p124 = scmp.lt.s32.totalorder %s9, 2
    // Predicated region
    $region21: #{unet1d_flattening_forward.156} parent=5 // pred_check
      %p125 = pneg %p124
    $region22: #{unet1d_flattening_forward.156} parent=5 // pred_check_branch
      %127 = sbr.rel (%p125) target = $region24
    $region23: #{unet1d_flattening_forward.156} parent=5 // pred_region
      // Predicated region
      $region25: #{unet1d_flattening_forward.156} parent=23 // pred_check
        %p128 = pneg %p29
      $region26: #{unet1d_flattening_forward.156} parent=23 // pred_check_branch
        %130 = sbr.rel (%p128) target = $region28
      $region27: #{unet1d_flattening_forward.156} parent=23 // pred_region
        %p131 = scmp.lt.s32.totalorder %s9, 1
        %s132 = scalar_select %p131, %s9, 1
        %s133 = smul.addr %s132, 2
        %s134 = smul.addr %s133, 4
        %s135 = scalar_lea.vmem %s0, %s134
      $region28: #{unet1d_flattening_forward.156} parent=23 // pred_fallthru
        _
    $region24: #{unet1d_flattening_forward.156} parent=5 // pred_fallthru
      _
    %p136 = scmp.le.s32.totalorder 1, %s9
    %p137 = scmp.lt.s32.totalorder %s9, 3
    %p138 = pnand %p136, %p137
    %p139 = pneg %p138
    // Predicated region
    $region29: #{unet1d_flattening_forward.156} parent=5 // pred_check
      _
    $region30: #{unet1d_flattening_forward.156} parent=5 // pred_check_branch
      %141 = sbr.rel (%p138) target = $region32
    $region31: #{unet1d_flattening_forward.156} parent=5 // pred_region
      %s142 = ssub.s32 %s9, 1
      %p143 = scmp.lt.s32.totalorder %s14, 1
      %s144 = scalar_select %p143, %s14, 1
      %s145 = smul.addr %s144, 2
      %s146 = smul.addr %s145, 4
      %s147 = scalar_lea.vmem %s0, %s146
      %p148 = pneg %p35
      %p149 = pneg %p32
      %p150 = pneg %p56
      %p151 = pneg %p53
      %p152 = pneg %p77
      %p153 = pneg %p74
      %p154 = pneg %p103
      %p155 = pneg %p100
      %p156 = scmp.lt.s32.totalorder %s14, 1
      %s157 = scalar_select %p156, %s14, 1
      %s158 = smul.addr %s157, 2
      %s159 = smul.addr %s158, 8
      %s160 = scalar_lea.vmem %s3, %s159
      %p161 = scmp.lt.s32.totalorder %s14, 1
      %s162 = scalar_select %p161, %s14, 1
      %s163 = smul.addr %s162, 2
      %s164 = smul.addr %s163, 4
      %s165 = scalar_lea.vmem %s0, %s164
      %p166 = scmp.lt.s32.totalorder %s14, 1
      %s167 = scalar_select %p166, %s14, 1
      %s168 = smul.addr %s167, 2
      %s169 = smul.addr %s168, 8
      %s170 = scalar_lea.vmem %s3, %s169
      %v172 = vld [vmem:[%s165] sm:$0xf]
      %v173 = vld [vmem:[%s165 + $0x4] sm:$0x3]
      %v174 = vld [vmem:[%s1] sm:$0xf]
      %v175 = vld [vmem:[%s1 + $0x4] sm:$0xf]
      %v176 = vld [vmem:[%s1 + $0x8] sm:$0xf]
      %v177 = vld [vmem:[%s1 + $0xc] sm:$0xf]
      %v178 = vld [vmem:[%s1 + $0x10] sm:$0xf]
      %v179 = vld [vmem:[%s1 + $0x14] sm:$0xf]
      %v180 = vld [vmem:[%s1 + $0x18] sm:$0xf]
      %v181 = vld [vmem:[%s1 + $0x1c] sm:$0xf]
      %v182 = vld [vmem:[%s1 + $0x20] sm:$0xf]
      %v183 = vld [vmem:[%s165 + $0x4] sm:$0x7]
      %s184 = scalar_lea.vmem %s1, 36
      %v185 = vld [vmem:[%s184] sm:$0xf]
      %v186 = vld [vmem:[%s184 + $0x4] sm:$0xf]
      %v187 = vld [vmem:[%s184 + $0x8] sm:$0xf]
      %v188 = vld [vmem:[%s184 + $0xc] sm:$0xf]
      %v189 = vld [vmem:[%s184 + $0x10] sm:$0xf]
      %v190 = vld [vmem:[%s184 + $0x14] sm:$0xf]
      %v191 = vld [vmem:[%s184 + $0x18] sm:$0xf]
      %v192 = vld [vmem:[%s184 + $0x1c] sm:$0xf]
      %v193 = vld [vmem:[%s184 + $0x20] sm:$0xf]
      %v196 = vunpack.c.l.b16 %v172
      %v197 = vunpack.c.l.b16 %v183
      %v198 = vpack.c.b16 %v197, %v196
      %v200 = vshrl.u32 %v198, 16
      %v202 = vshll.u32 %v198, 16
      %v204 = vrot.slane %v202, 1
      %v205 = vor.u32 %v200, %v204
      %v215 = vunpack.c.l.b16 %v185
      %v216 = vunpack.c.l.b16 %v186
      %v217 = vunpack.c.l.b16 %v187
      %v218 = vunpack.c.l.b16 %v188
      %v219 = vunpack.c.l.b16 %v189
      %v220 = vunpack.c.l.b16 %v190
      %v221 = vunpack.c.l.b16 %v191
      %v222 = vunpack.c.l.b16 %v192
      %v223 = vunpack.c.l.b16 %v193
      %v224 = vpack.c.b16 %v216, %v215
      %v225 = vpack.c.b16 %v218, %v217
      %v226 = vpack.c.b16 %v220, %v219
      %v227 = vpack.c.b16 %v222, %v221
      %v228 = vpack.c.b16 %v223, %v223
      %vm233 = vcmask 588800
      %v235 = vsel %vm233, %v205, 0
      %vm237 = vcmask 1043456
      %v239 = vsel %vm237, %v228, 0
      %241 = vmatprep.subr.bf16.mxu0 0
      %242 = vmatpush1.bf16.msra.mxu0 %v224
      %243 = vmatprep.subr.bf16.mxu0 0
      %244 = vmatpush1.bf16.msra.mxu0 %v225
      %245 = vmatprep.subr.bf16.mxu0 0
      %246 = vmatpush1.bf16.msra.mxu0 %v226
      %247 = vmatprep.subr.bf16.mxu0 0
      %248 = vmatpush1.bf16.msra.mxu0 %v227
      %249 = vmatprep.subr.bf16.mxu0 0
      %250 = vmatpush1.bf16.msra.mxu0 %v239
      %251 = vmatprep.subr.bf16.mxu0 0
      %252 = vmatpush1.bf16.msra.mxu0 0
      %253 = vmatprep.subr.bf16.mxu0 0
      %254 = vmatpush1.bf16.msra.mxu0 0
      %255 = vmatprep.subr.bf16.mxu0 0
      %256 = vmatpush1.bf16.msra.mxu0 0
      %257 = vmatprep.subr.bf16.mxu0 0
      %258 = vmatpush1.bf16.msra.mxu0 0
      %259 = vmatprep.subr.bf16.mxu0 0
      %260 = vmatpush1.bf16.msra.mxu0 0
      %261 = vmatprep.subr.bf16.mxu0 0
      %262 = vmatpush1.bf16.msra.mxu0 0
      %263 = vmatprep.subr.bf16.mxu0 0
      %264 = vmatpush1.bf16.msra.mxu0 0
      %265 = vmatprep.subr.bf16.mxu0 0
      %266 = vmatpush1.bf16.msra.mxu0 0
      %267 = vmatprep.subr.bf16.mxu0 0
      %268 = vmatpush1.bf16.msra.mxu0 0
      %269 = vmatprep.subr.bf16.mxu0 0
      %270 = vmatpush1.bf16.msra.mxu0 0
      %271 = vmatprep.subr.bf16.mxu0 0
      %272 = vmatpush1.bf16.msra.mxu0 0
      %273 = vmatprep.mubr.bf16.mxu0 0
      %274 = vmatmul.mubr.bf16.gmra.mrb[0].mxu0 %v235
      %v275 = vpop.f32.mrb[0].mxu0
      %v276 = vadd.f32 0.0, %v275
      %v277 = vpop.f32.mrb[0].mxu0
      %v278 = vpop.f32.mrb[0].mxu0
      %v279 = vadd.f32 0.0, %v278
      %v280 = vpop.f32.mrb[0].mxu0
      %281 = vdwg.mxu0
      %v283 = vunpack.c.l.b16 %v173
      %v284 = vpack.c.b16 %v283, %v196
      %v294 = vunpack.c.l.b16 %v174
      %v295 = vunpack.c.l.b16 %v175
      %v296 = vunpack.c.l.b16 %v176
      %v297 = vunpack.c.l.b16 %v177
      %v298 = vunpack.c.l.b16 %v178
      %v299 = vunpack.c.l.b16 %v179
      %v300 = vunpack.c.l.b16 %v180
      %v301 = vunpack.c.l.b16 %v181
      %v302 = vunpack.c.l.b16 %v182
      %v303 = vpack.c.b16 %v295, %v294
      %v304 = vpack.c.b16 %v297, %v296
      %v305 = vpack.c.b16 %v299, %v298
      %v306 = vpack.c.b16 %v301, %v300
      %v307 = vpack.c.b16 %v302, %v302
      %v313 = vsel %vm233, %v284, 0
      %v316 = vsel %vm237, %v307, 0
      %318 = vmatprep.subr.bf16.mxu0 0
      %319 = vmatpush1.bf16.msra.mxu0 %v303
      %320 = vmatprep.subr.bf16.mxu0 0
      %321 = vmatpush1.bf16.msra.mxu0 %v304
      %322 = vmatprep.subr.bf16.mxu0 0
      %323 = vmatpush1.bf16.msra.mxu0 %v305
      %324 = vmatprep.subr.bf16.mxu0 0
      %325 = vmatpush1.bf16.msra.mxu0 %v306
      %326 = vmatprep.subr.bf16.mxu0 0
      %327 = vmatpush1.bf16.msra.mxu0 %v316
      %328 = vmatprep.subr.bf16.mxu0 0
      %329 = vmatpush1.bf16.msra.mxu0 0
      %330 = vmatprep.subr.bf16.mxu0 0
      %331 = vmatpush1.bf16.msra.mxu0 0
      %332 = vmatprep.subr.bf16.mxu0 0
      %333 = vmatpush1.bf16.msra.mxu0 0
      %334 = vmatprep.subr.bf16.mxu0 0
      %335 = vmatpush1.bf16.msra.mxu0 0
      %336 = vmatprep.subr.bf16.mxu0 0
      %337 = vmatpush1.bf16.msra.mxu0 0
      %338 = vmatprep.subr.bf16.mxu0 0
      %339 = vmatpush1.bf16.msra.mxu0 0
      %340 = vmatprep.subr.bf16.mxu0 0
      %341 = vmatpush1.bf16.msra.mxu0 0
      %342 = vmatprep.subr.bf16.mxu0 0
      %343 = vmatpush1.bf16.msra.mxu0 0
      %344 = vmatprep.subr.bf16.mxu0 0
      %345 = vmatpush1.bf16.msra.mxu0 0
      %346 = vmatprep.subr.bf16.mxu0 0
      %347 = vmatpush1.bf16.msra.mxu0 0
      %348 = vmatprep.subr.bf16.mxu0 0
      %349 = vmatpush1.bf16.msra.mxu0 0
      %350 = vmatprep.mubr.bf16.mxu0 0
      %351 = vmatmul.mubr.bf16.gmra.mrb[0].mxu0 %v313
      %v352 = vpop.f32.mrb[0].mxu0
      %v353 = vadd.f32 %v276, %v352
      %v354 = vpop.f32.mrb[0].mxu0
      %v355 = vpop.f32.mrb[0].mxu0
      %v356 = vadd.f32 %v279, %v355
      %v357 = vpop.f32.mrb[0].mxu0
      %358 = vdwg.mxu0
      %v359 = vld [vmem:[%s165] sm:$0xe]
      %s360 = scalar_lea.vmem %s1, 72
      %v361 = vld [vmem:[%s360] sm:$0xf]
      %v362 = vld [vmem:[%s360 + $0x4] sm:$0xf]
      %v363 = vld [vmem:[%s360 + $0x8] sm:$0xf]
      %v364 = vld [vmem:[%s360 + $0xc] sm:$0xf]
      %v365 = vld [vmem:[%s360 + $0x10] sm:$0xf]
      %v366 = vld [vmem:[%s360 + $0x14] sm:$0xf]
      %v367 = vld [vmem:[%s360 + $0x18] sm:$0xf]
      %v368 = vld [vmem:[%s360 + $0x1c] sm:$0xf]
      %v369 = vld [vmem:[%s360 + $0x20] sm:$0xf]
      %v371 = vunpack.c.l.b16 %v359
      %v372 = vpack.c.b16 %v197, %v371
      %v373 = vrot.slane %v372, 1
      %v383 = vunpack.c.l.b16 %v361
      %v384 = vunpack.c.l.b16 %v362
      %v385 = vunpack.c.l.b16 %v363
      %v386 = vunpack.c.l.b16 %v364
      %v387 = vunpack.c.l.b16 %v365
      %v388 = vunpack.c.l.b16 %v366
      %v389 = vunpack.c.l.b16 %v367
      %v390 = vunpack.c.l.b16 %v368
      %v391 = vunpack.c.l.b16 %v369
      %v392 = vpack.c.b16 %v384, %v383
      %v393 = vpack.c.b16 %v386, %v385
      %v394 = vpack.c.b16 %v388, %v387
      %v395 = vpack.c.b16 %v390, %v389
      %v396 = vpack.c.b16 %v391, %v391
      %v402 = vsel %vm233, %v373, 0
      %v405 = vsel %vm237, %v396, 0
      %407 = vmatprep.subr.bf16.mxu0 0
      %408 = vmatpush1.bf16.msra.mxu0 %v392
      %409 = vmatprep.subr.bf16.mxu0 0
      %410 = vmatpush1.bf16.msra.mxu0 %v393
      %411 = vmatprep.subr.bf16.mxu0 0
      %412 = vmatpush1.bf16.msra.mxu0 %v394
      %413 = vmatprep.subr.bf16.mxu0 0
      %414 = vmatpush1.bf16.msra.mxu0 %v395
      %415 = vmatprep.subr.bf16.mxu0 0
      %416 = vmatpush1.bf16.msra.mxu0 %v405
      %417 = vmatprep.subr.bf16.mxu0 0
      %418 = vmatpush1.bf16.msra.mxu0 0
      %419 = vmatprep.subr.bf16.mxu0 0
      %420 = vmatpush1.bf16.msra.mxu0 0
      %421 = vmatprep.subr.bf16.mxu0 0
      %422 = vmatpush1.bf16.msra.mxu0 0
      %423 = vmatprep.subr.bf16.mxu0 0
      %424 = vmatpush1.bf16.msra.mxu0 0
      %425 = vmatprep.subr.bf16.mxu0 0
      %426 = vmatpush1.bf16.msra.mxu0 0
      %427 = vmatprep.subr.bf16.mxu0 0
      %428 = vmatpush1.bf16.msra.mxu0 0
      %429 = vmatprep.subr.bf16.mxu0 0
      %430 = vmatpush1.bf16.msra.mxu0 0
      %431 = vmatprep.subr.bf16.mxu0 0
      %432 = vmatpush1.bf16.msra.mxu0 0
      %433 = vmatprep.subr.bf16.mxu0 0
      %434 = vmatpush1.bf16.msra.mxu0 0
      %435 = vmatprep.subr.bf16.mxu0 0
      %436 = vmatpush1.bf16.msra.mxu0 0
      %437 = vmatprep.subr.bf16.mxu0 0
      %438 = vmatpush1.bf16.msra.mxu0 0
      %439 = vmatprep.mubr.bf16.mxu0 0
      %440 = vmatmul.mubr.bf16.gmra.mrb[0].mxu0 %v402
      %v441 = vpop.f32.mrb[0].mxu0
      %v442 = vadd.f32 0.0, %v441
      %v443 = vpop.f32.mrb[0].mxu0
      %v444 = vpop.f32.mrb[0].mxu0
      %v445 = vadd.f32 0.0, %v444
      %v446 = vpop.f32.mrb[0].mxu0
      %447 = vdwg.mxu0
      %v448 = vadd.f32 %v353, %v442
      %v449 = vadd.f32 %v356, %v445
      %v450 = vld [vmem:[%s2] sm:$0x1]
      %v452 = vlaneseq
      %v453 = vshrl.u32 %v452, 7
      %v454 = vsub.s32 0, %v453
      %v455 = vrot.slane %v450, %v454
      %v457 = vadd.f32 %v448, %v455
      %v458 = vadd.f32 %v449, %v455
      %vm459 = vcmask 392192
      %460 = vst.msk [vmem:[%s170] sm:$0xff] %vm459, %v457
      %vm461 = vcmask 388096
      %462 = vst.msk [vmem:[%s170 + $0x8] sm:$0xf] %vm461, %v458
      %p463 = scmp.lt.s32.totalorder %s14, 1
      %s464 = scalar_select %p463, %s14, 1
      %s465 = smul.addr %s464, 2
      %s466 = smul.addr %s465, 8
      %s467 = scalar_lea.vmem %s3, %s466
      // Predicated region
      $region33: #{unet1d_flattening_forward.156} parent=31 // pred_check
        %p468 = pneg %p100
      $region34: #{unet1d_flattening_forward.156} parent=31 // pred_check_branch
        %470 = sbr.rel (%p468) target = $region36
      $region35: #{unet1d_flattening_forward.156} parent=31 // pred_region
        _
      $region36: #{unet1d_flattening_forward.156} parent=31 // pred_fallthru
        _
    $region32: #{unet1d_flattening_forward.156} parent=5 // pred_fallthru
      _
    %p471 = scmp.le.s32.totalorder 2, %s9
    // Predicated region
    $region37: #{unet1d_flattening_forward.156} parent=5 // pred_check
      %p472 = pneg %p471
    $region38: #{unet1d_flattening_forward.156} parent=5 // pred_check_branch
      %474 = sbr.rel (%p472) target = $region40
    $region39: #{unet1d_flattening_forward.156} parent=5 // pred_region
      %s475 = ssub.s32 %s9, 2
      // Predicated region
      $region41: #{unet1d_flattening_forward.156} parent=39 // pred_check
        %p476 = pneg %p106
      $region42: #{unet1d_flattening_forward.156} parent=39 // pred_check_branch
        %478 = sbr.rel (%p476) target = $region44
      $region43: #{unet1d_flattening_forward.156} parent=39 // pred_region
        %p479 = scmp.lt.s32.totalorder %s15, 1
        %s480 = scalar_select %p479, %s15, 1
        %s481 = smul.addr %s480, 2
        %s482 = smul.addr %s481, 8
        %s483 = scalar_lea.vmem %s3, %s482
      $region44: #{unet1d_flattening_forward.156} parent=39 // pred_fallthru
        _
    $region40: #{unet1d_flattening_forward.156} parent=5 // pred_fallthru
      _
  $region6: #{unet1d_flattening_forward.156} parent=0 // loop_footer
    %s13 = sadd.s32 1, %s9
  $region7: #{unet1d_flattening_forward.156} parent=0 // loop_footer_branch
    %8 = sbr.rel target = $region3
  $region8: #{unet1d_flattening_forward.156} parent=0 // loop_exit
    _

// kernel: unet1d_flattening_forward.177
$region0: #{unet1d_flattening_forward.177}
  #allocation0 [shape = 'u32[]', space=smem, size = 0x4, offset = 0x4, fixed_abs, tag = 'smem constant byte address 0x4 - core index']
  #allocation1 [shape = 'u32[144,128]{1,0:T(1,128)}', space=vmem, size = 0x12000, scoped, tag = 'internal scratch']
  %s0 = inlined_call_operand.vmem [shape: bf16[2,26,48], index: 0, kind: input, shape index: {}]
  %s1 = inlined_call_operand.vmem [shape: bf16[3,48,24], index: 1, kind: input, shape index: {}]
  %s2 = inlined_call_operand.vmem [shape: f32[1,24], index: 2, kind: input, shape index: {}]
  %s3 = inlined_call_operand.vmem [shape: f32[2,24,24], index: 3, kind: output, shape index: {}]
  %s4 = sld [smem:[#allocation0]]
  $region45: #{unet1d_flattening_forward.177} parent=0
    _
  %s6 = ssub.s32 1, %s4
  %s7 = scalar_select 0, %s6, %s4
  loop: start=0, step=1, limit=4
  $region2: #{unet1d_flattening_forward.177} parent=0 // loop_pre_header
    _
  $region3: #{unet1d_flattening_forward.177} parent=0 // loop_header
    %s9 = sphi 0, %s13
    %p10 = scmp.ge.s32.totalorder %s9, 4
    %s19 = sphi 0, %s21
    %s22 = sphi 0, %s19
    %s23 = sphi 0, %s22
    %s39 = sphi 0, %s23
    %s43 = sphi 0, %s43
    %s45 = sphi 0, %s43
    %s46 = sphi 0, %s45
    %s60 = sphi 0, %s46
    %s64 = sphi 0, %s64
    %s66 = sphi 0, %s64
    %s67 = sphi 0, %s66
    %s81 = sphi 0, %s67
    %s87 = sphi 0, %s89
    %s90 = sphi 0, %s87
    %s91 = sphi 0, %s90
    %s107 = sphi 0, %s91
  $region4: #{unet1d_flattening_forward.177} parent=0 // loop_header_branch
    %12 = sbr.rel (%p10) target = $region8
  $region5: #{unet1d_flattening_forward.177} parent=0 // loop_body
    %s14 = ssub.s32 %s9, 1
    %s15 = ssub.s32 %s9, 2
    %s16 = sadd.s32 %s9, 1
    %s17 = ssub.s32 %s9, %s16
    %p18 = scmp.eq.s32.totalorder %s17, 0
    %s20 = sadd.s32 %s19, 1
    %s21 = scalar_select %p18, %s19, %s20
    %p24 = pneg %p18
    %p25 = scmp.eq.s32.totalorder %s9, 1
    %p26 = por %p24, %p25
    %p27 = scmp.ne.s32.totalorder %s19, %s22
    %p28 = scmp.eq.s32.totalorder %s9, 0
    %p29 = por %p27, %p28
    %p30 = scmp.ne.s32.totalorder %s19, %s22
    %p31 = scmp.eq.s32.totalorder %s14, 1
    %p32 = por %p30, %p31
    %p33 = scmp.ne.s32.totalorder %s22, %s23
    %p34 = scmp.eq.s32.totalorder %s14, 0
    %p35 = por %p33, %p34
    %p36 = scmp.ne.s32.totalorder %s22, %s23
    %p37 = scmp.eq.s32.totalorder %s15, 1
    %p38 = por %p36, %p37
    %p40 = scmp.ne.s32.totalorder %s23, %s39
    %p41 = scmp.eq.s32.totalorder %s15, 0
    %p42 = por %p40, %p41
    %s44 = sadd.s32 %s43, 1
    %p47 = scmp.eq.s32.totalorder %s9, 1
    %p48 = scmp.ne.s32.totalorder %s43, %s45
    %p49 = scmp.eq.s32.totalorder %s9, 0
    %p50 = por %p48, %p49
    %p51 = scmp.ne.s32.totalorder %s43, %s45
    %p52 = scmp.eq.s32.totalorder %s14, 1
    %p53 = por %p51, %p52
    %p54 = scmp.ne.s32.totalorder %s45, %s46
    %p55 = scmp.eq.s32.totalorder %s14, 0
    %p56 = por %p54, %p55
    %p57 = scmp.ne.s32.totalorder %s45, %s46
    %p58 = scmp.eq.s32.totalorder %s15, 1
    %p59 = por %p57, %p58
    %p61 = scmp.ne.s32.totalorder %s46, %s60
    %p62 = scmp.eq.s32.totalorder %s15, 0
    %p63 = por %p61, %p62
    %s65 = sadd.s32 %s64, 1
    %p68 = scmp.eq.s32.totalorder %s9, 1
    %p69 = scmp.ne.s32.totalorder %s64, %s66
    %p70 = scmp.eq.s32.totalorder %s9, 0
    %p71 = por %p69, %p70
    %p72 = scmp.ne.s32.totalorder %s64, %s66
    %p73 = scmp.eq.s32.totalorder %s14, 1
    %p74 = por %p72, %p73
    %p75 = scmp.ne.s32.totalorder %s66, %s67
    %p76 = scmp.eq.s32.totalorder %s14, 0
    %p77 = por %p75, %p76
    %p78 = scmp.ne.s32.totalorder %s66, %s67
    %p79 = scmp.eq.s32.totalorder %s15, 1
    %p80 = por %p78, %p79
    %p82 = scmp.ne.s32.totalorder %s67, %s81
    %p83 = scmp.eq.s32.totalorder %s15, 0
    %p84 = por %p82, %p83
    %s85 = ssub.s32 %s9, %s16
    %p86 = scmp.eq.s32.totalorder %s85, 0
    %s88 = sadd.s32 %s87, 1
    %s89 = scalar_select %p86, %s87, %s88
    %p92 = pneg %p86
    %p93 = scmp.eq.s32.totalorder %s9, 1
    %p94 = por %p92, %p93
    %p95 = scmp.ne.s32.totalorder %s87, %s90
    %p96 = scmp.eq.s32.totalorder %s9, 0
    %p97 = por %p95, %p96
    %p98 = scmp.ne.s32.totalorder %s87, %s90
    %p99 = scmp.eq.s32.totalorder %s14, 1
    %p100 = por %p98, %p99
    %p101 = scmp.ne.s32.totalorder %s90, %s91
    %p102 = scmp.eq.s32.totalorder %s14, 0
    %p103 = por %p101, %p102
    %p104 = scmp.ne.s32.totalorder %s90, %s91
    %p105 = scmp.eq.s32.totalorder %s15, 1
    %p106 = por %p104, %p105
    %p108 = scmp.ne.s32.totalorder %s91, %s107
    %p109 = scmp.eq.s32.totalorder %s15, 0
    %p110 = por %p108, %p109
    %p111 = scmp.le.s32.totalorder 1, %s9
    %p112 = scmp.lt.s32.totalorder %s9, 3
    %p113 = pnand %p111, %p112
    %p114 = pneg %p113
    // Predicated region
    $region9: #{unet1d_flattening_forward.177} parent=5 // pred_check
      _
    $region10: #{unet1d_flattening_forward.177} parent=5 // pred_check_branch
      %116 = sbr.rel (%p113) target = $region12
    $region11: #{unet1d_flattening_forward.177} parent=5 // pred_region
      %s117 = ssub.s32 %s9, 1
      // Predicated region
      $region13: #{unet1d_flattening_forward.177} parent=11 // pred_check
        %p118 = pneg %p56
      $region14: #{unet1d_flattening_forward.177} parent=11 // pred_check_branch
        %120 = sbr.rel (%p118) target = $region16
      $region15: #{unet1d_flattening_forward.177} parent=11 // pred_region
        _
      $region16: #{unet1d_flattening_forward.177} parent=11 // pred_fallthru
        _
      // Predicated region
      $region17: #{unet1d_flattening_forward.177} parent=11 // pred_check
        %p121 = pneg %p77
      $region18: #{unet1d_flattening_forward.177} parent=11 // pred_check_branch
        %123 = sbr.rel (%p121) target = $region20
      $region19: #{unet1d_flattening_forward.177} parent=11 // pred_region
        _
      $region20: #{unet1d_flattening_forward.177} parent=11 // pred_fallthru
        _
    $region12: #{unet1d_flattening_forward.177} parent=5 // pred_fallthru
      _
    %p124 = scmp.lt.s32.totalorder %s9, 2
    // Predicated region
    $region21: #{unet1d_flattening_forward.177} parent=5 // pred_check
      %p125 = pneg %p124
    $region22: #{unet1d_flattening_forward.177} parent=5 // pred_check_branch
      %127 = sbr.rel (%p125) target = $region24
    $region23: #{unet1d_flattening_forward.177} parent=5 // pred_region
      // Predicated region
      $region25: #{unet1d_flattening_forward.177} parent=23 // pred_check
        %p128 = pneg %p29
      $region26: #{unet1d_flattening_forward.177} parent=23 // pred_check_branch
        %130 = sbr.rel (%p128) target = $region28
      $region27: #{unet1d_flattening_forward.177} parent=23 // pred_region
        %p131 = scmp.lt.s32.totalorder %s9, 1
        %s132 = scalar_select %p131, %s9, 1
        %s133 = smul.addr %s132, 4
        %s134 = smul.addr %s133, 4
        %s135 = scalar_lea.vmem %s0, %s134
      $region28: #{unet1d_flattening_forward.177} parent=23 // pred_fallthru
        _
    $region24: #{unet1d_flattening_forward.177} parent=5 // pred_fallthru
      _
    %p136 = scmp.le.s32.totalorder 1, %s9
    %p137 = scmp.lt.s32.totalorder %s9, 3
    %p138 = pnand %p136, %p137
    %p139 = pneg %p138
    // Predicated region
    $region29: #{unet1d_flattening_forward.177} parent=5 // pred_check
      _
    $region30: #{unet1d_flattening_forward.177} parent=5 // pred_check_branch
      %141 = sbr.rel (%p138) target = $region32
    $region31: #{unet1d_flattening_forward.177} parent=5 // pred_region
      %s142 = ssub.s32 %s9, 1
      %p143 = scmp.lt.s32.totalorder %s14, 1
      %s144 = scalar_select %p143, %s14, 1
      %s145 = smul.addr %s144, 4
      %s146 = smul.addr %s145, 4
      %s147 = scalar_lea.vmem %s0, %s146
      %p148 = pneg %p35
      %p149 = pneg %p32
      %p150 = pneg %p56
      %p151 = pneg %p53
      %p152 = pneg %p77
      %p153 = pneg %p74
      %p154 = pneg %p103
      %p155 = pneg %p100
      %p156 = scmp.lt.s32.totalorder %s14, 1
      %s157 = scalar_select %p156, %s14, 1
      %s158 = smul.addr %s157, 3
      %s159 = smul.addr %s158, 8
      %s160 = scalar_lea.vmem %s3, %s159
      %p161 = scmp.lt.s32.totalorder %s14, 1
      %s162 = scalar_select %p161, %s14, 1
      %s163 = smul.addr %s162, 4
      %s164 = smul.addr %s163, 4
      %s165 = scalar_lea.vmem %s0, %s164
      %p166 = scmp.lt.s32.totalorder %s14, 1
      %s167 = scalar_select %p166, %s14, 1
      %s168 = smul.addr %s167, 3
      %s169 = smul.addr %s168, 8
      %s170 = scalar_lea.vmem %s3, %s169
      %v172 = vld [vmem:[%s165] sm:$0xf]
      %v173 = vld [vmem:[%s165 + $0x4] sm:$0xf]
      %v174 = vld [vmem:[%s165 + $0x8] sm:$0xf]
      %v175 = vld [vmem:[%s1] sm:$0xf]
      %v176 = vld [vmem:[%s1 + $0x4] sm:$0xf]
      %v177 = vld [vmem:[%s1 + $0x8] sm:$0xf]
      %v178 = vld [vmem:[%s1 + $0xc] sm:$0xf]
      %v179 = vld [vmem:[%s1 + $0x10] sm:$0xf]
      %v180 = vld [vmem:[%s1 + $0x14] sm:$0xf]
      %v181 = vld [vmem:[%s165 + $0xc] sm:$0x1]
      %s182 = scalar_lea.vmem %s1, 24
      %v183 = vld [vmem:[%s182] sm:$0xf]
      %v184 = vld [vmem:[%s182 + $0x4] sm:$0xf]
      %v185 = vld [vmem:[%s182 + $0x8] sm:$0xf]
      %v186 = vld [vmem:[%s182 + $0xc] sm:$0xf]
      %v187 = vld [vmem:[%s182 + $0x10] sm:$0xf]
      %v188 = vld [vmem:[%s182 + $0x14] sm:$0xf]
      %v193 = vunpack.c.l.b16 %v172
      %v194 = vunpack.c.l.b16 %v173
      %v195 = vunpack.c.l.b16 %v174
      %v196 = vunpack.c.l.b16 %v181
      %v197 = vpack.c.b16 %v194, %v193
      %v198 = vpack.c.b16 %v196, %v195
      %vm199 = vsmask.f32 7424
      %v201 = vshrl.u32 %v197, 16
      %v203 = vshll.u32 %v197, 16
      %v205 = vrot.slane %v203, 1
      %v206 = vor.u32 %v201, %v205
      %v208 = vshll.u32 %v198, 16
      %v210 = vrot.slane %v208, 1
      %v211 = vsel %vm199, %v206, %v210
      %v212 = vshrl.u32 %v198, 16
      %v214 = vor.u32 %v212, %v210
      %v221 = vunpack.c.l.b16 %v183
      %v222 = vunpack.c.l.b16 %v184
      %v223 = vunpack.c.l.b16 %v185
      %v224 = vunpack.c.l.b16 %v186
      %v225 = vunpack.c.l.b16 %v187
      %v226 = vunpack.c.l.b16 %v188
      %v227 = vpack.c.b16 %v222, %v221
      %v228 = vpack.c.b16 %v224, %v223
      %v229 = vpack.c.b16 %v226, %v225
      %vm233 = vcmask 392192
      %v235 = vsel %vm233, %v211, 0
      %v238 = vsel %vm233, %v214, 0
      %240 = vmatprep.subr.bf16.mxu0 0
      %241 = vmatpush1.bf16.msra.mxu0 %v227
      %242 = vmatprep.subr.bf16.mxu0 0
      %243 = vmatpush1.bf16.msra.mxu0 %v228
      %244 = vmatprep.subr.bf16.mxu0 0
      %245 = vmatpush1.bf16.msra.mxu0 %v229
      %246 = vmatprep.subr.bf16.mxu0 0
      %247 = vmatpush1.bf16.msra.mxu0 0
      %248 = vmatprep.subr.bf16.mxu0 0
      %249 = vmatpush1.bf16.msra.mxu0 0
      %250 = vmatprep.subr.bf16.mxu0 0
      %251 = vmatpush1.bf16.msra.mxu0 0
      %252 = vmatprep.subr.bf16.mxu0 0
      %253 = vmatpush1.bf16.msra.mxu0 0
      %254 = vmatprep.subr.bf16.mxu0 0
      %255 = vmatpush1.bf16.msra.mxu0 0
      %256 = vmatprep.subr.bf16.mxu0 0
      %257 = vmatpush1.bf16.msra.mxu0 0
      %258 = vmatprep.subr.bf16.mxu0 0
      %259 = vmatpush1.bf16.msra.mxu0 0
      %260 = vmatprep.subr.bf16.mxu0 0
      %261 = vmatpush1.bf16.msra.mxu0 0
      %262 = vmatprep.subr.bf16.mxu0 0
      %263 = vmatpush1.bf16.msra.mxu0 0
      %264 = vmatprep.subr.bf16.mxu0 0
      %265 = vmatpush1.bf16.msra.mxu0 0
      %266 = vmatprep.subr.bf16.mxu0 0
      %267 = vmatpush1.bf16.msra.mxu0 0
      %268 = vmatprep.subr.bf16.mxu0 0
      %269 = vmatpush1.bf16.msra.mxu0 0
      %270 = vmatprep.subr.bf16.mxu0 0
      %271 = vmatpush1.bf16.msra.mxu0 0
      %272 = vmatprep.mubr.bf16.mxu0 0
      %273 = vmatmul.mubr.bf16.gmra.mrb[0].mxu0 %v235
      %v274 = vpop.f32.mrb[0].mxu0
      %v275 = vadd.f32 0.0, %v274
      %v276 = vpop.f32.mrb[0].mxu0
      %v277 = vpop.f32.mrb[0].mxu0
      %v278 = vadd.f32 0.0, %v277
      %v279 = vpop.f32.mrb[0].mxu0
      %280 = vmatprep.mubr.bf16.mxu0 0
      %281 = vmatmul.mubr.bf16.gmra.mrb[0].mxu0 %v238
      %v282 = vpop.f32.mrb[0].mxu0
      %v283 = vadd.f32 0.0, %v282
      %v284 = vpop.f32.mrb[0].mxu0
      %v285 = vpop.f32.mrb[0].mxu0
      %v286 = vpop.f32.mrb[0].mxu0
      %287 = vdwg.mxu0
      %v288 = vpack.c.b16 %v195, %v195
      %v295 = vunpack.c.l.b16 %v175
      %v296 = vunpack.c.l.b16 %v176
      %v297 = vunpack.c.l.b16 %v177
      %v298 = vunpack.c.l.b16 %v178
      %v299 = vunpack.c.l.b16 %v179
      %v300 = vunpack.c.l.b16 %v180
      %v301 = vpack.c.b16 %v296, %v295
      %v302 = vpack.c.b16 %v298, %v297
      %v303 = vpack.c.b16 %v300, %v299
      %v307 = vsel %vm233, %v197, 0
      %v310 = vsel %vm233, %v288, 0
      %312 = vmatprep.subr.bf16.mxu0 0
      %313 = vmatpush1.bf16.msra.mxu0 %v301
      %314 = vmatprep.subr.bf16.mxu0 0
      %315 = vmatpush1.bf16.msra.mxu0 %v302
      %316 = vmatprep.subr.bf16.mxu0 0
      %317 = vmatpush1.bf16.msra.mxu0 %v303
      %318 = vmatprep.subr.bf16.mxu0 0
      %319 = vmatpush1.bf16.msra.mxu0 0
      %320 = vmatprep.subr.bf16.mxu0 0
      %321 = vmatpush1.bf16.msra.mxu0 0
      %322 = vmatprep.subr.bf16.mxu0 0
      %323 = vmatpush1.bf16.msra.mxu0 0
      %324 = vmatprep.subr.bf16.mxu0 0
      %325 = vmatpush1.bf16.msra.mxu0 0
      %326 = vmatprep.subr.bf16.mxu0 0
      %327 = vmatpush1.bf16.msra.mxu0 0
      %328 = vmatprep.subr.bf16.mxu0 0
      %329 = vmatpush1.bf16.msra.mxu0 0
      %330 = vmatprep.subr.bf16.mxu0 0
      %331 = vmatpush1.bf16.msra.mxu0 0
      %332 = vmatprep.subr.bf16.mxu0 0
      %333 = vmatpush1.bf16.msra.mxu0 0
      %334 = vmatprep.subr.bf16.mxu0 0
      %335 = vmatpush1.bf16.msra.mxu0 0
      %336 = vmatprep.subr.bf16.mxu0 0
      %337 = vmatpush1.bf16.msra.mxu0 0
      %338 = vmatprep.subr.bf16.mxu0 0
      %339 = vmatpush1.bf16.msra.mxu0 0
      %340 = vmatprep.subr.bf16.mxu0 0
      %341 = vmatpush1.bf16.msra.mxu0 0
      %342 = vmatprep.subr.bf16.mxu0 0
      %343 = vmatpush1.bf16.msra.mxu0 0
      %344 = vmatprep.mubr.bf16.mxu0 0
      %345 = vmatmul.mubr.bf16.gmra.mrb[0].mxu0 %v307
      %v346 = vpop.f32.mrb[0].mxu0
      %v347 = vadd.f32 %v275, %v346
      %v348 = vpop.f32.mrb[0].mxu0
      %v349 = vpop.f32.mrb[0].mxu0
      %v350 = vadd.f32 %v278, %v349
      %v351 = vpop.f32.mrb[0].mxu0
      %352 = vmatprep.mubr.bf16.mxu0 0
      %353 = vmatmul.mubr.bf16.gmra.mrb[0].mxu0 %v310
      %v354 = vpop.f32.mrb[0].mxu0
      %v355 = vadd.f32 %v283, %v354
      %v356 = vpop.f32.mrb[0].mxu0
      %v357 = vpop.f32.mrb[0].mxu0
      %v358 = vpop.f32.mrb[0].mxu0
      %359 = vdwg.mxu0
      %v360 = vld [vmem:[%s165] sm:$0xe]
      %s361 = scalar_lea.vmem %s1, 48
      %v362 = vld [vmem:[%s361] sm:$0xf]
      %v363 = vld [vmem:[%s361 + $0x4] sm:$0xf]
      %v364 = vld [vmem:[%s361 + $0x8] sm:$0xf]
      %v365 = vld [vmem:[%s361 + $0xc] sm:$0xf]
      %v366 = vld [vmem:[%s361 + $0x10] sm:$0xf]
      %v367 = vld [vmem:[%s361 + $0x14] sm:$0xf]
      %v369 = vunpack.c.l.b16 %v360
      %v370 = vpack.c.b16 %v194, %v369
      %vm371 = vcmask 1046528
      %v372 = vrot.slane %v370, 1
      %v373 = vrot.slane %v198, 1
      %v374 = vsel %vm371, %v372, %v373
      %v381 = vunpack.c.l.b16 %v362
      %v382 = vunpack.c.l.b16 %v363
      %v383 = vunpack.c.l.b16 %v364
      %v384 = vunpack.c.l.b16 %v365
      %v385 = vunpack.c.l.b16 %v366
      %v386 = vunpack.c.l.b16 %v367
      %v387 = vpack.c.b16 %v382, %v381
      %v388 = vpack.c.b16 %v384, %v383
      %v389 = vpack.c.b16 %v386, %v385
      %v394 = vsel %vm233, %v374, 0
      %v397 = vsel %vm233, %v373, 0
      %399 = vmatprep.subr.bf16.mxu0 0
      %400 = vmatpush1.bf16.msra.mxu0 %v387
      %401 = vmatprep.subr.bf16.mxu0 0
      %402 = vmatpush1.bf16.msra.mxu0 %v388
      %403 = vmatprep.subr.bf16.mxu0 0
      %404 = vmatpush1.bf16.msra.mxu0 %v389
      %405 = vmatprep.subr.bf16.mxu0 0
      %406 = vmatpush1.bf16.msra.mxu0 0
      %407 = vmatprep.subr.bf16.mxu0 0
      %408 = vmatpush1.bf16.msra.mxu0 0
      %409 = vmatprep.subr.bf16.mxu0 0
      %410 = vmatpush1.bf16.msra.mxu0 0
      %411 = vmatprep.subr.bf16.mxu0 0
      %412 = vmatpush1.bf16.msra.mxu0 0
      %413 = vmatprep.subr.bf16.mxu0 0
      %414 = vmatpush1.bf16.msra.mxu0 0
      %415 = vmatprep.subr.bf16.mxu0 0
      %416 = vmatpush1.bf16.msra.mxu0 0
      %417 = vmatprep.subr.bf16.mxu0 0
      %418 = vmatpush1.bf16.msra.mxu0 0
      %419 = vmatprep.subr.bf16.mxu0 0
      %420 = vmatpush1.bf16.msra.mxu0 0
      %421 = vmatprep.subr.bf16.mxu0 0
      %422 = vmatpush1.bf16.msra.mxu0 0
      %423 = vmatprep.subr.bf16.mxu0 0
      %424 = vmatpush1.bf16.msra.mxu0 0
      %425 = vmatprep.subr.bf16.mxu0 0
      %426 = vmatpush1.bf16.msra.mxu0 0
      %427 = vmatprep.subr.bf16.mxu0 0
      %428 = vmatpush1.bf16.msra.mxu0 0
      %429 = vmatprep.subr.bf16.mxu0 0
      %430 = vmatpush1.bf16.msra.mxu0 0
      %431 = vmatprep.mubr.bf16.mxu0 0
      %432 = vmatmul.mubr.bf16.gmra.mrb[0].mxu0 %v394
      %v433 = vpop.f32.mrb[0].mxu0
      %v434 = vadd.f32 0.0, %v433
      %v435 = vpop.f32.mrb[0].mxu0
      %v436 = vpop.f32.mrb[0].mxu0
      %v437 = vadd.f32 0.0, %v436
      %v438 = vpop.f32.mrb[0].mxu0
      %439 = vmatprep.mubr.bf16.mxu0 0
      %440 = vmatmul.mubr.bf16.gmra.mrb[0].mxu0 %v397
      %v441 = vpop.f32.mrb[0].mxu0
      %v442 = vadd.f32 0.0, %v441
      %v443 = vpop.f32.mrb[0].mxu0
      %v444 = vpop.f32.mrb[0].mxu0
      %v445 = vpop.f32.mrb[0].mxu0
      %446 = vdwg.mxu0
      %v447 = vadd.f32 %v347, %v434
      %v448 = vadd.f32 %v350, %v437
      %v449 = vadd.f32 %v355, %v442
      %v450 = vld [vmem:[%s2] sm:$0x1]
      %v452 = vlaneseq
      %v453 = vshrl.u32 %v452, 7
      %v454 = vsub.s32 0, %v453
      %v455 = vrot.slane %v450, %v454
      %v457 = vadd.f32 %v447, %v455
      %v458 = vadd.f32 %v448, %v455
      %v459 = vadd.f32 %v449, %v455
      %vm460 = vcmask 195584
      %461 = vst.msk [vmem:[%s170] sm:$0xff] %vm460, %v457
      %462 = vst.msk [vmem:[%s170 + $0x8] sm:$0xff] %vm460, %v458
      %463 = vst.msk [vmem:[%s170 + $0x10] sm:$0xff] %vm460, %v459
      %p464 = scmp.lt.s32.totalorder %s14, 1
      %s465 = scalar_select %p464, %s14, 1
      %s466 = smul.addr %s465, 3
      %s467 = smul.addr %s466, 8
      %s468 = scalar_lea.vmem %s3, %s467
      // Predicated region
      $region33: #{unet1d_flattening_forward.177} parent=31 // pred_check
        %p469 = pneg %p100
      $region34: #{unet1d_flattening_forward.177} parent=31 // pred_check_branch
        %471 = sbr.rel (%p469) target = $region36
      $region35: #{unet1d_flattening_forward.177} parent=31 // pred_region
        _
      $region36: #{unet1d_flattening_forward.177} parent=31 // pred_fallthru
        _
    $region32: #{unet1d_flattening_forward.177} parent=5 // pred_fallthru
      _
    %p472 = scmp.le.s32.totalorder 2, %s9
    // Predicated region
    $region37: #{unet1d_flattening_forward.177} parent=5 // pred_check
      %p473 = pneg %p472
    $region38: #{unet1d_flattening_forward.177} parent=5 // pred_check_branch
      %475 = sbr.rel (%p473) target = $region40
    $region39: #{unet1d_flattening_forward.177} parent=5 // pred_region
      %s476 = ssub.s32 %s9, 2
      // Predicated region
      $region41: #{unet1d_flattening_forward.177} parent=39 // pred_check
        %p477 = pneg %p106
      $region42: #{unet1d_flattening_forward.177} parent=39 // pred_check_branch
        %479 = sbr.rel (%p477) target = $region44
      $region43: #{unet1d_flattening_forward.177} parent=39 // pred_region
        %p480 = scmp.lt.s32.totalorder %s15, 1
        %s481 = scalar_select %p480, %s15, 1
        %s482 = smul.addr %s481, 3
        %s483 = smul.addr %s482, 8
        %s484 = scalar_lea.vmem %s3, %s483
      $region44: #{unet1d_flattening_forward.177} parent=39 // pred_fallthru
        _
    $region40: #{unet1d_flattening_forward.177} parent=5 // pred_fallthru
      _
  $region6: #{unet1d_flattening_forward.177} parent=0 // loop_footer
    %s13 = sadd.s32 1, %s9
  $region7: #{unet1d_flattening_forward.177} parent=0 // loop_footer_branch
    %8 = sbr.rel target = $region3
  $region8: #{unet1d_flattening_forward.177} parent=0 // loop_exit
    _

</llo_original>
